<compile_context>
chip_gen: v7x
topology: tpu7x:2x2x1
jax: 0.10.0
libtpu: 0.0.40
codegen_flags: <defaults>
</compile_context>

<pallas_src>
import math
import functools

import jax
import jax.numpy as jnp
from jax import lax
from jax.experimental import pallas as pl
from jax.experimental.pallas import tpu as pltpu


def _pos_embed_kernel(nm_ref, nmt_ref, lowh_ref, uppw_ref, mfreq_ref, ynorm_ref, xnorm_ref,
                      out_ref, *, TH, F, normalize, use_mxu):
    # nm_ref   : (Bt, H, W)    bf16 not_mask (exact 0/1), full H, resident across h tiles
    # nmt_ref  : (Bt, TH, W)   bf16 not_mask rows of this h tile
    # lowh_ref : (TH, H)       bf16 rows [h*TH, h*TH+TH) of the inclusive lower-tri matrix
    # uppw_ref : (W, W)        bf16 inclusive upper-tri matrix
    # mfreq_ref: (8, F2p)      f32  rows [inv_y; inv_x; phase; 0...]
    # ynorm_ref: (Bt, 1, W)    f32  scale/(col_sum+eps)   (unused when normalize=False)
    # xnorm_ref: (Bt, TH, 1)   f32  scale/(row_sum+eps)   (unused when normalize=False)
    # out_ref  : (Bt, TH*W, F2p)  [MXU path]   or   (Bt, TH, W, F2p)  [VPU fallback]
    Bt = nm_ref.shape[0]
    W = nm_ref.shape[2]
    F2p = mfreq_ref.shape[-1]

    low = lowh_ref[...]
    upp = uppw_ref[...]
    mfreq = mfreq_ref[...]

    # Loop-invariant lane constants hoisted out of the batch loop (JAX does not CSE these).
    if use_mxu:
        lane8 = lax.broadcasted_iota(jnp.int32, (1, 1, 8), 2)
        e_y = (lane8 == 0).astype(jnp.float32)
        e_x = (lane8 == 1).astype(jnp.float32)
        e_1 = (lane8 == 2).astype(jnp.float32)
    else:
        inv_full = (mfreq[0:1, :] + mfreq[1:2, :]).reshape(1, 1, F2p)  # halves don't overlap
        phase = mfreq[2:3, :].reshape(1, 1, F2p)
        is_y = lax.broadcasted_iota(jnp.int32, (1, 1, F2p), 2) < F

    for b in range(Bt):                       # Bt is a small static block size
        nm_b = nm_ref[b]                      # (H,  W) bf16
        nm_t = nmt_ref[b]                     # (TH, W) bf16

        # y_embed[i, j] = sum_{k <= h*TH+i} nm[k, j]   (exact: 0/1 inputs, f32 accumulate)
        y_emb = jnp.dot(low, nm_b, preferred_element_type=jnp.float32)     # (TH, W)
        # x_embed[i, j] = sum_{k <= j} nm[h*TH+i, k]
        x_emb = jnp.dot(nm_t, upp, preferred_element_type=jnp.float32)     # (TH, W)

        if normalize:
            y_emb = y_emb * ynorm_ref[b]      # (1, W):  scale/(col_sum+eps), precomputed
            x_emb = x_emb * xnorm_ref[b]      # (TH, 1): scale/(row_sum+eps), precomputed

        if use_mxu:
            # coef = [y | x | 1 | 0...] on 8 lanes, then one K=8 matmul against
            # [inv_y; inv_x; phase] does the per-lane scale + phase on the MXU and emits
            # `arg` already in the (rows, F2p) lane-dense output layout.
            coef = y_emb[:, :, None] * e_y + x_emb[:, :, None] * e_x + e_1   # (TH, W, 8)
            coef = coef.reshape(TH * W, 8)
            # HIGHEST precision: normalized y/x values do not round-trip through a single
            # bf16 pass (the 0/1 cumsum matmuls above are exact, this one would not be).
            arg = jnp.dot(coef, mfreq, precision=lax.Precision.HIGHEST,
                          preferred_element_type=jnp.float32)                # (TH*W, F2p)
            # sin lowers to a VPU polynomial and should fuse into the store (no VMEM temp).
            out_ref[b] = jnp.sin(arg).astype(out_ref.dtype)
        else:
            # VPU fallback: one select + one mul + one add per output element
            # (lanes [0,F): sin(y*inv+phase); lanes [F,2F): sin(x*inv+phase)).
            sel = jnp.where(is_y, y_emb[:, :, None], x_emb[:, :, None])      # (TH, W, F2p)
            arg = sel * inv_full + phase
            out_ref[b] = jnp.sin(arg).astype(out_ref.dtype)


def _choose_block_sizes(B, H, W, F2p, out_bytes):
    elem_out_bytes = H * W * F2p * out_bytes

    # Batch block: group batch elements only when per-element output slabs are tiny
    # (amortizes ~0.35us per grid step) while keeping >= 2 batch blocks when B >= 2 so a
    # parallel grid axis has work for both v7x TensorCores.  On single-TC v5e/v6e this
    # costs at most one extra grid step.
    bt = 1
    for cand in range(1, B + 1):
        if B % cand:
            continue
        if cand * elem_out_bytes <= (2 << 20) and (B // cand) >= min(2, B):
            bt = cand

    # H tile: largest multiple of 16 (bf16 sublane tile) dividing H that keeps the output
    # block under ~6 MiB, so 2x double-buffered output + the (TH*W, F2p) f32 temp + the
    # resident full-H not_mask block stay well inside the 48 MiB VMEM limit (v7x: 64 MiB/TC).
    budget = 6 << 20
    th = H
    if bt * elem_out_bytes > budget:
        best = None
        for cand in range(16, H, 16):
            if H % cand == 0 and bt * cand * W * F2p * out_bytes <= budget:
                best = cand
        if best is not None:
            th = best
        # else: fall back to TH = H (single oversized block; may need a larger vmem limit).
        # TODO(synk): for very large H switch to a carried running-column-sum formulation
        # (h axis 'arbitrary', (Bt,1,W) accumulator) instead of the O(H^2*W) full-H matmul.

    # Guarantee >= 2 (fully parallel) grid steps whenever the shape allows, so both v7x
    # TensorCores get work even for B == 1, single-block feature maps.
    if (B // bt) * (H // th) == 1:
        for cand in range(((H - 1) // 16) * 16, 15, -16):
            if cand < H and H % cand == 0:
                th = cand
                break
    return bt, th


def _position_embedding_sine_impl(mask, num_pos_feats, temperature, normalize, scale,
                                  out_dtype, use_mxu):
    B, H, W = mask.shape
    F = num_pos_feats
    F2 = 2 * F
    F2p = ((F2 + 127) // 128) * 128   # lane-dense (unmasked vst) output stores for any F

    # --- grid-invariant constants, hoisted out of the kernel ---------------------------
    not_mask = jnp.logical_not(mask).astype(jnp.bfloat16)                 # exact 0/1

    r = jnp.arange(H, dtype=jnp.int32)
    lower_h = (r[None, :] <= r[:, None]).astype(jnp.bfloat16)             # (H, H): k <= i
    c = jnp.arange(W, dtype=jnp.int32)
    upper_w = (c[:, None] <= c[None, :]).astype(jnp.bfloat16)             # (W, W): k <= j

    lane = jnp.arange(F2, dtype=jnp.float32)
    j = jnp.where(lane < F, lane, lane - F)                               # index within half
    dim_t = jnp.asarray(temperature, jnp.float32) ** (2.0 * jnp.floor(j / 2.0) / F)
    inv_dim = 1.0 / dim_t
    inv_y = jnp.where(lane < F, inv_dim, 0.0)                             # zero on x half
    inv_x = jnp.where(lane < F, 0.0, inv_dim)                             # zero on y half
    phase = jnp.where(jnp.mod(j, 2.0) == 0.0, 0.0, math.pi / 2.0)         # cos(t)=sin(t+pi/2)
    mfreq = jnp.zeros((8, F2p), jnp.float32)
    mfreq = mfreq.at[0, :F2].set(inv_y).at[1, :F2].set(inv_x).at[2, :F2].set(phase)

    eps = 1e-6
    if normalize:
        nm_f32 = not_mask.astype(jnp.float32)
        y_norm = scale / (jnp.sum(nm_f32, axis=1, keepdims=True) + eps)   # (B, 1, W)
        x_norm = scale / (jnp.sum(nm_f32, axis=2, keepdims=True) + eps)   # (B, H, 1)
    else:
        y_norm = jnp.ones((B, 1, W), jnp.float32)
        x_norm = jnp.ones((B, H, 1), jnp.float32)

    Bt, TH = _choose_block_sizes(B, H, W, F2p, jnp.dtype(out_dtype).itemsize)

    kernel = functools.partial(_pos_embed_kernel, TH=TH, F=F,
                               normalize=normalize, use_mxu=use_mxu)

    if use_mxu:
        # Kernel writes the flattened (rows=(i,j), lanes=F2p) slab; the reshape below is
        # metadata-only in HBM.
        out_shape = jax.ShapeDtypeStruct((B, H * W, F2p), out_dtype)
        out_spec = pl.BlockSpec((Bt, TH * W, F2p), lambda b, h: (b, h, 0))
    else:
        out_shape = jax.ShapeDtypeStruct((B, H, W, F2p), out_dtype)
        out_spec = pl.BlockSpec((Bt, TH, W, F2p), lambda b, h: (b, h, 0, 0))

    out = pl.pallas_call(
        kernel,
        out_shape=out_shape,
        grid=(B // Bt, H // TH),
        in_specs=[
            pl.BlockSpec((Bt, H, W), lambda b, h: (b, 0, 0)),    # not_mask, full H (y cumsum)
            pl.BlockSpec((Bt, TH, W), lambda b, h: (b, h, 0)),   # not_mask rows of this tile
            pl.BlockSpec((TH, H), lambda b, h: (h, 0)),          # lower-tri rows of this tile
            pl.BlockSpec((W, W), lambda b, h: (0, 0)),           # upper-tri
            pl.BlockSpec((8, F2p), lambda b, h: (0, 0)),         # [inv_y; inv_x; phase]
            pl.BlockSpec((Bt, 1, W), lambda b, h: (b, 0, 0)),    # scale/(col_sum+eps)
            pl.BlockSpec((Bt, TH, 1), lambda b, h: (b, h, 0)),   # scale/(row_sum+eps)
        ],
        out_specs=out_spec,
        compiler_params=pltpu.CompilerParams(
            dimension_semantics=("parallel", "parallel"),
            vmem_limit_bytes=48 * 1024 * 1024,
        ),
    )(not_mask, not_mask, lower_h, upper_w, mfreq, y_norm, x_norm)

    out = out.reshape(B, H, W, F2p)
    if F2p != F2:
        out = out[..., :F2]
    return out


_MXU_BROADCAST = None


def _mxu_broadcast_path():
    """One-time eager probe: does this Mosaic build lower the small-K f32 HIGHEST matmul
    used to offload the lane broadcast to the MXU, and is it accurate enough?  Falls back
    to the pure-VPU select path otherwise.  Resolved once at the Python level, so it also
    applies when the public wrappers are jitted."""
    global _MXU_BROADCAST
    if _MXU_BROADCAST is None:
        try:
            h, w, f = 16, 16, 64
            m = (jnp.arange(h * w, dtype=jnp.int32).reshape(1, h, w) % 5) == 0
            got = _position_embedding_sine_impl(m, f, 10000, True, 2 * math.pi,
                                                jnp.float32, use_mxu=True)
            got = jax.block_until_ready(got)
            want = jnp.transpose(_reference(m, f, 10000, True), (0, 2, 3, 1))
            _MXU_BROADCAST = bool(jnp.max(jnp.abs(got - want)) <= 5e-5)
        except Exception:   # lowering / compile failure on this Mosaic build
            _MXU_BROADCAST = False
    return _MXU_BROADCAST


def position_embedding_sine_nhwc(mask, num_pos_feats=64, temperature=10000,
                                 normalize=False, scale=None, out_dtype=jnp.float32):
    """mask: (B, H, W) bool (True = padded). Returns (B, H, W, 2*num_pos_feats) of out_dtype.
    out_dtype=jnp.bfloat16 halves the output HBM traffic for write-bound consumers (v5e)."""
    if scale is not None and normalize is False:
        raise ValueError('normalize should be True if scale is passed')
    if scale is None:
        scale = 2 * math.pi
    if num_pos_feats % 2 != 0:
        raise ValueError('num_pos_feats must be even (PyTorch stack/flatten requires it)')
    return _position_embedding_sine_impl(mask, num_pos_feats, temperature, normalize,
                                         float(scale), out_dtype,
                                         use_mxu=_mxu_broadcast_path())


def position_embedding_sine(mask, num_pos_feats=64, temperature=10000,
                            normalize=False, scale=None):
    """Matches the PyTorch module: returns (B, 2*num_pos_feats, H, W) float32 (NCHW)."""
    out_nhwc = position_embedding_sine_nhwc(mask, num_pos_feats, temperature, normalize, scale)
    # PyTorch's permute(0, 3, 1, 2).  Kept in the wrapper: with W < 128, folding it into the
    # kernel would turn every store into a masked vst.msk.  Consumers that can take
    # channels-last should use position_embedding_sine_nhwc and skip this transpose.
    return jnp.transpose(out_nhwc, (0, 3, 1, 2))


def _reference(mask, num_pos_feats=64, temperature=10000, normalize=False, scale=None):
    """Pure-JAX transcription of the PyTorch forward, for verification."""
    if scale is None:
        scale = 2 * math.pi
    not_mask = jnp.logical_not(mask).astype(jnp.float32)
    y_embed = jnp.cumsum(not_mask, axis=1)
    x_embed = jnp.cumsum(not_mask, axis=2)
    if normalize:
        eps = 1e-6
        y_embed = y_embed / (y_embed[:, -1:, :] + eps) * scale
        x_embed = x_embed / (x_embed[:, :, -1:] + eps) * scale
    dim_t = jnp.arange(num_pos_feats, dtype=jnp.float32)
    dim_t = temperature ** (2 * jnp.floor(dim_t / 2) / num_pos_feats)
    pos_x = x_embed[:, :, :, None] / dim_t
    pos_y = y_embed[:, :, :, None] / dim_t
    B, H, W, _ = pos_x.shape
    pos_x = jnp.stack((jnp.sin(pos_x[..., 0::2]), jnp.cos(pos_x[..., 1::2])),
                      axis=4).reshape(B, H, W, -1)
    pos_y = jnp.stack((jnp.sin(pos_y[..., 0::2]), jnp.cos(pos_y[..., 1::2])),
                      axis=4).reshape(B, H, W, -1)
    pos = jnp.concatenate((pos_y, pos_x), axis=3).transpose(0, 3, 1, 2)
    return pos


if __name__ == "__main__":
    key = jax.random.PRNGKey(0)
    B, C, H, W = 2, 4, 16, 16
    num_pos_feats = 64

    kx, km = jax.random.split(key)
    # x only supplies device/dtype in the PyTorch module; the math uses only mask.
    x = jax.random.normal(kx, (B, C, H, W), dtype=jnp.float32)
    mask = jax.random.bernoulli(km, p=0.25, shape=(B, H, W))   # True = padding

    for normalize in (False, True):
        pos = position_embedding_sine(mask, num_pos_feats=num_pos_feats,
                                      temperature=10000, normalize=normalize)
        pos = jax.block_until_ready(pos)
        ref = _reference(mask, num_pos_feats=num_pos_feats, temperature=10000,
                         normalize=normalize)
        assert pos.shape == (B, 2 * num_pos_feats, H, W), pos.shape
        err = float(jnp.max(jnp.abs(pos - ref)))
        # 5e-5 leaves headroom for the multi-pass-bf16 HIGHEST-precision K=8 matmul; the
        # eager probe already fell back to the exact f32 VPU path if the error were larger.
        assert err <= 5e-5, (normalize, err)

    # bf16 output variant for write-bound consumers (v5e): same math, cast at the store.
    pos_bf16 = position_embedding_sine_nhwc(mask, num_pos_feats=num_pos_feats,
                                            temperature=10000, normalize=True,
                                            out_dtype=jnp.bfloat16)
    pos_bf16 = jax.block_until_ready(pos_bf16)
    ref_nhwc = jnp.transpose(_reference(mask, num_pos_feats, 10000, True), (0, 2, 3, 1))
    bf16_err = float(jnp.max(jnp.abs(pos_bf16.astype(jnp.float32) - ref_nhwc)))
    assert bf16_err <= 2e-2, bf16_err

    print("KERNEL_OK")
</pallas_src>

<mosaic_0001>
module attributes {stable_mosaic.version = 11 : i64} {
  func.func @_pos_embed_kernel(%arg0: i32, %arg1: i32, %arg2: memref<1x16x16xbf16, #tpu.memory_space<vmem>>, %arg3: memref<1x16x16xbf16, #tpu.memory_space<vmem>>, %arg4: memref<16x16xbf16, #tpu.memory_space<vmem>>, %arg5: memref<16x16xbf16, #tpu.memory_space<vmem>>, %arg6: memref<8x128xf32, #tpu.memory_space<vmem>>, %arg7: memref<1x1x16xf32, #tpu.memory_space<vmem>>, %arg8: memref<1x16x1xf32, #tpu.memory_space<vmem>>, %arg9: memref<1x256x128xf32, #tpu.memory_space<vmem>>) attributes {dimension_semantics = [#tpu.dimension_semantics<parallel>, #tpu.dimension_semantics<parallel>], iteration_bounds = array<i64: 1, 1>, scalar_prefetch = 0 : i64, scratch_operands = 0 : i64, tpu.core_type = #tpu.core_type<tc>, window_params = [{transform_indices = @transform_0, window_bounds = array<i64: 1, 16, 16>}, {transform_indices = @transform_1, window_bounds = array<i64: 1, 16, 16>}, {transform_indices = @transform_2, window_bounds = array<i64: 16, 16>}, {pipeline_mode = #tpu.pipeline_mode<synchronous>, transform_indices = @transform_3, window_bounds = array<i64: 16, 16>}, {pipeline_mode = #tpu.pipeline_mode<synchronous>, transform_indices = @transform_4, window_bounds = array<i64: 8, 128>}, {transform_indices = @transform_5, window_bounds = array<i64: 1, 1, 16>}, {transform_indices = @transform_6, window_bounds = array<i64: 1, 16, 1>}, {transform_indices = @transform_7, window_bounds = array<i64: 1, 256, 128>}]} {
    %c0 = arith.constant 0 : index
    %c0_0 = arith.constant 0 : index
    %0 = vector.load %arg4[%c0, %c0_0] : memref<16x16xbf16, #tpu.memory_space<vmem>>, vector<16x16xbf16>
    %c0_1 = arith.constant 0 : index
    %c0_2 = arith.constant 0 : index
    %1 = vector.load %arg5[%c0_1, %c0_2] : memref<16x16xbf16, #tpu.memory_space<vmem>>, vector<16x16xbf16>
    %c0_3 = arith.constant 0 : index
    %c0_4 = arith.constant 0 : index
    %2 = vector.load %arg6[%c0_3, %c0_4] : memref<8x128xf32, #tpu.memory_space<vmem>>, vector<8x128xf32>
    %3 = tpu.iota {dimensions = array<i32: 2>} : vector<1x1x8xi32>
    %c0_i32 = arith.constant 0 : i32
    %4 = vector.broadcast %c0_i32 : i32 to vector<1x1x8xi32>
    %5 = arith.cmpi eq, %3, %4 : vector<1x1x8xi32>
    %6 = arith.extui %5 : vector<1x1x8xi1> to vector<1x1x8xi32>
    %7 = arith.sitofp %6 : vector<1x1x8xi32> to vector<1x1x8xf32>
    %c1_i32 = arith.constant 1 : i32
    %8 = vector.broadcast %c1_i32 : i32 to vector<1x1x8xi32>
    %9 = arith.cmpi eq, %3, %8 : vector<1x1x8xi32>
    %10 = arith.extui %9 : vector<1x1x8xi1> to vector<1x1x8xi32>
    %11 = arith.sitofp %10 : vector<1x1x8xi32> to vector<1x1x8xf32>
    %c2_i32 = arith.constant 2 : i32
    %12 = vector.broadcast %c2_i32 : i32 to vector<1x1x8xi32>
    %13 = arith.cmpi eq, %3, %12 : vector<1x1x8xi32>
    %14 = arith.extui %13 : vector<1x1x8xi1> to vector<1x1x8xi32>
    %15 = arith.sitofp %14 : vector<1x1x8xi32> to vector<1x1x8xf32>
    %c0_5 = arith.constant 0 : index
    %c0_6 = arith.constant 0 : index
    %c0_7 = arith.constant 0 : index
    %16 = vector.load %arg2[%c0_5, %c0_6, %c0_7] : memref<1x16x16xbf16, #tpu.memory_space<vmem>>, vector<1x16x16xbf16>
    %17 = vector.shape_cast %16 : vector<1x16x16xbf16> to vector<16x16xbf16>
    %c0_8 = arith.constant 0 : index
    %c0_9 = arith.constant 0 : index
    %c0_10 = arith.constant 0 : index
    %18 = vector.load %arg3[%c0_8, %c0_9, %c0_10] : memref<1x16x16xbf16, #tpu.memory_space<vmem>>, vector<1x16x16xbf16>
    %19 = vector.shape_cast %18 : vector<1x16x16xbf16> to vector<16x16xbf16>
    %cst = arith.constant dense<0.000000e+00> : vector<16x16xf32>
    %20 = tpu.matmul %0, %17, %cst {dimension_numbers = #tpu.dot_dimension_numbers<[1], [0], [0], [1], [0, 0, 1, 1], [], []>} : vector<16x16xbf16>, vector<16x16xbf16>, vector<16x16xf32> -> vector<16x16xf32>
    %cst_11 = arith.constant dense<0.000000e+00> : vector<16x16xf32>
    %21 = tpu.matmul %19, %1, %cst_11 {dimension_numbers = #tpu.dot_dimension_numbers<[1], [0], [0], [1], [0, 0, 1, 1], [], []>} : vector<16x16xbf16>, vector<16x16xbf16>, vector<16x16xf32> -> vector<16x16xf32>
    %c0_12 = arith.constant 0 : index
    %c0_13 = arith.constant 0 : index
    %c0_14 = arith.constant 0 : index
    %22 = vector.load %arg7[%c0_12, %c0_13, %c0_14] : memref<1x1x16xf32, #tpu.memory_space<vmem>>, vector<1x1x16xf32>
    %23 = vector.shape_cast %22 : vector<1x1x16xf32> to vector<1x16xf32>
    %24 = vector.broadcast %23 : vector<1x16xf32> to vector<16x16xf32>
    %25 = arith.mulf %20, %24 : vector<16x16xf32>
    %c0_15 = arith.constant 0 : index
    %c0_16 = arith.constant 0 : index
    %c0_17 = arith.constant 0 : index
    %26 = vector.load %arg8[%c0_15, %c0_16, %c0_17] : memref<1x16x1xf32, #tpu.memory_space<vmem>>, vector<1x16x1xf32>
    %27 = vector.shape_cast %26 : vector<1x16x1xf32> to vector<16x1xf32>
    %28 = vector.broadcast %27 : vector<16x1xf32> to vector<16x16xf32>
    %29 = arith.mulf %21, %28 : vector<16x16xf32>
    %30 = vector.shape_cast %25 : vector<16x16xf32> to vector<16x16x1xf32>
    %31 = vector.broadcast %30 : vector<16x16x1xf32> to vector<16x16x8xf32>
    %32 = vector.broadcast %7 : vector<1x1x8xf32> to vector<16x16x8xf32>
    %33 = arith.mulf %31, %32 : vector<16x16x8xf32>
    %34 = vector.shape_cast %29 : vector<16x16xf32> to vector<16x16x1xf32>
    %35 = vector.broadcast %34 : vector<16x16x1xf32> to vector<16x16x8xf32>
    %36 = vector.broadcast %11 : vector<1x1x8xf32> to vector<16x16x8xf32>
    %37 = arith.mulf %35, %36 : vector<16x16x8xf32>
    %38 = arith.addf %33, %37 : vector<16x16x8xf32>
    %39 = vector.broadcast %15 : vector<1x1x8xf32> to vector<16x16x8xf32>
    %40 = arith.addf %38, %39 : vector<16x16x8xf32>
    %41 = vector.shape_cast %40 : vector<16x16x8xf32> to vector<256x8xf32>
    %cst_18 = arith.constant dense<0.000000e+00> : vector<256x128xf32>
    %42 = tpu.matmul %41, %2, %cst_18 {dimension_numbers = #tpu.dot_dimension_numbers<[1], [0], [0], [1], [0, 0, 1, 1], [], []>, precision = #tpu.contract_precision<fp32>} : vector<256x8xf32>, vector<8x128xf32>, vector<256x128xf32> -> vector<256x128xf32>
    %43 = math.sin %42 : vector<256x128xf32>
    %c0_19 = arith.constant 0 : index
    %c0_20 = arith.constant 0 : index
    %c0_21 = arith.constant 0 : index
    %44 = vector.load %arg9[%c0_19, %c0_20, %c0_21] : memref<1x256x128xf32, #tpu.memory_space<vmem>>, vector<1x256x128xf32>
    %45 = vector.shape_cast %44 : vector<1x256x128xf32> to vector<256x128xf32>
    %46 = vector.shape_cast %43 : vector<256x128xf32> to vector<1x256x128xf32>
    tpu.vector_store %arg9[%c0_19, %c0_20, %c0_21], %46 {strides = array<i32>} : memref<1x256x128xf32, #tpu.memory_space<vmem>>, vector<1x256x128xf32>,
    return
  }
  func.func @transform_0(%arg0: i32, %arg1: i32) -> (i32, i32, i32) {
    %c0_i32 = arith.constant 0 : i32
    %c0_i32_0 = arith.constant 0 : i32
    %c0_i32_1 = arith.constant 0 : i32
    return %arg0, %c0_i32, %c0_i32_0 : i32, i32, i32
  }
  func.func @transform_1(%arg0: i32, %arg1: i32) -> (i32, i32, i32) {
    %c0_i32 = arith.constant 0 : i32
    %c0_i32_0 = arith.constant 0 : i32
    return %arg0, %arg1, %c0_i32 : i32, i32, i32
  }
  func.func @transform_2(%arg0: i32, %arg1: i32) -> (i32, i32) {
    %c0_i32 = arith.constant 0 : i32
    %c0_i32_0 = arith.constant 0 : i32
    return %arg1, %c0_i32 : i32, i32
  }
  func.func @transform_3(%arg0: i32, %arg1: i32) -> (i32, i32) {
    %c0_i32 = arith.constant 0 : i32
    %c0_i32_0 = arith.constant 0 : i32
    %c0_i32_1 = arith.constant 0 : i32
    return %c0_i32, %c0_i32_0 : i32, i32
  }
  func.func @transform_4(%arg0: i32, %arg1: i32) -> (i32, i32) {
    %c0_i32 = arith.constant 0 : i32
    %c0_i32_0 = arith.constant 0 : i32
    %c0_i32_1 = arith.constant 0 : i32
    return %c0_i32, %c0_i32_0 : i32, i32
  }
  func.func @transform_5(%arg0: i32, %arg1: i32) -> (i32, i32, i32) {
    %c0_i32 = arith.constant 0 : i32
    %c0_i32_0 = arith.constant 0 : i32
    %c0_i32_1 = arith.constant 0 : i32
    return %arg0, %c0_i32, %c0_i32_0 : i32, i32, i32
  }
  func.func @transform_6(%arg0: i32, %arg1: i32) -> (i32, i32, i32) {
    %c0_i32 = arith.constant 0 : i32
    %c0_i32_0 = arith.constant 0 : i32
    return %arg0, %arg1, %c0_i32 : i32, i32, i32
  }
  func.func @transform_7(%arg0: i32, %arg1: i32) -> (i32, i32, i32) {
    %c0_i32 = arith.constant 0 : i32
    %c0_i32_0 = arith.constant 0 : i32
    return %arg0, %arg1, %c0_i32 : i32, i32, i32
  }
}

module attributes {stable_mosaic.version = 11 : i64} {
  func.func @_pos_embed_kernel(%arg0: i32, %arg1: i32, %arg2: memref<1x16x16xbf16, #tpu.memory_space<vmem>>, %arg3: memref<1x16x16xbf16, #tpu.memory_space<vmem>>, %arg4: memref<16x16xbf16, #tpu.memory_space<vmem>>, %arg5: memref<16x16xbf16, #tpu.memory_space<vmem>>, %arg6: memref<8x128xf32, #tpu.memory_space<vmem>>, %arg7: memref<1x1x16xf32, #tpu.memory_space<vmem>>, %arg8: memref<1x16x1xf32, #tpu.memory_space<vmem>>, %arg9: memref<1x16x16x128xf32, #tpu.memory_space<vmem>>) attributes {dimension_semantics = [#tpu.dimension_semantics<parallel>, #tpu.dimension_semantics<parallel>], iteration_bounds = array<i64: 2, 1>, scalar_prefetch = 0 : i64, scratch_operands = 0 : i64, tpu.core_type = #tpu.core_type<tc>, window_params = [{transform_indices = @transform_0, window_bounds = array<i64: 1, 16, 16>}, {transform_indices = @transform_1, window_bounds = array<i64: 1, 16, 16>}, {transform_indices = @transform_2, window_bounds = array<i64: 16, 16>}, {pipeline_mode = #tpu.pipeline_mode<synchronous>, transform_indices = @transform_3, window_bounds = array<i64: 16, 16>}, {pipeline_mode = #tpu.pipeline_mode<synchronous>, transform_indices = @transform_4, window_bounds = array<i64: 8, 128>}, {transform_indices = @transform_5, window_bounds = array<i64: 1, 1, 16>}, {transform_indices = @transform_6, window_bounds = array<i64: 1, 16, 1>}, {transform_indices = @transform_7, window_bounds = array<i64: 1, 16, 16, 128>}]} {
    %c0 = arith.constant 0 : index
    %c0_0 = arith.constant 0 : index
    %0 = vector.load %arg4[%c0, %c0_0] : memref<16x16xbf16, #tpu.memory_space<vmem>>, vector<16x16xbf16>
    %c0_1 = arith.constant 0 : index
    %c0_2 = arith.constant 0 : index
    %1 = vector.load %arg5[%c0_1, %c0_2] : memref<16x16xbf16, #tpu.memory_space<vmem>>, vector<16x16xbf16>
    %c0_3 = arith.constant 0 : index
    %c0_4 = arith.constant 0 : index
    %2 = vector.load %arg6[%c0_3, %c0_4] : memref<8x128xf32, #tpu.memory_space<vmem>>, vector<8x128xf32>
    %3 = vector.extract_strided_slice %2 {offsets = [0, 0], sizes = [1, 128], strides = [1, 1]} : vector<8x128xf32> to vector<1x128xf32>
    %4 = vector.extract_strided_slice %2 {offsets = [1, 0], sizes = [1, 128], strides = [1, 1]} : vector<8x128xf32> to vector<1x128xf32>
    %5 = arith.addf %3, %4 : vector<1x128xf32>
    %6 = vector.shape_cast %5 : vector<1x128xf32> to vector<1x1x128xf32>
    %7 = vector.extract_strided_slice %2 {offsets = [2, 0], sizes = [1, 128], strides = [1, 1]} : vector<8x128xf32> to vector<1x128xf32>
    %8 = vector.shape_cast %7 : vector<1x128xf32> to vector<1x1x128xf32>
    %9 = tpu.iota {dimensions = array<i32: 2>} : vector<1x1x128xi32>
    %c64_i32 = arith.constant 64 : i32
    %10 = vector.broadcast %c64_i32 : i32 to vector<1x1x128xi32>
    %11 = arith.cmpi slt, %9, %10 : vector<1x1x128xi32>
    %c0_5 = arith.constant 0 : index
    %c0_6 = arith.constant 0 : index
    %c0_7 = arith.constant 0 : index
    %12 = vector.load %arg2[%c0_5, %c0_6, %c0_7] : memref<1x16x16xbf16, #tpu.memory_space<vmem>>, vector<1x16x16xbf16>
    %13 = vector.shape_cast %12 : vector<1x16x16xbf16> to vector<16x16xbf16>
    %c0_8 = arith.constant 0 : index
    %c0_9 = arith.constant 0 : index
    %c0_10 = arith.constant 0 : index
    %14 = vector.load %arg3[%c0_8, %c0_9, %c0_10] : memref<1x16x16xbf16, #tpu.memory_space<vmem>>, vector<1x16x16xbf16>
    %15 = vector.shape_cast %14 : vector<1x16x16xbf16> to vector<16x16xbf16>
    %cst = arith.constant dense<0.000000e+00> : vector<16x16xf32>
    %16 = tpu.matmul %0, %13, %cst {dimension_numbers = #tpu.dot_dimension_numbers<[1], [0], [0], [1], [0, 0, 1, 1], [], []>} : vector<16x16xbf16>, vector<16x16xbf16>, vector<16x16xf32> -> vector<16x16xf32>
    %cst_11 = arith.constant dense<0.000000e+00> : vector<16x16xf32>
    %17 = tpu.matmul %15, %1, %cst_11 {dimension_numbers = #tpu.dot_dimension_numbers<[1], [0], [0], [1], [0, 0, 1, 1], [], []>} : vector<16x16xbf16>, vector<16x16xbf16>, vector<16x16xf32> -> vector<16x16xf32>
    %18 = vector.shape_cast %16 : vector<16x16xf32> to vector<16x16x1xf32>
    %19 = vector.shape_cast %17 : vector<16x16xf32> to vector<16x16x1xf32>
    %20 = vector.shape_cast %11 : vector<1x1x128xi1> to vector<1x1x128xi1>
    %21 = vector.broadcast %20 : vector<1x1x128xi1> to vector<16x16x128xi1>
    %22 = vector.shape_cast %18 : vector<16x16x1xf32> to vector<16x16x1xf32>
    %23 = vector.broadcast %22 : vector<16x16x1xf32> to vector<16x16x128xf32>
    %24 = vector.shape_cast %19 : vector<16x16x1xf32> to vector<16x16x1xf32>
    %25 = vector.broadcast %24 : vector<16x16x1xf32> to vector<16x16x128xf32>
    %26 = arith.select %21, %23, %25 : vector<16x16x128xi1>, vector<16x16x128xf32>
    %27 = vector.broadcast %6 : vector<1x1x128xf32> to vector<16x16x128xf32>
    %28 = arith.mulf %26, %27 : vector<16x16x128xf32>
    %29 = vector.broadcast %8 : vector<1x1x128xf32> to vector<16x16x128xf32>
    %30 = arith.addf %28, %29 : vector<16x16x128xf32>
    %31 = math.sin %30 : vector<16x16x128xf32>
    %c0_12 = arith.constant 0 : index
    %c0_13 = arith.constant 0 : index
    %c0_14 = arith.constant 0 : index
    %c0_15 = arith.constant 0 : index
    %32 = vector.load %arg9[%c0_12, %c0_13, %c0_14, %c0_15] : memref<1x16x16x128xf32, #tpu.memory_space<vmem>>, vector<1x16x16x128xf32>
    %33 = vector.shape_cast %32 : vector<1x16x16x128xf32> to vector<16x16x128xf32>
    %34 = vector.shape_cast %31 : vector<16x16x128xf32> to vector<1x16x16x128xf32>
    tpu.vector_store %arg9[%c0_12, %c0_13, %c0_14, %c0_15], %34 {strides = array<i32>} : memref<1x16x16x128xf32, #tpu.memory_space<vmem>>, vector<1x16x16x128xf32>,
    return
  }
  func.func @transform_0(%arg0: i32, %arg1: i32) -> (i32, i32, i32) {
    %c0_i32 = arith.constant 0 : i32
    %c0_i32_0 = arith.constant 0 : i32
    %c0_i32_1 = arith.constant 0 : i32
    return %arg0, %c0_i32, %c0_i32_0 : i32, i32, i32
  }
  func.func @transform_1(%arg0: i32, %arg1: i32) -> (i32, i32, i32) {
    %c0_i32 = arith.constant 0 : i32
    %c0_i32_0 = arith.constant 0 : i32
    return %arg0, %arg1, %c0_i32 : i32, i32, i32
  }
  func.func @transform_2(%arg0: i32, %arg1: i32) -> (i32, i32) {
    %c0_i32 = arith.constant 0 : i32
    %c0_i32_0 = arith.constant 0 : i32
    return %arg1, %c0_i32 : i32, i32
  }
  func.func @transform_3(%arg0: i32, %arg1: i32) -> (i32, i32) {
    %c0_i32 = arith.constant 0 : i32
    %c0_i32_0 = arith.constant 0 : i32
    %c0_i32_1 = arith.constant 0 : i32
    return %c0_i32, %c0_i32_0 : i32, i32
  }
  func.func @transform_4(%arg0: i32, %arg1: i32) -> (i32, i32) {
    %c0_i32 = arith.constant 0 : i32
    %c0_i32_0 = arith.constant 0 : i32
    %c0_i32_1 = arith.constant 0 : i32
    return %c0_i32, %c0_i32_0 : i32, i32
  }
  func.func @transform_5(%arg0: i32, %arg1: i32) -> (i32, i32, i32) {
    %c0_i32 = arith.constant 0 : i32
    %c0_i32_0 = arith.constant 0 : i32
    %c0_i32_1 = arith.constant 0 : i32
    return %arg0, %c0_i32, %c0_i32_0 : i32, i32, i32
  }
  func.func @transform_6(%arg0: i32, %arg1: i32) -> (i32, i32, i32) {
    %c0_i32 = arith.constant 0 : i32
    %c0_i32_0 = arith.constant 0 : i32
    return %arg0, %arg1, %c0_i32 : i32, i32, i32
  }
  func.func @transform_7(%arg0: i32, %arg1: i32) -> (i32, i32, i32, i32) {
    %c0_i32 = arith.constant 0 : i32
    %c0_i32_0 = arith.constant 0 : i32
    %c0_i32_1 = arith.constant 0 : i32
    return %arg0, %arg1, %c0_i32, %c0_i32_0 : i32, i32, i32, i32
  }
}

</mosaic_0001>

<llo_original>
// kernel: tpu_custom_call.1
$region0: #{tpu_custom_call.1}
  #allocation0 [shape = 'u32[]', space=smem, size = 0x4, offset = 0x4, fixed_abs, tag = 'smem constant byte address 0x4 - core index']
  #allocation1 [shape = 'u32[144,128]{1,0:T(1,128)}', space=vmem, size = 0x12000, scoped, tag = 'internal scratch']
  %s0 = inlined_call_operand.vmem [shape: bf16[1,16,16], index: 0, kind: input, shape index: {}]
  %s1 = inlined_call_operand.vmem [shape: bf16[1,16,16], index: 1, kind: input, shape index: {}]
  %s2 = inlined_call_operand.vmem [shape: bf16[16,16], index: 2, kind: input, shape index: {}]
  %s3 = inlined_call_operand.hbm [shape: bf16[16,16], index: 3, kind: input, shape index: {}]
  %s4 = inlined_call_operand.vmem [shape: f32[8,128], index: 4, kind: input, shape index: {}]
  %s5 = inlined_call_operand.vmem [shape: f32[1,1,16], index: 5, kind: input, shape index: {}]
  %s6 = inlined_call_operand.vmem [shape: f32[1,16,1], index: 6, kind: input, shape index: {}]
  %s7 = inlined_call_operand.hbm [shape: f32[1,256,128], index: 7, kind: output, shape index: {}]
  %s8 = sld [smem:[#allocation0]]
  $region42: #{tpu_custom_call.1} parent=0
    _
  %s10 = ssub.s32 1, %s8
  %s11 = scalar_select 0, %s10, %s8
  $region1: #{tpu_custom_call.1} parent=0
    #allocation2 [shape = 'u8[4096]{0}', space=vmem, size = 0x1000, scoped, tag = 'input window, operand 3, single buffered']
    #allocation3 [shape = 's32[1]{0}', space=sflag, size = 0x4, scoped, tag = 'scoped memory for tpu_custom_call.1']
    #allocation4 [shape = 's32[1]{0}', space=sflag, size = 0x4, scoped, tag = 'scoped memory for tpu_custom_call.1']
    #allocation5 [shape = 'u8[131072]{0}', space=vmem, size = 0x20000, scoped, tag = 'output window, operand 0, single buffered']
    %12 = vsyncpa [#allocation3], 0
    %13 = vsyncpa [#allocation4], 0
    // Predicated region
    $region2: #{tpu_custom_call.1} parent=1 // pred_check
      _
    $region3: #{tpu_custom_call.1} parent=1 // pred_check_branch
      %15 = sbr.rel (0) target = $region5
    $region4: #{tpu_custom_call.1} parent=1 // pred_region
      _
    $region5: #{tpu_custom_call.1} parent=1 // pred_fallthru
      _
    // Predicated region
    $region6: #{tpu_custom_call.1} parent=1 // pred_check
      _
    $region7: #{tpu_custom_call.1} parent=1 // pred_check_branch
      %17 = sbr.rel (0) target = $region9
    $region8: #{tpu_custom_call.1} parent=1 // pred_region
      _
    $region9: #{tpu_custom_call.1} parent=1 // pred_fallthru
      _
    // Predicated region
    $region10: #{tpu_custom_call.1} parent=1 // pred_check
      _
    $region11: #{tpu_custom_call.1} parent=1 // pred_check_branch
      %19 = sbr.rel (0) target = $region13
    $region12: #{tpu_custom_call.1} parent=1 // pred_region
      _
    $region13: #{tpu_custom_call.1} parent=1 // pred_fallthru
      _
    // Predicated region
    $region14: #{tpu_custom_call.1} parent=1 // pred_check
      _
    $region15: #{tpu_custom_call.1} parent=1 // pred_check_branch
      %21 = sbr.rel (0) target = $region17
    $region16: #{tpu_custom_call.1} parent=1 // pred_region
      %s23 = ssub.s32 128, 128
      %24 = vsyncadd [#allocation3], %s23
      %s25 = sshll.u32 [#allocation2], 4
      %s26 = int_to_ptr.vmem [resolvable:$true] %s25
      %31 = dma.hbm_to_vmem [thread:$0]  %s3, 128, %s26, [#allocation3], 64, 64, 4
    $region17: #{tpu_custom_call.1} parent=1 // pred_fallthru
      _
    // Predicated region
    $region18: #{tpu_custom_call.1} parent=1 // pred_check
      _
    $region19: #{tpu_custom_call.1} parent=1 // pred_check_branch
      %33 = sbr.rel (0) target = $region21
    $region20: #{tpu_custom_call.1} parent=1 // pred_region
      _
    $region21: #{tpu_custom_call.1} parent=1 // pred_fallthru
      _
    // Predicated region
    $region22: #{tpu_custom_call.1} parent=1 // pred_check
      _
    $region23: #{tpu_custom_call.1} parent=1 // pred_check_branch
      %35 = sbr.rel (0) target = $region25
    $region24: #{tpu_custom_call.1} parent=1 // pred_region
      _
    $region25: #{tpu_custom_call.1} parent=1 // pred_fallthru
      _
    // Predicated region
    $region26: #{tpu_custom_call.1} parent=1 // pred_check
      _
    $region27: #{tpu_custom_call.1} parent=1 // pred_check_branch
      %37 = sbr.rel (0) target = $region29
    $region28: #{tpu_custom_call.1} parent=1 // pred_region
      _
    $region29: #{tpu_custom_call.1} parent=1 // pred_fallthru
      _
    // Predicated region
    $region30: #{tpu_custom_call.1} parent=1 // pred_check
      _
    $region31: #{tpu_custom_call.1} parent=1 // pred_check_branch
      %39 = sbr.rel (0) target = $region33
    $region32: #{tpu_custom_call.1} parent=1 // pred_region
      %40 = dma.done [#allocation3], 128
    $region33: #{tpu_custom_call.1} parent=1 // pred_fallthru
      _
    %v42 = vld [vmem:[%s2] sm:$0xf]
    %v43 = vld [vmem:[%s2 + $0x4] sm:$0xf]
    %v44 = vld [vmem:[#allocation2] sm:$0xf]
    %v45 = vld [vmem:[#allocation2 + $0x4] sm:$0xf]
    %v46 = vld [vmem:[%s4] sm:$0xff]
    %v47 = vlaneseq
    %v48 = vand.u32 %v47, 127
    %vm49 = vcmp.eq.s32.totalorder %v48, 0
    %v50 = vsel %vm49, 1, 0
    %v51 = vcvt.s32.f32 %v50
    %vm52 = vcmp.eq.s32.totalorder %v48, 1
    %v53 = vsel %vm52, 1, 0
    %v54 = vcvt.s32.f32 %v53
    %vm55 = vcmp.eq.s32.totalorder %v48, 2
    %v56 = vsel %vm55, 1, 0
    %v57 = vcvt.s32.f32 %v56
    %v58 = vld [vmem:[%s0] sm:$0xf]
    %v59 = vld [vmem:[%s0 + $0x4] sm:$0xf]
    %v60 = vld [vmem:[%s1] sm:$0xf]
    %v61 = vld [vmem:[%s1 + $0x4] sm:$0xf]
    %v64 = vunpack.c.l.b16 %v42
    %v65 = vunpack.c.l.b16 %v43
    %v66 = vpack.c.b16 %v65, %v64
    %v69 = vunpack.c.l.b16 %v58
    %v70 = vunpack.c.l.b16 %v59
    %v71 = vpack.c.b16 %v70, %v69
    %vm73 = vcmask 130048
    %v75 = vsel %vm73, %v66, 0
    %77 = vmatprep.subr.bf16.mxu0 0
    %78 = vmatpush1.bf16.msra.mxu0 %v71
    %79 = vmatprep.subr.bf16.mxu0 0
    %80 = vmatpush1.bf16.msra.mxu0 0
    %81 = vmatprep.subr.bf16.mxu0 0
    %82 = vmatpush1.bf16.msra.mxu0 0
    %83 = vmatprep.subr.bf16.mxu0 0
    %84 = vmatpush1.bf16.msra.mxu0 0
    %85 = vmatprep.subr.bf16.mxu0 0
    %86 = vmatpush1.bf16.msra.mxu0 0
    %87 = vmatprep.subr.bf16.mxu0 0
    %88 = vmatpush1.bf16.msra.mxu0 0
    %89 = vmatprep.subr.bf16.mxu0 0
    %90 = vmatpush1.bf16.msra.mxu0 0
    %91 = vmatprep.subr.bf16.mxu0 0
    %92 = vmatpush1.bf16.msra.mxu0 0
    %93 = vmatprep.subr.bf16.mxu0 0
    %94 = vmatpush1.bf16.msra.mxu0 0
    %95 = vmatprep.subr.bf16.mxu0 0
    %96 = vmatpush1.bf16.msra.mxu0 0
    %97 = vmatprep.subr.bf16.mxu0 0
    %98 = vmatpush1.bf16.msra.mxu0 0
    %99 = vmatprep.subr.bf16.mxu0 0
    %100 = vmatpush1.bf16.msra.mxu0 0
    %101 = vmatprep.subr.bf16.mxu0 0
    %102 = vmatpush1.bf16.msra.mxu0 0
    %103 = vmatprep.subr.bf16.mxu0 0
    %104 = vmatpush1.bf16.msra.mxu0 0
    %105 = vmatprep.subr.bf16.mxu0 0
    %106 = vmatpush1.bf16.msra.mxu0 0
    %107 = vmatprep.subr.bf16.mxu0 0
    %108 = vmatpush1.bf16.msra.mxu0 0
    %109 = vmatprep.mubr.bf16.mxu0 0
    %110 = vmatmul.mubr.bf16.gmra.mrb[0].mxu0 %v75
    %v111 = vpop.f32.mrb[0].mxu0
    %v112 = vadd.f32 0.0, %v111
    %v113 = vpop.f32.mrb[0].mxu0
    %v114 = vpop.f32.mrb[0].mxu0
    %v115 = vadd.f32 0.0, %v114
    %v116 = vpop.f32.mrb[0].mxu0
    %117 = vdwg.mxu0
    %v120 = vunpack.c.l.b16 %v60
    %v121 = vunpack.c.l.b16 %v61
    %v122 = vpack.c.b16 %v121, %v120
    %v125 = vunpack.c.l.b16 %v44
    %v126 = vunpack.c.l.b16 %v45
    %v127 = vpack.c.b16 %v126, %v125
    %v130 = vsel %vm73, %v122, 0
    %132 = vmatprep.subr.bf16.mxu0 0
    %133 = vmatpush1.bf16.msra.mxu0 %v127
    %134 = vmatprep.subr.bf16.mxu0 0
    %135 = vmatpush1.bf16.msra.mxu0 0
    %136 = vmatprep.subr.bf16.mxu0 0
    %137 = vmatpush1.bf16.msra.mxu0 0
    %138 = vmatprep.subr.bf16.mxu0 0
    %139 = vmatpush1.bf16.msra.mxu0 0
    %140 = vmatprep.subr.bf16.mxu0 0
    %141 = vmatpush1.bf16.msra.mxu0 0
    %142 = vmatprep.subr.bf16.mxu0 0
    %143 = vmatpush1.bf16.msra.mxu0 0
    %144 = vmatprep.subr.bf16.mxu0 0
    %145 = vmatpush1.bf16.msra.mxu0 0
    %146 = vmatprep.subr.bf16.mxu0 0
    %147 = vmatpush1.bf16.msra.mxu0 0
    %148 = vmatprep.subr.bf16.mxu0 0
    %149 = vmatpush1.bf16.msra.mxu0 0
    %150 = vmatprep.subr.bf16.mxu0 0
    %151 = vmatpush1.bf16.msra.mxu0 0
    %152 = vmatprep.subr.bf16.mxu0 0
    %153 = vmatpush1.bf16.msra.mxu0 0
    %154 = vmatprep.subr.bf16.mxu0 0
    %155 = vmatpush1.bf16.msra.mxu0 0
    %156 = vmatprep.subr.bf16.mxu0 0
    %157 = vmatpush1.bf16.msra.mxu0 0
    %158 = vmatprep.subr.bf16.mxu0 0
    %159 = vmatpush1.bf16.msra.mxu0 0
    %160 = vmatprep.subr.bf16.mxu0 0
    %161 = vmatpush1.bf16.msra.mxu0 0
    %162 = vmatprep.subr.bf16.mxu0 0
    %163 = vmatpush1.bf16.msra.mxu0 0
    %164 = vmatprep.mubr.bf16.mxu0 0
    %165 = vmatmul.mubr.bf16.gmra.mrb[0].mxu0 %v130
    %v166 = vpop.f32.mrb[0].mxu0
    %v167 = vadd.f32 0.0, %v166
    %v168 = vpop.f32.mrb[0].mxu0
    %v169 = vpop.f32.mrb[0].mxu0
    %v170 = vadd.f32 0.0, %v169
    %v171 = vpop.f32.mrb[0].mxu0
    %172 = vdwg.mxu0
    %v173 = vld [vmem:[%s5] sm:$0x1]
    %v175 = vlaneseq
    %v176 = vshrl.u32 %v175, 7
    %v177 = vsub.s32 0, %v176
    %v178 = vrot.slane %v173, %v177
    %v180 = vmul.f32 %v112, %v178
    %v181 = vmul.f32 %v115, %v178
    %v182 = vld [vmem:[%s6] sm:$0xff]
    %v183 = vld [vmem:[%s6 + $0x8] sm:$0xff]
    %185 = vset.pattern.permute.xlu0 0
    %186 = vperm.xlu0 %185, %v182
    %v187 = vpop.permute.xlu0 %186
    %190 = vset.pattern.permute.xlu0 0
    %191 = vperm.xlu0 %190, %v183
    %v192 = vpop.permute.xlu0 %191
    %v194 = vmul.f32 %v167, %v187
    %v195 = vmul.f32 %v170, %v192
    %v196 = vlaneseq
    %v197 = vshrl.u32 %v196, 7
    %v198 = vsub.s32 0, %v197
    %v199 = vrot.slane %v180, %v198
    %201 = vbcast.lane.b32.xlu0 %v199, 256
    %v202 = vpop.permute.xlu0 %201
    %s204 = sor.u32 256, 8
    %205 = vbcast.lane.b32.xlu0 %v199, %s204
    %v206 = vpop.permute.xlu0 %205
    %v207 = vlaneseq
    %v208 = vshrl.u32 %v207, 7
    %v209 = vsub.s32 1, %v208
    %v210 = vrot.slane %v180, %v209
    %212 = vbcast.lane.b32.xlu0 %v210, 256
    %v213 = vpop.permute.xlu0 %212
    %s215 = sor.u32 256, 8
    %216 = vbcast.lane.b32.xlu0 %v210, %s215
    %v217 = vpop.permute.xlu0 %216
    %v218 = vlaneseq
    %v219 = vshrl.u32 %v218, 7
    %v220 = vsub.s32 2, %v219
    %v221 = vrot.slane %v180, %v220
    %223 = vbcast.lane.b32.xlu0 %v221, 256
    %v224 = vpop.permute.xlu0 %223
    %s226 = sor.u32 256, 8
    %227 = vbcast.lane.b32.xlu0 %v221, %s226
    %v228 = vpop.permute.xlu0 %227
    %v229 = vlaneseq
    %v230 = vshrl.u32 %v229, 7
    %v231 = vsub.s32 3, %v230
    %v232 = vrot.slane %v180, %v231
    %234 = vbcast.lane.b32.xlu0 %v232, 256
    %v235 = vpop.permute.xlu0 %234
    %s237 = sor.u32 256, 8
    %238 = vbcast.lane.b32.xlu0 %v232, %s237
    %v239 = vpop.permute.xlu0 %238
    %v240 = vlaneseq
    %v241 = vshrl.u32 %v240, 7
    %v242 = vsub.s32 4, %v241
    %v243 = vrot.slane %v180, %v242
    %245 = vbcast.lane.b32.xlu0 %v243, 256
    %v246 = vpop.permute.xlu0 %245
    %s248 = sor.u32 256, 8
    %249 = vbcast.lane.b32.xlu0 %v243, %s248
    %v250 = vpop.permute.xlu0 %249
    %v251 = vlaneseq
    %v252 = vshrl.u32 %v251, 7
    %v253 = vsub.s32 5, %v252
    %v254 = vrot.slane %v180, %v253
    %256 = vbcast.lane.b32.xlu0 %v254, 256
    %v257 = vpop.permute.xlu0 %256
    %s259 = sor.u32 256, 8
    %260 = vbcast.lane.b32.xlu0 %v254, %s259
    %v261 = vpop.permute.xlu0 %260
    %v262 = vlaneseq
    %v263 = vshrl.u32 %v262, 7
    %v264 = vsub.s32 6, %v263
    %v265 = vrot.slane %v180, %v264
    %267 = vbcast.lane.b32.xlu0 %v265, 256
    %v268 = vpop.permute.xlu0 %267
    %s270 = sor.u32 256, 8
    %271 = vbcast.lane.b32.xlu0 %v265, %s270
    %v272 = vpop.permute.xlu0 %271
    %v273 = vlaneseq
    %v274 = vshrl.u32 %v273, 7
    %v275 = vsub.s32 7, %v274
    %v276 = vrot.slane %v180, %v275
    %278 = vbcast.lane.b32.xlu0 %v276, 256
    %v279 = vpop.permute.xlu0 %278
    %s281 = sor.u32 256, 8
    %282 = vbcast.lane.b32.xlu0 %v276, %s281
    %v283 = vpop.permute.xlu0 %282
    %v284 = vlaneseq
    %v285 = vshrl.u32 %v284, 7
    %v286 = vsub.s32 0, %v285
    %v287 = vrot.slane %v181, %v286
    %289 = vbcast.lane.b32.xlu0 %v287, 256
    %v290 = vpop.permute.xlu0 %289
    %s292 = sor.u32 256, 8
    %293 = vbcast.lane.b32.xlu0 %v287, %s292
    %v294 = vpop.permute.xlu0 %293
    %v295 = vlaneseq
    %v296 = vshrl.u32 %v295, 7
    %v297 = vsub.s32 1, %v296
    %v298 = vrot.slane %v181, %v297
    %300 = vbcast.lane.b32.xlu0 %v298, 256
    %v301 = vpop.permute.xlu0 %300
    %s303 = sor.u32 256, 8
    %304 = vbcast.lane.b32.xlu0 %v298, %s303
    %v305 = vpop.permute.xlu0 %304
    %v306 = vlaneseq
    %v307 = vshrl.u32 %v306, 7
    %v308 = vsub.s32 2, %v307
    %v309 = vrot.slane %v181, %v308
    %311 = vbcast.lane.b32.xlu0 %v309, 256
    %v312 = vpop.permute.xlu0 %311
    %s314 = sor.u32 256, 8
    %315 = vbcast.lane.b32.xlu0 %v309, %s314
    %v316 = vpop.permute.xlu0 %315
    %v317 = vlaneseq
    %v318 = vshrl.u32 %v317, 7
    %v319 = vsub.s32 3, %v318
    %v320 = vrot.slane %v181, %v319
    %322 = vbcast.lane.b32.xlu0 %v320, 256
    %v323 = vpop.permute.xlu0 %322
    %s325 = sor.u32 256, 8
    %326 = vbcast.lane.b32.xlu0 %v320, %s325
    %v327 = vpop.permute.xlu0 %326
    %v328 = vlaneseq
    %v329 = vshrl.u32 %v328, 7
    %v330 = vsub.s32 4, %v329
    %v331 = vrot.slane %v181, %v330
    %333 = vbcast.lane.b32.xlu0 %v331, 256
    %v334 = vpop.permute.xlu0 %333
    %s336 = sor.u32 256, 8
    %337 = vbcast.lane.b32.xlu0 %v331, %s336
    %v338 = vpop.permute.xlu0 %337
    %v339 = vlaneseq
    %v340 = vshrl.u32 %v339, 7
    %v341 = vsub.s32 5, %v340
    %v342 = vrot.slane %v181, %v341
    %344 = vbcast.lane.b32.xlu0 %v342, 256
    %v345 = vpop.permute.xlu0 %344
    %s347 = sor.u32 256, 8
    %348 = vbcast.lane.b32.xlu0 %v342, %s347
    %v349 = vpop.permute.xlu0 %348
    %v350 = vlaneseq
    %v351 = vshrl.u32 %v350, 7
    %v352 = vsub.s32 6, %v351
    %v353 = vrot.slane %v181, %v352
    %355 = vbcast.lane.b32.xlu0 %v353, 256
    %v356 = vpop.permute.xlu0 %355
    %s358 = sor.u32 256, 8
    %359 = vbcast.lane.b32.xlu0 %v353, %s358
    %v360 = vpop.permute.xlu0 %359
    %v361 = vlaneseq
    %v362 = vshrl.u32 %v361, 7
    %v363 = vsub.s32 7, %v362
    %v364 = vrot.slane %v181, %v363
    %366 = vbcast.lane.b32.xlu0 %v364, 256
    %v367 = vpop.permute.xlu0 %366
    %s369 = sor.u32 256, 8
    %370 = vbcast.lane.b32.xlu0 %v364, %s369
    %v371 = vpop.permute.xlu0 %370
    %v372 = vmul.f32 %v202, %v51
    %v373 = vmul.f32 %v206, %v51
    %v374 = vmul.f32 %v213, %v51
    %v375 = vmul.f32 %v217, %v51
    %v376 = vmul.f32 %v224, %v51
    %v377 = vmul.f32 %v228, %v51
    %v378 = vmul.f32 %v235, %v51
    %v379 = vmul.f32 %v239, %v51
    %v380 = vmul.f32 %v246, %v51
    %v381 = vmul.f32 %v250, %v51
    %v382 = vmul.f32 %v257, %v51
    %v383 = vmul.f32 %v261, %v51
    %v384 = vmul.f32 %v268, %v51
    %v385 = vmul.f32 %v272, %v51
    %v386 = vmul.f32 %v279, %v51
    %v387 = vmul.f32 %v283, %v51
    %v388 = vmul.f32 %v290, %v51
    %v389 = vmul.f32 %v294, %v51
    %v390 = vmul.f32 %v301, %v51
    %v391 = vmul.f32 %v305, %v51
    %v392 = vmul.f32 %v312, %v51
    %v393 = vmul.f32 %v316, %v51
    %v394 = vmul.f32 %v323, %v51
    %v395 = vmul.f32 %v327, %v51
    %v396 = vmul.f32 %v334, %v51
    %v397 = vmul.f32 %v338, %v51
    %v398 = vmul.f32 %v345, %v51
    %v399 = vmul.f32 %v349, %v51
    %v400 = vmul.f32 %v356, %v51
    %v401 = vmul.f32 %v360, %v51
    %v402 = vmul.f32 %v367, %v51
    %v403 = vmul.f32 %v371, %v51
    %v404 = vlaneseq
    %v405 = vshrl.u32 %v404, 7
    %v406 = vsub.s32 0, %v405
    %v407 = vrot.slane %v194, %v406
    %409 = vbcast.lane.b32.xlu0 %v407, 256
    %v410 = vpop.permute.xlu0 %409
    %s412 = sor.u32 256, 8
    %413 = vbcast.lane.b32.xlu0 %v407, %s412
    %v414 = vpop.permute.xlu0 %413
    %v415 = vlaneseq
    %v416 = vshrl.u32 %v415, 7
    %v417 = vsub.s32 1, %v416
    %v418 = vrot.slane %v194, %v417
    %420 = vbcast.lane.b32.xlu0 %v418, 256
    %v421 = vpop.permute.xlu0 %420
    %s423 = sor.u32 256, 8
    %424 = vbcast.lane.b32.xlu0 %v418, %s423
    %v425 = vpop.permute.xlu0 %424
    %v426 = vlaneseq
    %v427 = vshrl.u32 %v426, 7
    %v428 = vsub.s32 2, %v427
    %v429 = vrot.slane %v194, %v428
    %431 = vbcast.lane.b32.xlu0 %v429, 256
    %v432 = vpop.permute.xlu0 %431
    %s434 = sor.u32 256, 8
    %435 = vbcast.lane.b32.xlu0 %v429, %s434
    %v436 = vpop.permute.xlu0 %435
    %v437 = vlaneseq
    %v438 = vshrl.u32 %v437, 7
    %v439 = vsub.s32 3, %v438
    %v440 = vrot.slane %v194, %v439
    %442 = vbcast.lane.b32.xlu0 %v440, 256
    %v443 = vpop.permute.xlu0 %442
    %s445 = sor.u32 256, 8
    %446 = vbcast.lane.b32.xlu0 %v440, %s445
    %v447 = vpop.permute.xlu0 %446
    %v448 = vlaneseq
    %v449 = vshrl.u32 %v448, 7
    %v450 = vsub.s32 4, %v449
    %v451 = vrot.slane %v194, %v450
    %453 = vbcast.lane.b32.xlu0 %v451, 256
    %v454 = vpop.permute.xlu0 %453
    %s456 = sor.u32 256, 8
    %457 = vbcast.lane.b32.xlu0 %v451, %s456
    %v458 = vpop.permute.xlu0 %457
    %v459 = vlaneseq
    %v460 = vshrl.u32 %v459, 7
    %v461 = vsub.s32 5, %v460
    %v462 = vrot.slane %v194, %v461
    %464 = vbcast.lane.b32.xlu0 %v462, 256
    %v465 = vpop.permute.xlu0 %464
    %s467 = sor.u32 256, 8
    %468 = vbcast.lane.b32.xlu0 %v462, %s467
    %v469 = vpop.permute.xlu0 %468
    %v470 = vlaneseq
    %v471 = vshrl.u32 %v470, 7
    %v472 = vsub.s32 6, %v471
    %v473 = vrot.slane %v194, %v472
    %475 = vbcast.lane.b32.xlu0 %v473, 256
    %v476 = vpop.permute.xlu0 %475
    %s478 = sor.u32 256, 8
    %479 = vbcast.lane.b32.xlu0 %v473, %s478
    %v480 = vpop.permute.xlu0 %479
    %v481 = vlaneseq
    %v482 = vshrl.u32 %v481, 7
    %v483 = vsub.s32 7, %v482
    %v484 = vrot.slane %v194, %v483
    %486 = vbcast.lane.b32.xlu0 %v484, 256
    %v487 = vpop.permute.xlu0 %486
    %s489 = sor.u32 256, 8
    %490 = vbcast.lane.b32.xlu0 %v484, %s489
    %v491 = vpop.permute.xlu0 %490
    %v492 = vlaneseq
    %v493 = vshrl.u32 %v492, 7
    %v494 = vsub.s32 0, %v493
    %v495 = vrot.slane %v195, %v494
    %497 = vbcast.lane.b32.xlu0 %v495, 256
    %v498 = vpop.permute.xlu0 %497
    %s500 = sor.u32 256, 8
    %501 = vbcast.lane.b32.xlu0 %v495, %s500
    %v502 = vpop.permute.xlu0 %501
    %v503 = vlaneseq
    %v504 = vshrl.u32 %v503, 7
    %v505 = vsub.s32 1, %v504
    %v506 = vrot.slane %v195, %v505
    %508 = vbcast.lane.b32.xlu0 %v506, 256
    %v509 = vpop.permute.xlu0 %508
    %s511 = sor.u32 256, 8
    %512 = vbcast.lane.b32.xlu0 %v506, %s511
    %v513 = vpop.permute.xlu0 %512
    %v514 = vlaneseq
    %v515 = vshrl.u32 %v514, 7
    %v516 = vsub.s32 2, %v515
    %v517 = vrot.slane %v195, %v516
    %519 = vbcast.lane.b32.xlu0 %v517, 256
    %v520 = vpop.permute.xlu0 %519
    %s522 = sor.u32 256, 8
    %523 = vbcast.lane.b32.xlu0 %v517, %s522
    %v524 = vpop.permute.xlu0 %523
    %v525 = vlaneseq
    %v526 = vshrl.u32 %v525, 7
    %v527 = vsub.s32 3, %v526
    %v528 = vrot.slane %v195, %v527
    %530 = vbcast.lane.b32.xlu0 %v528, 256
    %v531 = vpop.permute.xlu0 %530
    %s533 = sor.u32 256, 8
    %534 = vbcast.lane.b32.xlu0 %v528, %s533
    %v535 = vpop.permute.xlu0 %534
    %v536 = vlaneseq
    %v537 = vshrl.u32 %v536, 7
    %v538 = vsub.s32 4, %v537
    %v539 = vrot.slane %v195, %v538
    %541 = vbcast.lane.b32.xlu0 %v539, 256
    %v542 = vpop.permute.xlu0 %541
    %s544 = sor.u32 256, 8
    %545 = vbcast.lane.b32.xlu0 %v539, %s544
    %v546 = vpop.permute.xlu0 %545
    %v547 = vlaneseq
    %v548 = vshrl.u32 %v547, 7
    %v549 = vsub.s32 5, %v548
    %v550 = vrot.slane %v195, %v549
    %552 = vbcast.lane.b32.xlu0 %v550, 256
    %v553 = vpop.permute.xlu0 %552
    %s555 = sor.u32 256, 8
    %556 = vbcast.lane.b32.xlu0 %v550, %s555
    %v557 = vpop.permute.xlu0 %556
    %v558 = vlaneseq
    %v559 = vshrl.u32 %v558, 7
    %v560 = vsub.s32 6, %v559
    %v561 = vrot.slane %v195, %v560
    %563 = vbcast.lane.b32.xlu0 %v561, 256
    %v564 = vpop.permute.xlu0 %563
    %s566 = sor.u32 256, 8
    %567 = vbcast.lane.b32.xlu0 %v561, %s566
    %v568 = vpop.permute.xlu0 %567
    %v569 = vlaneseq
    %v570 = vshrl.u32 %v569, 7
    %v571 = vsub.s32 7, %v570
    %v572 = vrot.slane %v195, %v571
    %574 = vbcast.lane.b32.xlu0 %v572, 256
    %v575 = vpop.permute.xlu0 %574
    %s577 = sor.u32 256, 8
    %578 = vbcast.lane.b32.xlu0 %v572, %s577
    %v579 = vpop.permute.xlu0 %578
    %v580 = vmul.f32 %v410, %v54
    %v581 = vmul.f32 %v414, %v54
    %v582 = vmul.f32 %v421, %v54
    %v583 = vmul.f32 %v425, %v54
    %v584 = vmul.f32 %v432, %v54
    %v585 = vmul.f32 %v436, %v54
    %v586 = vmul.f32 %v443, %v54
    %v587 = vmul.f32 %v447, %v54
    %v588 = vmul.f32 %v454, %v54
    %v589 = vmul.f32 %v458, %v54
    %v590 = vmul.f32 %v465, %v54
    %v591 = vmul.f32 %v469, %v54
    %v592 = vmul.f32 %v476, %v54
    %v593 = vmul.f32 %v480, %v54
    %v594 = vmul.f32 %v487, %v54
    %v595 = vmul.f32 %v491, %v54
    %v596 = vmul.f32 %v498, %v54
    %v597 = vmul.f32 %v502, %v54
    %v598 = vmul.f32 %v509, %v54
    %v599 = vmul.f32 %v513, %v54
    %v600 = vmul.f32 %v520, %v54
    %v601 = vmul.f32 %v524, %v54
    %v602 = vmul.f32 %v531, %v54
    %v603 = vmul.f32 %v535, %v54
    %v604 = vmul.f32 %v542, %v54
    %v605 = vmul.f32 %v546, %v54
    %v606 = vmul.f32 %v553, %v54
    %v607 = vmul.f32 %v557, %v54
    %v608 = vmul.f32 %v564, %v54
    %v609 = vmul.f32 %v568, %v54
    %v610 = vmul.f32 %v575, %v54
    %v611 = vmul.f32 %v579, %v54
    %v612 = vadd.f32 %v372, %v580
    %v613 = vadd.f32 %v373, %v581
    %v614 = vadd.f32 %v374, %v582
    %v615 = vadd.f32 %v375, %v583
    %v616 = vadd.f32 %v376, %v584
    %v617 = vadd.f32 %v377, %v585
    %v618 = vadd.f32 %v378, %v586
    %v619 = vadd.f32 %v379, %v587
    %v620 = vadd.f32 %v380, %v588
    %v621 = vadd.f32 %v381, %v589
    %v622 = vadd.f32 %v382, %v590
    %v623 = vadd.f32 %v383, %v591
    %v624 = vadd.f32 %v384, %v592
    %v625 = vadd.f32 %v385, %v593
    %v626 = vadd.f32 %v386, %v594
    %v627 = vadd.f32 %v387, %v595
    %v628 = vadd.f32 %v388, %v596
    %v629 = vadd.f32 %v389, %v597
    %v630 = vadd.f32 %v390, %v598
    %v631 = vadd.f32 %v391, %v599
    %v632 = vadd.f32 %v392, %v600
    %v633 = vadd.f32 %v393, %v601
    %v634 = vadd.f32 %v394, %v602
    %v635 = vadd.f32 %v395, %v603
    %v636 = vadd.f32 %v396, %v604
    %v637 = vadd.f32 %v397, %v605
    %v638 = vadd.f32 %v398, %v606
    %v639 = vadd.f32 %v399, %v607
    %v640 = vadd.f32 %v400, %v608
    %v641 = vadd.f32 %v401, %v609
    %v642 = vadd.f32 %v402, %v610
    %v643 = vadd.f32 %v403, %v611
    %v644 = vadd.f32 %v612, %v57
    %v645 = vadd.f32 %v613, %v57
    %v646 = vadd.f32 %v614, %v57
    %v647 = vadd.f32 %v615, %v57
    %v648 = vadd.f32 %v616, %v57
    %v649 = vadd.f32 %v617, %v57
    %v650 = vadd.f32 %v618, %v57
    %v651 = vadd.f32 %v619, %v57
    %v652 = vadd.f32 %v620, %v57
    %v653 = vadd.f32 %v621, %v57
    %v654 = vadd.f32 %v622, %v57
    %v655 = vadd.f32 %v623, %v57
    %v656 = vadd.f32 %v624, %v57
    %v657 = vadd.f32 %v625, %v57
    %v658 = vadd.f32 %v626, %v57
    %v659 = vadd.f32 %v627, %v57
    %v660 = vadd.f32 %v628, %v57
    %v661 = vadd.f32 %v629, %v57
    %v662 = vadd.f32 %v630, %v57
    %v663 = vadd.f32 %v631, %v57
    %v664 = vadd.f32 %v632, %v57
    %v665 = vadd.f32 %v633, %v57
    %v666 = vadd.f32 %v634, %v57
    %v667 = vadd.f32 %v635, %v57
    %v668 = vadd.f32 %v636, %v57
    %v669 = vadd.f32 %v637, %v57
    %v670 = vadd.f32 %v638, %v57
    %v671 = vadd.f32 %v639, %v57
    %v672 = vadd.f32 %v640, %v57
    %v673 = vadd.f32 %v641, %v57
    %v674 = vadd.f32 %v642, %v57
    %v675 = vadd.f32 %v643, %v57
    %vm676 = vcmask 64512
    %v678 = vsel %vm676, %v644, 0
    %v681 = vsel %vm676, %v645, 0
    %v684 = vsel %vm676, %v646, 0
    %v687 = vsel %vm676, %v647, 0
    %v690 = vsel %vm676, %v648, 0
    %v693 = vsel %vm676, %v649, 0
    %v696 = vsel %vm676, %v650, 0
    %v699 = vsel %vm676, %v651, 0
    %v702 = vsel %vm676, %v652, 0
    %v705 = vsel %vm676, %v653, 0
    %v708 = vsel %vm676, %v654, 0
    %v711 = vsel %vm676, %v655, 0
    %v714 = vsel %vm676, %v656, 0
    %v717 = vsel %vm676, %v657, 0
    %v720 = vsel %vm676, %v658, 0
    %v723 = vsel %vm676, %v659, 0
    %v726 = vsel %vm676, %v660, 0
    %v729 = vsel %vm676, %v661, 0
    %v732 = vsel %vm676, %v662, 0
    %v735 = vsel %vm676, %v663, 0
    %v738 = vsel %vm676, %v664, 0
    %v741 = vsel %vm676, %v665, 0
    %v744 = vsel %vm676, %v666, 0
    %v747 = vsel %vm676, %v667, 0
    %v750 = vsel %vm676, %v668, 0
    %v753 = vsel %vm676, %v669, 0
    %v756 = vsel %vm676, %v670, 0
    %v759 = vsel %vm676, %v671, 0
    %v762 = vsel %vm676, %v672, 0
    %v765 = vsel %vm676, %v673, 0
    %v768 = vsel %vm676, %v674, 0
    %v771 = vsel %vm676, %v675, 0
    %773 = vmatprep.subr.mxu0 0.0
    %v774 = vand.u32 %v46, 4294901760
    %775 = vmatpush1.msra.mxu0 %v774
    %776 = vmatprep.subr.mxu0 0.0
    %777 = vmatpush1.msra.mxu0 0.0
    %778 = vmatprep.subr.mxu0 0.0
    %779 = vmatpush1.msra.mxu0 0.0
    %780 = vmatprep.subr.mxu0 0.0
    %781 = vmatpush1.msra.mxu0 0.0
    %782 = vmatprep.subr.mxu0 0.0
    %783 = vmatpush1.msra.mxu0 0.0
    %784 = vmatprep.subr.mxu0 0.0
    %785 = vmatpush1.msra.mxu0 0.0
    %786 = vmatprep.subr.mxu0 0.0
    %787 = vmatpush1.msra.mxu0 0.0
    %788 = vmatprep.subr.mxu0 0.0
    %789 = vmatpush1.msra.mxu0 0.0
    %790 = vmatprep.subr.mxu0 0.0
    %791 = vmatpush1.msra.mxu0 0.0
    %792 = vmatprep.subr.mxu0 0.0
    %793 = vmatpush1.msra.mxu0 0.0
    %794 = vmatprep.subr.mxu0 0.0
    %795 = vmatpush1.msra.mxu0 0.0
    %796 = vmatprep.subr.mxu0 0.0
    %797 = vmatpush1.msra.mxu0 0.0
    %798 = vmatprep.subr.mxu0 0.0
    %799 = vmatpush1.msra.mxu0 0.0
    %800 = vmatprep.subr.mxu0 0.0
    %801 = vmatpush1.msra.mxu0 0.0
    %802 = vmatprep.subr.mxu0 0.0
    %803 = vmatpush1.msra.mxu0 0.0
    %804 = vmatprep.subr.mxu0 0.0
    %805 = vmatpush1.msra.mxu0 0.0
    %806 = vmatprep.subr.mxu0 0.0
    %807 = vmatpush1.msra.mxu0 0.0
    %808 = vmatprep.subr.mxu0 0.0
    %809 = vmatpush1.msra.mxu0 0.0
    %810 = vmatprep.subr.mxu0 0.0
    %811 = vmatpush1.msra.mxu0 0.0
    %812 = vmatprep.subr.mxu0 0.0
    %813 = vmatpush1.msra.mxu0 0.0
    %814 = vmatprep.subr.mxu0 0.0
    %815 = vmatpush1.msra.mxu0 0.0
    %816 = vmatprep.subr.mxu0 0.0
    %817 = vmatpush1.msra.mxu0 0.0
    %818 = vmatprep.subr.mxu0 0.0
    %819 = vmatpush1.msra.mxu0 0.0
    %820 = vmatprep.subr.mxu0 0.0
    %821 = vmatpush1.msra.mxu0 0.0
    %822 = vmatprep.subr.mxu0 0.0
    %823 = vmatpush1.msra.mxu0 0.0
    %824 = vmatprep.subr.mxu0 0.0
    %825 = vmatpush1.msra.mxu0 0.0
    %826 = vmatprep.subr.mxu0 0.0
    %827 = vmatpush1.msra.mxu0 0.0
    %828 = vmatprep.subr.mxu0 0.0
    %829 = vmatpush1.msra.mxu0 0.0
    %830 = vmatprep.subr.mxu0 0.0
    %831 = vmatpush1.msra.mxu0 0.0
    %832 = vmatprep.subr.mxu0 0.0
    %833 = vmatpush1.msra.mxu0 0.0
    %834 = vmatprep.subr.mxu0 0.0
    %835 = vmatpush1.msra.mxu0 0.0
    %836 = vmatprep.subr.mxu0 0.0
    %837 = vmatpush1.msra.mxu0 0.0
    %838 = vmatprep.mubr.f32.mxu0 0.0
    %v839 = vand.u32 %v678, 4294901760
    %v840 = vsub.f32 %v678, %v839
    %v841 = vand.u32 %v840, 4294901760
    %v842 = vsub.f32 %v840, %v841
    %v843 = vand.u32 %v842, 4294901760
    %844 = vmatmul.mubr.f32.gmra.mrb[0].mxu0 %v843
    %v845 = vpop.f32.mrb[0].mxu0
    %v846 = vadd.f32 0.0, %v845
    %v847 = vpop.f32.mrb[0].mxu0
    %848 = vmatprep.mubr.f32.mxu0 0.0
    %v849 = vand.u32 %v681, 4294901760
    %v850 = vsub.f32 %v681, %v849
    %v851 = vand.u32 %v850, 4294901760
    %v852 = vsub.f32 %v850, %v851
    %v853 = vand.u32 %v852, 4294901760
    %854 = vmatmul.mubr.f32.gmra.mrb[0].mxu0 %v853
    %v855 = vpop.f32.mrb[0].mxu0
    %v856 = vadd.f32 0.0, %v855
    %v857 = vpop.f32.mrb[0].mxu0
    %858 = vmatprep.mubr.f32.mxu0 0.0
    %v859 = vand.u32 %v684, 4294901760
    %v860 = vsub.f32 %v684, %v859
    %v861 = vand.u32 %v860, 4294901760
    %v862 = vsub.f32 %v860, %v861
    %v863 = vand.u32 %v862, 4294901760
    %864 = vmatmul.mubr.f32.gmra.mrb[0].mxu0 %v863
    %v865 = vpop.f32.mrb[0].mxu0
    %v866 = vadd.f32 0.0, %v865
    %v867 = vpop.f32.mrb[0].mxu0
    %868 = vmatprep.mubr.f32.mxu0 0.0
    %v869 = vand.u32 %v687, 4294901760
    %v870 = vsub.f32 %v687, %v869
    %v871 = vand.u32 %v870, 4294901760
    %v872 = vsub.f32 %v870, %v871
    %v873 = vand.u32 %v872, 4294901760
    %874 = vmatmul.mubr.f32.gmra.mrb[0].mxu0 %v873
    %v875 = vpop.f32.mrb[0].mxu0
    %v876 = vadd.f32 0.0, %v875
    %v877 = vpop.f32.mrb[0].mxu0
    %878 = vmatprep.mubr.f32.mxu0 0.0
    %v879 = vand.u32 %v690, 4294901760
    %v880 = vsub.f32 %v690, %v879
    %v881 = vand.u32 %v880, 4294901760
    %v882 = vsub.f32 %v880, %v881
    %v883 = vand.u32 %v882, 4294901760
    %884 = vmatmul.mubr.f32.gmra.mrb[0].mxu0 %v883
    %v885 = vpop.f32.mrb[0].mxu0
    %v886 = vadd.f32 0.0, %v885
    %v887 = vpop.f32.mrb[0].mxu0
    %888 = vmatprep.mubr.f32.mxu0 0.0
    %v889 = vand.u32 %v693, 4294901760
    %v890 = vsub.f32 %v693, %v889
    %v891 = vand.u32 %v890, 4294901760
    %v892 = vsub.f32 %v890, %v891
    %v893 = vand.u32 %v892, 4294901760
    %894 = vmatmul.mubr.f32.gmra.mrb[0].mxu0 %v893
    %v895 = vpop.f32.mrb[0].mxu0
    %v896 = vadd.f32 0.0, %v895
    %v897 = vpop.f32.mrb[0].mxu0
    %898 = vmatprep.mubr.f32.mxu0 0.0
    %v899 = vand.u32 %v696, 4294901760
    %v900 = vsub.f32 %v696, %v899
    %v901 = vand.u32 %v900, 4294901760
    %v902 = vsub.f32 %v900, %v901
    %v903 = vand.u32 %v902, 4294901760
    %904 = vmatmul.mubr.f32.gmra.mrb[0].mxu0 %v903
    %v905 = vpop.f32.mrb[0].mxu0
    %v906 = vadd.f32 0.0, %v905
    %v907 = vpop.f32.mrb[0].mxu0
    %908 = vmatprep.mubr.f32.mxu0 0.0
    %v909 = vand.u32 %v699, 4294901760
    %v910 = vsub.f32 %v699, %v909
    %v911 = vand.u32 %v910, 4294901760
    %v912 = vsub.f32 %v910, %v911
    %v913 = vand.u32 %v912, 4294901760
    %914 = vmatmul.mubr.f32.gmra.mrb[0].mxu0 %v913
    %v915 = vpop.f32.mrb[0].mxu0
    %v916 = vadd.f32 0.0, %v915
    %v917 = vpop.f32.mrb[0].mxu0
    %918 = vmatprep.mubr.f32.mxu0 0.0
    %v919 = vand.u32 %v702, 4294901760
    %v920 = vsub.f32 %v702, %v919
    %v921 = vand.u32 %v920, 4294901760
    %v922 = vsub.f32 %v920, %v921
    %v923 = vand.u32 %v922, 4294901760
    %924 = vmatmul.mubr.f32.gmra.mrb[0].mxu0 %v923
    %v925 = vpop.f32.mrb[0].mxu0
    %v926 = vadd.f32 0.0, %v925
    %v927 = vpop.f32.mrb[0].mxu0
    %928 = vmatprep.mubr.f32.mxu0 0.0
    %v929 = vand.u32 %v705, 4294901760
    %v930 = vsub.f32 %v705, %v929
    %v931 = vand.u32 %v930, 4294901760
    %v932 = vsub.f32 %v930, %v931
    %v933 = vand.u32 %v932, 4294901760
    %934 = vmatmul.mubr.f32.gmra.mrb[0].mxu0 %v933
    %v935 = vpop.f32.mrb[0].mxu0
    %v936 = vadd.f32 0.0, %v935
    %v937 = vpop.f32.mrb[0].mxu0
    %938 = vmatprep.mubr.f32.mxu0 0.0
    %v939 = vand.u32 %v708, 4294901760
    %v940 = vsub.f32 %v708, %v939
    %v941 = vand.u32 %v940, 4294901760
    %v942 = vsub.f32 %v940, %v941
    %v943 = vand.u32 %v942, 4294901760
    %944 = vmatmul.mubr.f32.gmra.mrb[0].mxu0 %v943
    %v945 = vpop.f32.mrb[0].mxu0
    %v946 = vadd.f32 0.0, %v945
    %v947 = vpop.f32.mrb[0].mxu0
    %948 = vmatprep.mubr.f32.mxu0 0.0
    %v949 = vand.u32 %v711, 4294901760
    %v950 = vsub.f32 %v711, %v949
    %v951 = vand.u32 %v950, 4294901760
    %v952 = vsub.f32 %v950, %v951
    %v953 = vand.u32 %v952, 4294901760
    %954 = vmatmul.mubr.f32.gmra.mrb[0].mxu0 %v953
    %v955 = vpop.f32.mrb[0].mxu0
    %v956 = vadd.f32 0.0, %v955
    %v957 = vpop.f32.mrb[0].mxu0
    %958 = vmatprep.mubr.f32.mxu0 0.0
    %v959 = vand.u32 %v714, 4294901760
    %v960 = vsub.f32 %v714, %v959
    %v961 = vand.u32 %v960, 4294901760
    %v962 = vsub.f32 %v960, %v961
    %v963 = vand.u32 %v962, 4294901760
    %964 = vmatmul.mubr.f32.gmra.mrb[0].mxu0 %v963
    %v965 = vpop.f32.mrb[0].mxu0
    %v966 = vadd.f32 0.0, %v965
    %v967 = vpop.f32.mrb[0].mxu0
    %968 = vmatprep.mubr.f32.mxu0 0.0
    %v969 = vand.u32 %v717, 4294901760
    %v970 = vsub.f32 %v717, %v969
    %v971 = vand.u32 %v970, 4294901760
    %v972 = vsub.f32 %v970, %v971
    %v973 = vand.u32 %v972, 4294901760
    %974 = vmatmul.mubr.f32.gmra.mrb[0].mxu0 %v973
    %v975 = vpop.f32.mrb[0].mxu0
    %v976 = vadd.f32 0.0, %v975
    %v977 = vpop.f32.mrb[0].mxu0
    %978 = vmatprep.mubr.f32.mxu0 0.0
    %v979 = vand.u32 %v720, 4294901760
    %v980 = vsub.f32 %v720, %v979
    %v981 = vand.u32 %v980, 4294901760
    %v982 = vsub.f32 %v980, %v981
    %v983 = vand.u32 %v982, 4294901760
    %984 = vmatmul.mubr.f32.gmra.mrb[0].mxu0 %v983
    %v985 = vpop.f32.mrb[0].mxu0
    %v986 = vadd.f32 0.0, %v985
    %v987 = vpop.f32.mrb[0].mxu0
    %988 = vmatprep.mubr.f32.mxu0 0.0
    %v989 = vand.u32 %v723, 4294901760
    %v990 = vsub.f32 %v723, %v989
    %v991 = vand.u32 %v990, 4294901760
    %v992 = vsub.f32 %v990, %v991
    %v993 = vand.u32 %v992, 4294901760
    %994 = vmatmul.mubr.f32.gmra.mrb[0].mxu0 %v993
    %v995 = vpop.f32.mrb[0].mxu0
    %v996 = vadd.f32 0.0, %v995
    %v997 = vpop.f32.mrb[0].mxu0
    %998 = vmatprep.mubr.f32.mxu0 0.0
    %v999 = vand.u32 %v726, 4294901760
    %v1000 = vsub.f32 %v726, %v999
    %v1001 = vand.u32 %v1000, 4294901760
    %v1002 = vsub.f32 %v1000, %v1001
    %v1003 = vand.u32 %v1002, 4294901760
    %1004 = vmatmul.mubr.f32.gmra.mrb[0].mxu0 %v1003
    %v1005 = vpop.f32.mrb[0].mxu0
    %v1006 = vadd.f32 0.0, %v1005
    %v1007 = vpop.f32.mrb[0].mxu0
    %1008 = vmatprep.mubr.f32.mxu0 0.0
    %v1009 = vand.u32 %v729, 4294901760
    %v1010 = vsub.f32 %v729, %v1009
    %v1011 = vand.u32 %v1010, 4294901760
    %v1012 = vsub.f32 %v1010, %v1011
    %v1013 = vand.u32 %v1012, 4294901760
    %1014 = vmatmul.mubr.f32.gmra.mrb[0].mxu0 %v1013
    %v1015 = vpop.f32.mrb[0].mxu0
    %v1016 = vadd.f32 0.0, %v1015
    %v1017 = vpop.f32.mrb[0].mxu0
    %1018 = vmatprep.mubr.f32.mxu0 0.0
    %v1019 = vand.u32 %v732, 4294901760
    %v1020 = vsub.f32 %v732, %v1019
    %v1021 = vand.u32 %v1020, 4294901760
    %v1022 = vsub.f32 %v1020, %v1021
    %v1023 = vand.u32 %v1022, 4294901760
    %1024 = vmatmul.mubr.f32.gmra.mrb[0].mxu0 %v1023
    %v1025 = vpop.f32.mrb[0].mxu0
    %v1026 = vadd.f32 0.0, %v1025
    %v1027 = vpop.f32.mrb[0].mxu0
    %1028 = vmatprep.mubr.f32.mxu0 0.0
    %v1029 = vand.u32 %v735, 4294901760
    %v1030 = vsub.f32 %v735, %v1029
    %v1031 = vand.u32 %v1030, 4294901760
    %v1032 = vsub.f32 %v1030, %v1031
    %v1033 = vand.u32 %v1032, 4294901760
    %1034 = vmatmul.mubr.f32.gmra.mrb[0].mxu0 %v1033
    %v1035 = vpop.f32.mrb[0].mxu0
    %v1036 = vadd.f32 0.0, %v1035
    %v1037 = vpop.f32.mrb[0].mxu0
    %1038 = vmatprep.mubr.f32.mxu0 0.0
    %v1039 = vand.u32 %v738, 4294901760
    %v1040 = vsub.f32 %v738, %v1039
    %v1041 = vand.u32 %v1040, 4294901760
    %v1042 = vsub.f32 %v1040, %v1041
    %v1043 = vand.u32 %v1042, 4294901760
    %1044 = vmatmul.mubr.f32.gmra.mrb[0].mxu0 %v1043
    %v1045 = vpop.f32.mrb[0].mxu0
    %v1046 = vadd.f32 0.0, %v1045
    %v1047 = vpop.f32.mrb[0].mxu0
    %1048 = vmatprep.mubr.f32.mxu0 0.0
    %v1049 = vand.u32 %v741, 4294901760
    %v1050 = vsub.f32 %v741, %v1049
    %v1051 = vand.u32 %v1050, 4294901760
    %v1052 = vsub.f32 %v1050, %v1051
    %v1053 = vand.u32 %v1052, 4294901760
    %1054 = vmatmul.mubr.f32.gmra.mrb[0].mxu0 %v1053
    %v1055 = vpop.f32.mrb[0].mxu0
    %v1056 = vadd.f32 0.0, %v1055
    %v1057 = vpop.f32.mrb[0].mxu0
    %1058 = vmatprep.mubr.f32.mxu0 0.0
    %v1059 = vand.u32 %v744, 4294901760
    %v1060 = vsub.f32 %v744, %v1059
    %v1061 = vand.u32 %v1060, 4294901760
    %v1062 = vsub.f32 %v1060, %v1061
    %v1063 = vand.u32 %v1062, 4294901760
    %1064 = vmatmul.mubr.f32.gmra.mrb[0].mxu0 %v1063
    %v1065 = vpop.f32.mrb[0].mxu0
    %v1066 = vadd.f32 0.0, %v1065
    %v1067 = vpop.f32.mrb[0].mxu0
    %1068 = vmatprep.mubr.f32.mxu0 0.0
    %v1069 = vand.u32 %v747, 4294901760
    %v1070 = vsub.f32 %v747, %v1069
    %v1071 = vand.u32 %v1070, 4294901760
    %v1072 = vsub.f32 %v1070, %v1071
    %v1073 = vand.u32 %v1072, 4294901760
    %1074 = vmatmul.mubr.f32.gmra.mrb[0].mxu0 %v1073
    %v1075 = vpop.f32.mrb[0].mxu0
    %v1076 = vadd.f32 0.0, %v1075
    %v1077 = vpop.f32.mrb[0].mxu0
    %1078 = vmatprep.mubr.f32.mxu0 0.0
    %v1079 = vand.u32 %v750, 4294901760
    %v1080 = vsub.f32 %v750, %v1079
    %v1081 = vand.u32 %v1080, 4294901760
    %v1082 = vsub.f32 %v1080, %v1081
    %v1083 = vand.u32 %v1082, 4294901760
    %1084 = vmatmul.mubr.f32.gmra.mrb[0].mxu0 %v1083
    %v1085 = vpop.f32.mrb[0].mxu0
    %v1086 = vadd.f32 0.0, %v1085
    %v1087 = vpop.f32.mrb[0].mxu0
    %1088 = vmatprep.mubr.f32.mxu0 0.0
    %v1089 = vand.u32 %v753, 4294901760
    %v1090 = vsub.f32 %v753, %v1089
    %v1091 = vand.u32 %v1090, 4294901760
    %v1092 = vsub.f32 %v1090, %v1091
    %v1093 = vand.u32 %v1092, 4294901760
    %1094 = vmatmul.mubr.f32.gmra.mrb[0].mxu0 %v1093
    %v1095 = vpop.f32.mrb[0].mxu0
    %v1096 = vadd.f32 0.0, %v1095
    %v1097 = vpop.f32.mrb[0].mxu0
    %1098 = vmatprep.mubr.f32.mxu0 0.0
    %v1099 = vand.u32 %v756, 4294901760
    %v1100 = vsub.f32 %v756, %v1099
    %v1101 = vand.u32 %v1100, 4294901760
    %v1102 = vsub.f32 %v1100, %v1101
    %v1103 = vand.u32 %v1102, 4294901760
    %1104 = vmatmul.mubr.f32.gmra.mrb[0].mxu0 %v1103
    %v1105 = vpop.f32.mrb[0].mxu0
    %v1106 = vadd.f32 0.0, %v1105
    %v1107 = vpop.f32.mrb[0].mxu0
    %1108 = vmatprep.mubr.f32.mxu0 0.0
    %v1109 = vand.u32 %v759, 4294901760
    %v1110 = vsub.f32 %v759, %v1109
    %v1111 = vand.u32 %v1110, 4294901760
    %v1112 = vsub.f32 %v1110, %v1111
    %v1113 = vand.u32 %v1112, 4294901760
    %1114 = vmatmul.mubr.f32.gmra.mrb[0].mxu0 %v1113
    %v1115 = vpop.f32.mrb[0].mxu0
    %v1116 = vadd.f32 0.0, %v1115
    %v1117 = vpop.f32.mrb[0].mxu0
    %1118 = vmatprep.mubr.f32.mxu0 0.0
    %v1119 = vand.u32 %v762, 4294901760
    %v1120 = vsub.f32 %v762, %v1119
    %v1121 = vand.u32 %v1120, 4294901760
    %v1122 = vsub.f32 %v1120, %v1121
    %v1123 = vand.u32 %v1122, 4294901760
    %1124 = vmatmul.mubr.f32.gmra.mrb[0].mxu0 %v1123
    %v1125 = vpop.f32.mrb[0].mxu0
    %v1126 = vadd.f32 0.0, %v1125
    %v1127 = vpop.f32.mrb[0].mxu0
    %1128 = vmatprep.mubr.f32.mxu0 0.0
    %v1129 = vand.u32 %v765, 4294901760
    %v1130 = vsub.f32 %v765, %v1129
    %v1131 = vand.u32 %v1130, 4294901760
    %v1132 = vsub.f32 %v1130, %v1131
    %v1133 = vand.u32 %v1132, 4294901760
    %1134 = vmatmul.mubr.f32.gmra.mrb[0].mxu0 %v1133
    %v1135 = vpop.f32.mrb[0].mxu0
    %v1136 = vadd.f32 0.0, %v1135
    %v1137 = vpop.f32.mrb[0].mxu0
    %1138 = vmatprep.mubr.f32.mxu0 0.0
    %v1139 = vand.u32 %v768, 4294901760
    %v1140 = vsub.f32 %v768, %v1139
    %v1141 = vand.u32 %v1140, 4294901760
    %v1142 = vsub.f32 %v1140, %v1141
    %v1143 = vand.u32 %v1142, 4294901760
    %1144 = vmatmul.mubr.f32.gmra.mrb[0].mxu0 %v1143
    %v1145 = vpop.f32.mrb[0].mxu0
    %v1146 = vadd.f32 0.0, %v1145
    %v1147 = vpop.f32.mrb[0].mxu0
    %1148 = vmatprep.mubr.f32.mxu0 0.0
    %v1149 = vand.u32 %v771, 4294901760
    %v1150 = vsub.f32 %v771, %v1149
    %v1151 = vand.u32 %v1150, 4294901760
    %v1152 = vsub.f32 %v1150, %v1151
    %v1153 = vand.u32 %v1152, 4294901760
    %1154 = vmatmul.mubr.f32.gmra.mrb[0].mxu0 %v1153
    %v1155 = vpop.f32.mrb[0].mxu0
    %v1156 = vadd.f32 0.0, %v1155
    %v1157 = vpop.f32.mrb[0].mxu0
    %1158 = vdwg.mxu0
    %1159 = vmatprep.subr.mxu0 0.0
    %v1160 = vand.u32 %v46, 4294901760
    %v1161 = vsub.f32 %v46, %v1160
    %v1162 = vand.u32 %v1161, 4294901760
    %v1163 = vsub.f32 %v1161, %v1162
    %v1164 = vand.u32 %v1163, 4294901760
    %1165 = vmatpush1.msra.mxu0 %v1164
    %1166 = vmatprep.subr.mxu0 0.0
    %1167 = vmatpush1.msra.mxu0 0.0
    %1168 = vmatprep.subr.mxu0 0.0
    %1169 = vmatpush1.msra.mxu0 0.0
    %1170 = vmatprep.subr.mxu0 0.0
    %1171 = vmatpush1.msra.mxu0 0.0
    %1172 = vmatprep.subr.mxu0 0.0
    %1173 = vmatpush1.msra.mxu0 0.0
    %1174 = vmatprep.subr.mxu0 0.0
    %1175 = vmatpush1.msra.mxu0 0.0
    %1176 = vmatprep.subr.mxu0 0.0
    %1177 = vmatpush1.msra.mxu0 0.0
    %1178 = vmatprep.subr.mxu0 0.0
    %1179 = vmatpush1.msra.mxu0 0.0
    %1180 = vmatprep.subr.mxu0 0.0
    %1181 = vmatpush1.msra.mxu0 0.0
    %1182 = vmatprep.subr.mxu0 0.0
    %1183 = vmatpush1.msra.mxu0 0.0
    %1184 = vmatprep.subr.mxu0 0.0
    %1185 = vmatpush1.msra.mxu0 0.0
    %1186 = vmatprep.subr.mxu0 0.0
    %1187 = vmatpush1.msra.mxu0 0.0
    %1188 = vmatprep.subr.mxu0 0.0
    %1189 = vmatpush1.msra.mxu0 0.0
    %1190 = vmatprep.subr.mxu0 0.0
    %1191 = vmatpush1.msra.mxu0 0.0
    %1192 = vmatprep.subr.mxu0 0.0
    %1193 = vmatpush1.msra.mxu0 0.0
    %1194 = vmatprep.subr.mxu0 0.0
    %1195 = vmatpush1.msra.mxu0 0.0
    %1196 = vmatprep.subr.mxu0 0.0
    %1197 = vmatpush1.msra.mxu0 0.0
    %1198 = vmatprep.subr.mxu0 0.0
    %1199 = vmatpush1.msra.mxu0 0.0
    %1200 = vmatprep.subr.mxu0 0.0
    %1201 = vmatpush1.msra.mxu0 0.0
    %1202 = vmatprep.subr.mxu0 0.0
    %1203 = vmatpush1.msra.mxu0 0.0
    %1204 = vmatprep.subr.mxu0 0.0
    %1205 = vmatpush1.msra.mxu0 0.0
    %1206 = vmatprep.subr.mxu0 0.0
    %1207 = vmatpush1.msra.mxu0 0.0
    %1208 = vmatprep.subr.mxu0 0.0
    %1209 = vmatpush1.msra.mxu0 0.0
    %1210 = vmatprep.subr.mxu0 0.0
    %1211 = vmatpush1.msra.mxu0 0.0
    %1212 = vmatprep.subr.mxu0 0.0
    %1213 = vmatpush1.msra.mxu0 0.0
    %1214 = vmatprep.subr.mxu0 0.0
    %1215 = vmatpush1.msra.mxu0 0.0
    %1216 = vmatprep.subr.mxu0 0.0
    %1217 = vmatpush1.msra.mxu0 0.0
    %1218 = vmatprep.subr.mxu0 0.0
    %1219 = vmatpush1.msra.mxu0 0.0
    %1220 = vmatprep.subr.mxu0 0.0
    %1221 = vmatpush1.msra.mxu0 0.0
    %1222 = vmatprep.subr.mxu0 0.0
    %1223 = vmatpush1.msra.mxu0 0.0
    %1224 = vmatprep.subr.mxu0 0.0
    %1225 = vmatpush1.msra.mxu0 0.0
    %1226 = vmatprep.subr.mxu0 0.0
    %1227 = vmatpush1.msra.mxu0 0.0
    %1228 = vmatprep.mubr.f32.mxu0 0.0
    %v1229 = vand.u32 %v678, 4294901760
    %1230 = vmatmul.mubr.f32.gmra.mrb[0].mxu0 %v1229
    %v1231 = vpop.f32.mrb[0].mxu0
    %v1232 = vadd.f32 %v846, %v1231
    %v1233 = vpop.f32.mrb[0].mxu0
    %1234 = vmatprep.mubr.f32.mxu0 0.0
    %v1235 = vand.u32 %v681, 4294901760
    %1236 = vmatmul.mubr.f32.gmra.mrb[0].mxu0 %v1235
    %v1237 = vpop.f32.mrb[0].mxu0
    %v1238 = vadd.f32 %v856, %v1237
    %v1239 = vpop.f32.mrb[0].mxu0
    %1240 = vmatprep.mubr.f32.mxu0 0.0
    %v1241 = vand.u32 %v684, 4294901760
    %1242 = vmatmul.mubr.f32.gmra.mrb[0].mxu0 %v1241
    %v1243 = vpop.f32.mrb[0].mxu0
    %v1244 = vadd.f32 %v866, %v1243
    %v1245 = vpop.f32.mrb[0].mxu0
    %1246 = vmatprep.mubr.f32.mxu0 0.0
    %v1247 = vand.u32 %v687, 4294901760
    %1248 = vmatmul.mubr.f32.gmra.mrb[0].mxu0 %v1247
    %v1249 = vpop.f32.mrb[0].mxu0
    %v1250 = vadd.f32 %v876, %v1249
    %v1251 = vpop.f32.mrb[0].mxu0
    %1252 = vmatprep.mubr.f32.mxu0 0.0
    %v1253 = vand.u32 %v690, 4294901760
    %1254 = vmatmul.mubr.f32.gmra.mrb[0].mxu0 %v1253
    %v1255 = vpop.f32.mrb[0].mxu0
    %v1256 = vadd.f32 %v886, %v1255
    %v1257 = vpop.f32.mrb[0].mxu0
    %1258 = vmatprep.mubr.f32.mxu0 0.0
    %v1259 = vand.u32 %v693, 4294901760
    %1260 = vmatmul.mubr.f32.gmra.mrb[0].mxu0 %v1259
    %v1261 = vpop.f32.mrb[0].mxu0
    %v1262 = vadd.f32 %v896, %v1261
    %v1263 = vpop.f32.mrb[0].mxu0
    %1264 = vmatprep.mubr.f32.mxu0 0.0
    %v1265 = vand.u32 %v696, 4294901760
    %1266 = vmatmul.mubr.f32.gmra.mrb[0].mxu0 %v1265
    %v1267 = vpop.f32.mrb[0].mxu0
    %v1268 = vadd.f32 %v906, %v1267
    %v1269 = vpop.f32.mrb[0].mxu0
    %1270 = vmatprep.mubr.f32.mxu0 0.0
    %v1271 = vand.u32 %v699, 4294901760
    %1272 = vmatmul.mubr.f32.gmra.mrb[0].mxu0 %v1271
    %v1273 = vpop.f32.mrb[0].mxu0
    %v1274 = vadd.f32 %v916, %v1273
    %v1275 = vpop.f32.mrb[0].mxu0
    %1276 = vmatprep.mubr.f32.mxu0 0.0
    %v1277 = vand.u32 %v702, 4294901760
    %1278 = vmatmul.mubr.f32.gmra.mrb[0].mxu0 %v1277
    %v1279 = vpop.f32.mrb[0].mxu0
    %v1280 = vadd.f32 %v926, %v1279
    %v1281 = vpop.f32.mrb[0].mxu0
    %1282 = vmatprep.mubr.f32.mxu0 0.0
    %v1283 = vand.u32 %v705, 4294901760
    %1284 = vmatmul.mubr.f32.gmra.mrb[0].mxu0 %v1283
    %v1285 = vpop.f32.mrb[0].mxu0
    %v1286 = vadd.f32 %v936, %v1285
    %v1287 = vpop.f32.mrb[0].mxu0
    %1288 = vmatprep.mubr.f32.mxu0 0.0
    %v1289 = vand.u32 %v708, 4294901760
    %1290 = vmatmul.mubr.f32.gmra.mrb[0].mxu0 %v1289
    %v1291 = vpop.f32.mrb[0].mxu0
    %v1292 = vadd.f32 %v946, %v1291
    %v1293 = vpop.f32.mrb[0].mxu0
    %1294 = vmatprep.mubr.f32.mxu0 0.0
    %v1295 = vand.u32 %v711, 4294901760
    %1296 = vmatmul.mubr.f32.gmra.mrb[0].mxu0 %v1295
    %v1297 = vpop.f32.mrb[0].mxu0
    %v1298 = vadd.f32 %v956, %v1297
    %v1299 = vpop.f32.mrb[0].mxu0
    %1300 = vmatprep.mubr.f32.mxu0 0.0
    %v1301 = vand.u32 %v714, 4294901760
    %1302 = vmatmul.mubr.f32.gmra.mrb[0].mxu0 %v1301
    %v1303 = vpop.f32.mrb[0].mxu0
    %v1304 = vadd.f32 %v966, %v1303
    %v1305 = vpop.f32.mrb[0].mxu0
    %1306 = vmatprep.mubr.f32.mxu0 0.0
    %v1307 = vand.u32 %v717, 4294901760
    %1308 = vmatmul.mubr.f32.gmra.mrb[0].mxu0 %v1307
    %v1309 = vpop.f32.mrb[0].mxu0
    %v1310 = vadd.f32 %v976, %v1309
    %v1311 = vpop.f32.mrb[0].mxu0
    %1312 = vmatprep.mubr.f32.mxu0 0.0
    %v1313 = vand.u32 %v720, 4294901760
    %1314 = vmatmul.mubr.f32.gmra.mrb[0].mxu0 %v1313
    %v1315 = vpop.f32.mrb[0].mxu0
    %v1316 = vadd.f32 %v986, %v1315
    %v1317 = vpop.f32.mrb[0].mxu0
    %1318 = vmatprep.mubr.f32.mxu0 0.0
    %v1319 = vand.u32 %v723, 4294901760
    %1320 = vmatmul.mubr.f32.gmra.mrb[0].mxu0 %v1319
    %v1321 = vpop.f32.mrb[0].mxu0
    %v1322 = vadd.f32 %v996, %v1321
    %v1323 = vpop.f32.mrb[0].mxu0
    %1324 = vmatprep.mubr.f32.mxu0 0.0
    %v1325 = vand.u32 %v726, 4294901760
    %1326 = vmatmul.mubr.f32.gmra.mrb[0].mxu0 %v1325
    %v1327 = vpop.f32.mrb[0].mxu0
    %v1328 = vadd.f32 %v1006, %v1327
    %v1329 = vpop.f32.mrb[0].mxu0
    %1330 = vmatprep.mubr.f32.mxu0 0.0
    %v1331 = vand.u32 %v729, 4294901760
    %1332 = vmatmul.mubr.f32.gmra.mrb[0].mxu0 %v1331
    %v1333 = vpop.f32.mrb[0].mxu0
    %v1334 = vadd.f32 %v1016, %v1333
    %v1335 = vpop.f32.mrb[0].mxu0
    %1336 = vmatprep.mubr.f32.mxu0 0.0
    %v1337 = vand.u32 %v732, 4294901760
    %1338 = vmatmul.mubr.f32.gmra.mrb[0].mxu0 %v1337
    %v1339 = vpop.f32.mrb[0].mxu0
    %v1340 = vadd.f32 %v1026, %v1339
    %v1341 = vpop.f32.mrb[0].mxu0
    %1342 = vmatprep.mubr.f32.mxu0 0.0
    %v1343 = vand.u32 %v735, 4294901760
    %1344 = vmatmul.mubr.f32.gmra.mrb[0].mxu0 %v1343
    %v1345 = vpop.f32.mrb[0].mxu0
    %v1346 = vadd.f32 %v1036, %v1345
    %v1347 = vpop.f32.mrb[0].mxu0
    %1348 = vmatprep.mubr.f32.mxu0 0.0
    %v1349 = vand.u32 %v738, 4294901760
    %1350 = vmatmul.mubr.f32.gmra.mrb[0].mxu0 %v1349
    %v1351 = vpop.f32.mrb[0].mxu0
    %v1352 = vadd.f32 %v1046, %v1351
    %v1353 = vpop.f32.mrb[0].mxu0
    %1354 = vmatprep.mubr.f32.mxu0 0.0
    %v1355 = vand.u32 %v741, 4294901760
    %1356 = vmatmul.mubr.f32.gmra.mrb[0].mxu0 %v1355
    %v1357 = vpop.f32.mrb[0].mxu0
    %v1358 = vadd.f32 %v1056, %v1357
    %v1359 = vpop.f32.mrb[0].mxu0
    %1360 = vmatprep.mubr.f32.mxu0 0.0
    %v1361 = vand.u32 %v744, 4294901760
    %1362 = vmatmul.mubr.f32.gmra.mrb[0].mxu0 %v1361
    %v1363 = vpop.f32.mrb[0].mxu0
    %v1364 = vadd.f32 %v1066, %v1363
    %v1365 = vpop.f32.mrb[0].mxu0
    %1366 = vmatprep.mubr.f32.mxu0 0.0
    %v1367 = vand.u32 %v747, 4294901760
    %1368 = vmatmul.mubr.f32.gmra.mrb[0].mxu0 %v1367
    %v1369 = vpop.f32.mrb[0].mxu0
    %v1370 = vadd.f32 %v1076, %v1369
    %v1371 = vpop.f32.mrb[0].mxu0
    %1372 = vmatprep.mubr.f32.mxu0 0.0
    %v1373 = vand.u32 %v750, 4294901760
    %1374 = vmatmul.mubr.f32.gmra.mrb[0].mxu0 %v1373
    %v1375 = vpop.f32.mrb[0].mxu0
    %v1376 = vadd.f32 %v1086, %v1375
    %v1377 = vpop.f32.mrb[0].mxu0
    %1378 = vmatprep.mubr.f32.mxu0 0.0
    %v1379 = vand.u32 %v753, 4294901760
    %1380 = vmatmul.mubr.f32.gmra.mrb[0].mxu0 %v1379
    %v1381 = vpop.f32.mrb[0].mxu0
    %v1382 = vadd.f32 %v1096, %v1381
    %v1383 = vpop.f32.mrb[0].mxu0
    %1384 = vmatprep.mubr.f32.mxu0 0.0
    %v1385 = vand.u32 %v756, 4294901760
    %1386 = vmatmul.mubr.f32.gmra.mrb[0].mxu0 %v1385
    %v1387 = vpop.f32.mrb[0].mxu0
    %v1388 = vadd.f32 %v1106, %v1387
    %v1389 = vpop.f32.mrb[0].mxu0
    %1390 = vmatprep.mubr.f32.mxu0 0.0
    %v1391 = vand.u32 %v759, 4294901760
    %1392 = vmatmul.mubr.f32.gmra.mrb[0].mxu0 %v1391
    %v1393 = vpop.f32.mrb[0].mxu0
    %v1394 = vadd.f32 %v1116, %v1393
    %v1395 = vpop.f32.mrb[0].mxu0
    %1396 = vmatprep.mubr.f32.mxu0 0.0
    %v1397 = vand.u32 %v762, 4294901760
    %1398 = vmatmul.mubr.f32.gmra.mrb[0].mxu0 %v1397
    %v1399 = vpop.f32.mrb[0].mxu0
    %v1400 = vadd.f32 %v1126, %v1399
    %v1401 = vpop.f32.mrb[0].mxu0
    %1402 = vmatprep.mubr.f32.mxu0 0.0
    %v1403 = vand.u32 %v765, 4294901760
    %1404 = vmatmul.mubr.f32.gmra.mrb[0].mxu0 %v1403
    %v1405 = vpop.f32.mrb[0].mxu0
    %v1406 = vadd.f32 %v1136, %v1405
    %v1407 = vpop.f32.mrb[0].mxu0
    %1408 = vmatprep.mubr.f32.mxu0 0.0
    %v1409 = vand.u32 %v768, 4294901760
    %1410 = vmatmul.mubr.f32.gmra.mrb[0].mxu0 %v1409
    %v1411 = vpop.f32.mrb[0].mxu0
    %v1412 = vadd.f32 %v1146, %v1411
    %v1413 = vpop.f32.mrb[0].mxu0
    %1414 = vmatprep.mubr.f32.mxu0 0.0
    %v1415 = vand.u32 %v771, 4294901760
    %1416 = vmatmul.mubr.f32.gmra.mrb[0].mxu0 %v1415
    %v1417 = vpop.f32.mrb[0].mxu0
    %v1418 = vadd.f32 %v1156, %v1417
    %v1419 = vpop.f32.mrb[0].mxu0
    %1420 = vdwg.mxu0
    %1421 = vmatprep.subr.mxu0 0.0
    %v1422 = vand.u32 %v46, 4294901760
    %v1423 = vsub.f32 %v46, %v1422
    %1424 = vmatpush1.msra.mxu0 %v1423
    %1425 = vmatprep.subr.mxu0 0.0
    %1426 = vmatpush1.msra.mxu0 0.0
    %1427 = vmatprep.subr.mxu0 0.0
    %1428 = vmatpush1.msra.mxu0 0.0
    %1429 = vmatprep.subr.mxu0 0.0
    %1430 = vmatpush1.msra.mxu0 0.0
    %1431 = vmatprep.subr.mxu0 0.0
    %1432 = vmatpush1.msra.mxu0 0.0
    %1433 = vmatprep.subr.mxu0 0.0
    %1434 = vmatpush1.msra.mxu0 0.0
    %1435 = vmatprep.subr.mxu0 0.0
    %1436 = vmatpush1.msra.mxu0 0.0
    %1437 = vmatprep.subr.mxu0 0.0
    %1438 = vmatpush1.msra.mxu0 0.0
    %1439 = vmatprep.subr.mxu0 0.0
    %1440 = vmatpush1.msra.mxu0 0.0
    %1441 = vmatprep.subr.mxu0 0.0
    %1442 = vmatpush1.msra.mxu0 0.0
    %1443 = vmatprep.subr.mxu0 0.0
    %1444 = vmatpush1.msra.mxu0 0.0
    %1445 = vmatprep.subr.mxu0 0.0
    %1446 = vmatpush1.msra.mxu0 0.0
    %1447 = vmatprep.subr.mxu0 0.0
    %1448 = vmatpush1.msra.mxu0 0.0
    %1449 = vmatprep.subr.mxu0 0.0
    %1450 = vmatpush1.msra.mxu0 0.0
    %1451 = vmatprep.subr.mxu0 0.0
    %1452 = vmatpush1.msra.mxu0 0.0
    %1453 = vmatprep.subr.mxu0 0.0
    %1454 = vmatpush1.msra.mxu0 0.0
    %1455 = vmatprep.subr.mxu0 0.0
    %1456 = vmatpush1.msra.mxu0 0.0
    %1457 = vmatprep.subr.mxu0 0.0
    %1458 = vmatpush1.msra.mxu0 0.0
    %1459 = vmatprep.subr.mxu0 0.0
    %1460 = vmatpush1.msra.mxu0 0.0
    %1461 = vmatprep.subr.mxu0 0.0
    %1462 = vmatpush1.msra.mxu0 0.0
    %1463 = vmatprep.subr.mxu0 0.0
    %1464 = vmatpush1.msra.mxu0 0.0
    %1465 = vmatprep.subr.mxu0 0.0
    %1466 = vmatpush1.msra.mxu0 0.0
    %1467 = vmatprep.subr.mxu0 0.0
    %1468 = vmatpush1.msra.mxu0 0.0
    %1469 = vmatprep.subr.mxu0 0.0
    %1470 = vmatpush1.msra.mxu0 0.0
    %1471 = vmatprep.subr.mxu0 0.0
    %1472 = vmatpush1.msra.mxu0 0.0
    %1473 = vmatprep.subr.mxu0 0.0
    %1474 = vmatpush1.msra.mxu0 0.0
    %1475 = vmatprep.subr.mxu0 0.0
    %1476 = vmatpush1.msra.mxu0 0.0
    %1477 = vmatprep.subr.mxu0 0.0
    %1478 = vmatpush1.msra.mxu0 0.0
    %1479 = vmatprep.subr.mxu0 0.0
    %1480 = vmatpush1.msra.mxu0 0.0
    %1481 = vmatprep.subr.mxu0 0.0
    %1482 = vmatpush1.msra.mxu0 0.0
    %1483 = vmatprep.subr.mxu0 0.0
    %1484 = vmatpush1.msra.mxu0 0.0
    %1485 = vmatprep.subr.mxu0 0.0
    %1486 = vmatpush1.msra.mxu0 0.0
    %1487 = vmatprep.mubr.f32.mxu0 0.0
    %v1488 = vand.u32 %v678, 4294901760
    %v1489 = vsub.f32 %v678, %v1488
    %1490 = vmatmul.mubr.f32.gmra.mrb[0].mxu0 %v1489
    %v1491 = vpop.f32.mrb[0].mxu0
    %v1492 = vadd.f32 %v1232, %v1491
    %v1493 = vpop.f32.mrb[0].mxu0
    %1494 = vmatprep.mubr.f32.mxu0 0.0
    %v1495 = vand.u32 %v681, 4294901760
    %v1496 = vsub.f32 %v681, %v1495
    %1497 = vmatmul.mubr.f32.gmra.mrb[0].mxu0 %v1496
    %v1498 = vpop.f32.mrb[0].mxu0
    %v1499 = vadd.f32 %v1238, %v1498
    %v1500 = vpop.f32.mrb[0].mxu0
    %1501 = vmatprep.mubr.f32.mxu0 0.0
    %v1502 = vand.u32 %v684, 4294901760
    %v1503 = vsub.f32 %v684, %v1502
    %1504 = vmatmul.mubr.f32.gmra.mrb[0].mxu0 %v1503
    %v1505 = vpop.f32.mrb[0].mxu0
    %v1506 = vadd.f32 %v1244, %v1505
    %v1507 = vpop.f32.mrb[0].mxu0
    %1508 = vmatprep.mubr.f32.mxu0 0.0
    %v1509 = vand.u32 %v687, 4294901760
    %v1510 = vsub.f32 %v687, %v1509
    %1511 = vmatmul.mubr.f32.gmra.mrb[0].mxu0 %v1510
    %v1512 = vpop.f32.mrb[0].mxu0
    %v1513 = vadd.f32 %v1250, %v1512
    %v1514 = vpop.f32.mrb[0].mxu0
    %1515 = vmatprep.mubr.f32.mxu0 0.0
    %v1516 = vand.u32 %v690, 4294901760
    %v1517 = vsub.f32 %v690, %v1516
    %1518 = vmatmul.mubr.f32.gmra.mrb[0].mxu0 %v1517
    %v1519 = vpop.f32.mrb[0].mxu0
    %v1520 = vadd.f32 %v1256, %v1519
    %v1521 = vpop.f32.mrb[0].mxu0
    %1522 = vmatprep.mubr.f32.mxu0 0.0
    %v1523 = vand.u32 %v693, 4294901760
    %v1524 = vsub.f32 %v693, %v1523
    %1525 = vmatmul.mubr.f32.gmra.mrb[0].mxu0 %v1524
    %v1526 = vpop.f32.mrb[0].mxu0
    %v1527 = vadd.f32 %v1262, %v1526
    %v1528 = vpop.f32.mrb[0].mxu0
    %1529 = vmatprep.mubr.f32.mxu0 0.0
    %v1530 = vand.u32 %v696, 4294901760
    %v1531 = vsub.f32 %v696, %v1530
    %1532 = vmatmul.mubr.f32.gmra.mrb[0].mxu0 %v1531
    %v1533 = vpop.f32.mrb[0].mxu0
    %v1534 = vadd.f32 %v1268, %v1533
    %v1535 = vpop.f32.mrb[0].mxu0
    %1536 = vmatprep.mubr.f32.mxu0 0.0
    %v1537 = vand.u32 %v699, 4294901760
    %v1538 = vsub.f32 %v699, %v1537
    %1539 = vmatmul.mubr.f32.gmra.mrb[0].mxu0 %v1538
    %v1540 = vpop.f32.mrb[0].mxu0
    %v1541 = vadd.f32 %v1274, %v1540
    %v1542 = vpop.f32.mrb[0].mxu0
    %1543 = vmatprep.mubr.f32.mxu0 0.0
    %v1544 = vand.u32 %v702, 4294901760
    %v1545 = vsub.f32 %v702, %v1544
    %1546 = vmatmul.mubr.f32.gmra.mrb[0].mxu0 %v1545
    %v1547 = vpop.f32.mrb[0].mxu0
    %v1548 = vadd.f32 %v1280, %v1547
    %v1549 = vpop.f32.mrb[0].mxu0
    %1550 = vmatprep.mubr.f32.mxu0 0.0
    %v1551 = vand.u32 %v705, 4294901760
    %v1552 = vsub.f32 %v705, %v1551
    %1553 = vmatmul.mubr.f32.gmra.mrb[0].mxu0 %v1552
    %v1554 = vpop.f32.mrb[0].mxu0
    %v1555 = vadd.f32 %v1286, %v1554
    %v1556 = vpop.f32.mrb[0].mxu0
    %1557 = vmatprep.mubr.f32.mxu0 0.0
    %v1558 = vand.u32 %v708, 4294901760
    %v1559 = vsub.f32 %v708, %v1558
    %1560 = vmatmul.mubr.f32.gmra.mrb[0].mxu0 %v1559
    %v1561 = vpop.f32.mrb[0].mxu0
    %v1562 = vadd.f32 %v1292, %v1561
    %v1563 = vpop.f32.mrb[0].mxu0
    %1564 = vmatprep.mubr.f32.mxu0 0.0
    %v1565 = vand.u32 %v711, 4294901760
    %v1566 = vsub.f32 %v711, %v1565
    %1567 = vmatmul.mubr.f32.gmra.mrb[0].mxu0 %v1566
    %v1568 = vpop.f32.mrb[0].mxu0
    %v1569 = vadd.f32 %v1298, %v1568
    %v1570 = vpop.f32.mrb[0].mxu0
    %1571 = vmatprep.mubr.f32.mxu0 0.0
    %v1572 = vand.u32 %v714, 4294901760
    %v1573 = vsub.f32 %v714, %v1572
    %1574 = vmatmul.mubr.f32.gmra.mrb[0].mxu0 %v1573
    %v1575 = vpop.f32.mrb[0].mxu0
    %v1576 = vadd.f32 %v1304, %v1575
    %v1577 = vpop.f32.mrb[0].mxu0
    %1578 = vmatprep.mubr.f32.mxu0 0.0
    %v1579 = vand.u32 %v717, 4294901760
    %v1580 = vsub.f32 %v717, %v1579
    %1581 = vmatmul.mubr.f32.gmra.mrb[0].mxu0 %v1580
    %v1582 = vpop.f32.mrb[0].mxu0
    %v1583 = vadd.f32 %v1310, %v1582
    %v1584 = vpop.f32.mrb[0].mxu0
    %1585 = vmatprep.mubr.f32.mxu0 0.0
    %v1586 = vand.u32 %v720, 4294901760
    %v1587 = vsub.f32 %v720, %v1586
    %1588 = vmatmul.mubr.f32.gmra.mrb[0].mxu0 %v1587
    %v1589 = vpop.f32.mrb[0].mxu0
    %v1590 = vadd.f32 %v1316, %v1589
    %v1591 = vpop.f32.mrb[0].mxu0
    %1592 = vmatprep.mubr.f32.mxu0 0.0
    %v1593 = vand.u32 %v723, 4294901760
    %v1594 = vsub.f32 %v723, %v1593
    %1595 = vmatmul.mubr.f32.gmra.mrb[0].mxu0 %v1594
    %v1596 = vpop.f32.mrb[0].mxu0
    %v1597 = vadd.f32 %v1322, %v1596
    %v1598 = vpop.f32.mrb[0].mxu0
    %1599 = vmatprep.mubr.f32.mxu0 0.0
    %v1600 = vand.u32 %v726, 4294901760
    %v1601 = vsub.f32 %v726, %v1600
    %1602 = vmatmul.mubr.f32.gmra.mrb[0].mxu0 %v1601
    %v1603 = vpop.f32.mrb[0].mxu0
    %v1604 = vadd.f32 %v1328, %v1603
    %v1605 = vpop.f32.mrb[0].mxu0
    %1606 = vmatprep.mubr.f32.mxu0 0.0
    %v1607 = vand.u32 %v729, 4294901760
    %v1608 = vsub.f32 %v729, %v1607
    %1609 = vmatmul.mubr.f32.gmra.mrb[0].mxu0 %v1608
    %v1610 = vpop.f32.mrb[0].mxu0
    %v1611 = vadd.f32 %v1334, %v1610
    %v1612 = vpop.f32.mrb[0].mxu0
    %1613 = vmatprep.mubr.f32.mxu0 0.0
    %v1614 = vand.u32 %v732, 4294901760
    %v1615 = vsub.f32 %v732, %v1614
    %1616 = vmatmul.mubr.f32.gmra.mrb[0].mxu0 %v1615
    %v1617 = vpop.f32.mrb[0].mxu0
    %v1618 = vadd.f32 %v1340, %v1617
    %v1619 = vpop.f32.mrb[0].mxu0
    %1620 = vmatprep.mubr.f32.mxu0 0.0
    %v1621 = vand.u32 %v735, 4294901760
    %v1622 = vsub.f32 %v735, %v1621
    %1623 = vmatmul.mubr.f32.gmra.mrb[0].mxu0 %v1622
    %v1624 = vpop.f32.mrb[0].mxu0
    %v1625 = vadd.f32 %v1346, %v1624
    %v1626 = vpop.f32.mrb[0].mxu0
    %1627 = vmatprep.mubr.f32.mxu0 0.0
    %v1628 = vand.u32 %v738, 4294901760
    %v1629 = vsub.f32 %v738, %v1628
    %1630 = vmatmul.mubr.f32.gmra.mrb[0].mxu0 %v1629
    %v1631 = vpop.f32.mrb[0].mxu0
    %v1632 = vadd.f32 %v1352, %v1631
    %v1633 = vpop.f32.mrb[0].mxu0
    %1634 = vmatprep.mubr.f32.mxu0 0.0
    %v1635 = vand.u32 %v741, 4294901760
    %v1636 = vsub.f32 %v741, %v1635
    %1637 = vmatmul.mubr.f32.gmra.mrb[0].mxu0 %v1636
    %v1638 = vpop.f32.mrb[0].mxu0
    %v1639 = vadd.f32 %v1358, %v1638
    %v1640 = vpop.f32.mrb[0].mxu0
    %1641 = vmatprep.mubr.f32.mxu0 0.0
    %v1642 = vand.u32 %v744, 4294901760
    %v1643 = vsub.f32 %v744, %v1642
    %1644 = vmatmul.mubr.f32.gmra.mrb[0].mxu0 %v1643
    %v1645 = vpop.f32.mrb[0].mxu0
    %v1646 = vadd.f32 %v1364, %v1645
    %v1647 = vpop.f32.mrb[0].mxu0
    %1648 = vmatprep.mubr.f32.mxu0 0.0
    %v1649 = vand.u32 %v747, 4294901760
    %v1650 = vsub.f32 %v747, %v1649
    %1651 = vmatmul.mubr.f32.gmra.mrb[0].mxu0 %v1650
    %v1652 = vpop.f32.mrb[0].mxu0
    %v1653 = vadd.f32 %v1370, %v1652
    %v1654 = vpop.f32.mrb[0].mxu0
    %1655 = vmatprep.mubr.f32.mxu0 0.0
    %v1656 = vand.u32 %v750, 4294901760
    %v1657 = vsub.f32 %v750, %v1656
    %1658 = vmatmul.mubr.f32.gmra.mrb[0].mxu0 %v1657
    %v1659 = vpop.f32.mrb[0].mxu0
    %v1660 = vadd.f32 %v1376, %v1659
    %v1661 = vpop.f32.mrb[0].mxu0
    %1662 = vmatprep.mubr.f32.mxu0 0.0
    %v1663 = vand.u32 %v753, 4294901760
    %v1664 = vsub.f32 %v753, %v1663
    %1665 = vmatmul.mubr.f32.gmra.mrb[0].mxu0 %v1664
    %v1666 = vpop.f32.mrb[0].mxu0
    %v1667 = vadd.f32 %v1382, %v1666
    %v1668 = vpop.f32.mrb[0].mxu0
    %1669 = vmatprep.mubr.f32.mxu0 0.0
    %v1670 = vand.u32 %v756, 4294901760
    %v1671 = vsub.f32 %v756, %v1670
    %1672 = vmatmul.mubr.f32.gmra.mrb[0].mxu0 %v1671
    %v1673 = vpop.f32.mrb[0].mxu0
    %v1674 = vadd.f32 %v1388, %v1673
    %v1675 = vpop.f32.mrb[0].mxu0
    %1676 = vmatprep.mubr.f32.mxu0 0.0
    %v1677 = vand.u32 %v759, 4294901760
    %v1678 = vsub.f32 %v759, %v1677
    %1679 = vmatmul.mubr.f32.gmra.mrb[0].mxu0 %v1678
    %v1680 = vpop.f32.mrb[0].mxu0
    %v1681 = vadd.f32 %v1394, %v1680
    %v1682 = vpop.f32.mrb[0].mxu0
    %1683 = vmatprep.mubr.f32.mxu0 0.0
    %v1684 = vand.u32 %v762, 4294901760
    %v1685 = vsub.f32 %v762, %v1684
    %1686 = vmatmul.mubr.f32.gmra.mrb[0].mxu0 %v1685
    %v1687 = vpop.f32.mrb[0].mxu0
    %v1688 = vadd.f32 %v1400, %v1687
    %v1689 = vpop.f32.mrb[0].mxu0
    %1690 = vmatprep.mubr.f32.mxu0 0.0
    %v1691 = vand.u32 %v765, 4294901760
    %v1692 = vsub.f32 %v765, %v1691
    %1693 = vmatmul.mubr.f32.gmra.mrb[0].mxu0 %v1692
    %v1694 = vpop.f32.mrb[0].mxu0
    %v1695 = vadd.f32 %v1406, %v1694
    %v1696 = vpop.f32.mrb[0].mxu0
    %1697 = vmatprep.mubr.f32.mxu0 0.0
    %v1698 = vand.u32 %v768, 4294901760
    %v1699 = vsub.f32 %v768, %v1698
    %1700 = vmatmul.mubr.f32.gmra.mrb[0].mxu0 %v1699
    %v1701 = vpop.f32.mrb[0].mxu0
    %v1702 = vadd.f32 %v1412, %v1701
    %v1703 = vpop.f32.mrb[0].mxu0
    %1704 = vmatprep.mubr.f32.mxu0 0.0
    %v1705 = vand.u32 %v771, 4294901760
    %v1706 = vsub.f32 %v771, %v1705
    %1707 = vmatmul.mubr.f32.gmra.mrb[0].mxu0 %v1706
    %v1708 = vpop.f32.mrb[0].mxu0
    %v1709 = vadd.f32 %v1418, %v1708
    %v1710 = vpop.f32.mrb[0].mxu0
    %1711 = vdwg.mxu0
    %1712 = vmatprep.subr.mxu0 0.0
    %v1713 = vand.u32 %v46, 4294901760
    %1714 = vmatpush1.msra.mxu0 %v1713
    %1715 = vmatprep.subr.mxu0 0.0
    %1716 = vmatpush1.msra.mxu0 0.0
    %1717 = vmatprep.subr.mxu0 0.0
    %1718 = vmatpush1.msra.mxu0 0.0
    %1719 = vmatprep.subr.mxu0 0.0
    %1720 = vmatpush1.msra.mxu0 0.0
    %1721 = vmatprep.subr.mxu0 0.0
    %1722 = vmatpush1.msra.mxu0 0.0
    %1723 = vmatprep.subr.mxu0 0.0
    %1724 = vmatpush1.msra.mxu0 0.0
    %1725 = vmatprep.subr.mxu0 0.0
    %1726 = vmatpush1.msra.mxu0 0.0
    %1727 = vmatprep.subr.mxu0 0.0
    %1728 = vmatpush1.msra.mxu0 0.0
    %1729 = vmatprep.subr.mxu0 0.0
    %1730 = vmatpush1.msra.mxu0 0.0
    %1731 = vmatprep.subr.mxu0 0.0
    %1732 = vmatpush1.msra.mxu0 0.0
    %1733 = vmatprep.subr.mxu0 0.0
    %1734 = vmatpush1.msra.mxu0 0.0
    %1735 = vmatprep.subr.mxu0 0.0
    %1736 = vmatpush1.msra.mxu0 0.0
    %1737 = vmatprep.subr.mxu0 0.0
    %1738 = vmatpush1.msra.mxu0 0.0
    %1739 = vmatprep.subr.mxu0 0.0
    %1740 = vmatpush1.msra.mxu0 0.0
    %1741 = vmatprep.subr.mxu0 0.0
    %1742 = vmatpush1.msra.mxu0 0.0
    %1743 = vmatprep.subr.mxu0 0.0
    %1744 = vmatpush1.msra.mxu0 0.0
    %1745 = vmatprep.subr.mxu0 0.0
    %1746 = vmatpush1.msra.mxu0 0.0
    %1747 = vmatprep.subr.mxu0 0.0
    %1748 = vmatpush1.msra.mxu0 0.0
    %1749 = vmatprep.subr.mxu0 0.0
    %1750 = vmatpush1.msra.mxu0 0.0
    %1751 = vmatprep.subr.mxu0 0.0
    %1752 = vmatpush1.msra.mxu0 0.0
    %1753 = vmatprep.subr.mxu0 0.0
    %1754 = vmatpush1.msra.mxu0 0.0
    %1755 = vmatprep.subr.mxu0 0.0
    %1756 = vmatpush1.msra.mxu0 0.0
    %1757 = vmatprep.subr.mxu0 0.0
    %1758 = vmatpush1.msra.mxu0 0.0
    %1759 = vmatprep.subr.mxu0 0.0
    %1760 = vmatpush1.msra.mxu0 0.0
    %1761 = vmatprep.subr.mxu0 0.0
    %1762 = vmatpush1.msra.mxu0 0.0
    %1763 = vmatprep.subr.mxu0 0.0
    %1764 = vmatpush1.msra.mxu0 0.0
    %1765 = vmatprep.subr.mxu0 0.0
    %1766 = vmatpush1.msra.mxu0 0.0
    %1767 = vmatprep.subr.mxu0 0.0
    %1768 = vmatpush1.msra.mxu0 0.0
    %1769 = vmatprep.subr.mxu0 0.0
    %1770 = vmatpush1.msra.mxu0 0.0
    %1771 = vmatprep.subr.mxu0 0.0
    %1772 = vmatpush1.msra.mxu0 0.0
    %1773 = vmatprep.subr.mxu0 0.0
    %1774 = vmatpush1.msra.mxu0 0.0
    %1775 = vmatprep.subr.mxu0 0.0
    %1776 = vmatpush1.msra.mxu0 0.0
    %1777 = vmatprep.mubr.f32.mxu0 0.0
    %v1778 = vand.u32 %v678, 4294901760
    %v1779 = vsub.f32 %v678, %v1778
    %v1780 = vand.u32 %v1779, 4294901760
    %1781 = vmatmul.mubr.f32.gmra.mrb[0].mxu0 %v1780
    %v1782 = vpop.f32.mrb[0].mxu0
    %v1783 = vadd.f32 %v1492, %v1782
    %v1784 = vpop.f32.mrb[0].mxu0
    %1785 = vmatprep.mubr.f32.mxu0 0.0
    %v1786 = vand.u32 %v681, 4294901760
    %v1787 = vsub.f32 %v681, %v1786
    %v1788 = vand.u32 %v1787, 4294901760
    %1789 = vmatmul.mubr.f32.gmra.mrb[0].mxu0 %v1788
    %v1790 = vpop.f32.mrb[0].mxu0
    %v1791 = vadd.f32 %v1499, %v1790
    %v1792 = vpop.f32.mrb[0].mxu0
    %1793 = vmatprep.mubr.f32.mxu0 0.0
    %v1794 = vand.u32 %v684, 4294901760
    %v1795 = vsub.f32 %v684, %v1794
    %v1796 = vand.u32 %v1795, 4294901760
    %1797 = vmatmul.mubr.f32.gmra.mrb[0].mxu0 %v1796
    %v1798 = vpop.f32.mrb[0].mxu0
    %v1799 = vadd.f32 %v1506, %v1798
    %v1800 = vpop.f32.mrb[0].mxu0
    %1801 = vmatprep.mubr.f32.mxu0 0.0
    %v1802 = vand.u32 %v687, 4294901760
    %v1803 = vsub.f32 %v687, %v1802
    %v1804 = vand.u32 %v1803, 4294901760
    %1805 = vmatmul.mubr.f32.gmra.mrb[0].mxu0 %v1804
    %v1806 = vpop.f32.mrb[0].mxu0
    %v1807 = vadd.f32 %v1513, %v1806
    %v1808 = vpop.f32.mrb[0].mxu0
    %1809 = vmatprep.mubr.f32.mxu0 0.0
    %v1810 = vand.u32 %v690, 4294901760
    %v1811 = vsub.f32 %v690, %v1810
    %v1812 = vand.u32 %v1811, 4294901760
    %1813 = vmatmul.mubr.f32.gmra.mrb[0].mxu0 %v1812
    %v1814 = vpop.f32.mrb[0].mxu0
    %v1815 = vadd.f32 %v1520, %v1814
    %v1816 = vpop.f32.mrb[0].mxu0
    %1817 = vmatprep.mubr.f32.mxu0 0.0
    %v1818 = vand.u32 %v693, 4294901760
    %v1819 = vsub.f32 %v693, %v1818
    %v1820 = vand.u32 %v1819, 4294901760
    %1821 = vmatmul.mubr.f32.gmra.mrb[0].mxu0 %v1820
    %v1822 = vpop.f32.mrb[0].mxu0
    %v1823 = vadd.f32 %v1527, %v1822
    %v1824 = vpop.f32.mrb[0].mxu0
    %1825 = vmatprep.mubr.f32.mxu0 0.0
    %v1826 = vand.u32 %v696, 4294901760
    %v1827 = vsub.f32 %v696, %v1826
    %v1828 = vand.u32 %v1827, 4294901760
    %1829 = vmatmul.mubr.f32.gmra.mrb[0].mxu0 %v1828
    %v1830 = vpop.f32.mrb[0].mxu0
    %v1831 = vadd.f32 %v1534, %v1830
    %v1832 = vpop.f32.mrb[0].mxu0
    %1833 = vmatprep.mubr.f32.mxu0 0.0
    %v1834 = vand.u32 %v699, 4294901760
    %v1835 = vsub.f32 %v699, %v1834
    %v1836 = vand.u32 %v1835, 4294901760
    %1837 = vmatmul.mubr.f32.gmra.mrb[0].mxu0 %v1836
    %v1838 = vpop.f32.mrb[0].mxu0
    %v1839 = vadd.f32 %v1541, %v1838
    %v1840 = vpop.f32.mrb[0].mxu0
    %1841 = vmatprep.mubr.f32.mxu0 0.0
    %v1842 = vand.u32 %v702, 4294901760
    %v1843 = vsub.f32 %v702, %v1842
    %v1844 = vand.u32 %v1843, 4294901760
    %1845 = vmatmul.mubr.f32.gmra.mrb[0].mxu0 %v1844
    %v1846 = vpop.f32.mrb[0].mxu0
    %v1847 = vadd.f32 %v1548, %v1846
    %v1848 = vpop.f32.mrb[0].mxu0
    %1849 = vmatprep.mubr.f32.mxu0 0.0
    %v1850 = vand.u32 %v705, 4294901760
    %v1851 = vsub.f32 %v705, %v1850
    %v1852 = vand.u32 %v1851, 4294901760
    %1853 = vmatmul.mubr.f32.gmra.mrb[0].mxu0 %v1852
    %v1854 = vpop.f32.mrb[0].mxu0
    %v1855 = vadd.f32 %v1555, %v1854
    %v1856 = vpop.f32.mrb[0].mxu0
    %1857 = vmatprep.mubr.f32.mxu0 0.0
    %v1858 = vand.u32 %v708, 4294901760
    %v1859 = vsub.f32 %v708, %v1858
    %v1860 = vand.u32 %v1859, 4294901760
    %1861 = vmatmul.mubr.f32.gmra.mrb[0].mxu0 %v1860
    %v1862 = vpop.f32.mrb[0].mxu0
    %v1863 = vadd.f32 %v1562, %v1862
    %v1864 = vpop.f32.mrb[0].mxu0
    %1865 = vmatprep.mubr.f32.mxu0 0.0
    %v1866 = vand.u32 %v711, 4294901760
    %v1867 = vsub.f32 %v711, %v1866
    %v1868 = vand.u32 %v1867, 4294901760
    %1869 = vmatmul.mubr.f32.gmra.mrb[0].mxu0 %v1868
    %v1870 = vpop.f32.mrb[0].mxu0
    %v1871 = vadd.f32 %v1569, %v1870
    %v1872 = vpop.f32.mrb[0].mxu0
    %1873 = vmatprep.mubr.f32.mxu0 0.0
    %v1874 = vand.u32 %v714, 4294901760
    %v1875 = vsub.f32 %v714, %v1874
    %v1876 = vand.u32 %v1875, 4294901760
    %1877 = vmatmul.mubr.f32.gmra.mrb[0].mxu0 %v1876
    %v1878 = vpop.f32.mrb[0].mxu0
    %v1879 = vadd.f32 %v1576, %v1878
    %v1880 = vpop.f32.mrb[0].mxu0
    %1881 = vmatprep.mubr.f32.mxu0 0.0
    %v1882 = vand.u32 %v717, 4294901760
    %v1883 = vsub.f32 %v717, %v1882
    %v1884 = vand.u32 %v1883, 4294901760
    %1885 = vmatmul.mubr.f32.gmra.mrb[0].mxu0 %v1884
    %v1886 = vpop.f32.mrb[0].mxu0
    %v1887 = vadd.f32 %v1583, %v1886
    %v1888 = vpop.f32.mrb[0].mxu0
    %1889 = vmatprep.mubr.f32.mxu0 0.0
    %v1890 = vand.u32 %v720, 4294901760
    %v1891 = vsub.f32 %v720, %v1890
    %v1892 = vand.u32 %v1891, 4294901760
    %1893 = vmatmul.mubr.f32.gmra.mrb[0].mxu0 %v1892
    %v1894 = vpop.f32.mrb[0].mxu0
    %v1895 = vadd.f32 %v1590, %v1894
    %v1896 = vpop.f32.mrb[0].mxu0
    %1897 = vmatprep.mubr.f32.mxu0 0.0
    %v1898 = vand.u32 %v723, 4294901760
    %v1899 = vsub.f32 %v723, %v1898
    %v1900 = vand.u32 %v1899, 4294901760
    %1901 = vmatmul.mubr.f32.gmra.mrb[0].mxu0 %v1900
    %v1902 = vpop.f32.mrb[0].mxu0
    %v1903 = vadd.f32 %v1597, %v1902
    %v1904 = vpop.f32.mrb[0].mxu0
    %1905 = vmatprep.mubr.f32.mxu0 0.0
    %v1906 = vand.u32 %v726, 4294901760
    %v1907 = vsub.f32 %v726, %v1906
    %v1908 = vand.u32 %v1907, 4294901760
    %1909 = vmatmul.mubr.f32.gmra.mrb[0].mxu0 %v1908
    %v1910 = vpop.f32.mrb[0].mxu0
    %v1911 = vadd.f32 %v1604, %v1910
    %v1912 = vpop.f32.mrb[0].mxu0
    %1913 = vmatprep.mubr.f32.mxu0 0.0
    %v1914 = vand.u32 %v729, 4294901760
    %v1915 = vsub.f32 %v729, %v1914
    %v1916 = vand.u32 %v1915, 4294901760
    %1917 = vmatmul.mubr.f32.gmra.mrb[0].mxu0 %v1916
    %v1918 = vpop.f32.mrb[0].mxu0
    %v1919 = vadd.f32 %v1611, %v1918
    %v1920 = vpop.f32.mrb[0].mxu0
    %1921 = vmatprep.mubr.f32.mxu0 0.0
    %v1922 = vand.u32 %v732, 4294901760
    %v1923 = vsub.f32 %v732, %v1922
    %v1924 = vand.u32 %v1923, 4294901760
    %1925 = vmatmul.mubr.f32.gmra.mrb[0].mxu0 %v1924
    %v1926 = vpop.f32.mrb[0].mxu0
    %v1927 = vadd.f32 %v1618, %v1926
    %v1928 = vpop.f32.mrb[0].mxu0
    %1929 = vmatprep.mubr.f32.mxu0 0.0
    %v1930 = vand.u32 %v735, 4294901760
    %v1931 = vsub.f32 %v735, %v1930
    %v1932 = vand.u32 %v1931, 4294901760
    %1933 = vmatmul.mubr.f32.gmra.mrb[0].mxu0 %v1932
    %v1934 = vpop.f32.mrb[0].mxu0
    %v1935 = vadd.f32 %v1625, %v1934
    %v1936 = vpop.f32.mrb[0].mxu0
    %1937 = vmatprep.mubr.f32.mxu0 0.0
    %v1938 = vand.u32 %v738, 4294901760
    %v1939 = vsub.f32 %v738, %v1938
    %v1940 = vand.u32 %v1939, 4294901760
    %1941 = vmatmul.mubr.f32.gmra.mrb[0].mxu0 %v1940
    %v1942 = vpop.f32.mrb[0].mxu0
    %v1943 = vadd.f32 %v1632, %v1942
    %v1944 = vpop.f32.mrb[0].mxu0
    %1945 = vmatprep.mubr.f32.mxu0 0.0
    %v1946 = vand.u32 %v741, 4294901760
    %v1947 = vsub.f32 %v741, %v1946
    %v1948 = vand.u32 %v1947, 4294901760
    %1949 = vmatmul.mubr.f32.gmra.mrb[0].mxu0 %v1948
    %v1950 = vpop.f32.mrb[0].mxu0
    %v1951 = vadd.f32 %v1639, %v1950
    %v1952 = vpop.f32.mrb[0].mxu0
    %1953 = vmatprep.mubr.f32.mxu0 0.0
    %v1954 = vand.u32 %v744, 4294901760
    %v1955 = vsub.f32 %v744, %v1954
    %v1956 = vand.u32 %v1955, 4294901760
    %1957 = vmatmul.mubr.f32.gmra.mrb[0].mxu0 %v1956
    %v1958 = vpop.f32.mrb[0].mxu0
    %v1959 = vadd.f32 %v1646, %v1958
    %v1960 = vpop.f32.mrb[0].mxu0
    %1961 = vmatprep.mubr.f32.mxu0 0.0
    %v1962 = vand.u32 %v747, 4294901760
    %v1963 = vsub.f32 %v747, %v1962
    %v1964 = vand.u32 %v1963, 4294901760
    %1965 = vmatmul.mubr.f32.gmra.mrb[0].mxu0 %v1964
    %v1966 = vpop.f32.mrb[0].mxu0
    %v1967 = vadd.f32 %v1653, %v1966
    %v1968 = vpop.f32.mrb[0].mxu0
    %1969 = vmatprep.mubr.f32.mxu0 0.0
    %v1970 = vand.u32 %v750, 4294901760
    %v1971 = vsub.f32 %v750, %v1970
    %v1972 = vand.u32 %v1971, 4294901760
    %1973 = vmatmul.mubr.f32.gmra.mrb[0].mxu0 %v1972
    %v1974 = vpop.f32.mrb[0].mxu0
    %v1975 = vadd.f32 %v1660, %v1974
    %v1976 = vpop.f32.mrb[0].mxu0
    %1977 = vmatprep.mubr.f32.mxu0 0.0
    %v1978 = vand.u32 %v753, 4294901760
    %v1979 = vsub.f32 %v753, %v1978
    %v1980 = vand.u32 %v1979, 4294901760
    %1981 = vmatmul.mubr.f32.gmra.mrb[0].mxu0 %v1980
    %v1982 = vpop.f32.mrb[0].mxu0
    %v1983 = vadd.f32 %v1667, %v1982
    %v1984 = vpop.f32.mrb[0].mxu0
    %1985 = vmatprep.mubr.f32.mxu0 0.0
    %v1986 = vand.u32 %v756, 4294901760
    %v1987 = vsub.f32 %v756, %v1986
    %v1988 = vand.u32 %v1987, 4294901760
    %1989 = vmatmul.mubr.f32.gmra.mrb[0].mxu0 %v1988
    %v1990 = vpop.f32.mrb[0].mxu0
    %v1991 = vadd.f32 %v1674, %v1990
    %v1992 = vpop.f32.mrb[0].mxu0
    %1993 = vmatprep.mubr.f32.mxu0 0.0
    %v1994 = vand.u32 %v759, 4294901760
    %v1995 = vsub.f32 %v759, %v1994
    %v1996 = vand.u32 %v1995, 4294901760
    %1997 = vmatmul.mubr.f32.gmra.mrb[0].mxu0 %v1996
    %v1998 = vpop.f32.mrb[0].mxu0
    %v1999 = vadd.f32 %v1681, %v1998
    %v2000 = vpop.f32.mrb[0].mxu0
    %2001 = vmatprep.mubr.f32.mxu0 0.0
    %v2002 = vand.u32 %v762, 4294901760
    %v2003 = vsub.f32 %v762, %v2002
    %v2004 = vand.u32 %v2003, 4294901760
    %2005 = vmatmul.mubr.f32.gmra.mrb[0].mxu0 %v2004
    %v2006 = vpop.f32.mrb[0].mxu0
    %v2007 = vadd.f32 %v1688, %v2006
    %v2008 = vpop.f32.mrb[0].mxu0
    %2009 = vmatprep.mubr.f32.mxu0 0.0
    %v2010 = vand.u32 %v765, 4294901760
    %v2011 = vsub.f32 %v765, %v2010
    %v2012 = vand.u32 %v2011, 4294901760
    %2013 = vmatmul.mubr.f32.gmra.mrb[0].mxu0 %v2012
    %v2014 = vpop.f32.mrb[0].mxu0
    %v2015 = vadd.f32 %v1695, %v2014
    %v2016 = vpop.f32.mrb[0].mxu0
    %2017 = vmatprep.mubr.f32.mxu0 0.0
    %v2018 = vand.u32 %v768, 4294901760
    %v2019 = vsub.f32 %v768, %v2018
    %v2020 = vand.u32 %v2019, 4294901760
    %2021 = vmatmul.mubr.f32.gmra.mrb[0].mxu0 %v2020
    %v2022 = vpop.f32.mrb[0].mxu0
    %v2023 = vadd.f32 %v1702, %v2022
    %v2024 = vpop.f32.mrb[0].mxu0
    %2025 = vmatprep.mubr.f32.mxu0 0.0
    %v2026 = vand.u32 %v771, 4294901760
    %v2027 = vsub.f32 %v771, %v2026
    %v2028 = vand.u32 %v2027, 4294901760
    %2029 = vmatmul.mubr.f32.gmra.mrb[0].mxu0 %v2028
    %v2030 = vpop.f32.mrb[0].mxu0
    %v2031 = vadd.f32 %v1709, %v2030
    %v2032 = vpop.f32.mrb[0].mxu0
    %2033 = vdwg.mxu0
    %2034 = vmatprep.subr.mxu0 0.0
    %v2035 = vand.u32 %v46, 4294901760
    %v2036 = vsub.f32 %v46, %v2035
    %v2037 = vand.u32 %v2036, 4294901760
    %2038 = vmatpush1.msra.mxu0 %v2037
    %2039 = vmatprep.subr.mxu0 0.0
    %2040 = vmatpush1.msra.mxu0 0.0
    %2041 = vmatprep.subr.mxu0 0.0
    %2042 = vmatpush1.msra.mxu0 0.0
    %2043 = vmatprep.subr.mxu0 0.0
    %2044 = vmatpush1.msra.mxu0 0.0
    %2045 = vmatprep.subr.mxu0 0.0
    %2046 = vmatpush1.msra.mxu0 0.0
    %2047 = vmatprep.subr.mxu0 0.0
    %2048 = vmatpush1.msra.mxu0 0.0
    %2049 = vmatprep.subr.mxu0 0.0
    %2050 = vmatpush1.msra.mxu0 0.0
    %2051 = vmatprep.subr.mxu0 0.0
    %2052 = vmatpush1.msra.mxu0 0.0
    %2053 = vmatprep.subr.mxu0 0.0
    %2054 = vmatpush1.msra.mxu0 0.0
    %2055 = vmatprep.subr.mxu0 0.0
    %2056 = vmatpush1.msra.mxu0 0.0
    %2057 = vmatprep.subr.mxu0 0.0
    %2058 = vmatpush1.msra.mxu0 0.0
    %2059 = vmatprep.subr.mxu0 0.0
    %2060 = vmatpush1.msra.mxu0 0.0
    %2061 = vmatprep.subr.mxu0 0.0
    %2062 = vmatpush1.msra.mxu0 0.0
    %2063 = vmatprep.subr.mxu0 0.0
    %2064 = vmatpush1.msra.mxu0 0.0
    %2065 = vmatprep.subr.mxu0 0.0
    %2066 = vmatpush1.msra.mxu0 0.0
    %2067 = vmatprep.subr.mxu0 0.0
    %2068 = vmatpush1.msra.mxu0 0.0
    %2069 = vmatprep.subr.mxu0 0.0
    %2070 = vmatpush1.msra.mxu0 0.0
    %2071 = vmatprep.subr.mxu0 0.0
    %2072 = vmatpush1.msra.mxu0 0.0
    %2073 = vmatprep.subr.mxu0 0.0
    %2074 = vmatpush1.msra.mxu0 0.0
    %2075 = vmatprep.subr.mxu0 0.0
    %2076 = vmatpush1.msra.mxu0 0.0
    %2077 = vmatprep.subr.mxu0 0.0
    %2078 = vmatpush1.msra.mxu0 0.0
    %2079 = vmatprep.subr.mxu0 0.0
    %2080 = vmatpush1.msra.mxu0 0.0
    %2081 = vmatprep.subr.mxu0 0.0
    %2082 = vmatpush1.msra.mxu0 0.0
    %2083 = vmatprep.subr.mxu0 0.0
    %2084 = vmatpush1.msra.mxu0 0.0
    %2085 = vmatprep.subr.mxu0 0.0
    %2086 = vmatpush1.msra.mxu0 0.0
    %2087 = vmatprep.subr.mxu0 0.0
    %2088 = vmatpush1.msra.mxu0 0.0
    %2089 = vmatprep.subr.mxu0 0.0
    %2090 = vmatpush1.msra.mxu0 0.0
    %2091 = vmatprep.subr.mxu0 0.0
    %2092 = vmatpush1.msra.mxu0 0.0
    %2093 = vmatprep.subr.mxu0 0.0
    %2094 = vmatpush1.msra.mxu0 0.0
    %2095 = vmatprep.subr.mxu0 0.0
    %2096 = vmatpush1.msra.mxu0 0.0
    %2097 = vmatprep.subr.mxu0 0.0
    %2098 = vmatpush1.msra.mxu0 0.0
    %2099 = vmatprep.subr.mxu0 0.0
    %2100 = vmatpush1.msra.mxu0 0.0
    %2101 = vmatprep.mubr.f32.mxu0 0.0
    %v2102 = vand.u32 %v678, 4294901760
    %2103 = vmatmul.mubr.f32.gmra.mrb[0].mxu0 %v2102
    %v2104 = vpop.f32.mrb[0].mxu0
    %v2105 = vadd.f32 %v1783, %v2104
    %v2106 = vpop.f32.mrb[0].mxu0
    %2107 = vmatprep.mubr.f32.mxu0 0.0
    %v2108 = vand.u32 %v681, 4294901760
    %2109 = vmatmul.mubr.f32.gmra.mrb[0].mxu0 %v2108
    %v2110 = vpop.f32.mrb[0].mxu0
    %v2111 = vadd.f32 %v1791, %v2110
    %v2112 = vpop.f32.mrb[0].mxu0
    %2113 = vmatprep.mubr.f32.mxu0 0.0
    %v2114 = vand.u32 %v684, 4294901760
    %2115 = vmatmul.mubr.f32.gmra.mrb[0].mxu0 %v2114
    %v2116 = vpop.f32.mrb[0].mxu0
    %v2117 = vadd.f32 %v1799, %v2116
    %v2118 = vpop.f32.mrb[0].mxu0
    %2119 = vmatprep.mubr.f32.mxu0 0.0
    %v2120 = vand.u32 %v687, 4294901760
    %2121 = vmatmul.mubr.f32.gmra.mrb[0].mxu0 %v2120
    %v2122 = vpop.f32.mrb[0].mxu0
    %v2123 = vadd.f32 %v1807, %v2122
    %v2124 = vpop.f32.mrb[0].mxu0
    %2125 = vmatprep.mubr.f32.mxu0 0.0
    %v2126 = vand.u32 %v690, 4294901760
    %2127 = vmatmul.mubr.f32.gmra.mrb[0].mxu0 %v2126
    %v2128 = vpop.f32.mrb[0].mxu0
    %v2129 = vadd.f32 %v1815, %v2128
    %v2130 = vpop.f32.mrb[0].mxu0
    %2131 = vmatprep.mubr.f32.mxu0 0.0
    %v2132 = vand.u32 %v693, 4294901760
    %2133 = vmatmul.mubr.f32.gmra.mrb[0].mxu0 %v2132
    %v2134 = vpop.f32.mrb[0].mxu0
    %v2135 = vadd.f32 %v1823, %v2134
    %v2136 = vpop.f32.mrb[0].mxu0
    %2137 = vmatprep.mubr.f32.mxu0 0.0
    %v2138 = vand.u32 %v696, 4294901760
    %2139 = vmatmul.mubr.f32.gmra.mrb[0].mxu0 %v2138
    %v2140 = vpop.f32.mrb[0].mxu0
    %v2141 = vadd.f32 %v1831, %v2140
    %v2142 = vpop.f32.mrb[0].mxu0
    %2143 = vmatprep.mubr.f32.mxu0 0.0
    %v2144 = vand.u32 %v699, 4294901760
    %2145 = vmatmul.mubr.f32.gmra.mrb[0].mxu0 %v2144
    %v2146 = vpop.f32.mrb[0].mxu0
    %v2147 = vadd.f32 %v1839, %v2146
    %v2148 = vpop.f32.mrb[0].mxu0
    %2149 = vmatprep.mubr.f32.mxu0 0.0
    %v2150 = vand.u32 %v702, 4294901760
    %2151 = vmatmul.mubr.f32.gmra.mrb[0].mxu0 %v2150
    %v2152 = vpop.f32.mrb[0].mxu0
    %v2153 = vadd.f32 %v1847, %v2152
    %v2154 = vpop.f32.mrb[0].mxu0
    %2155 = vmatprep.mubr.f32.mxu0 0.0
    %v2156 = vand.u32 %v705, 4294901760
    %2157 = vmatmul.mubr.f32.gmra.mrb[0].mxu0 %v2156
    %v2158 = vpop.f32.mrb[0].mxu0
    %v2159 = vadd.f32 %v1855, %v2158
    %v2160 = vpop.f32.mrb[0].mxu0
    %2161 = vmatprep.mubr.f32.mxu0 0.0
    %v2162 = vand.u32 %v708, 4294901760
    %2163 = vmatmul.mubr.f32.gmra.mrb[0].mxu0 %v2162
    %v2164 = vpop.f32.mrb[0].mxu0
    %v2165 = vadd.f32 %v1863, %v2164
    %v2166 = vpop.f32.mrb[0].mxu0
    %2167 = vmatprep.mubr.f32.mxu0 0.0
    %v2168 = vand.u32 %v711, 4294901760
    %2169 = vmatmul.mubr.f32.gmra.mrb[0].mxu0 %v2168
    %v2170 = vpop.f32.mrb[0].mxu0
    %v2171 = vadd.f32 %v1871, %v2170
    %v2172 = vpop.f32.mrb[0].mxu0
    %2173 = vmatprep.mubr.f32.mxu0 0.0
    %v2174 = vand.u32 %v714, 4294901760
    %2175 = vmatmul.mubr.f32.gmra.mrb[0].mxu0 %v2174
    %v2176 = vpop.f32.mrb[0].mxu0
    %v2177 = vadd.f32 %v1879, %v2176
    %v2178 = vpop.f32.mrb[0].mxu0
    %2179 = vmatprep.mubr.f32.mxu0 0.0
    %v2180 = vand.u32 %v717, 4294901760
    %2181 = vmatmul.mubr.f32.gmra.mrb[0].mxu0 %v2180
    %v2182 = vpop.f32.mrb[0].mxu0
    %v2183 = vadd.f32 %v1887, %v2182
    %v2184 = vpop.f32.mrb[0].mxu0
    %2185 = vmatprep.mubr.f32.mxu0 0.0
    %v2186 = vand.u32 %v720, 4294901760
    %2187 = vmatmul.mubr.f32.gmra.mrb[0].mxu0 %v2186
    %v2188 = vpop.f32.mrb[0].mxu0
    %v2189 = vadd.f32 %v1895, %v2188
    %v2190 = vpop.f32.mrb[0].mxu0
    %2191 = vmatprep.mubr.f32.mxu0 0.0
    %v2192 = vand.u32 %v723, 4294901760
    %2193 = vmatmul.mubr.f32.gmra.mrb[0].mxu0 %v2192
    %v2194 = vpop.f32.mrb[0].mxu0
    %v2195 = vadd.f32 %v1903, %v2194
    %v2196 = vpop.f32.mrb[0].mxu0
    %2197 = vmatprep.mubr.f32.mxu0 0.0
    %v2198 = vand.u32 %v726, 4294901760
    %2199 = vmatmul.mubr.f32.gmra.mrb[0].mxu0 %v2198
    %v2200 = vpop.f32.mrb[0].mxu0
    %v2201 = vadd.f32 %v1911, %v2200
    %v2202 = vpop.f32.mrb[0].mxu0
    %2203 = vmatprep.mubr.f32.mxu0 0.0
    %v2204 = vand.u32 %v729, 4294901760
    %2205 = vmatmul.mubr.f32.gmra.mrb[0].mxu0 %v2204
    %v2206 = vpop.f32.mrb[0].mxu0
    %v2207 = vadd.f32 %v1919, %v2206
    %v2208 = vpop.f32.mrb[0].mxu0
    %2209 = vmatprep.mubr.f32.mxu0 0.0
    %v2210 = vand.u32 %v732, 4294901760
    %2211 = vmatmul.mubr.f32.gmra.mrb[0].mxu0 %v2210
    %v2212 = vpop.f32.mrb[0].mxu0
    %v2213 = vadd.f32 %v1927, %v2212
    %v2214 = vpop.f32.mrb[0].mxu0
    %2215 = vmatprep.mubr.f32.mxu0 0.0
    %v2216 = vand.u32 %v735, 4294901760
    %2217 = vmatmul.mubr.f32.gmra.mrb[0].mxu0 %v2216
    %v2218 = vpop.f32.mrb[0].mxu0
    %v2219 = vadd.f32 %v1935, %v2218
    %v2220 = vpop.f32.mrb[0].mxu0
    %2221 = vmatprep.mubr.f32.mxu0 0.0
    %v2222 = vand.u32 %v738, 4294901760
    %2223 = vmatmul.mubr.f32.gmra.mrb[0].mxu0 %v2222
    %v2224 = vpop.f32.mrb[0].mxu0
    %v2225 = vadd.f32 %v1943, %v2224
    %v2226 = vpop.f32.mrb[0].mxu0
    %2227 = vmatprep.mubr.f32.mxu0 0.0
    %v2228 = vand.u32 %v741, 4294901760
    %2229 = vmatmul.mubr.f32.gmra.mrb[0].mxu0 %v2228
    %v2230 = vpop.f32.mrb[0].mxu0
    %v2231 = vadd.f32 %v1951, %v2230
    %v2232 = vpop.f32.mrb[0].mxu0
    %2233 = vmatprep.mubr.f32.mxu0 0.0
    %v2234 = vand.u32 %v744, 4294901760
    %2235 = vmatmul.mubr.f32.gmra.mrb[0].mxu0 %v2234
    %v2236 = vpop.f32.mrb[0].mxu0
    %v2237 = vadd.f32 %v1959, %v2236
    %v2238 = vpop.f32.mrb[0].mxu0
    %2239 = vmatprep.mubr.f32.mxu0 0.0
    %v2240 = vand.u32 %v747, 4294901760
    %2241 = vmatmul.mubr.f32.gmra.mrb[0].mxu0 %v2240
    %v2242 = vpop.f32.mrb[0].mxu0
    %v2243 = vadd.f32 %v1967, %v2242
    %v2244 = vpop.f32.mrb[0].mxu0
    %2245 = vmatprep.mubr.f32.mxu0 0.0
    %v2246 = vand.u32 %v750, 4294901760
    %2247 = vmatmul.mubr.f32.gmra.mrb[0].mxu0 %v2246
    %v2248 = vpop.f32.mrb[0].mxu0
    %v2249 = vadd.f32 %v1975, %v2248
    %v2250 = vpop.f32.mrb[0].mxu0
    %2251 = vmatprep.mubr.f32.mxu0 0.0
    %v2252 = vand.u32 %v753, 4294901760
    %2253 = vmatmul.mubr.f32.gmra.mrb[0].mxu0 %v2252
    %v2254 = vpop.f32.mrb[0].mxu0
    %v2255 = vadd.f32 %v1983, %v2254
    %v2256 = vpop.f32.mrb[0].mxu0
    %2257 = vmatprep.mubr.f32.mxu0 0.0
    %v2258 = vand.u32 %v756, 4294901760
    %2259 = vmatmul.mubr.f32.gmra.mrb[0].mxu0 %v2258
    %v2260 = vpop.f32.mrb[0].mxu0
    %v2261 = vadd.f32 %v1991, %v2260
    %v2262 = vpop.f32.mrb[0].mxu0
    %2263 = vmatprep.mubr.f32.mxu0 0.0
    %v2264 = vand.u32 %v759, 4294901760
    %2265 = vmatmul.mubr.f32.gmra.mrb[0].mxu0 %v2264
    %v2266 = vpop.f32.mrb[0].mxu0
    %v2267 = vadd.f32 %v1999, %v2266
    %v2268 = vpop.f32.mrb[0].mxu0
    %2269 = vmatprep.mubr.f32.mxu0 0.0
    %v2270 = vand.u32 %v762, 4294901760
    %2271 = vmatmul.mubr.f32.gmra.mrb[0].mxu0 %v2270
    %v2272 = vpop.f32.mrb[0].mxu0
    %v2273 = vadd.f32 %v2007, %v2272
    %v2274 = vpop.f32.mrb[0].mxu0
    %2275 = vmatprep.mubr.f32.mxu0 0.0
    %v2276 = vand.u32 %v765, 4294901760
    %2277 = vmatmul.mubr.f32.gmra.mrb[0].mxu0 %v2276
    %v2278 = vpop.f32.mrb[0].mxu0
    %v2279 = vadd.f32 %v2015, %v2278
    %v2280 = vpop.f32.mrb[0].mxu0
    %2281 = vmatprep.mubr.f32.mxu0 0.0
    %v2282 = vand.u32 %v768, 4294901760
    %2283 = vmatmul.mubr.f32.gmra.mrb[0].mxu0 %v2282
    %v2284 = vpop.f32.mrb[0].mxu0
    %v2285 = vadd.f32 %v2023, %v2284
    %v2286 = vpop.f32.mrb[0].mxu0
    %2287 = vmatprep.mubr.f32.mxu0 0.0
    %v2288 = vand.u32 %v771, 4294901760
    %2289 = vmatmul.mubr.f32.gmra.mrb[0].mxu0 %v2288
    %v2290 = vpop.f32.mrb[0].mxu0
    %v2291 = vadd.f32 %v2031, %v2290
    %v2292 = vpop.f32.mrb[0].mxu0
    %2293 = vdwg.mxu0
    %2294 = vmatprep.subr.mxu0 0.0
    %v2295 = vand.u32 %v46, 4294901760
    %2296 = vmatpush1.msra.mxu0 %v2295
    %2297 = vmatprep.subr.mxu0 0.0
    %2298 = vmatpush1.msra.mxu0 0.0
    %2299 = vmatprep.subr.mxu0 0.0
    %2300 = vmatpush1.msra.mxu0 0.0
    %2301 = vmatprep.subr.mxu0 0.0
    %2302 = vmatpush1.msra.mxu0 0.0
    %2303 = vmatprep.subr.mxu0 0.0
    %2304 = vmatpush1.msra.mxu0 0.0
    %2305 = vmatprep.subr.mxu0 0.0
    %2306 = vmatpush1.msra.mxu0 0.0
    %2307 = vmatprep.subr.mxu0 0.0
    %2308 = vmatpush1.msra.mxu0 0.0
    %2309 = vmatprep.subr.mxu0 0.0
    %2310 = vmatpush1.msra.mxu0 0.0
    %2311 = vmatprep.subr.mxu0 0.0
    %2312 = vmatpush1.msra.mxu0 0.0
    %2313 = vmatprep.subr.mxu0 0.0
    %2314 = vmatpush1.msra.mxu0 0.0
    %2315 = vmatprep.subr.mxu0 0.0
    %2316 = vmatpush1.msra.mxu0 0.0
    %2317 = vmatprep.subr.mxu0 0.0
    %2318 = vmatpush1.msra.mxu0 0.0
    %2319 = vmatprep.subr.mxu0 0.0
    %2320 = vmatpush1.msra.mxu0 0.0
    %2321 = vmatprep.subr.mxu0 0.0
    %2322 = vmatpush1.msra.mxu0 0.0
    %2323 = vmatprep.subr.mxu0 0.0
    %2324 = vmatpush1.msra.mxu0 0.0
    %2325 = vmatprep.subr.mxu0 0.0
    %2326 = vmatpush1.msra.mxu0 0.0
    %2327 = vmatprep.subr.mxu0 0.0
    %2328 = vmatpush1.msra.mxu0 0.0
    %2329 = vmatprep.subr.mxu0 0.0
    %2330 = vmatpush1.msra.mxu0 0.0
    %2331 = vmatprep.subr.mxu0 0.0
    %2332 = vmatpush1.msra.mxu0 0.0
    %2333 = vmatprep.subr.mxu0 0.0
    %2334 = vmatpush1.msra.mxu0 0.0
    %2335 = vmatprep.subr.mxu0 0.0
    %2336 = vmatpush1.msra.mxu0 0.0
    %2337 = vmatprep.subr.mxu0 0.0
    %2338 = vmatpush1.msra.mxu0 0.0
    %2339 = vmatprep.subr.mxu0 0.0
    %2340 = vmatpush1.msra.mxu0 0.0
    %2341 = vmatprep.subr.mxu0 0.0
    %2342 = vmatpush1.msra.mxu0 0.0
    %2343 = vmatprep.subr.mxu0 0.0
    %2344 = vmatpush1.msra.mxu0 0.0
    %2345 = vmatprep.subr.mxu0 0.0
    %2346 = vmatpush1.msra.mxu0 0.0
    %2347 = vmatprep.subr.mxu0 0.0
    %2348 = vmatpush1.msra.mxu0 0.0
    %2349 = vmatprep.subr.mxu0 0.0
    %2350 = vmatpush1.msra.mxu0 0.0
    %2351 = vmatprep.subr.mxu0 0.0
    %2352 = vmatpush1.msra.mxu0 0.0
    %2353 = vmatprep.subr.mxu0 0.0
    %2354 = vmatpush1.msra.mxu0 0.0
    %2355 = vmatprep.subr.mxu0 0.0
    %2356 = vmatpush1.msra.mxu0 0.0
    %2357 = vmatprep.subr.mxu0 0.0
    %2358 = vmatpush1.msra.mxu0 0.0
    %2359 = vmatprep.mubr.f32.mxu0 0.0
    %v2360 = vand.u32 %v678, 4294901760
    %2361 = vmatmul.mubr.f32.gmra.mrb[0].mxu0 %v2360
    %v2362 = vpop.f32.mrb[0].mxu0
    %v2363 = vadd.f32 %v2105, %v2362
    %v2364 = vpop.f32.mrb[0].mxu0
    %2365 = vmatprep.mubr.f32.mxu0 0.0
    %v2366 = vand.u32 %v681, 4294901760
    %2367 = vmatmul.mubr.f32.gmra.mrb[0].mxu0 %v2366
    %v2368 = vpop.f32.mrb[0].mxu0
    %v2369 = vadd.f32 %v2111, %v2368
    %v2370 = vpop.f32.mrb[0].mxu0
    %2371 = vmatprep.mubr.f32.mxu0 0.0
    %v2372 = vand.u32 %v684, 4294901760
    %2373 = vmatmul.mubr.f32.gmra.mrb[0].mxu0 %v2372
    %v2374 = vpop.f32.mrb[0].mxu0
    %v2375 = vadd.f32 %v2117, %v2374
    %v2376 = vpop.f32.mrb[0].mxu0
    %2377 = vmatprep.mubr.f32.mxu0 0.0
    %v2378 = vand.u32 %v687, 4294901760
    %2379 = vmatmul.mubr.f32.gmra.mrb[0].mxu0 %v2378
    %v2380 = vpop.f32.mrb[0].mxu0
    %v2381 = vadd.f32 %v2123, %v2380
    %v2382 = vpop.f32.mrb[0].mxu0
    %2383 = vmatprep.mubr.f32.mxu0 0.0
    %v2384 = vand.u32 %v690, 4294901760
    %2385 = vmatmul.mubr.f32.gmra.mrb[0].mxu0 %v2384
    %v2386 = vpop.f32.mrb[0].mxu0
    %v2387 = vadd.f32 %v2129, %v2386
    %v2388 = vpop.f32.mrb[0].mxu0
    %2389 = vmatprep.mubr.f32.mxu0 0.0
    %v2390 = vand.u32 %v693, 4294901760
    %2391 = vmatmul.mubr.f32.gmra.mrb[0].mxu0 %v2390
    %v2392 = vpop.f32.mrb[0].mxu0
    %v2393 = vadd.f32 %v2135, %v2392
    %v2394 = vpop.f32.mrb[0].mxu0
    %2395 = vmatprep.mubr.f32.mxu0 0.0
    %v2396 = vand.u32 %v696, 4294901760
    %2397 = vmatmul.mubr.f32.gmra.mrb[0].mxu0 %v2396
    %v2398 = vpop.f32.mrb[0].mxu0
    %v2399 = vadd.f32 %v2141, %v2398
    %v2400 = vpop.f32.mrb[0].mxu0
    %2401 = vmatprep.mubr.f32.mxu0 0.0
    %v2402 = vand.u32 %v699, 4294901760
    %2403 = vmatmul.mubr.f32.gmra.mrb[0].mxu0 %v2402
    %v2404 = vpop.f32.mrb[0].mxu0
    %v2405 = vadd.f32 %v2147, %v2404
    %v2406 = vpop.f32.mrb[0].mxu0
    %2407 = vmatprep.mubr.f32.mxu0 0.0
    %v2408 = vand.u32 %v702, 4294901760
    %2409 = vmatmul.mubr.f32.gmra.mrb[0].mxu0 %v2408
    %v2410 = vpop.f32.mrb[0].mxu0
    %v2411 = vadd.f32 %v2153, %v2410
    %v2412 = vpop.f32.mrb[0].mxu0
    %2413 = vmatprep.mubr.f32.mxu0 0.0
    %v2414 = vand.u32 %v705, 4294901760
    %2415 = vmatmul.mubr.f32.gmra.mrb[0].mxu0 %v2414
    %v2416 = vpop.f32.mrb[0].mxu0
    %v2417 = vadd.f32 %v2159, %v2416
    %v2418 = vpop.f32.mrb[0].mxu0
    %2419 = vmatprep.mubr.f32.mxu0 0.0
    %v2420 = vand.u32 %v708, 4294901760
    %2421 = vmatmul.mubr.f32.gmra.mrb[0].mxu0 %v2420
    %v2422 = vpop.f32.mrb[0].mxu0
    %v2423 = vadd.f32 %v2165, %v2422
    %v2424 = vpop.f32.mrb[0].mxu0
    %2425 = vmatprep.mubr.f32.mxu0 0.0
    %v2426 = vand.u32 %v711, 4294901760
    %2427 = vmatmul.mubr.f32.gmra.mrb[0].mxu0 %v2426
    %v2428 = vpop.f32.mrb[0].mxu0
    %v2429 = vadd.f32 %v2171, %v2428
    %v2430 = vpop.f32.mrb[0].mxu0
    %2431 = vmatprep.mubr.f32.mxu0 0.0
    %v2432 = vand.u32 %v714, 4294901760
    %2433 = vmatmul.mubr.f32.gmra.mrb[0].mxu0 %v2432
    %v2434 = vpop.f32.mrb[0].mxu0
    %v2435 = vadd.f32 %v2177, %v2434
    %v2436 = vpop.f32.mrb[0].mxu0
    %2437 = vmatprep.mubr.f32.mxu0 0.0
    %v2438 = vand.u32 %v717, 4294901760
    %2439 = vmatmul.mubr.f32.gmra.mrb[0].mxu0 %v2438
    %v2440 = vpop.f32.mrb[0].mxu0
    %v2441 = vadd.f32 %v2183, %v2440
    %v2442 = vpop.f32.mrb[0].mxu0
    %2443 = vmatprep.mubr.f32.mxu0 0.0
    %v2444 = vand.u32 %v720, 4294901760
    %2445 = vmatmul.mubr.f32.gmra.mrb[0].mxu0 %v2444
    %v2446 = vpop.f32.mrb[0].mxu0
    %v2447 = vadd.f32 %v2189, %v2446
    %v2448 = vpop.f32.mrb[0].mxu0
    %2449 = vmatprep.mubr.f32.mxu0 0.0
    %v2450 = vand.u32 %v723, 4294901760
    %2451 = vmatmul.mubr.f32.gmra.mrb[0].mxu0 %v2450
    %v2452 = vpop.f32.mrb[0].mxu0
    %v2453 = vadd.f32 %v2195, %v2452
    %v2454 = vpop.f32.mrb[0].mxu0
    %2455 = vmatprep.mubr.f32.mxu0 0.0
    %v2456 = vand.u32 %v726, 4294901760
    %2457 = vmatmul.mubr.f32.gmra.mrb[0].mxu0 %v2456
    %v2458 = vpop.f32.mrb[0].mxu0
    %v2459 = vadd.f32 %v2201, %v2458
    %v2460 = vpop.f32.mrb[0].mxu0
    %2461 = vmatprep.mubr.f32.mxu0 0.0
    %v2462 = vand.u32 %v729, 4294901760
    %2463 = vmatmul.mubr.f32.gmra.mrb[0].mxu0 %v2462
    %v2464 = vpop.f32.mrb[0].mxu0
    %v2465 = vadd.f32 %v2207, %v2464
    %v2466 = vpop.f32.mrb[0].mxu0
    %2467 = vmatprep.mubr.f32.mxu0 0.0
    %v2468 = vand.u32 %v732, 4294901760
    %2469 = vmatmul.mubr.f32.gmra.mrb[0].mxu0 %v2468
    %v2470 = vpop.f32.mrb[0].mxu0
    %v2471 = vadd.f32 %v2213, %v2470
    %v2472 = vpop.f32.mrb[0].mxu0
    %2473 = vmatprep.mubr.f32.mxu0 0.0
    %v2474 = vand.u32 %v735, 4294901760
    %2475 = vmatmul.mubr.f32.gmra.mrb[0].mxu0 %v2474
    %v2476 = vpop.f32.mrb[0].mxu0
    %v2477 = vadd.f32 %v2219, %v2476
    %v2478 = vpop.f32.mrb[0].mxu0
    %2479 = vmatprep.mubr.f32.mxu0 0.0
    %v2480 = vand.u32 %v738, 4294901760
    %2481 = vmatmul.mubr.f32.gmra.mrb[0].mxu0 %v2480
    %v2482 = vpop.f32.mrb[0].mxu0
    %v2483 = vadd.f32 %v2225, %v2482
    %v2484 = vpop.f32.mrb[0].mxu0
    %2485 = vmatprep.mubr.f32.mxu0 0.0
    %v2486 = vand.u32 %v741, 4294901760
    %2487 = vmatmul.mubr.f32.gmra.mrb[0].mxu0 %v2486
    %v2488 = vpop.f32.mrb[0].mxu0
    %v2489 = vadd.f32 %v2231, %v2488
    %v2490 = vpop.f32.mrb[0].mxu0
    %2491 = vmatprep.mubr.f32.mxu0 0.0
    %v2492 = vand.u32 %v744, 4294901760
    %2493 = vmatmul.mubr.f32.gmra.mrb[0].mxu0 %v2492
    %v2494 = vpop.f32.mrb[0].mxu0
    %v2495 = vadd.f32 %v2237, %v2494
    %v2496 = vpop.f32.mrb[0].mxu0
    %2497 = vmatprep.mubr.f32.mxu0 0.0
    %v2498 = vand.u32 %v747, 4294901760
    %2499 = vmatmul.mubr.f32.gmra.mrb[0].mxu0 %v2498
    %v2500 = vpop.f32.mrb[0].mxu0
    %v2501 = vadd.f32 %v2243, %v2500
    %v2502 = vpop.f32.mrb[0].mxu0
    %2503 = vmatprep.mubr.f32.mxu0 0.0
    %v2504 = vand.u32 %v750, 4294901760
    %2505 = vmatmul.mubr.f32.gmra.mrb[0].mxu0 %v2504
    %v2506 = vpop.f32.mrb[0].mxu0
    %v2507 = vadd.f32 %v2249, %v2506
    %v2508 = vpop.f32.mrb[0].mxu0
    %2509 = vmatprep.mubr.f32.mxu0 0.0
    %v2510 = vand.u32 %v753, 4294901760
    %2511 = vmatmul.mubr.f32.gmra.mrb[0].mxu0 %v2510
    %v2512 = vpop.f32.mrb[0].mxu0
    %v2513 = vadd.f32 %v2255, %v2512
    %v2514 = vpop.f32.mrb[0].mxu0
    %2515 = vmatprep.mubr.f32.mxu0 0.0
    %v2516 = vand.u32 %v756, 4294901760
    %2517 = vmatmul.mubr.f32.gmra.mrb[0].mxu0 %v2516
    %v2518 = vpop.f32.mrb[0].mxu0
    %v2519 = vadd.f32 %v2261, %v2518
    %v2520 = vpop.f32.mrb[0].mxu0
    %2521 = vmatprep.mubr.f32.mxu0 0.0
    %v2522 = vand.u32 %v759, 4294901760
    %2523 = vmatmul.mubr.f32.gmra.mrb[0].mxu0 %v2522
    %v2524 = vpop.f32.mrb[0].mxu0
    %v2525 = vadd.f32 %v2267, %v2524
    %v2526 = vpop.f32.mrb[0].mxu0
    %2527 = vmatprep.mubr.f32.mxu0 0.0
    %v2528 = vand.u32 %v762, 4294901760
    %2529 = vmatmul.mubr.f32.gmra.mrb[0].mxu0 %v2528
    %v2530 = vpop.f32.mrb[0].mxu0
    %v2531 = vadd.f32 %v2273, %v2530
    %v2532 = vpop.f32.mrb[0].mxu0
    %2533 = vmatprep.mubr.f32.mxu0 0.0
    %v2534 = vand.u32 %v765, 4294901760
    %2535 = vmatmul.mubr.f32.gmra.mrb[0].mxu0 %v2534
    %v2536 = vpop.f32.mrb[0].mxu0
    %v2537 = vadd.f32 %v2279, %v2536
    %v2538 = vpop.f32.mrb[0].mxu0
    %2539 = vmatprep.mubr.f32.mxu0 0.0
    %v2540 = vand.u32 %v768, 4294901760
    %2541 = vmatmul.mubr.f32.gmra.mrb[0].mxu0 %v2540
    %v2542 = vpop.f32.mrb[0].mxu0
    %v2543 = vadd.f32 %v2285, %v2542
    %v2544 = vpop.f32.mrb[0].mxu0
    %2545 = vmatprep.mubr.f32.mxu0 0.0
    %v2546 = vand.u32 %v771, 4294901760
    %2547 = vmatmul.mubr.f32.gmra.mrb[0].mxu0 %v2546
    %v2548 = vpop.f32.mrb[0].mxu0
    %v2549 = vadd.f32 %v2291, %v2548
    %v2550 = vpop.f32.mrb[0].mxu0
    %2551 = vdwg.mxu0
    %v2552 = vand.u32 2147483647, %v2363
    %vm2553 = vcmp.le.f32.partialorder %v2552, 0.7853982
    %vm2554 = vcmp.lt.s32.totalorder %v2363, 0
    %v2555 = vand.u32 %v2363, 2139095040
    %v2556 = vshrl.u32 %v2555, 23
    %v2557 = vsub.s32 %v2556, 127
    %v2558 = vand.u32 2147483647, %v2363
    %v2559 = vand.u32 %v2558, 8388607
    %v2560 = vor.u32 %v2559, 8388608
    %v2561 = vsub.s32 0, %v2560
    %v2562 = vadd.s32 %v2557, 1
    %vm2563 = vcmp.gt.s32.totalorder %v2562, 0
    %v2564 = vsel %vm2563, %v2562, 0
    %v2565 = vshrl.u32 %v2564, 5
    %v2566 = vand.u32 %v2564, 31
    %v2567 = vsub.s32 32, %v2566
    %v2568 = vshrl.u32 683565275, %v2567
    %v2569 = vshll.u32 683565275, %v2566
    %v2570 = vshrl.u32 2475754826, %v2567
    %v2571 = vor.u32 %v2569, %v2570
    %v2572 = vshll.u32 2475754826, %v2566
    %v2573 = vshrl.u32 2131351028, %v2567
    %v2574 = vor.u32 %v2572, %v2573
    %v2575 = vshll.u32 2131351028, %v2566
    %v2576 = vshrl.u32 2102212464, %v2567
    %v2577 = vor.u32 %v2575, %v2576
    %v2578 = vshll.u32 2102212464, %v2566
    %v2579 = vshrl.u32 920167782, %v2567
    %v2580 = vor.u32 %v2578, %v2579
    %v2581 = vshll.u32 920167782, %v2566
    %v2582 = vshrl.u32 1326507024, %v2567
    %v2583 = vor.u32 %v2581, %v2582
    %vm2584 = vcmp.lt.s32.totalorder %v2565, 1
    %vm2585 = vcmp.lt.s32.totalorder %v2565, 2
    %vm2586 = vcmp.lt.s32.totalorder %v2565, 3
    %vm2587 = vcmp.lt.s32.totalorder %v2565, 4
    %v2588 = vsel %vm2584, %v2568, %v2571
    %v2589 = vsel %vm2587, %v2577, 2102212464
    %v2590 = vsel %vm2586, %v2574, %v2589
    %v2591 = vsel %vm2585, %v2588, %v2590
    %v2592 = vsel %vm2584, %v2571, %v2574
    %v2593 = vsel %vm2587, %v2580, 920167782
    %v2594 = vsel %vm2586, %v2577, %v2593
    %v2595 = vsel %vm2585, %v2592, %v2594
    %v2596 = vsel %vm2584, %v2574, %v2577
    %v2597 = vsel %vm2587, %v2583, 1326507024
    %v2598 = vsel %vm2586, %v2580, %v2597
    %v2599 = vsel %vm2585, %v2596, %v2598
    %v2600 = vshll.u32 %v2560, 8
    %v2601 = vmul.u32.u64.compose %v2600, %v2599
    %v2602 = vextract.low.u32 %v2601
    %v2603 = vextract.high.u32 %v2601
    %v2604 = vmul.u32.u64.compose %v2600, %v2595
    %v2605 = vextract.low.u32 %v2604
    %v2606 = vextract.high.u32 %v2604
    %v2607 = vmul.u32 %v2600, %v2591
    %v2608 = vadd.s32 %v2603, %v2605
    %vm2609 = vc.u32 %v2603, %v2605
    %v2610 = vadd.s32 %v2606, 1
    %v2611 = vsel %vm2609, %v2610, %v2606
    %v2612 = vadd.s32 %v2607, %v2611
    %v2613 = vadd.s32 %v2612, 536870912
    %v2614 = vshrl.u32 %v2613, 30
    %v2615 = vshll.u32 %v2614, 30
    %v2616 = vsub.s32 %v2612, %v2615
    %vm2617 = vcmp.lt.s32.totalorder %v2616, 0
    %v2618 = vsub.s32 0, %v2616
    %v2619 = vsel %vm2617, %v2618, %v2616
    %v2620 = vclz %v2619
    %v2621 = vsub.s32 %v2620, 2
    %vm2622 = vcmp.gt.s32.totalorder 0, %v2621
    %v2623 = vsel %vm2622, 0, %v2621
    %v2624 = vsub.s32 32, %v2623
    %v2625 = vshll.u32 %v2616, %v2623
    %v2626 = vshrl.u32 %v2608, %v2624
    %v2627 = vor.u32 %v2625, %v2626
    %v2628 = vsub.s32 4294967266, %v2623
    %v2629 = vadd.s32 %v2628, 127
    %v2630 = vshll.u32 %v2629, 23
    %v2631 = vor.u32 4788187, %v2630
    %v2632 = vand.u32 2147483647, %v2631
    %v2634 = vcvt.s32.f32 %v2627
    %v2635 = vmul.f32 %v2634, %v2632
    %v2636 = vxor.u32 %v2635, 2147483648
    %v2637 = vsel %vm2554, %v2636, %v2635
    %v2638 = vsub.s32 4, %v2614
    %v2639 = vsel %vm2554, %v2638, %v2614
    %v2640 = vsel %vm2553, %v2363, %v2637
    %v2641 = vsel %vm2553, 0, %v2639
    %v2642 = vcosq.f32.pop %v2640
    %v2643 = vsinq.f32.pop %v2640
    %vm2644 = vweird.f32 %v2363
    %v2645 = vadd.s32 %v2641, 3
    %v2646 = vand.u32 %v2645, 3
    %vm2647 = vcmp.lt.s32.totalorder %v2646, 2
    %vm2648 = vcmp.eq.s32.totalorder %v2646, 0
    %v2649 = vxor.u32 %v2643, 2147483648
    %v2650 = vsel %vm2648, %v2642, %v2649
    %vm2651 = vcmp.eq.s32.totalorder %v2646, 2
    %v2652 = vxor.u32 %v2642, 2147483648
    %v2653 = vsel %vm2651, %v2652, %v2643
    %v2654 = vsel %vm2647, %v2650, %v2653
    %v2655 = vsel %vm2644, nan, %v2654
    %v2656 = vand.u32 2147483647, %v2369
    %vm2657 = vcmp.le.f32.partialorder %v2656, 0.7853982
    %vm2658 = vcmp.lt.s32.totalorder %v2369, 0
    %v2659 = vand.u32 %v2369, 2139095040
    %v2660 = vshrl.u32 %v2659, 23
    %v2661 = vsub.s32 %v2660, 127
    %v2662 = vand.u32 2147483647, %v2369
    %v2663 = vand.u32 %v2662, 8388607
    %v2664 = vor.u32 %v2663, 8388608
    %v2665 = vsub.s32 0, %v2664
    %v2666 = vadd.s32 %v2661, 1
    %vm2667 = vcmp.gt.s32.totalorder %v2666, 0
    %v2668 = vsel %vm2667, %v2666, 0
    %v2669 = vshrl.u32 %v2668, 5
    %v2670 = vand.u32 %v2668, 31
    %v2671 = vsub.s32 32, %v2670
    %v2672 = vshrl.u32 683565275, %v2671
    %v2673 = vshll.u32 683565275, %v2670
    %v2674 = vshrl.u32 2475754826, %v2671
    %v2675 = vor.u32 %v2673, %v2674
    %v2676 = vshll.u32 2475754826, %v2670
    %v2677 = vshrl.u32 2131351028, %v2671
    %v2678 = vor.u32 %v2676, %v2677
    %v2679 = vshll.u32 2131351028, %v2670
    %v2680 = vshrl.u32 2102212464, %v2671
    %v2681 = vor.u32 %v2679, %v2680
    %v2682 = vshll.u32 2102212464, %v2670
    %v2683 = vshrl.u32 920167782, %v2671
    %v2684 = vor.u32 %v2682, %v2683
    %v2685 = vshll.u32 920167782, %v2670
    %v2686 = vshrl.u32 1326507024, %v2671
    %v2687 = vor.u32 %v2685, %v2686
    %vm2688 = vcmp.lt.s32.totalorder %v2669, 1
    %vm2689 = vcmp.lt.s32.totalorder %v2669, 2
    %vm2690 = vcmp.lt.s32.totalorder %v2669, 3
    %vm2691 = vcmp.lt.s32.totalorder %v2669, 4
    %v2692 = vsel %vm2688, %v2672, %v2675
    %v2693 = vsel %vm2691, %v2681, 2102212464
    %v2694 = vsel %vm2690, %v2678, %v2693
    %v2695 = vsel %vm2689, %v2692, %v2694
    %v2696 = vsel %vm2688, %v2675, %v2678
    %v2697 = vsel %vm2691, %v2684, 920167782
    %v2698 = vsel %vm2690, %v2681, %v2697
    %v2699 = vsel %vm2689, %v2696, %v2698
    %v2700 = vsel %vm2688, %v2678, %v2681
    %v2701 = vsel %vm2691, %v2687, 1326507024
    %v2702 = vsel %vm2690, %v2684, %v2701
    %v2703 = vsel %vm2689, %v2700, %v2702
    %v2704 = vshll.u32 %v2664, 8
    %v2705 = vmul.u32.u64.compose %v2704, %v2703
    %v2706 = vextract.low.u32 %v2705
    %v2707 = vextract.high.u32 %v2705
    %v2708 = vmul.u32.u64.compose %v2704, %v2699
    %v2709 = vextract.low.u32 %v2708
    %v2710 = vextract.high.u32 %v2708
    %v2711 = vmul.u32 %v2704, %v2695
    %v2712 = vadd.s32 %v2707, %v2709
    %vm2713 = vc.u32 %v2707, %v2709
    %v2714 = vadd.s32 %v2710, 1
    %v2715 = vsel %vm2713, %v2714, %v2710
    %v2716 = vadd.s32 %v2711, %v2715
    %v2717 = vadd.s32 %v2716, 536870912
    %v2718 = vshrl.u32 %v2717, 30
    %v2719 = vshll.u32 %v2718, 30
    %v2720 = vsub.s32 %v2716, %v2719
    %vm2721 = vcmp.lt.s32.totalorder %v2720, 0
    %v2722 = vsub.s32 0, %v2720
    %v2723 = vsel %vm2721, %v2722, %v2720
    %v2724 = vclz %v2723
    %v2725 = vsub.s32 %v2724, 2
    %vm2726 = vcmp.gt.s32.totalorder 0, %v2725
    %v2727 = vsel %vm2726, 0, %v2725
    %v2728 = vsub.s32 32, %v2727
    %v2729 = vshll.u32 %v2720, %v2727
    %v2730 = vshrl.u32 %v2712, %v2728
    %v2731 = vor.u32 %v2729, %v2730
    %v2732 = vsub.s32 4294967266, %v2727
    %v2733 = vadd.s32 %v2732, 127
    %v2734 = vshll.u32 %v2733, 23
    %v2735 = vor.u32 4788187, %v2734
    %v2736 = vand.u32 2147483647, %v2735
    %v2738 = vcvt.s32.f32 %v2731
    %v2739 = vmul.f32 %v2738, %v2736
    %v2740 = vxor.u32 %v2739, 2147483648
    %v2741 = vsel %vm2658, %v2740, %v2739
    %v2742 = vsub.s32 4, %v2718
    %v2743 = vsel %vm2658, %v2742, %v2718
    %v2744 = vsel %vm2657, %v2369, %v2741
    %v2745 = vsel %vm2657, 0, %v2743
    %v2746 = vcosq.f32.pop %v2744
    %v2747 = vsinq.f32.pop %v2744
    %vm2748 = vweird.f32 %v2369
    %v2749 = vadd.s32 %v2745, 3
    %v2750 = vand.u32 %v2749, 3
    %vm2751 = vcmp.lt.s32.totalorder %v2750, 2
    %vm2752 = vcmp.eq.s32.totalorder %v2750, 0
    %v2753 = vxor.u32 %v2747, 2147483648
    %v2754 = vsel %vm2752, %v2746, %v2753
    %vm2755 = vcmp.eq.s32.totalorder %v2750, 2
    %v2756 = vxor.u32 %v2746, 2147483648
    %v2757 = vsel %vm2755, %v2756, %v2747
    %v2758 = vsel %vm2751, %v2754, %v2757
    %v2759 = vsel %vm2748, nan, %v2758
    %v2760 = vand.u32 2147483647, %v2375
    %vm2761 = vcmp.le.f32.partialorder %v2760, 0.7853982
    %vm2762 = vcmp.lt.s32.totalorder %v2375, 0
    %v2763 = vand.u32 %v2375, 2139095040
    %v2764 = vshrl.u32 %v2763, 23
    %v2765 = vsub.s32 %v2764, 127
    %v2766 = vand.u32 2147483647, %v2375
    %v2767 = vand.u32 %v2766, 8388607
    %v2768 = vor.u32 %v2767, 8388608
    %v2769 = vsub.s32 0, %v2768
    %v2770 = vadd.s32 %v2765, 1
    %vm2771 = vcmp.gt.s32.totalorder %v2770, 0
    %v2772 = vsel %vm2771, %v2770, 0
    %v2773 = vshrl.u32 %v2772, 5
    %v2774 = vand.u32 %v2772, 31
    %v2775 = vsub.s32 32, %v2774
    %v2776 = vshrl.u32 683565275, %v2775
    %v2777 = vshll.u32 683565275, %v2774
    %v2778 = vshrl.u32 2475754826, %v2775
    %v2779 = vor.u32 %v2777, %v2778
    %v2780 = vshll.u32 2475754826, %v2774
    %v2781 = vshrl.u32 2131351028, %v2775
    %v2782 = vor.u32 %v2780, %v2781
    %v2783 = vshll.u32 2131351028, %v2774
    %v2784 = vshrl.u32 2102212464, %v2775
    %v2785 = vor.u32 %v2783, %v2784
    %v2786 = vshll.u32 2102212464, %v2774
    %v2787 = vshrl.u32 920167782, %v2775
    %v2788 = vor.u32 %v2786, %v2787
    %v2789 = vshll.u32 920167782, %v2774
    %v2790 = vshrl.u32 1326507024, %v2775
    %v2791 = vor.u32 %v2789, %v2790
    %vm2792 = vcmp.lt.s32.totalorder %v2773, 1
    %vm2793 = vcmp.lt.s32.totalorder %v2773, 2
    %vm2794 = vcmp.lt.s32.totalorder %v2773, 3
    %vm2795 = vcmp.lt.s32.totalorder %v2773, 4
    %v2796 = vsel %vm2792, %v2776, %v2779
    %v2797 = vsel %vm2795, %v2785, 2102212464
    %v2798 = vsel %vm2794, %v2782, %v2797
    %v2799 = vsel %vm2793, %v2796, %v2798
    %v2800 = vsel %vm2792, %v2779, %v2782
    %v2801 = vsel %vm2795, %v2788, 920167782
    %v2802 = vsel %vm2794, %v2785, %v2801
    %v2803 = vsel %vm2793, %v2800, %v2802
    %v2804 = vsel %vm2792, %v2782, %v2785
    %v2805 = vsel %vm2795, %v2791, 1326507024
    %v2806 = vsel %vm2794, %v2788, %v2805
    %v2807 = vsel %vm2793, %v2804, %v2806
    %v2808 = vshll.u32 %v2768, 8
    %v2809 = vmul.u32.u64.compose %v2808, %v2807
    %v2810 = vextract.low.u32 %v2809
    %v2811 = vextract.high.u32 %v2809
    %v2812 = vmul.u32.u64.compose %v2808, %v2803
    %v2813 = vextract.low.u32 %v2812
    %v2814 = vextract.high.u32 %v2812
    %v2815 = vmul.u32 %v2808, %v2799
    %v2816 = vadd.s32 %v2811, %v2813
    %vm2817 = vc.u32 %v2811, %v2813
    %v2818 = vadd.s32 %v2814, 1
    %v2819 = vsel %vm2817, %v2818, %v2814
    %v2820 = vadd.s32 %v2815, %v2819
    %v2821 = vadd.s32 %v2820, 536870912
    %v2822 = vshrl.u32 %v2821, 30
    %v2823 = vshll.u32 %v2822, 30
    %v2824 = vsub.s32 %v2820, %v2823
    %vm2825 = vcmp.lt.s32.totalorder %v2824, 0
    %v2826 = vsub.s32 0, %v2824
    %v2827 = vsel %vm2825, %v2826, %v2824
    %v2828 = vclz %v2827
    %v2829 = vsub.s32 %v2828, 2
    %vm2830 = vcmp.gt.s32.totalorder 0, %v2829
    %v2831 = vsel %vm2830, 0, %v2829
    %v2832 = vsub.s32 32, %v2831
    %v2833 = vshll.u32 %v2824, %v2831
    %v2834 = vshrl.u32 %v2816, %v2832
    %v2835 = vor.u32 %v2833, %v2834
    %v2836 = vsub.s32 4294967266, %v2831
    %v2837 = vadd.s32 %v2836, 127
    %v2838 = vshll.u32 %v2837, 23
    %v2839 = vor.u32 4788187, %v2838
    %v2840 = vand.u32 2147483647, %v2839
    %v2842 = vcvt.s32.f32 %v2835
    %v2843 = vmul.f32 %v2842, %v2840
    %v2844 = vxor.u32 %v2843, 2147483648
    %v2845 = vsel %vm2762, %v2844, %v2843
    %v2846 = vsub.s32 4, %v2822
    %v2847 = vsel %vm2762, %v2846, %v2822
    %v2848 = vsel %vm2761, %v2375, %v2845
    %v2849 = vsel %vm2761, 0, %v2847
    %v2850 = vcosq.f32.pop %v2848
    %v2851 = vsinq.f32.pop %v2848
    %vm2852 = vweird.f32 %v2375
    %v2853 = vadd.s32 %v2849, 3
    %v2854 = vand.u32 %v2853, 3
    %vm2855 = vcmp.lt.s32.totalorder %v2854, 2
    %vm2856 = vcmp.eq.s32.totalorder %v2854, 0
    %v2857 = vxor.u32 %v2851, 2147483648
    %v2858 = vsel %vm2856, %v2850, %v2857
    %vm2859 = vcmp.eq.s32.totalorder %v2854, 2
    %v2860 = vxor.u32 %v2850, 2147483648
    %v2861 = vsel %vm2859, %v2860, %v2851
    %v2862 = vsel %vm2855, %v2858, %v2861
    %v2863 = vsel %vm2852, nan, %v2862
    %v2864 = vand.u32 2147483647, %v2381
    %vm2865 = vcmp.le.f32.partialorder %v2864, 0.7853982
    %vm2866 = vcmp.lt.s32.totalorder %v2381, 0
    %v2867 = vand.u32 %v2381, 2139095040
    %v2868 = vshrl.u32 %v2867, 23
    %v2869 = vsub.s32 %v2868, 127
    %v2870 = vand.u32 2147483647, %v2381
    %v2871 = vand.u32 %v2870, 8388607
    %v2872 = vor.u32 %v2871, 8388608
    %v2873 = vsub.s32 0, %v2872
    %v2874 = vadd.s32 %v2869, 1
    %vm2875 = vcmp.gt.s32.totalorder %v2874, 0
    %v2876 = vsel %vm2875, %v2874, 0
    %v2877 = vshrl.u32 %v2876, 5
    %v2878 = vand.u32 %v2876, 31
    %v2879 = vsub.s32 32, %v2878
    %v2880 = vshrl.u32 683565275, %v2879
    %v2881 = vshll.u32 683565275, %v2878
    %v2882 = vshrl.u32 2475754826, %v2879
    %v2883 = vor.u32 %v2881, %v2882
    %v2884 = vshll.u32 2475754826, %v2878
    %v2885 = vshrl.u32 2131351028, %v2879
    %v2886 = vor.u32 %v2884, %v2885
    %v2887 = vshll.u32 2131351028, %v2878
    %v2888 = vshrl.u32 2102212464, %v2879
    %v2889 = vor.u32 %v2887, %v2888
    %v2890 = vshll.u32 2102212464, %v2878
    %v2891 = vshrl.u32 920167782, %v2879
    %v2892 = vor.u32 %v2890, %v2891
    %v2893 = vshll.u32 920167782, %v2878
    %v2894 = vshrl.u32 1326507024, %v2879
    %v2895 = vor.u32 %v2893, %v2894
    %vm2896 = vcmp.lt.s32.totalorder %v2877, 1
    %vm2897 = vcmp.lt.s32.totalorder %v2877, 2
    %vm2898 = vcmp.lt.s32.totalorder %v2877, 3
    %vm2899 = vcmp.lt.s32.totalorder %v2877, 4
    %v2900 = vsel %vm2896, %v2880, %v2883
    %v2901 = vsel %vm2899, %v2889, 2102212464
    %v2902 = vsel %vm2898, %v2886, %v2901
    %v2903 = vsel %vm2897, %v2900, %v2902
    %v2904 = vsel %vm2896, %v2883, %v2886
    %v2905 = vsel %vm2899, %v2892, 920167782
    %v2906 = vsel %vm2898, %v2889, %v2905
    %v2907 = vsel %vm2897, %v2904, %v2906
    %v2908 = vsel %vm2896, %v2886, %v2889
    %v2909 = vsel %vm2899, %v2895, 1326507024
    %v2910 = vsel %vm2898, %v2892, %v2909
    %v2911 = vsel %vm2897, %v2908, %v2910
    %v2912 = vshll.u32 %v2872, 8
    %v2913 = vmul.u32.u64.compose %v2912, %v2911
    %v2914 = vextract.low.u32 %v2913
    %v2915 = vextract.high.u32 %v2913
    %v2916 = vmul.u32.u64.compose %v2912, %v2907
    %v2917 = vextract.low.u32 %v2916
    %v2918 = vextract.high.u32 %v2916
    %v2919 = vmul.u32 %v2912, %v2903
    %v2920 = vadd.s32 %v2915, %v2917
    %vm2921 = vc.u32 %v2915, %v2917
    %v2922 = vadd.s32 %v2918, 1
    %v2923 = vsel %vm2921, %v2922, %v2918
    %v2924 = vadd.s32 %v2919, %v2923
    %v2925 = vadd.s32 %v2924, 536870912
    %v2926 = vshrl.u32 %v2925, 30
    %v2927 = vshll.u32 %v2926, 30
    %v2928 = vsub.s32 %v2924, %v2927
    %vm2929 = vcmp.lt.s32.totalorder %v2928, 0
    %v2930 = vsub.s32 0, %v2928
    %v2931 = vsel %vm2929, %v2930, %v2928
    %v2932 = vclz %v2931
    %v2933 = vsub.s32 %v2932, 2
    %vm2934 = vcmp.gt.s32.totalorder 0, %v2933
    %v2935 = vsel %vm2934, 0, %v2933
    %v2936 = vsub.s32 32, %v2935
    %v2937 = vshll.u32 %v2928, %v2935
    %v2938 = vshrl.u32 %v2920, %v2936
    %v2939 = vor.u32 %v2937, %v2938
    %v2940 = vsub.s32 4294967266, %v2935
    %v2941 = vadd.s32 %v2940, 127
    %v2942 = vshll.u32 %v2941, 23
    %v2943 = vor.u32 4788187, %v2942
    %v2944 = vand.u32 2147483647, %v2943
    %v2946 = vcvt.s32.f32 %v2939
    %v2947 = vmul.f32 %v2946, %v2944
    %v2948 = vxor.u32 %v2947, 2147483648
    %v2949 = vsel %vm2866, %v2948, %v2947
    %v2950 = vsub.s32 4, %v2926
    %v2951 = vsel %vm2866, %v2950, %v2926
    %v2952 = vsel %vm2865, %v2381, %v2949
    %v2953 = vsel %vm2865, 0, %v2951
    %v2954 = vcosq.f32.pop %v2952
    %v2955 = vsinq.f32.pop %v2952
    %vm2956 = vweird.f32 %v2381
    %v2957 = vadd.s32 %v2953, 3
    %v2958 = vand.u32 %v2957, 3
    %vm2959 = vcmp.lt.s32.totalorder %v2958, 2
    %vm2960 = vcmp.eq.s32.totalorder %v2958, 0
    %v2961 = vxor.u32 %v2955, 2147483648
    %v2962 = vsel %vm2960, %v2954, %v2961
    %vm2963 = vcmp.eq.s32.totalorder %v2958, 2
    %v2964 = vxor.u32 %v2954, 2147483648
    %v2965 = vsel %vm2963, %v2964, %v2955
    %v2966 = vsel %vm2959, %v2962, %v2965
    %v2967 = vsel %vm2956, nan, %v2966
    %v2968 = vand.u32 2147483647, %v2387
    %vm2969 = vcmp.le.f32.partialorder %v2968, 0.7853982
    %vm2970 = vcmp.lt.s32.totalorder %v2387, 0
    %v2971 = vand.u32 %v2387, 2139095040
    %v2972 = vshrl.u32 %v2971, 23
    %v2973 = vsub.s32 %v2972, 127
    %v2974 = vand.u32 2147483647, %v2387
    %v2975 = vand.u32 %v2974, 8388607
    %v2976 = vor.u32 %v2975, 8388608
    %v2977 = vsub.s32 0, %v2976
    %v2978 = vadd.s32 %v2973, 1
    %vm2979 = vcmp.gt.s32.totalorder %v2978, 0
    %v2980 = vsel %vm2979, %v2978, 0
    %v2981 = vshrl.u32 %v2980, 5
    %v2982 = vand.u32 %v2980, 31
    %v2983 = vsub.s32 32, %v2982
    %v2984 = vshrl.u32 683565275, %v2983
    %v2985 = vshll.u32 683565275, %v2982
    %v2986 = vshrl.u32 2475754826, %v2983
    %v2987 = vor.u32 %v2985, %v2986
    %v2988 = vshll.u32 2475754826, %v2982
    %v2989 = vshrl.u32 2131351028, %v2983
    %v2990 = vor.u32 %v2988, %v2989
    %v2991 = vshll.u32 2131351028, %v2982
    %v2992 = vshrl.u32 2102212464, %v2983
    %v2993 = vor.u32 %v2991, %v2992
    %v2994 = vshll.u32 2102212464, %v2982
    %v2995 = vshrl.u32 920167782, %v2983
    %v2996 = vor.u32 %v2994, %v2995
    %v2997 = vshll.u32 920167782, %v2982
    %v2998 = vshrl.u32 1326507024, %v2983
    %v2999 = vor.u32 %v2997, %v2998
    %vm3000 = vcmp.lt.s32.totalorder %v2981, 1
    %vm3001 = vcmp.lt.s32.totalorder %v2981, 2
    %vm3002 = vcmp.lt.s32.totalorder %v2981, 3
    %vm3003 = vcmp.lt.s32.totalorder %v2981, 4
    %v3004 = vsel %vm3000, %v2984, %v2987
    %v3005 = vsel %vm3003, %v2993, 2102212464
    %v3006 = vsel %vm3002, %v2990, %v3005
    %v3007 = vsel %vm3001, %v3004, %v3006
    %v3008 = vsel %vm3000, %v2987, %v2990
    %v3009 = vsel %vm3003, %v2996, 920167782
    %v3010 = vsel %vm3002, %v2993, %v3009
    %v3011 = vsel %vm3001, %v3008, %v3010
    %v3012 = vsel %vm3000, %v2990, %v2993
    %v3013 = vsel %vm3003, %v2999, 1326507024
    %v3014 = vsel %vm3002, %v2996, %v3013
    %v3015 = vsel %vm3001, %v3012, %v3014
    %v3016 = vshll.u32 %v2976, 8
    %v3017 = vmul.u32.u64.compose %v3016, %v3015
    %v3018 = vextract.low.u32 %v3017
    %v3019 = vextract.high.u32 %v3017
    %v3020 = vmul.u32.u64.compose %v3016, %v3011
    %v3021 = vextract.low.u32 %v3020
    %v3022 = vextract.high.u32 %v3020
    %v3023 = vmul.u32 %v3016, %v3007
    %v3024 = vadd.s32 %v3019, %v3021
    %vm3025 = vc.u32 %v3019, %v3021
    %v3026 = vadd.s32 %v3022, 1
    %v3027 = vsel %vm3025, %v3026, %v3022
    %v3028 = vadd.s32 %v3023, %v3027
    %v3029 = vadd.s32 %v3028, 536870912
    %v3030 = vshrl.u32 %v3029, 30
    %v3031 = vshll.u32 %v3030, 30
    %v3032 = vsub.s32 %v3028, %v3031
    %vm3033 = vcmp.lt.s32.totalorder %v3032, 0
    %v3034 = vsub.s32 0, %v3032
    %v3035 = vsel %vm3033, %v3034, %v3032
    %v3036 = vclz %v3035
    %v3037 = vsub.s32 %v3036, 2
    %vm3038 = vcmp.gt.s32.totalorder 0, %v3037
    %v3039 = vsel %vm3038, 0, %v3037
    %v3040 = vsub.s32 32, %v3039
    %v3041 = vshll.u32 %v3032, %v3039
    %v3042 = vshrl.u32 %v3024, %v3040
    %v3043 = vor.u32 %v3041, %v3042
    %v3044 = vsub.s32 4294967266, %v3039
    %v3045 = vadd.s32 %v3044, 127
    %v3046 = vshll.u32 %v3045, 23
    %v3047 = vor.u32 4788187, %v3046
    %v3048 = vand.u32 2147483647, %v3047
    %v3050 = vcvt.s32.f32 %v3043
    %v3051 = vmul.f32 %v3050, %v3048
    %v3052 = vxor.u32 %v3051, 2147483648
    %v3053 = vsel %vm2970, %v3052, %v3051
    %v3054 = vsub.s32 4, %v3030
    %v3055 = vsel %vm2970, %v3054, %v3030
    %v3056 = vsel %vm2969, %v2387, %v3053
    %v3057 = vsel %vm2969, 0, %v3055
    %v3058 = vcosq.f32.pop %v3056
    %v3059 = vsinq.f32.pop %v3056
    %vm3060 = vweird.f32 %v2387
    %v3061 = vadd.s32 %v3057, 3
    %v3062 = vand.u32 %v3061, 3
    %vm3063 = vcmp.lt.s32.totalorder %v3062, 2
    %vm3064 = vcmp.eq.s32.totalorder %v3062, 0
    %v3065 = vxor.u32 %v3059, 2147483648
    %v3066 = vsel %vm3064, %v3058, %v3065
    %vm3067 = vcmp.eq.s32.totalorder %v3062, 2
    %v3068 = vxor.u32 %v3058, 2147483648
    %v3069 = vsel %vm3067, %v3068, %v3059
    %v3070 = vsel %vm3063, %v3066, %v3069
    %v3071 = vsel %vm3060, nan, %v3070
    %v3072 = vand.u32 2147483647, %v2393
    %vm3073 = vcmp.le.f32.partialorder %v3072, 0.7853982
    %vm3074 = vcmp.lt.s32.totalorder %v2393, 0
    %v3075 = vand.u32 %v2393, 2139095040
    %v3076 = vshrl.u32 %v3075, 23
    %v3077 = vsub.s32 %v3076, 127
    %v3078 = vand.u32 2147483647, %v2393
    %v3079 = vand.u32 %v3078, 8388607
    %v3080 = vor.u32 %v3079, 8388608
    %v3081 = vsub.s32 0, %v3080
    %v3082 = vadd.s32 %v3077, 1
    %vm3083 = vcmp.gt.s32.totalorder %v3082, 0
    %v3084 = vsel %vm3083, %v3082, 0
    %v3085 = vshrl.u32 %v3084, 5
    %v3086 = vand.u32 %v3084, 31
    %v3087 = vsub.s32 32, %v3086
    %v3088 = vshrl.u32 683565275, %v3087
    %v3089 = vshll.u32 683565275, %v3086
    %v3090 = vshrl.u32 2475754826, %v3087
    %v3091 = vor.u32 %v3089, %v3090
    %v3092 = vshll.u32 2475754826, %v3086
    %v3093 = vshrl.u32 2131351028, %v3087
    %v3094 = vor.u32 %v3092, %v3093
    %v3095 = vshll.u32 2131351028, %v3086
    %v3096 = vshrl.u32 2102212464, %v3087
    %v3097 = vor.u32 %v3095, %v3096
    %v3098 = vshll.u32 2102212464, %v3086
    %v3099 = vshrl.u32 920167782, %v3087
    %v3100 = vor.u32 %v3098, %v3099
    %v3101 = vshll.u32 920167782, %v3086
    %v3102 = vshrl.u32 1326507024, %v3087
    %v3103 = vor.u32 %v3101, %v3102
    %vm3104 = vcmp.lt.s32.totalorder %v3085, 1
    %vm3105 = vcmp.lt.s32.totalorder %v3085, 2
    %vm3106 = vcmp.lt.s32.totalorder %v3085, 3
    %vm3107 = vcmp.lt.s32.totalorder %v3085, 4
    %v3108 = vsel %vm3104, %v3088, %v3091
    %v3109 = vsel %vm3107, %v3097, 2102212464
    %v3110 = vsel %vm3106, %v3094, %v3109
    %v3111 = vsel %vm3105, %v3108, %v3110
    %v3112 = vsel %vm3104, %v3091, %v3094
    %v3113 = vsel %vm3107, %v3100, 920167782
    %v3114 = vsel %vm3106, %v3097, %v3113
    %v3115 = vsel %vm3105, %v3112, %v3114
    %v3116 = vsel %vm3104, %v3094, %v3097
    %v3117 = vsel %vm3107, %v3103, 1326507024
    %v3118 = vsel %vm3106, %v3100, %v3117
    %v3119 = vsel %vm3105, %v3116, %v3118
    %v3120 = vshll.u32 %v3080, 8
    %v3121 = vmul.u32.u64.compose %v3120, %v3119
    %v3122 = vextract.low.u32 %v3121
    %v3123 = vextract.high.u32 %v3121
    %v3124 = vmul.u32.u64.compose %v3120, %v3115
    %v3125 = vextract.low.u32 %v3124
    %v3126 = vextract.high.u32 %v3124
    %v3127 = vmul.u32 %v3120, %v3111
    %v3128 = vadd.s32 %v3123, %v3125
    %vm3129 = vc.u32 %v3123, %v3125
    %v3130 = vadd.s32 %v3126, 1
    %v3131 = vsel %vm3129, %v3130, %v3126
    %v3132 = vadd.s32 %v3127, %v3131
    %v3133 = vadd.s32 %v3132, 536870912
    %v3134 = vshrl.u32 %v3133, 30
    %v3135 = vshll.u32 %v3134, 30
    %v3136 = vsub.s32 %v3132, %v3135
    %vm3137 = vcmp.lt.s32.totalorder %v3136, 0
    %v3138 = vsub.s32 0, %v3136
    %v3139 = vsel %vm3137, %v3138, %v3136
    %v3140 = vclz %v3139
    %v3141 = vsub.s32 %v3140, 2
    %vm3142 = vcmp.gt.s32.totalorder 0, %v3141
    %v3143 = vsel %vm3142, 0, %v3141
    %v3144 = vsub.s32 32, %v3143
    %v3145 = vshll.u32 %v3136, %v3143
    %v3146 = vshrl.u32 %v3128, %v3144
    %v3147 = vor.u32 %v3145, %v3146
    %v3148 = vsub.s32 4294967266, %v3143
    %v3149 = vadd.s32 %v3148, 127
    %v3150 = vshll.u32 %v3149, 23
    %v3151 = vor.u32 4788187, %v3150
    %v3152 = vand.u32 2147483647, %v3151
    %v3154 = vcvt.s32.f32 %v3147
    %v3155 = vmul.f32 %v3154, %v3152
    %v3156 = vxor.u32 %v3155, 2147483648
    %v3157 = vsel %vm3074, %v3156, %v3155
    %v3158 = vsub.s32 4, %v3134
    %v3159 = vsel %vm3074, %v3158, %v3134
    %v3160 = vsel %vm3073, %v2393, %v3157
    %v3161 = vsel %vm3073, 0, %v3159
    %v3162 = vcosq.f32.pop %v3160
    %v3163 = vsinq.f32.pop %v3160
    %vm3164 = vweird.f32 %v2393
    %v3165 = vadd.s32 %v3161, 3
    %v3166 = vand.u32 %v3165, 3
    %vm3167 = vcmp.lt.s32.totalorder %v3166, 2
    %vm3168 = vcmp.eq.s32.totalorder %v3166, 0
    %v3169 = vxor.u32 %v3163, 2147483648
    %v3170 = vsel %vm3168, %v3162, %v3169
    %vm3171 = vcmp.eq.s32.totalorder %v3166, 2
    %v3172 = vxor.u32 %v3162, 2147483648
    %v3173 = vsel %vm3171, %v3172, %v3163
    %v3174 = vsel %vm3167, %v3170, %v3173
    %v3175 = vsel %vm3164, nan, %v3174
    %v3176 = vand.u32 2147483647, %v2399
    %vm3177 = vcmp.le.f32.partialorder %v3176, 0.7853982
    %vm3178 = vcmp.lt.s32.totalorder %v2399, 0
    %v3179 = vand.u32 %v2399, 2139095040
    %v3180 = vshrl.u32 %v3179, 23
    %v3181 = vsub.s32 %v3180, 127
    %v3182 = vand.u32 2147483647, %v2399
    %v3183 = vand.u32 %v3182, 8388607
    %v3184 = vor.u32 %v3183, 8388608
    %v3185 = vsub.s32 0, %v3184
    %v3186 = vadd.s32 %v3181, 1
    %vm3187 = vcmp.gt.s32.totalorder %v3186, 0
    %v3188 = vsel %vm3187, %v3186, 0
    %v3189 = vshrl.u32 %v3188, 5
    %v3190 = vand.u32 %v3188, 31
    %v3191 = vsub.s32 32, %v3190
    %v3192 = vshrl.u32 683565275, %v3191
    %v3193 = vshll.u32 683565275, %v3190
    %v3194 = vshrl.u32 2475754826, %v3191
    %v3195 = vor.u32 %v3193, %v3194
    %v3196 = vshll.u32 2475754826, %v3190
    %v3197 = vshrl.u32 2131351028, %v3191
    %v3198 = vor.u32 %v3196, %v3197
    %v3199 = vshll.u32 2131351028, %v3190
    %v3200 = vshrl.u32 2102212464, %v3191
    %v3201 = vor.u32 %v3199, %v3200
    %v3202 = vshll.u32 2102212464, %v3190
    %v3203 = vshrl.u32 920167782, %v3191
    %v3204 = vor.u32 %v3202, %v3203
    %v3205 = vshll.u32 920167782, %v3190
    %v3206 = vshrl.u32 1326507024, %v3191
    %v3207 = vor.u32 %v3205, %v3206
    %vm3208 = vcmp.lt.s32.totalorder %v3189, 1
    %vm3209 = vcmp.lt.s32.totalorder %v3189, 2
    %vm3210 = vcmp.lt.s32.totalorder %v3189, 3
    %vm3211 = vcmp.lt.s32.totalorder %v3189, 4
    %v3212 = vsel %vm3208, %v3192, %v3195
    %v3213 = vsel %vm3211, %v3201, 2102212464
    %v3214 = vsel %vm3210, %v3198, %v3213
    %v3215 = vsel %vm3209, %v3212, %v3214
    %v3216 = vsel %vm3208, %v3195, %v3198
    %v3217 = vsel %vm3211, %v3204, 920167782
    %v3218 = vsel %vm3210, %v3201, %v3217
    %v3219 = vsel %vm3209, %v3216, %v3218
    %v3220 = vsel %vm3208, %v3198, %v3201
    %v3221 = vsel %vm3211, %v3207, 1326507024
    %v3222 = vsel %vm3210, %v3204, %v3221
    %v3223 = vsel %vm3209, %v3220, %v3222
    %v3224 = vshll.u32 %v3184, 8
    %v3225 = vmul.u32.u64.compose %v3224, %v3223
    %v3226 = vextract.low.u32 %v3225
    %v3227 = vextract.high.u32 %v3225
    %v3228 = vmul.u32.u64.compose %v3224, %v3219
    %v3229 = vextract.low.u32 %v3228
    %v3230 = vextract.high.u32 %v3228
    %v3231 = vmul.u32 %v3224, %v3215
    %v3232 = vadd.s32 %v3227, %v3229
    %vm3233 = vc.u32 %v3227, %v3229
    %v3234 = vadd.s32 %v3230, 1
    %v3235 = vsel %vm3233, %v3234, %v3230
    %v3236 = vadd.s32 %v3231, %v3235
    %v3237 = vadd.s32 %v3236, 536870912
    %v3238 = vshrl.u32 %v3237, 30
    %v3239 = vshll.u32 %v3238, 30
    %v3240 = vsub.s32 %v3236, %v3239
    %vm3241 = vcmp.lt.s32.totalorder %v3240, 0
    %v3242 = vsub.s32 0, %v3240
    %v3243 = vsel %vm3241, %v3242, %v3240
    %v3244 = vclz %v3243
    %v3245 = vsub.s32 %v3244, 2
    %vm3246 = vcmp.gt.s32.totalorder 0, %v3245
    %v3247 = vsel %vm3246, 0, %v3245
    %v3248 = vsub.s32 32, %v3247
    %v3249 = vshll.u32 %v3240, %v3247
    %v3250 = vshrl.u32 %v3232, %v3248
    %v3251 = vor.u32 %v3249, %v3250
    %v3252 = vsub.s32 4294967266, %v3247
    %v3253 = vadd.s32 %v3252, 127
    %v3254 = vshll.u32 %v3253, 23
    %v3255 = vor.u32 4788187, %v3254
    %v3256 = vand.u32 2147483647, %v3255
    %v3258 = vcvt.s32.f32 %v3251
    %v3259 = vmul.f32 %v3258, %v3256
    %v3260 = vxor.u32 %v3259, 2147483648
    %v3261 = vsel %vm3178, %v3260, %v3259
    %v3262 = vsub.s32 4, %v3238
    %v3263 = vsel %vm3178, %v3262, %v3238
    %v3264 = vsel %vm3177, %v2399, %v3261
    %v3265 = vsel %vm3177, 0, %v3263
    %v3266 = vcosq.f32.pop %v3264
    %v3267 = vsinq.f32.pop %v3264
    %vm3268 = vweird.f32 %v2399
    %v3269 = vadd.s32 %v3265, 3
    %v3270 = vand.u32 %v3269, 3
    %vm3271 = vcmp.lt.s32.totalorder %v3270, 2
    %vm3272 = vcmp.eq.s32.totalorder %v3270, 0
    %v3273 = vxor.u32 %v3267, 2147483648
    %v3274 = vsel %vm3272, %v3266, %v3273
    %vm3275 = vcmp.eq.s32.totalorder %v3270, 2
    %v3276 = vxor.u32 %v3266, 2147483648
    %v3277 = vsel %vm3275, %v3276, %v3267
    %v3278 = vsel %vm3271, %v3274, %v3277
    %v3279 = vsel %vm3268, nan, %v3278
    %v3280 = vand.u32 2147483647, %v2405
    %vm3281 = vcmp.le.f32.partialorder %v3280, 0.7853982
    %vm3282 = vcmp.lt.s32.totalorder %v2405, 0
    %v3283 = vand.u32 %v2405, 2139095040
    %v3284 = vshrl.u32 %v3283, 23
    %v3285 = vsub.s32 %v3284, 127
    %v3286 = vand.u32 2147483647, %v2405
    %v3287 = vand.u32 %v3286, 8388607
    %v3288 = vor.u32 %v3287, 8388608
    %v3289 = vsub.s32 0, %v3288
    %v3290 = vadd.s32 %v3285, 1
    %vm3291 = vcmp.gt.s32.totalorder %v3290, 0
    %v3292 = vsel %vm3291, %v3290, 0
    %v3293 = vshrl.u32 %v3292, 5
    %v3294 = vand.u32 %v3292, 31
    %v3295 = vsub.s32 32, %v3294
    %v3296 = vshrl.u32 683565275, %v3295
    %v3297 = vshll.u32 683565275, %v3294
    %v3298 = vshrl.u32 2475754826, %v3295
    %v3299 = vor.u32 %v3297, %v3298
    %v3300 = vshll.u32 2475754826, %v3294
    %v3301 = vshrl.u32 2131351028, %v3295
    %v3302 = vor.u32 %v3300, %v3301
    %v3303 = vshll.u32 2131351028, %v3294
    %v3304 = vshrl.u32 2102212464, %v3295
    %v3305 = vor.u32 %v3303, %v3304
    %v3306 = vshll.u32 2102212464, %v3294
    %v3307 = vshrl.u32 920167782, %v3295
    %v3308 = vor.u32 %v3306, %v3307
    %v3309 = vshll.u32 920167782, %v3294
    %v3310 = vshrl.u32 1326507024, %v3295
    %v3311 = vor.u32 %v3309, %v3310
    %vm3312 = vcmp.lt.s32.totalorder %v3293, 1
    %vm3313 = vcmp.lt.s32.totalorder %v3293, 2
    %vm3314 = vcmp.lt.s32.totalorder %v3293, 3
    %vm3315 = vcmp.lt.s32.totalorder %v3293, 4
    %v3316 = vsel %vm3312, %v3296, %v3299
    %v3317 = vsel %vm3315, %v3305, 2102212464
    %v3318 = vsel %vm3314, %v3302, %v3317
    %v3319 = vsel %vm3313, %v3316, %v3318
    %v3320 = vsel %vm3312, %v3299, %v3302
    %v3321 = vsel %vm3315, %v3308, 920167782
    %v3322 = vsel %vm3314, %v3305, %v3321
    %v3323 = vsel %vm3313, %v3320, %v3322
    %v3324 = vsel %vm3312, %v3302, %v3305
    %v3325 = vsel %vm3315, %v3311, 1326507024
    %v3326 = vsel %vm3314, %v3308, %v3325
    %v3327 = vsel %vm3313, %v3324, %v3326
    %v3328 = vshll.u32 %v3288, 8
    %v3329 = vmul.u32.u64.compose %v3328, %v3327
    %v3330 = vextract.low.u32 %v3329
    %v3331 = vextract.high.u32 %v3329
    %v3332 = vmul.u32.u64.compose %v3328, %v3323
    %v3333 = vextract.low.u32 %v3332
    %v3334 = vextract.high.u32 %v3332
    %v3335 = vmul.u32 %v3328, %v3319
    %v3336 = vadd.s32 %v3331, %v3333
    %vm3337 = vc.u32 %v3331, %v3333
    %v3338 = vadd.s32 %v3334, 1
    %v3339 = vsel %vm3337, %v3338, %v3334
    %v3340 = vadd.s32 %v3335, %v3339
    %v3341 = vadd.s32 %v3340, 536870912
    %v3342 = vshrl.u32 %v3341, 30
    %v3343 = vshll.u32 %v3342, 30
    %v3344 = vsub.s32 %v3340, %v3343
    %vm3345 = vcmp.lt.s32.totalorder %v3344, 0
    %v3346 = vsub.s32 0, %v3344
    %v3347 = vsel %vm3345, %v3346, %v3344
    %v3348 = vclz %v3347
    %v3349 = vsub.s32 %v3348, 2
    %vm3350 = vcmp.gt.s32.totalorder 0, %v3349
    %v3351 = vsel %vm3350, 0, %v3349
    %v3352 = vsub.s32 32, %v3351
    %v3353 = vshll.u32 %v3344, %v3351
    %v3354 = vshrl.u32 %v3336, %v3352
    %v3355 = vor.u32 %v3353, %v3354
    %v3356 = vsub.s32 4294967266, %v3351
    %v3357 = vadd.s32 %v3356, 127
    %v3358 = vshll.u32 %v3357, 23
    %v3359 = vor.u32 4788187, %v3358
    %v3360 = vand.u32 2147483647, %v3359
    %v3362 = vcvt.s32.f32 %v3355
    %v3363 = vmul.f32 %v3362, %v3360
    %v3364 = vxor.u32 %v3363, 2147483648
    %v3365 = vsel %vm3282, %v3364, %v3363
    %v3366 = vsub.s32 4, %v3342
    %v3367 = vsel %vm3282, %v3366, %v3342
    %v3368 = vsel %vm3281, %v2405, %v3365
    %v3369 = vsel %vm3281, 0, %v3367
    %v3370 = vcosq.f32.pop %v3368
    %v3371 = vsinq.f32.pop %v3368
    %vm3372 = vweird.f32 %v2405
    %v3373 = vadd.s32 %v3369, 3
    %v3374 = vand.u32 %v3373, 3
    %vm3375 = vcmp.lt.s32.totalorder %v3374, 2
    %vm3376 = vcmp.eq.s32.totalorder %v3374, 0
    %v3377 = vxor.u32 %v3371, 2147483648
    %v3378 = vsel %vm3376, %v3370, %v3377
    %vm3379 = vcmp.eq.s32.totalorder %v3374, 2
    %v3380 = vxor.u32 %v3370, 2147483648
    %v3381 = vsel %vm3379, %v3380, %v3371
    %v3382 = vsel %vm3375, %v3378, %v3381
    %v3383 = vsel %vm3372, nan, %v3382
    %v3384 = vand.u32 2147483647, %v2411
    %vm3385 = vcmp.le.f32.partialorder %v3384, 0.7853982
    %vm3386 = vcmp.lt.s32.totalorder %v2411, 0
    %v3387 = vand.u32 %v2411, 2139095040
    %v3388 = vshrl.u32 %v3387, 23
    %v3389 = vsub.s32 %v3388, 127
    %v3390 = vand.u32 2147483647, %v2411
    %v3391 = vand.u32 %v3390, 8388607
    %v3392 = vor.u32 %v3391, 8388608
    %v3393 = vsub.s32 0, %v3392
    %v3394 = vadd.s32 %v3389, 1
    %vm3395 = vcmp.gt.s32.totalorder %v3394, 0
    %v3396 = vsel %vm3395, %v3394, 0
    %v3397 = vshrl.u32 %v3396, 5
    %v3398 = vand.u32 %v3396, 31
    %v3399 = vsub.s32 32, %v3398
    %v3400 = vshrl.u32 683565275, %v3399
    %v3401 = vshll.u32 683565275, %v3398
    %v3402 = vshrl.u32 2475754826, %v3399
    %v3403 = vor.u32 %v3401, %v3402
    %v3404 = vshll.u32 2475754826, %v3398
    %v3405 = vshrl.u32 2131351028, %v3399
    %v3406 = vor.u32 %v3404, %v3405
    %v3407 = vshll.u32 2131351028, %v3398
    %v3408 = vshrl.u32 2102212464, %v3399
    %v3409 = vor.u32 %v3407, %v3408
    %v3410 = vshll.u32 2102212464, %v3398
    %v3411 = vshrl.u32 920167782, %v3399
    %v3412 = vor.u32 %v3410, %v3411
    %v3413 = vshll.u32 920167782, %v3398
    %v3414 = vshrl.u32 1326507024, %v3399
    %v3415 = vor.u32 %v3413, %v3414
    %vm3416 = vcmp.lt.s32.totalorder %v3397, 1
    %vm3417 = vcmp.lt.s32.totalorder %v3397, 2
    %vm3418 = vcmp.lt.s32.totalorder %v3397, 3
    %vm3419 = vcmp.lt.s32.totalorder %v3397, 4
    %v3420 = vsel %vm3416, %v3400, %v3403
    %v3421 = vsel %vm3419, %v3409, 2102212464
    %v3422 = vsel %vm3418, %v3406, %v3421
    %v3423 = vsel %vm3417, %v3420, %v3422
    %v3424 = vsel %vm3416, %v3403, %v3406
    %v3425 = vsel %vm3419, %v3412, 920167782
    %v3426 = vsel %vm3418, %v3409, %v3425
    %v3427 = vsel %vm3417, %v3424, %v3426
    %v3428 = vsel %vm3416, %v3406, %v3409
    %v3429 = vsel %vm3419, %v3415, 1326507024
    %v3430 = vsel %vm3418, %v3412, %v3429
    %v3431 = vsel %vm3417, %v3428, %v3430
    %v3432 = vshll.u32 %v3392, 8
    %v3433 = vmul.u32.u64.compose %v3432, %v3431
    %v3434 = vextract.low.u32 %v3433
    %v3435 = vextract.high.u32 %v3433
    %v3436 = vmul.u32.u64.compose %v3432, %v3427
    %v3437 = vextract.low.u32 %v3436
    %v3438 = vextract.high.u32 %v3436
    %v3439 = vmul.u32 %v3432, %v3423
    %v3440 = vadd.s32 %v3435, %v3437
    %vm3441 = vc.u32 %v3435, %v3437
    %v3442 = vadd.s32 %v3438, 1
    %v3443 = vsel %vm3441, %v3442, %v3438
    %v3444 = vadd.s32 %v3439, %v3443
    %v3445 = vadd.s32 %v3444, 536870912
    %v3446 = vshrl.u32 %v3445, 30
    %v3447 = vshll.u32 %v3446, 30
    %v3448 = vsub.s32 %v3444, %v3447
    %vm3449 = vcmp.lt.s32.totalorder %v3448, 0
    %v3450 = vsub.s32 0, %v3448
    %v3451 = vsel %vm3449, %v3450, %v3448
    %v3452 = vclz %v3451
    %v3453 = vsub.s32 %v3452, 2
    %vm3454 = vcmp.gt.s32.totalorder 0, %v3453
    %v3455 = vsel %vm3454, 0, %v3453
    %v3456 = vsub.s32 32, %v3455
    %v3457 = vshll.u32 %v3448, %v3455
    %v3458 = vshrl.u32 %v3440, %v3456
    %v3459 = vor.u32 %v3457, %v3458
    %v3460 = vsub.s32 4294967266, %v3455
    %v3461 = vadd.s32 %v3460, 127
    %v3462 = vshll.u32 %v3461, 23
    %v3463 = vor.u32 4788187, %v3462
    %v3464 = vand.u32 2147483647, %v3463
    %v3466 = vcvt.s32.f32 %v3459
    %v3467 = vmul.f32 %v3466, %v3464
    %v3468 = vxor.u32 %v3467, 2147483648
    %v3469 = vsel %vm3386, %v3468, %v3467
    %v3470 = vsub.s32 4, %v3446
    %v3471 = vsel %vm3386, %v3470, %v3446
    %v3472 = vsel %vm3385, %v2411, %v3469
    %v3473 = vsel %vm3385, 0, %v3471
    %v3474 = vcosq.f32.pop %v3472
    %v3475 = vsinq.f32.pop %v3472
    %vm3476 = vweird.f32 %v2411
    %v3477 = vadd.s32 %v3473, 3
    %v3478 = vand.u32 %v3477, 3
    %vm3479 = vcmp.lt.s32.totalorder %v3478, 2
    %vm3480 = vcmp.eq.s32.totalorder %v3478, 0
    %v3481 = vxor.u32 %v3475, 2147483648
    %v3482 = vsel %vm3480, %v3474, %v3481
    %vm3483 = vcmp.eq.s32.totalorder %v3478, 2
    %v3484 = vxor.u32 %v3474, 2147483648
    %v3485 = vsel %vm3483, %v3484, %v3475
    %v3486 = vsel %vm3479, %v3482, %v3485
    %v3487 = vsel %vm3476, nan, %v3486
    %v3488 = vand.u32 2147483647, %v2417
    %vm3489 = vcmp.le.f32.partialorder %v3488, 0.7853982
    %vm3490 = vcmp.lt.s32.totalorder %v2417, 0
    %v3491 = vand.u32 %v2417, 2139095040
    %v3492 = vshrl.u32 %v3491, 23
    %v3493 = vsub.s32 %v3492, 127
    %v3494 = vand.u32 2147483647, %v2417
    %v3495 = vand.u32 %v3494, 8388607
    %v3496 = vor.u32 %v3495, 8388608
    %v3497 = vsub.s32 0, %v3496
    %v3498 = vadd.s32 %v3493, 1
    %vm3499 = vcmp.gt.s32.totalorder %v3498, 0
    %v3500 = vsel %vm3499, %v3498, 0
    %v3501 = vshrl.u32 %v3500, 5
    %v3502 = vand.u32 %v3500, 31
    %v3503 = vsub.s32 32, %v3502
    %v3504 = vshrl.u32 683565275, %v3503
    %v3505 = vshll.u32 683565275, %v3502
    %v3506 = vshrl.u32 2475754826, %v3503
    %v3507 = vor.u32 %v3505, %v3506
    %v3508 = vshll.u32 2475754826, %v3502
    %v3509 = vshrl.u32 2131351028, %v3503
    %v3510 = vor.u32 %v3508, %v3509
    %v3511 = vshll.u32 2131351028, %v3502
    %v3512 = vshrl.u32 2102212464, %v3503
    %v3513 = vor.u32 %v3511, %v3512
    %v3514 = vshll.u32 2102212464, %v3502
    %v3515 = vshrl.u32 920167782, %v3503
    %v3516 = vor.u32 %v3514, %v3515
    %v3517 = vshll.u32 920167782, %v3502
    %v3518 = vshrl.u32 1326507024, %v3503
    %v3519 = vor.u32 %v3517, %v3518
    %vm3520 = vcmp.lt.s32.totalorder %v3501, 1
    %vm3521 = vcmp.lt.s32.totalorder %v3501, 2
    %vm3522 = vcmp.lt.s32.totalorder %v3501, 3
    %vm3523 = vcmp.lt.s32.totalorder %v3501, 4
    %v3524 = vsel %vm3520, %v3504, %v3507
    %v3525 = vsel %vm3523, %v3513, 2102212464
    %v3526 = vsel %vm3522, %v3510, %v3525
    %v3527 = vsel %vm3521, %v3524, %v3526
    %v3528 = vsel %vm3520, %v3507, %v3510
    %v3529 = vsel %vm3523, %v3516, 920167782
    %v3530 = vsel %vm3522, %v3513, %v3529
    %v3531 = vsel %vm3521, %v3528, %v3530
    %v3532 = vsel %vm3520, %v3510, %v3513
    %v3533 = vsel %vm3523, %v3519, 1326507024
    %v3534 = vsel %vm3522, %v3516, %v3533
    %v3535 = vsel %vm3521, %v3532, %v3534
    %v3536 = vshll.u32 %v3496, 8
    %v3537 = vmul.u32.u64.compose %v3536, %v3535
    %v3538 = vextract.low.u32 %v3537
    %v3539 = vextract.high.u32 %v3537
    %v3540 = vmul.u32.u64.compose %v3536, %v3531
    %v3541 = vextract.low.u32 %v3540
    %v3542 = vextract.high.u32 %v3540
    %v3543 = vmul.u32 %v3536, %v3527
    %v3544 = vadd.s32 %v3539, %v3541
    %vm3545 = vc.u32 %v3539, %v3541
    %v3546 = vadd.s32 %v3542, 1
    %v3547 = vsel %vm3545, %v3546, %v3542
    %v3548 = vadd.s32 %v3543, %v3547
    %v3549 = vadd.s32 %v3548, 536870912
    %v3550 = vshrl.u32 %v3549, 30
    %v3551 = vshll.u32 %v3550, 30
    %v3552 = vsub.s32 %v3548, %v3551
    %vm3553 = vcmp.lt.s32.totalorder %v3552, 0
    %v3554 = vsub.s32 0, %v3552
    %v3555 = vsel %vm3553, %v3554, %v3552
    %v3556 = vclz %v3555
    %v3557 = vsub.s32 %v3556, 2
    %vm3558 = vcmp.gt.s32.totalorder 0, %v3557
    %v3559 = vsel %vm3558, 0, %v3557
    %v3560 = vsub.s32 32, %v3559
    %v3561 = vshll.u32 %v3552, %v3559
    %v3562 = vshrl.u32 %v3544, %v3560
    %v3563 = vor.u32 %v3561, %v3562
    %v3564 = vsub.s32 4294967266, %v3559
    %v3565 = vadd.s32 %v3564, 127
    %v3566 = vshll.u32 %v3565, 23
    %v3567 = vor.u32 4788187, %v3566
    %v3568 = vand.u32 2147483647, %v3567
    %v3570 = vcvt.s32.f32 %v3563
    %v3571 = vmul.f32 %v3570, %v3568
    %v3572 = vxor.u32 %v3571, 2147483648
    %v3573 = vsel %vm3490, %v3572, %v3571
    %v3574 = vsub.s32 4, %v3550
    %v3575 = vsel %vm3490, %v3574, %v3550
    %v3576 = vsel %vm3489, %v2417, %v3573
    %v3577 = vsel %vm3489, 0, %v3575
    %v3578 = vcosq.f32.pop %v3576
    %v3579 = vsinq.f32.pop %v3576
    %vm3580 = vweird.f32 %v2417
    %v3581 = vadd.s32 %v3577, 3
    %v3582 = vand.u32 %v3581, 3
    %vm3583 = vcmp.lt.s32.totalorder %v3582, 2
    %vm3584 = vcmp.eq.s32.totalorder %v3582, 0
    %v3585 = vxor.u32 %v3579, 2147483648
    %v3586 = vsel %vm3584, %v3578, %v3585
    %vm3587 = vcmp.eq.s32.totalorder %v3582, 2
    %v3588 = vxor.u32 %v3578, 2147483648
    %v3589 = vsel %vm3587, %v3588, %v3579
    %v3590 = vsel %vm3583, %v3586, %v3589
    %v3591 = vsel %vm3580, nan, %v3590
    %v3592 = vand.u32 2147483647, %v2423
    %vm3593 = vcmp.le.f32.partialorder %v3592, 0.7853982
    %vm3594 = vcmp.lt.s32.totalorder %v2423, 0
    %v3595 = vand.u32 %v2423, 2139095040
    %v3596 = vshrl.u32 %v3595, 23
    %v3597 = vsub.s32 %v3596, 127
    %v3598 = vand.u32 2147483647, %v2423
    %v3599 = vand.u32 %v3598, 8388607
    %v3600 = vor.u32 %v3599, 8388608
    %v3601 = vsub.s32 0, %v3600
    %v3602 = vadd.s32 %v3597, 1
    %vm3603 = vcmp.gt.s32.totalorder %v3602, 0
    %v3604 = vsel %vm3603, %v3602, 0
    %v3605 = vshrl.u32 %v3604, 5
    %v3606 = vand.u32 %v3604, 31
    %v3607 = vsub.s32 32, %v3606
    %v3608 = vshrl.u32 683565275, %v3607
    %v3609 = vshll.u32 683565275, %v3606
    %v3610 = vshrl.u32 2475754826, %v3607
    %v3611 = vor.u32 %v3609, %v3610
    %v3612 = vshll.u32 2475754826, %v3606
    %v3613 = vshrl.u32 2131351028, %v3607
    %v3614 = vor.u32 %v3612, %v3613
    %v3615 = vshll.u32 2131351028, %v3606
    %v3616 = vshrl.u32 2102212464, %v3607
    %v3617 = vor.u32 %v3615, %v3616
    %v3618 = vshll.u32 2102212464, %v3606
    %v3619 = vshrl.u32 920167782, %v3607
    %v3620 = vor.u32 %v3618, %v3619
    %v3621 = vshll.u32 920167782, %v3606
    %v3622 = vshrl.u32 1326507024, %v3607
    %v3623 = vor.u32 %v3621, %v3622
    %vm3624 = vcmp.lt.s32.totalorder %v3605, 1
    %vm3625 = vcmp.lt.s32.totalorder %v3605, 2
    %vm3626 = vcmp.lt.s32.totalorder %v3605, 3
    %vm3627 = vcmp.lt.s32.totalorder %v3605, 4
    %v3628 = vsel %vm3624, %v3608, %v3611
    %v3629 = vsel %vm3627, %v3617, 2102212464
    %v3630 = vsel %vm3626, %v3614, %v3629
    %v3631 = vsel %vm3625, %v3628, %v3630
    %v3632 = vsel %vm3624, %v3611, %v3614
    %v3633 = vsel %vm3627, %v3620, 920167782
    %v3634 = vsel %vm3626, %v3617, %v3633
    %v3635 = vsel %vm3625, %v3632, %v3634
    %v3636 = vsel %vm3624, %v3614, %v3617
    %v3637 = vsel %vm3627, %v3623, 1326507024
    %v3638 = vsel %vm3626, %v3620, %v3637
    %v3639 = vsel %vm3625, %v3636, %v3638
    %v3640 = vshll.u32 %v3600, 8
    %v3641 = vmul.u32.u64.compose %v3640, %v3639
    %v3642 = vextract.low.u32 %v3641
    %v3643 = vextract.high.u32 %v3641
    %v3644 = vmul.u32.u64.compose %v3640, %v3635
    %v3645 = vextract.low.u32 %v3644
    %v3646 = vextract.high.u32 %v3644
    %v3647 = vmul.u32 %v3640, %v3631
    %v3648 = vadd.s32 %v3643, %v3645
    %vm3649 = vc.u32 %v3643, %v3645
    %v3650 = vadd.s32 %v3646, 1
    %v3651 = vsel %vm3649, %v3650, %v3646
    %v3652 = vadd.s32 %v3647, %v3651
    %v3653 = vadd.s32 %v3652, 536870912
    %v3654 = vshrl.u32 %v3653, 30
    %v3655 = vshll.u32 %v3654, 30
    %v3656 = vsub.s32 %v3652, %v3655
    %vm3657 = vcmp.lt.s32.totalorder %v3656, 0
    %v3658 = vsub.s32 0, %v3656
    %v3659 = vsel %vm3657, %v3658, %v3656
    %v3660 = vclz %v3659
    %v3661 = vsub.s32 %v3660, 2
    %vm3662 = vcmp.gt.s32.totalorder 0, %v3661
    %v3663 = vsel %vm3662, 0, %v3661
    %v3664 = vsub.s32 32, %v3663
    %v3665 = vshll.u32 %v3656, %v3663
    %v3666 = vshrl.u32 %v3648, %v3664
    %v3667 = vor.u32 %v3665, %v3666
    %v3668 = vsub.s32 4294967266, %v3663
    %v3669 = vadd.s32 %v3668, 127
    %v3670 = vshll.u32 %v3669, 23
    %v3671 = vor.u32 4788187, %v3670
    %v3672 = vand.u32 2147483647, %v3671
    %v3674 = vcvt.s32.f32 %v3667
    %v3675 = vmul.f32 %v3674, %v3672
    %v3676 = vxor.u32 %v3675, 2147483648
    %v3677 = vsel %vm3594, %v3676, %v3675
    %v3678 = vsub.s32 4, %v3654
    %v3679 = vsel %vm3594, %v3678, %v3654
    %v3680 = vsel %vm3593, %v2423, %v3677
    %v3681 = vsel %vm3593, 0, %v3679
    %v3682 = vcosq.f32.pop %v3680
    %v3683 = vsinq.f32.pop %v3680
    %vm3684 = vweird.f32 %v2423
    %v3685 = vadd.s32 %v3681, 3
    %v3686 = vand.u32 %v3685, 3
    %vm3687 = vcmp.lt.s32.totalorder %v3686, 2
    %vm3688 = vcmp.eq.s32.totalorder %v3686, 0
    %v3689 = vxor.u32 %v3683, 2147483648
    %v3690 = vsel %vm3688, %v3682, %v3689
    %vm3691 = vcmp.eq.s32.totalorder %v3686, 2
    %v3692 = vxor.u32 %v3682, 2147483648
    %v3693 = vsel %vm3691, %v3692, %v3683
    %v3694 = vsel %vm3687, %v3690, %v3693
    %v3695 = vsel %vm3684, nan, %v3694
    %v3696 = vand.u32 2147483647, %v2429
    %vm3697 = vcmp.le.f32.partialorder %v3696, 0.7853982
    %vm3698 = vcmp.lt.s32.totalorder %v2429, 0
    %v3699 = vand.u32 %v2429, 2139095040
    %v3700 = vshrl.u32 %v3699, 23
    %v3701 = vsub.s32 %v3700, 127
    %v3702 = vand.u32 2147483647, %v2429
    %v3703 = vand.u32 %v3702, 8388607
    %v3704 = vor.u32 %v3703, 8388608
    %v3705 = vsub.s32 0, %v3704
    %v3706 = vadd.s32 %v3701, 1
    %vm3707 = vcmp.gt.s32.totalorder %v3706, 0
    %v3708 = vsel %vm3707, %v3706, 0
    %v3709 = vshrl.u32 %v3708, 5
    %v3710 = vand.u32 %v3708, 31
    %v3711 = vsub.s32 32, %v3710
    %v3712 = vshrl.u32 683565275, %v3711
    %v3713 = vshll.u32 683565275, %v3710
    %v3714 = vshrl.u32 2475754826, %v3711
    %v3715 = vor.u32 %v3713, %v3714
    %v3716 = vshll.u32 2475754826, %v3710
    %v3717 = vshrl.u32 2131351028, %v3711
    %v3718 = vor.u32 %v3716, %v3717
    %v3719 = vshll.u32 2131351028, %v3710
    %v3720 = vshrl.u32 2102212464, %v3711
    %v3721 = vor.u32 %v3719, %v3720
    %v3722 = vshll.u32 2102212464, %v3710
    %v3723 = vshrl.u32 920167782, %v3711
    %v3724 = vor.u32 %v3722, %v3723
    %v3725 = vshll.u32 920167782, %v3710
    %v3726 = vshrl.u32 1326507024, %v3711
    %v3727 = vor.u32 %v3725, %v3726
    %vm3728 = vcmp.lt.s32.totalorder %v3709, 1
    %vm3729 = vcmp.lt.s32.totalorder %v3709, 2
    %vm3730 = vcmp.lt.s32.totalorder %v3709, 3
    %vm3731 = vcmp.lt.s32.totalorder %v3709, 4
    %v3732 = vsel %vm3728, %v3712, %v3715
    %v3733 = vsel %vm3731, %v3721, 2102212464
    %v3734 = vsel %vm3730, %v3718, %v3733
    %v3735 = vsel %vm3729, %v3732, %v3734
    %v3736 = vsel %vm3728, %v3715, %v3718
    %v3737 = vsel %vm3731, %v3724, 920167782
    %v3738 = vsel %vm3730, %v3721, %v3737
    %v3739 = vsel %vm3729, %v3736, %v3738
    %v3740 = vsel %vm3728, %v3718, %v3721
    %v3741 = vsel %vm3731, %v3727, 1326507024
    %v3742 = vsel %vm3730, %v3724, %v3741
    %v3743 = vsel %vm3729, %v3740, %v3742
    %v3744 = vshll.u32 %v3704, 8
    %v3745 = vmul.u32.u64.compose %v3744, %v3743
    %v3746 = vextract.low.u32 %v3745
    %v3747 = vextract.high.u32 %v3745
    %v3748 = vmul.u32.u64.compose %v3744, %v3739
    %v3749 = vextract.low.u32 %v3748
    %v3750 = vextract.high.u32 %v3748
    %v3751 = vmul.u32 %v3744, %v3735
    %v3752 = vadd.s32 %v3747, %v3749
    %vm3753 = vc.u32 %v3747, %v3749
    %v3754 = vadd.s32 %v3750, 1
    %v3755 = vsel %vm3753, %v3754, %v3750
    %v3756 = vadd.s32 %v3751, %v3755
    %v3757 = vadd.s32 %v3756, 536870912
    %v3758 = vshrl.u32 %v3757, 30
    %v3759 = vshll.u32 %v3758, 30
    %v3760 = vsub.s32 %v3756, %v3759
    %vm3761 = vcmp.lt.s32.totalorder %v3760, 0
    %v3762 = vsub.s32 0, %v3760
    %v3763 = vsel %vm3761, %v3762, %v3760
    %v3764 = vclz %v3763
    %v3765 = vsub.s32 %v3764, 2
    %vm3766 = vcmp.gt.s32.totalorder 0, %v3765
    %v3767 = vsel %vm3766, 0, %v3765
    %v3768 = vsub.s32 32, %v3767
    %v3769 = vshll.u32 %v3760, %v3767
    %v3770 = vshrl.u32 %v3752, %v3768
    %v3771 = vor.u32 %v3769, %v3770
    %v3772 = vsub.s32 4294967266, %v3767
    %v3773 = vadd.s32 %v3772, 127
    %v3774 = vshll.u32 %v3773, 23
    %v3775 = vor.u32 4788187, %v3774
    %v3776 = vand.u32 2147483647, %v3775
    %v3778 = vcvt.s32.f32 %v3771
    %v3779 = vmul.f32 %v3778, %v3776
    %v3780 = vxor.u32 %v3779, 2147483648
    %v3781 = vsel %vm3698, %v3780, %v3779
    %v3782 = vsub.s32 4, %v3758
    %v3783 = vsel %vm3698, %v3782, %v3758
    %v3784 = vsel %vm3697, %v2429, %v3781
    %v3785 = vsel %vm3697, 0, %v3783
    %v3786 = vcosq.f32.pop %v3784
    %v3787 = vsinq.f32.pop %v3784
    %vm3788 = vweird.f32 %v2429
    %v3789 = vadd.s32 %v3785, 3
    %v3790 = vand.u32 %v3789, 3
    %vm3791 = vcmp.lt.s32.totalorder %v3790, 2
    %vm3792 = vcmp.eq.s32.totalorder %v3790, 0
    %v3793 = vxor.u32 %v3787, 2147483648
    %v3794 = vsel %vm3792, %v3786, %v3793
    %vm3795 = vcmp.eq.s32.totalorder %v3790, 2
    %v3796 = vxor.u32 %v3786, 2147483648
    %v3797 = vsel %vm3795, %v3796, %v3787
    %v3798 = vsel %vm3791, %v3794, %v3797
    %v3799 = vsel %vm3788, nan, %v3798
    %v3800 = vand.u32 2147483647, %v2435
    %vm3801 = vcmp.le.f32.partialorder %v3800, 0.7853982
    %vm3802 = vcmp.lt.s32.totalorder %v2435, 0
    %v3803 = vand.u32 %v2435, 2139095040
    %v3804 = vshrl.u32 %v3803, 23
    %v3805 = vsub.s32 %v3804, 127
    %v3806 = vand.u32 2147483647, %v2435
    %v3807 = vand.u32 %v3806, 8388607
    %v3808 = vor.u32 %v3807, 8388608
    %v3809 = vsub.s32 0, %v3808
    %v3810 = vadd.s32 %v3805, 1
    %vm3811 = vcmp.gt.s32.totalorder %v3810, 0
    %v3812 = vsel %vm3811, %v3810, 0
    %v3813 = vshrl.u32 %v3812, 5
    %v3814 = vand.u32 %v3812, 31
    %v3815 = vsub.s32 32, %v3814
    %v3816 = vshrl.u32 683565275, %v3815
    %v3817 = vshll.u32 683565275, %v3814
    %v3818 = vshrl.u32 2475754826, %v3815
    %v3819 = vor.u32 %v3817, %v3818
    %v3820 = vshll.u32 2475754826, %v3814
    %v3821 = vshrl.u32 2131351028, %v3815
    %v3822 = vor.u32 %v3820, %v3821
    %v3823 = vshll.u32 2131351028, %v3814
    %v3824 = vshrl.u32 2102212464, %v3815
    %v3825 = vor.u32 %v3823, %v3824
    %v3826 = vshll.u32 2102212464, %v3814
    %v3827 = vshrl.u32 920167782, %v3815
    %v3828 = vor.u32 %v3826, %v3827
    %v3829 = vshll.u32 920167782, %v3814
    %v3830 = vshrl.u32 1326507024, %v3815
    %v3831 = vor.u32 %v3829, %v3830
    %vm3832 = vcmp.lt.s32.totalorder %v3813, 1
    %vm3833 = vcmp.lt.s32.totalorder %v3813, 2
    %vm3834 = vcmp.lt.s32.totalorder %v3813, 3
    %vm3835 = vcmp.lt.s32.totalorder %v3813, 4
    %v3836 = vsel %vm3832, %v3816, %v3819
    %v3837 = vsel %vm3835, %v3825, 2102212464
    %v3838 = vsel %vm3834, %v3822, %v3837
    %v3839 = vsel %vm3833, %v3836, %v3838
    %v3840 = vsel %vm3832, %v3819, %v3822
    %v3841 = vsel %vm3835, %v3828, 920167782
    %v3842 = vsel %vm3834, %v3825, %v3841
    %v3843 = vsel %vm3833, %v3840, %v3842
    %v3844 = vsel %vm3832, %v3822, %v3825
    %v3845 = vsel %vm3835, %v3831, 1326507024
    %v3846 = vsel %vm3834, %v3828, %v3845
    %v3847 = vsel %vm3833, %v3844, %v3846
    %v3848 = vshll.u32 %v3808, 8
    %v3849 = vmul.u32.u64.compose %v3848, %v3847
    %v3850 = vextract.low.u32 %v3849
    %v3851 = vextract.high.u32 %v3849
    %v3852 = vmul.u32.u64.compose %v3848, %v3843
    %v3853 = vextract.low.u32 %v3852
    %v3854 = vextract.high.u32 %v3852
    %v3855 = vmul.u32 %v3848, %v3839
    %v3856 = vadd.s32 %v3851, %v3853
    %vm3857 = vc.u32 %v3851, %v3853
    %v3858 = vadd.s32 %v3854, 1
    %v3859 = vsel %vm3857, %v3858, %v3854
    %v3860 = vadd.s32 %v3855, %v3859
    %v3861 = vadd.s32 %v3860, 536870912
    %v3862 = vshrl.u32 %v3861, 30
    %v3863 = vshll.u32 %v3862, 30
    %v3864 = vsub.s32 %v3860, %v3863
    %vm3865 = vcmp.lt.s32.totalorder %v3864, 0
    %v3866 = vsub.s32 0, %v3864
    %v3867 = vsel %vm3865, %v3866, %v3864
    %v3868 = vclz %v3867
    %v3869 = vsub.s32 %v3868, 2
    %vm3870 = vcmp.gt.s32.totalorder 0, %v3869
    %v3871 = vsel %vm3870, 0, %v3869
    %v3872 = vsub.s32 32, %v3871
    %v3873 = vshll.u32 %v3864, %v3871
    %v3874 = vshrl.u32 %v3856, %v3872
    %v3875 = vor.u32 %v3873, %v3874
    %v3876 = vsub.s32 4294967266, %v3871
    %v3877 = vadd.s32 %v3876, 127
    %v3878 = vshll.u32 %v3877, 23
    %v3879 = vor.u32 4788187, %v3878
    %v3880 = vand.u32 2147483647, %v3879
    %v3882 = vcvt.s32.f32 %v3875
    %v3883 = vmul.f32 %v3882, %v3880
    %v3884 = vxor.u32 %v3883, 2147483648
    %v3885 = vsel %vm3802, %v3884, %v3883
    %v3886 = vsub.s32 4, %v3862
    %v3887 = vsel %vm3802, %v3886, %v3862
    %v3888 = vsel %vm3801, %v2435, %v3885
    %v3889 = vsel %vm3801, 0, %v3887
    %v3890 = vcosq.f32.pop %v3888
    %v3891 = vsinq.f32.pop %v3888
    %vm3892 = vweird.f32 %v2435
    %v3893 = vadd.s32 %v3889, 3
    %v3894 = vand.u32 %v3893, 3
    %vm3895 = vcmp.lt.s32.totalorder %v3894, 2
    %vm3896 = vcmp.eq.s32.totalorder %v3894, 0
    %v3897 = vxor.u32 %v3891, 2147483648
    %v3898 = vsel %vm3896, %v3890, %v3897
    %vm3899 = vcmp.eq.s32.totalorder %v3894, 2
    %v3900 = vxor.u32 %v3890, 2147483648
    %v3901 = vsel %vm3899, %v3900, %v3891
    %v3902 = vsel %vm3895, %v3898, %v3901
    %v3903 = vsel %vm3892, nan, %v3902
    %v3904 = vand.u32 2147483647, %v2441
    %vm3905 = vcmp.le.f32.partialorder %v3904, 0.7853982
    %vm3906 = vcmp.lt.s32.totalorder %v2441, 0
    %v3907 = vand.u32 %v2441, 2139095040
    %v3908 = vshrl.u32 %v3907, 23
    %v3909 = vsub.s32 %v3908, 127
    %v3910 = vand.u32 2147483647, %v2441
    %v3911 = vand.u32 %v3910, 8388607
    %v3912 = vor.u32 %v3911, 8388608
    %v3913 = vsub.s32 0, %v3912
    %v3914 = vadd.s32 %v3909, 1
    %vm3915 = vcmp.gt.s32.totalorder %v3914, 0
    %v3916 = vsel %vm3915, %v3914, 0
    %v3917 = vshrl.u32 %v3916, 5
    %v3918 = vand.u32 %v3916, 31
    %v3919 = vsub.s32 32, %v3918
    %v3920 = vshrl.u32 683565275, %v3919
    %v3921 = vshll.u32 683565275, %v3918
    %v3922 = vshrl.u32 2475754826, %v3919
    %v3923 = vor.u32 %v3921, %v3922
    %v3924 = vshll.u32 2475754826, %v3918
    %v3925 = vshrl.u32 2131351028, %v3919
    %v3926 = vor.u32 %v3924, %v3925
    %v3927 = vshll.u32 2131351028, %v3918
    %v3928 = vshrl.u32 2102212464, %v3919
    %v3929 = vor.u32 %v3927, %v3928
    %v3930 = vshll.u32 2102212464, %v3918
    %v3931 = vshrl.u32 920167782, %v3919
    %v3932 = vor.u32 %v3930, %v3931
    %v3933 = vshll.u32 920167782, %v3918
    %v3934 = vshrl.u32 1326507024, %v3919
    %v3935 = vor.u32 %v3933, %v3934
    %vm3936 = vcmp.lt.s32.totalorder %v3917, 1
    %vm3937 = vcmp.lt.s32.totalorder %v3917, 2
    %vm3938 = vcmp.lt.s32.totalorder %v3917, 3
    %vm3939 = vcmp.lt.s32.totalorder %v3917, 4
    %v3940 = vsel %vm3936, %v3920, %v3923
    %v3941 = vsel %vm3939, %v3929, 2102212464
    %v3942 = vsel %vm3938, %v3926, %v3941
    %v3943 = vsel %vm3937, %v3940, %v3942
    %v3944 = vsel %vm3936, %v3923, %v3926
    %v3945 = vsel %vm3939, %v3932, 920167782
    %v3946 = vsel %vm3938, %v3929, %v3945
    %v3947 = vsel %vm3937, %v3944, %v3946
    %v3948 = vsel %vm3936, %v3926, %v3929
    %v3949 = vsel %vm3939, %v3935, 1326507024
    %v3950 = vsel %vm3938, %v3932, %v3949
    %v3951 = vsel %vm3937, %v3948, %v3950
    %v3952 = vshll.u32 %v3912, 8
    %v3953 = vmul.u32.u64.compose %v3952, %v3951
    %v3954 = vextract.low.u32 %v3953
    %v3955 = vextract.high.u32 %v3953
    %v3956 = vmul.u32.u64.compose %v3952, %v3947
    %v3957 = vextract.low.u32 %v3956
    %v3958 = vextract.high.u32 %v3956
    %v3959 = vmul.u32 %v3952, %v3943
    %v3960 = vadd.s32 %v3955, %v3957
    %vm3961 = vc.u32 %v3955, %v3957
    %v3962 = vadd.s32 %v3958, 1
    %v3963 = vsel %vm3961, %v3962, %v3958
    %v3964 = vadd.s32 %v3959, %v3963
    %v3965 = vadd.s32 %v3964, 536870912
    %v3966 = vshrl.u32 %v3965, 30
    %v3967 = vshll.u32 %v3966, 30
    %v3968 = vsub.s32 %v3964, %v3967
    %vm3969 = vcmp.lt.s32.totalorder %v3968, 0
    %v3970 = vsub.s32 0, %v3968
    %v3971 = vsel %vm3969, %v3970, %v3968
    %v3972 = vclz %v3971
    %v3973 = vsub.s32 %v3972, 2
    %vm3974 = vcmp.gt.s32.totalorder 0, %v3973
    %v3975 = vsel %vm3974, 0, %v3973
    %v3976 = vsub.s32 32, %v3975
    %v3977 = vshll.u32 %v3968, %v3975
    %v3978 = vshrl.u32 %v3960, %v3976
    %v3979 = vor.u32 %v3977, %v3978
    %v3980 = vsub.s32 4294967266, %v3975
    %v3981 = vadd.s32 %v3980, 127
    %v3982 = vshll.u32 %v3981, 23
    %v3983 = vor.u32 4788187, %v3982
    %v3984 = vand.u32 2147483647, %v3983
    %v3986 = vcvt.s32.f32 %v3979
    %v3987 = vmul.f32 %v3986, %v3984
    %v3988 = vxor.u32 %v3987, 2147483648
    %v3989 = vsel %vm3906, %v3988, %v3987
    %v3990 = vsub.s32 4, %v3966
    %v3991 = vsel %vm3906, %v3990, %v3966
    %v3992 = vsel %vm3905, %v2441, %v3989
    %v3993 = vsel %vm3905, 0, %v3991
    %v3994 = vcosq.f32.pop %v3992
    %v3995 = vsinq.f32.pop %v3992
    %vm3996 = vweird.f32 %v2441
    %v3997 = vadd.s32 %v3993, 3
    %v3998 = vand.u32 %v3997, 3
    %vm3999 = vcmp.lt.s32.totalorder %v3998, 2
    %vm4000 = vcmp.eq.s32.totalorder %v3998, 0
    %v4001 = vxor.u32 %v3995, 2147483648
    %v4002 = vsel %vm4000, %v3994, %v4001
    %vm4003 = vcmp.eq.s32.totalorder %v3998, 2
    %v4004 = vxor.u32 %v3994, 2147483648
    %v4005 = vsel %vm4003, %v4004, %v3995
    %v4006 = vsel %vm3999, %v4002, %v4005
    %v4007 = vsel %vm3996, nan, %v4006
    %v4008 = vand.u32 2147483647, %v2447
    %vm4009 = vcmp.le.f32.partialorder %v4008, 0.7853982
    %vm4010 = vcmp.lt.s32.totalorder %v2447, 0
    %v4011 = vand.u32 %v2447, 2139095040
    %v4012 = vshrl.u32 %v4011, 23
    %v4013 = vsub.s32 %v4012, 127
    %v4014 = vand.u32 2147483647, %v2447
    %v4015 = vand.u32 %v4014, 8388607
    %v4016 = vor.u32 %v4015, 8388608
    %v4017 = vsub.s32 0, %v4016
    %v4018 = vadd.s32 %v4013, 1
    %vm4019 = vcmp.gt.s32.totalorder %v4018, 0
    %v4020 = vsel %vm4019, %v4018, 0
    %v4021 = vshrl.u32 %v4020, 5
    %v4022 = vand.u32 %v4020, 31
    %v4023 = vsub.s32 32, %v4022
    %v4024 = vshrl.u32 683565275, %v4023
    %v4025 = vshll.u32 683565275, %v4022
    %v4026 = vshrl.u32 2475754826, %v4023
    %v4027 = vor.u32 %v4025, %v4026
    %v4028 = vshll.u32 2475754826, %v4022
    %v4029 = vshrl.u32 2131351028, %v4023
    %v4030 = vor.u32 %v4028, %v4029
    %v4031 = vshll.u32 2131351028, %v4022
    %v4032 = vshrl.u32 2102212464, %v4023
    %v4033 = vor.u32 %v4031, %v4032
    %v4034 = vshll.u32 2102212464, %v4022
    %v4035 = vshrl.u32 920167782, %v4023
    %v4036 = vor.u32 %v4034, %v4035
    %v4037 = vshll.u32 920167782, %v4022
    %v4038 = vshrl.u32 1326507024, %v4023
    %v4039 = vor.u32 %v4037, %v4038
    %vm4040 = vcmp.lt.s32.totalorder %v4021, 1
    %vm4041 = vcmp.lt.s32.totalorder %v4021, 2
    %vm4042 = vcmp.lt.s32.totalorder %v4021, 3
    %vm4043 = vcmp.lt.s32.totalorder %v4021, 4
    %v4044 = vsel %vm4040, %v4024, %v4027
    %v4045 = vsel %vm4043, %v4033, 2102212464
    %v4046 = vsel %vm4042, %v4030, %v4045
    %v4047 = vsel %vm4041, %v4044, %v4046
    %v4048 = vsel %vm4040, %v4027, %v4030
    %v4049 = vsel %vm4043, %v4036, 920167782
    %v4050 = vsel %vm4042, %v4033, %v4049
    %v4051 = vsel %vm4041, %v4048, %v4050
    %v4052 = vsel %vm4040, %v4030, %v4033
    %v4053 = vsel %vm4043, %v4039, 1326507024
    %v4054 = vsel %vm4042, %v4036, %v4053
    %v4055 = vsel %vm4041, %v4052, %v4054
    %v4056 = vshll.u32 %v4016, 8
    %v4057 = vmul.u32.u64.compose %v4056, %v4055
    %v4058 = vextract.low.u32 %v4057
    %v4059 = vextract.high.u32 %v4057
    %v4060 = vmul.u32.u64.compose %v4056, %v4051
    %v4061 = vextract.low.u32 %v4060
    %v4062 = vextract.high.u32 %v4060
    %v4063 = vmul.u32 %v4056, %v4047
    %v4064 = vadd.s32 %v4059, %v4061
    %vm4065 = vc.u32 %v4059, %v4061
    %v4066 = vadd.s32 %v4062, 1
    %v4067 = vsel %vm4065, %v4066, %v4062
    %v4068 = vadd.s32 %v4063, %v4067
    %v4069 = vadd.s32 %v4068, 536870912
    %v4070 = vshrl.u32 %v4069, 30
    %v4071 = vshll.u32 %v4070, 30
    %v4072 = vsub.s32 %v4068, %v4071
    %vm4073 = vcmp.lt.s32.totalorder %v4072, 0
    %v4074 = vsub.s32 0, %v4072
    %v4075 = vsel %vm4073, %v4074, %v4072
    %v4076 = vclz %v4075
    %v4077 = vsub.s32 %v4076, 2
    %vm4078 = vcmp.gt.s32.totalorder 0, %v4077
    %v4079 = vsel %vm4078, 0, %v4077
    %v4080 = vsub.s32 32, %v4079
    %v4081 = vshll.u32 %v4072, %v4079
    %v4082 = vshrl.u32 %v4064, %v4080
    %v4083 = vor.u32 %v4081, %v4082
    %v4084 = vsub.s32 4294967266, %v4079
    %v4085 = vadd.s32 %v4084, 127
    %v4086 = vshll.u32 %v4085, 23
    %v4087 = vor.u32 4788187, %v4086
    %v4088 = vand.u32 2147483647, %v4087
    %v4090 = vcvt.s32.f32 %v4083
    %v4091 = vmul.f32 %v4090, %v4088
    %v4092 = vxor.u32 %v4091, 2147483648
    %v4093 = vsel %vm4010, %v4092, %v4091
    %v4094 = vsub.s32 4, %v4070
    %v4095 = vsel %vm4010, %v4094, %v4070
    %v4096 = vsel %vm4009, %v2447, %v4093
    %v4097 = vsel %vm4009, 0, %v4095
    %v4098 = vcosq.f32.pop %v4096
    %v4099 = vsinq.f32.pop %v4096
    %vm4100 = vweird.f32 %v2447
    %v4101 = vadd.s32 %v4097, 3
    %v4102 = vand.u32 %v4101, 3
    %vm4103 = vcmp.lt.s32.totalorder %v4102, 2
    %vm4104 = vcmp.eq.s32.totalorder %v4102, 0
    %v4105 = vxor.u32 %v4099, 2147483648
    %v4106 = vsel %vm4104, %v4098, %v4105
    %vm4107 = vcmp.eq.s32.totalorder %v4102, 2
    %v4108 = vxor.u32 %v4098, 2147483648
    %v4109 = vsel %vm4107, %v4108, %v4099
    %v4110 = vsel %vm4103, %v4106, %v4109
    %v4111 = vsel %vm4100, nan, %v4110
    %v4112 = vand.u32 2147483647, %v2453
    %vm4113 = vcmp.le.f32.partialorder %v4112, 0.7853982
    %vm4114 = vcmp.lt.s32.totalorder %v2453, 0
    %v4115 = vand.u32 %v2453, 2139095040
    %v4116 = vshrl.u32 %v4115, 23
    %v4117 = vsub.s32 %v4116, 127
    %v4118 = vand.u32 2147483647, %v2453
    %v4119 = vand.u32 %v4118, 8388607
    %v4120 = vor.u32 %v4119, 8388608
    %v4121 = vsub.s32 0, %v4120
    %v4122 = vadd.s32 %v4117, 1
    %vm4123 = vcmp.gt.s32.totalorder %v4122, 0
    %v4124 = vsel %vm4123, %v4122, 0
    %v4125 = vshrl.u32 %v4124, 5
    %v4126 = vand.u32 %v4124, 31
    %v4127 = vsub.s32 32, %v4126
    %v4128 = vshrl.u32 683565275, %v4127
    %v4129 = vshll.u32 683565275, %v4126
    %v4130 = vshrl.u32 2475754826, %v4127
    %v4131 = vor.u32 %v4129, %v4130
    %v4132 = vshll.u32 2475754826, %v4126
    %v4133 = vshrl.u32 2131351028, %v4127
    %v4134 = vor.u32 %v4132, %v4133
    %v4135 = vshll.u32 2131351028, %v4126
    %v4136 = vshrl.u32 2102212464, %v4127
    %v4137 = vor.u32 %v4135, %v4136
    %v4138 = vshll.u32 2102212464, %v4126
    %v4139 = vshrl.u32 920167782, %v4127
    %v4140 = vor.u32 %v4138, %v4139
    %v4141 = vshll.u32 920167782, %v4126
    %v4142 = vshrl.u32 1326507024, %v4127
    %v4143 = vor.u32 %v4141, %v4142
    %vm4144 = vcmp.lt.s32.totalorder %v4125, 1
    %vm4145 = vcmp.lt.s32.totalorder %v4125, 2
    %vm4146 = vcmp.lt.s32.totalorder %v4125, 3
    %vm4147 = vcmp.lt.s32.totalorder %v4125, 4
    %v4148 = vsel %vm4144, %v4128, %v4131
    %v4149 = vsel %vm4147, %v4137, 2102212464
    %v4150 = vsel %vm4146, %v4134, %v4149
    %v4151 = vsel %vm4145, %v4148, %v4150
    %v4152 = vsel %vm4144, %v4131, %v4134
    %v4153 = vsel %vm4147, %v4140, 920167782
    %v4154 = vsel %vm4146, %v4137, %v4153
    %v4155 = vsel %vm4145, %v4152, %v4154
    %v4156 = vsel %vm4144, %v4134, %v4137
    %v4157 = vsel %vm4147, %v4143, 1326507024
    %v4158 = vsel %vm4146, %v4140, %v4157
    %v4159 = vsel %vm4145, %v4156, %v4158
    %v4160 = vshll.u32 %v4120, 8
    %v4161 = vmul.u32.u64.compose %v4160, %v4159
    %v4162 = vextract.low.u32 %v4161
    %v4163 = vextract.high.u32 %v4161
    %v4164 = vmul.u32.u64.compose %v4160, %v4155
    %v4165 = vextract.low.u32 %v4164
    %v4166 = vextract.high.u32 %v4164
    %v4167 = vmul.u32 %v4160, %v4151
    %v4168 = vadd.s32 %v4163, %v4165
    %vm4169 = vc.u32 %v4163, %v4165
    %v4170 = vadd.s32 %v4166, 1
    %v4171 = vsel %vm4169, %v4170, %v4166
    %v4172 = vadd.s32 %v4167, %v4171
    %v4173 = vadd.s32 %v4172, 536870912
    %v4174 = vshrl.u32 %v4173, 30
    %v4175 = vshll.u32 %v4174, 30
    %v4176 = vsub.s32 %v4172, %v4175
    %vm4177 = vcmp.lt.s32.totalorder %v4176, 0
    %v4178 = vsub.s32 0, %v4176
    %v4179 = vsel %vm4177, %v4178, %v4176
    %v4180 = vclz %v4179
    %v4181 = vsub.s32 %v4180, 2
    %vm4182 = vcmp.gt.s32.totalorder 0, %v4181
    %v4183 = vsel %vm4182, 0, %v4181
    %v4184 = vsub.s32 32, %v4183
    %v4185 = vshll.u32 %v4176, %v4183
    %v4186 = vshrl.u32 %v4168, %v4184
    %v4187 = vor.u32 %v4185, %v4186
    %v4188 = vsub.s32 4294967266, %v4183
    %v4189 = vadd.s32 %v4188, 127
    %v4190 = vshll.u32 %v4189, 23
    %v4191 = vor.u32 4788187, %v4190
    %v4192 = vand.u32 2147483647, %v4191
    %v4194 = vcvt.s32.f32 %v4187
    %v4195 = vmul.f32 %v4194, %v4192
    %v4196 = vxor.u32 %v4195, 2147483648
    %v4197 = vsel %vm4114, %v4196, %v4195
    %v4198 = vsub.s32 4, %v4174
    %v4199 = vsel %vm4114, %v4198, %v4174
    %v4200 = vsel %vm4113, %v2453, %v4197
    %v4201 = vsel %vm4113, 0, %v4199
    %v4202 = vcosq.f32.pop %v4200
    %v4203 = vsinq.f32.pop %v4200
    %vm4204 = vweird.f32 %v2453
    %v4205 = vadd.s32 %v4201, 3
    %v4206 = vand.u32 %v4205, 3
    %vm4207 = vcmp.lt.s32.totalorder %v4206, 2
    %vm4208 = vcmp.eq.s32.totalorder %v4206, 0
    %v4209 = vxor.u32 %v4203, 2147483648
    %v4210 = vsel %vm4208, %v4202, %v4209
    %vm4211 = vcmp.eq.s32.totalorder %v4206, 2
    %v4212 = vxor.u32 %v4202, 2147483648
    %v4213 = vsel %vm4211, %v4212, %v4203
    %v4214 = vsel %vm4207, %v4210, %v4213
    %v4215 = vsel %vm4204, nan, %v4214
    %v4216 = vand.u32 2147483647, %v2459
    %vm4217 = vcmp.le.f32.partialorder %v4216, 0.7853982
    %vm4218 = vcmp.lt.s32.totalorder %v2459, 0
    %v4219 = vand.u32 %v2459, 2139095040
    %v4220 = vshrl.u32 %v4219, 23
    %v4221 = vsub.s32 %v4220, 127
    %v4222 = vand.u32 2147483647, %v2459
    %v4223 = vand.u32 %v4222, 8388607
    %v4224 = vor.u32 %v4223, 8388608
    %v4225 = vsub.s32 0, %v4224
    %v4226 = vadd.s32 %v4221, 1
    %vm4227 = vcmp.gt.s32.totalorder %v4226, 0
    %v4228 = vsel %vm4227, %v4226, 0
    %v4229 = vshrl.u32 %v4228, 5
    %v4230 = vand.u32 %v4228, 31
    %v4231 = vsub.s32 32, %v4230
    %v4232 = vshrl.u32 683565275, %v4231
    %v4233 = vshll.u32 683565275, %v4230
    %v4234 = vshrl.u32 2475754826, %v4231
    %v4235 = vor.u32 %v4233, %v4234
    %v4236 = vshll.u32 2475754826, %v4230
    %v4237 = vshrl.u32 2131351028, %v4231
    %v4238 = vor.u32 %v4236, %v4237
    %v4239 = vshll.u32 2131351028, %v4230
    %v4240 = vshrl.u32 2102212464, %v4231
    %v4241 = vor.u32 %v4239, %v4240
    %v4242 = vshll.u32 2102212464, %v4230
    %v4243 = vshrl.u32 920167782, %v4231
    %v4244 = vor.u32 %v4242, %v4243
    %v4245 = vshll.u32 920167782, %v4230
    %v4246 = vshrl.u32 1326507024, %v4231
    %v4247 = vor.u32 %v4245, %v4246
    %vm4248 = vcmp.lt.s32.totalorder %v4229, 1
    %vm4249 = vcmp.lt.s32.totalorder %v4229, 2
    %vm4250 = vcmp.lt.s32.totalorder %v4229, 3
    %vm4251 = vcmp.lt.s32.totalorder %v4229, 4
    %v4252 = vsel %vm4248, %v4232, %v4235
    %v4253 = vsel %vm4251, %v4241, 2102212464
    %v4254 = vsel %vm4250, %v4238, %v4253
    %v4255 = vsel %vm4249, %v4252, %v4254
    %v4256 = vsel %vm4248, %v4235, %v4238
    %v4257 = vsel %vm4251, %v4244, 920167782
    %v4258 = vsel %vm4250, %v4241, %v4257
    %v4259 = vsel %vm4249, %v4256, %v4258
    %v4260 = vsel %vm4248, %v4238, %v4241
    %v4261 = vsel %vm4251, %v4247, 1326507024
    %v4262 = vsel %vm4250, %v4244, %v4261
    %v4263 = vsel %vm4249, %v4260, %v4262
    %v4264 = vshll.u32 %v4224, 8
    %v4265 = vmul.u32.u64.compose %v4264, %v4263
    %v4266 = vextract.low.u32 %v4265
    %v4267 = vextract.high.u32 %v4265
    %v4268 = vmul.u32.u64.compose %v4264, %v4259
    %v4269 = vextract.low.u32 %v4268
    %v4270 = vextract.high.u32 %v4268
    %v4271 = vmul.u32 %v4264, %v4255
    %v4272 = vadd.s32 %v4267, %v4269
    %vm4273 = vc.u32 %v4267, %v4269
    %v4274 = vadd.s32 %v4270, 1
    %v4275 = vsel %vm4273, %v4274, %v4270
    %v4276 = vadd.s32 %v4271, %v4275
    %v4277 = vadd.s32 %v4276, 536870912
    %v4278 = vshrl.u32 %v4277, 30
    %v4279 = vshll.u32 %v4278, 30
    %v4280 = vsub.s32 %v4276, %v4279
    %vm4281 = vcmp.lt.s32.totalorder %v4280, 0
    %v4282 = vsub.s32 0, %v4280
    %v4283 = vsel %vm4281, %v4282, %v4280
    %v4284 = vclz %v4283
    %v4285 = vsub.s32 %v4284, 2
    %vm4286 = vcmp.gt.s32.totalorder 0, %v4285
    %v4287 = vsel %vm4286, 0, %v4285
    %v4288 = vsub.s32 32, %v4287
    %v4289 = vshll.u32 %v4280, %v4287
    %v4290 = vshrl.u32 %v4272, %v4288
    %v4291 = vor.u32 %v4289, %v4290
    %v4292 = vsub.s32 4294967266, %v4287
    %v4293 = vadd.s32 %v4292, 127
    %v4294 = vshll.u32 %v4293, 23
    %v4295 = vor.u32 4788187, %v4294
    %v4296 = vand.u32 2147483647, %v4295
    %v4298 = vcvt.s32.f32 %v4291
    %v4299 = vmul.f32 %v4298, %v4296
    %v4300 = vxor.u32 %v4299, 2147483648
    %v4301 = vsel %vm4218, %v4300, %v4299
    %v4302 = vsub.s32 4, %v4278
    %v4303 = vsel %vm4218, %v4302, %v4278
    %v4304 = vsel %vm4217, %v2459, %v4301
    %v4305 = vsel %vm4217, 0, %v4303
    %v4306 = vcosq.f32.pop %v4304
    %v4307 = vsinq.f32.pop %v4304
    %vm4308 = vweird.f32 %v2459
    %v4309 = vadd.s32 %v4305, 3
    %v4310 = vand.u32 %v4309, 3
    %vm4311 = vcmp.lt.s32.totalorder %v4310, 2
    %vm4312 = vcmp.eq.s32.totalorder %v4310, 0
    %v4313 = vxor.u32 %v4307, 2147483648
    %v4314 = vsel %vm4312, %v4306, %v4313
    %vm4315 = vcmp.eq.s32.totalorder %v4310, 2
    %v4316 = vxor.u32 %v4306, 2147483648
    %v4317 = vsel %vm4315, %v4316, %v4307
    %v4318 = vsel %vm4311, %v4314, %v4317
    %v4319 = vsel %vm4308, nan, %v4318
    %v4320 = vand.u32 2147483647, %v2465
    %vm4321 = vcmp.le.f32.partialorder %v4320, 0.7853982
    %vm4322 = vcmp.lt.s32.totalorder %v2465, 0
    %v4323 = vand.u32 %v2465, 2139095040
    %v4324 = vshrl.u32 %v4323, 23
    %v4325 = vsub.s32 %v4324, 127
    %v4326 = vand.u32 2147483647, %v2465
    %v4327 = vand.u32 %v4326, 8388607
    %v4328 = vor.u32 %v4327, 8388608
    %v4329 = vsub.s32 0, %v4328
    %v4330 = vadd.s32 %v4325, 1
    %vm4331 = vcmp.gt.s32.totalorder %v4330, 0
    %v4332 = vsel %vm4331, %v4330, 0
    %v4333 = vshrl.u32 %v4332, 5
    %v4334 = vand.u32 %v4332, 31
    %v4335 = vsub.s32 32, %v4334
    %v4336 = vshrl.u32 683565275, %v4335
    %v4337 = vshll.u32 683565275, %v4334
    %v4338 = vshrl.u32 2475754826, %v4335
    %v4339 = vor.u32 %v4337, %v4338
    %v4340 = vshll.u32 2475754826, %v4334
    %v4341 = vshrl.u32 2131351028, %v4335
    %v4342 = vor.u32 %v4340, %v4341
    %v4343 = vshll.u32 2131351028, %v4334
    %v4344 = vshrl.u32 2102212464, %v4335
    %v4345 = vor.u32 %v4343, %v4344
    %v4346 = vshll.u32 2102212464, %v4334
    %v4347 = vshrl.u32 920167782, %v4335
    %v4348 = vor.u32 %v4346, %v4347
    %v4349 = vshll.u32 920167782, %v4334
    %v4350 = vshrl.u32 1326507024, %v4335
    %v4351 = vor.u32 %v4349, %v4350
    %vm4352 = vcmp.lt.s32.totalorder %v4333, 1
    %vm4353 = vcmp.lt.s32.totalorder %v4333, 2
    %vm4354 = vcmp.lt.s32.totalorder %v4333, 3
    %vm4355 = vcmp.lt.s32.totalorder %v4333, 4
    %v4356 = vsel %vm4352, %v4336, %v4339
    %v4357 = vsel %vm4355, %v4345, 2102212464
    %v4358 = vsel %vm4354, %v4342, %v4357
    %v4359 = vsel %vm4353, %v4356, %v4358
    %v4360 = vsel %vm4352, %v4339, %v4342
    %v4361 = vsel %vm4355, %v4348, 920167782
    %v4362 = vsel %vm4354, %v4345, %v4361
    %v4363 = vsel %vm4353, %v4360, %v4362
    %v4364 = vsel %vm4352, %v4342, %v4345
    %v4365 = vsel %vm4355, %v4351, 1326507024
    %v4366 = vsel %vm4354, %v4348, %v4365
    %v4367 = vsel %vm4353, %v4364, %v4366
    %v4368 = vshll.u32 %v4328, 8
    %v4369 = vmul.u32.u64.compose %v4368, %v4367
    %v4370 = vextract.low.u32 %v4369
    %v4371 = vextract.high.u32 %v4369
    %v4372 = vmul.u32.u64.compose %v4368, %v4363
    %v4373 = vextract.low.u32 %v4372
    %v4374 = vextract.high.u32 %v4372
    %v4375 = vmul.u32 %v4368, %v4359
    %v4376 = vadd.s32 %v4371, %v4373
    %vm4377 = vc.u32 %v4371, %v4373
    %v4378 = vadd.s32 %v4374, 1
    %v4379 = vsel %vm4377, %v4378, %v4374
    %v4380 = vadd.s32 %v4375, %v4379
    %v4381 = vadd.s32 %v4380, 536870912
    %v4382 = vshrl.u32 %v4381, 30
    %v4383 = vshll.u32 %v4382, 30
    %v4384 = vsub.s32 %v4380, %v4383
    %vm4385 = vcmp.lt.s32.totalorder %v4384, 0
    %v4386 = vsub.s32 0, %v4384
    %v4387 = vsel %vm4385, %v4386, %v4384
    %v4388 = vclz %v4387
    %v4389 = vsub.s32 %v4388, 2
    %vm4390 = vcmp.gt.s32.totalorder 0, %v4389
    %v4391 = vsel %vm4390, 0, %v4389
    %v4392 = vsub.s32 32, %v4391
    %v4393 = vshll.u32 %v4384, %v4391
    %v4394 = vshrl.u32 %v4376, %v4392
    %v4395 = vor.u32 %v4393, %v4394
    %v4396 = vsub.s32 4294967266, %v4391
    %v4397 = vadd.s32 %v4396, 127
    %v4398 = vshll.u32 %v4397, 23
    %v4399 = vor.u32 4788187, %v4398
    %v4400 = vand.u32 2147483647, %v4399
    %v4402 = vcvt.s32.f32 %v4395
    %v4403 = vmul.f32 %v4402, %v4400
    %v4404 = vxor.u32 %v4403, 2147483648
    %v4405 = vsel %vm4322, %v4404, %v4403
    %v4406 = vsub.s32 4, %v4382
    %v4407 = vsel %vm4322, %v4406, %v4382
    %v4408 = vsel %vm4321, %v2465, %v4405
    %v4409 = vsel %vm4321, 0, %v4407
    %v4410 = vcosq.f32.pop %v4408
    %v4411 = vsinq.f32.pop %v4408
    %vm4412 = vweird.f32 %v2465
    %v4413 = vadd.s32 %v4409, 3
    %v4414 = vand.u32 %v4413, 3
    %vm4415 = vcmp.lt.s32.totalorder %v4414, 2
    %vm4416 = vcmp.eq.s32.totalorder %v4414, 0
    %v4417 = vxor.u32 %v4411, 2147483648
    %v4418 = vsel %vm4416, %v4410, %v4417
    %vm4419 = vcmp.eq.s32.totalorder %v4414, 2
    %v4420 = vxor.u32 %v4410, 2147483648
    %v4421 = vsel %vm4419, %v4420, %v4411
    %v4422 = vsel %vm4415, %v4418, %v4421
    %v4423 = vsel %vm4412, nan, %v4422
    %v4424 = vand.u32 2147483647, %v2471
    %vm4425 = vcmp.le.f32.partialorder %v4424, 0.7853982
    %vm4426 = vcmp.lt.s32.totalorder %v2471, 0
    %v4427 = vand.u32 %v2471, 2139095040
    %v4428 = vshrl.u32 %v4427, 23
    %v4429 = vsub.s32 %v4428, 127
    %v4430 = vand.u32 2147483647, %v2471
    %v4431 = vand.u32 %v4430, 8388607
    %v4432 = vor.u32 %v4431, 8388608
    %v4433 = vsub.s32 0, %v4432
    %v4434 = vadd.s32 %v4429, 1
    %vm4435 = vcmp.gt.s32.totalorder %v4434, 0
    %v4436 = vsel %vm4435, %v4434, 0
    %v4437 = vshrl.u32 %v4436, 5
    %v4438 = vand.u32 %v4436, 31
    %v4439 = vsub.s32 32, %v4438
    %v4440 = vshrl.u32 683565275, %v4439
    %v4441 = vshll.u32 683565275, %v4438
    %v4442 = vshrl.u32 2475754826, %v4439
    %v4443 = vor.u32 %v4441, %v4442
    %v4444 = vshll.u32 2475754826, %v4438
    %v4445 = vshrl.u32 2131351028, %v4439
    %v4446 = vor.u32 %v4444, %v4445
    %v4447 = vshll.u32 2131351028, %v4438
    %v4448 = vshrl.u32 2102212464, %v4439
    %v4449 = vor.u32 %v4447, %v4448
    %v4450 = vshll.u32 2102212464, %v4438
    %v4451 = vshrl.u32 920167782, %v4439
    %v4452 = vor.u32 %v4450, %v4451
    %v4453 = vshll.u32 920167782, %v4438
    %v4454 = vshrl.u32 1326507024, %v4439
    %v4455 = vor.u32 %v4453, %v4454
    %vm4456 = vcmp.lt.s32.totalorder %v4437, 1
    %vm4457 = vcmp.lt.s32.totalorder %v4437, 2
    %vm4458 = vcmp.lt.s32.totalorder %v4437, 3
    %vm4459 = vcmp.lt.s32.totalorder %v4437, 4
    %v4460 = vsel %vm4456, %v4440, %v4443
    %v4461 = vsel %vm4459, %v4449, 2102212464
    %v4462 = vsel %vm4458, %v4446, %v4461
    %v4463 = vsel %vm4457, %v4460, %v4462
    %v4464 = vsel %vm4456, %v4443, %v4446
    %v4465 = vsel %vm4459, %v4452, 920167782
    %v4466 = vsel %vm4458, %v4449, %v4465
    %v4467 = vsel %vm4457, %v4464, %v4466
    %v4468 = vsel %vm4456, %v4446, %v4449
    %v4469 = vsel %vm4459, %v4455, 1326507024
    %v4470 = vsel %vm4458, %v4452, %v4469
    %v4471 = vsel %vm4457, %v4468, %v4470
    %v4472 = vshll.u32 %v4432, 8
    %v4473 = vmul.u32.u64.compose %v4472, %v4471
    %v4474 = vextract.low.u32 %v4473
    %v4475 = vextract.high.u32 %v4473
    %v4476 = vmul.u32.u64.compose %v4472, %v4467
    %v4477 = vextract.low.u32 %v4476
    %v4478 = vextract.high.u32 %v4476
    %v4479 = vmul.u32 %v4472, %v4463
    %v4480 = vadd.s32 %v4475, %v4477
    %vm4481 = vc.u32 %v4475, %v4477
    %v4482 = vadd.s32 %v4478, 1
    %v4483 = vsel %vm4481, %v4482, %v4478
    %v4484 = vadd.s32 %v4479, %v4483
    %v4485 = vadd.s32 %v4484, 536870912
    %v4486 = vshrl.u32 %v4485, 30
    %v4487 = vshll.u32 %v4486, 30
    %v4488 = vsub.s32 %v4484, %v4487
    %vm4489 = vcmp.lt.s32.totalorder %v4488, 0
    %v4490 = vsub.s32 0, %v4488
    %v4491 = vsel %vm4489, %v4490, %v4488
    %v4492 = vclz %v4491
    %v4493 = vsub.s32 %v4492, 2
    %vm4494 = vcmp.gt.s32.totalorder 0, %v4493
    %v4495 = vsel %vm4494, 0, %v4493
    %v4496 = vsub.s32 32, %v4495
    %v4497 = vshll.u32 %v4488, %v4495
    %v4498 = vshrl.u32 %v4480, %v4496
    %v4499 = vor.u32 %v4497, %v4498
    %v4500 = vsub.s32 4294967266, %v4495
    %v4501 = vadd.s32 %v4500, 127
    %v4502 = vshll.u32 %v4501, 23
    %v4503 = vor.u32 4788187, %v4502
    %v4504 = vand.u32 2147483647, %v4503
    %v4506 = vcvt.s32.f32 %v4499
    %v4507 = vmul.f32 %v4506, %v4504
    %v4508 = vxor.u32 %v4507, 2147483648
    %v4509 = vsel %vm4426, %v4508, %v4507
    %v4510 = vsub.s32 4, %v4486
    %v4511 = vsel %vm4426, %v4510, %v4486
    %v4512 = vsel %vm4425, %v2471, %v4509
    %v4513 = vsel %vm4425, 0, %v4511
    %v4514 = vcosq.f32.pop %v4512
    %v4515 = vsinq.f32.pop %v4512
    %vm4516 = vweird.f32 %v2471
    %v4517 = vadd.s32 %v4513, 3
    %v4518 = vand.u32 %v4517, 3
    %vm4519 = vcmp.lt.s32.totalorder %v4518, 2
    %vm4520 = vcmp.eq.s32.totalorder %v4518, 0
    %v4521 = vxor.u32 %v4515, 2147483648
    %v4522 = vsel %vm4520, %v4514, %v4521
    %vm4523 = vcmp.eq.s32.totalorder %v4518, 2
    %v4524 = vxor.u32 %v4514, 2147483648
    %v4525 = vsel %vm4523, %v4524, %v4515
    %v4526 = vsel %vm4519, %v4522, %v4525
    %v4527 = vsel %vm4516, nan, %v4526
    %v4528 = vand.u32 2147483647, %v2477
    %vm4529 = vcmp.le.f32.partialorder %v4528, 0.7853982
    %vm4530 = vcmp.lt.s32.totalorder %v2477, 0
    %v4531 = vand.u32 %v2477, 2139095040
    %v4532 = vshrl.u32 %v4531, 23
    %v4533 = vsub.s32 %v4532, 127
    %v4534 = vand.u32 2147483647, %v2477
    %v4535 = vand.u32 %v4534, 8388607
    %v4536 = vor.u32 %v4535, 8388608
    %v4537 = vsub.s32 0, %v4536
    %v4538 = vadd.s32 %v4533, 1
    %vm4539 = vcmp.gt.s32.totalorder %v4538, 0
    %v4540 = vsel %vm4539, %v4538, 0
    %v4541 = vshrl.u32 %v4540, 5
    %v4542 = vand.u32 %v4540, 31
    %v4543 = vsub.s32 32, %v4542
    %v4544 = vshrl.u32 683565275, %v4543
    %v4545 = vshll.u32 683565275, %v4542
    %v4546 = vshrl.u32 2475754826, %v4543
    %v4547 = vor.u32 %v4545, %v4546
    %v4548 = vshll.u32 2475754826, %v4542
    %v4549 = vshrl.u32 2131351028, %v4543
    %v4550 = vor.u32 %v4548, %v4549
    %v4551 = vshll.u32 2131351028, %v4542
    %v4552 = vshrl.u32 2102212464, %v4543
    %v4553 = vor.u32 %v4551, %v4552
    %v4554 = vshll.u32 2102212464, %v4542
    %v4555 = vshrl.u32 920167782, %v4543
    %v4556 = vor.u32 %v4554, %v4555
    %v4557 = vshll.u32 920167782, %v4542
    %v4558 = vshrl.u32 1326507024, %v4543
    %v4559 = vor.u32 %v4557, %v4558
    %vm4560 = vcmp.lt.s32.totalorder %v4541, 1
    %vm4561 = vcmp.lt.s32.totalorder %v4541, 2
    %vm4562 = vcmp.lt.s32.totalorder %v4541, 3
    %vm4563 = vcmp.lt.s32.totalorder %v4541, 4
    %v4564 = vsel %vm4560, %v4544, %v4547
    %v4565 = vsel %vm4563, %v4553, 2102212464
    %v4566 = vsel %vm4562, %v4550, %v4565
    %v4567 = vsel %vm4561, %v4564, %v4566
    %v4568 = vsel %vm4560, %v4547, %v4550
    %v4569 = vsel %vm4563, %v4556, 920167782
    %v4570 = vsel %vm4562, %v4553, %v4569
    %v4571 = vsel %vm4561, %v4568, %v4570
    %v4572 = vsel %vm4560, %v4550, %v4553
    %v4573 = vsel %vm4563, %v4559, 1326507024
    %v4574 = vsel %vm4562, %v4556, %v4573
    %v4575 = vsel %vm4561, %v4572, %v4574
    %v4576 = vshll.u32 %v4536, 8
    %v4577 = vmul.u32.u64.compose %v4576, %v4575
    %v4578 = vextract.low.u32 %v4577
    %v4579 = vextract.high.u32 %v4577
    %v4580 = vmul.u32.u64.compose %v4576, %v4571
    %v4581 = vextract.low.u32 %v4580
    %v4582 = vextract.high.u32 %v4580
    %v4583 = vmul.u32 %v4576, %v4567
    %v4584 = vadd.s32 %v4579, %v4581
    %vm4585 = vc.u32 %v4579, %v4581
    %v4586 = vadd.s32 %v4582, 1
    %v4587 = vsel %vm4585, %v4586, %v4582
    %v4588 = vadd.s32 %v4583, %v4587
    %v4589 = vadd.s32 %v4588, 536870912
    %v4590 = vshrl.u32 %v4589, 30
    %v4591 = vshll.u32 %v4590, 30
    %v4592 = vsub.s32 %v4588, %v4591
    %vm4593 = vcmp.lt.s32.totalorder %v4592, 0
    %v4594 = vsub.s32 0, %v4592
    %v4595 = vsel %vm4593, %v4594, %v4592
    %v4596 = vclz %v4595
    %v4597 = vsub.s32 %v4596, 2
    %vm4598 = vcmp.gt.s32.totalorder 0, %v4597
    %v4599 = vsel %vm4598, 0, %v4597
    %v4600 = vsub.s32 32, %v4599
    %v4601 = vshll.u32 %v4592, %v4599
    %v4602 = vshrl.u32 %v4584, %v4600
    %v4603 = vor.u32 %v4601, %v4602
    %v4604 = vsub.s32 4294967266, %v4599
    %v4605 = vadd.s32 %v4604, 127
    %v4606 = vshll.u32 %v4605, 23
    %v4607 = vor.u32 4788187, %v4606
    %v4608 = vand.u32 2147483647, %v4607
    %v4610 = vcvt.s32.f32 %v4603
    %v4611 = vmul.f32 %v4610, %v4608
    %v4612 = vxor.u32 %v4611, 2147483648
    %v4613 = vsel %vm4530, %v4612, %v4611
    %v4614 = vsub.s32 4, %v4590
    %v4615 = vsel %vm4530, %v4614, %v4590
    %v4616 = vsel %vm4529, %v2477, %v4613
    %v4617 = vsel %vm4529, 0, %v4615
    %v4618 = vcosq.f32.pop %v4616
    %v4619 = vsinq.f32.pop %v4616
    %vm4620 = vweird.f32 %v2477
    %v4621 = vadd.s32 %v4617, 3
    %v4622 = vand.u32 %v4621, 3
    %vm4623 = vcmp.lt.s32.totalorder %v4622, 2
    %vm4624 = vcmp.eq.s32.totalorder %v4622, 0
    %v4625 = vxor.u32 %v4619, 2147483648
    %v4626 = vsel %vm4624, %v4618, %v4625
    %vm4627 = vcmp.eq.s32.totalorder %v4622, 2
    %v4628 = vxor.u32 %v4618, 2147483648
    %v4629 = vsel %vm4627, %v4628, %v4619
    %v4630 = vsel %vm4623, %v4626, %v4629
    %v4631 = vsel %vm4620, nan, %v4630
    %v4632 = vand.u32 2147483647, %v2483
    %vm4633 = vcmp.le.f32.partialorder %v4632, 0.7853982
    %vm4634 = vcmp.lt.s32.totalorder %v2483, 0
    %v4635 = vand.u32 %v2483, 2139095040
    %v4636 = vshrl.u32 %v4635, 23
    %v4637 = vsub.s32 %v4636, 127
    %v4638 = vand.u32 2147483647, %v2483
    %v4639 = vand.u32 %v4638, 8388607
    %v4640 = vor.u32 %v4639, 8388608
    %v4641 = vsub.s32 0, %v4640
    %v4642 = vadd.s32 %v4637, 1
    %vm4643 = vcmp.gt.s32.totalorder %v4642, 0
    %v4644 = vsel %vm4643, %v4642, 0
    %v4645 = vshrl.u32 %v4644, 5
    %v4646 = vand.u32 %v4644, 31
    %v4647 = vsub.s32 32, %v4646
    %v4648 = vshrl.u32 683565275, %v4647
    %v4649 = vshll.u32 683565275, %v4646
    %v4650 = vshrl.u32 2475754826, %v4647
    %v4651 = vor.u32 %v4649, %v4650
    %v4652 = vshll.u32 2475754826, %v4646
    %v4653 = vshrl.u32 2131351028, %v4647
    %v4654 = vor.u32 %v4652, %v4653
    %v4655 = vshll.u32 2131351028, %v4646
    %v4656 = vshrl.u32 2102212464, %v4647
    %v4657 = vor.u32 %v4655, %v4656
    %v4658 = vshll.u32 2102212464, %v4646
    %v4659 = vshrl.u32 920167782, %v4647
    %v4660 = vor.u32 %v4658, %v4659
    %v4661 = vshll.u32 920167782, %v4646
    %v4662 = vshrl.u32 1326507024, %v4647
    %v4663 = vor.u32 %v4661, %v4662
    %vm4664 = vcmp.lt.s32.totalorder %v4645, 1
    %vm4665 = vcmp.lt.s32.totalorder %v4645, 2
    %vm4666 = vcmp.lt.s32.totalorder %v4645, 3
    %vm4667 = vcmp.lt.s32.totalorder %v4645, 4
    %v4668 = vsel %vm4664, %v4648, %v4651
    %v4669 = vsel %vm4667, %v4657, 2102212464
    %v4670 = vsel %vm4666, %v4654, %v4669
    %v4671 = vsel %vm4665, %v4668, %v4670
    %v4672 = vsel %vm4664, %v4651, %v4654
    %v4673 = vsel %vm4667, %v4660, 920167782
    %v4674 = vsel %vm4666, %v4657, %v4673
    %v4675 = vsel %vm4665, %v4672, %v4674
    %v4676 = vsel %vm4664, %v4654, %v4657
    %v4677 = vsel %vm4667, %v4663, 1326507024
    %v4678 = vsel %vm4666, %v4660, %v4677
    %v4679 = vsel %vm4665, %v4676, %v4678
    %v4680 = vshll.u32 %v4640, 8
    %v4681 = vmul.u32.u64.compose %v4680, %v4679
    %v4682 = vextract.low.u32 %v4681
    %v4683 = vextract.high.u32 %v4681
    %v4684 = vmul.u32.u64.compose %v4680, %v4675
    %v4685 = vextract.low.u32 %v4684
    %v4686 = vextract.high.u32 %v4684
    %v4687 = vmul.u32 %v4680, %v4671
    %v4688 = vadd.s32 %v4683, %v4685
    %vm4689 = vc.u32 %v4683, %v4685
    %v4690 = vadd.s32 %v4686, 1
    %v4691 = vsel %vm4689, %v4690, %v4686
    %v4692 = vadd.s32 %v4687, %v4691
    %v4693 = vadd.s32 %v4692, 536870912
    %v4694 = vshrl.u32 %v4693, 30
    %v4695 = vshll.u32 %v4694, 30
    %v4696 = vsub.s32 %v4692, %v4695
    %vm4697 = vcmp.lt.s32.totalorder %v4696, 0
    %v4698 = vsub.s32 0, %v4696
    %v4699 = vsel %vm4697, %v4698, %v4696
    %v4700 = vclz %v4699
    %v4701 = vsub.s32 %v4700, 2
    %vm4702 = vcmp.gt.s32.totalorder 0, %v4701
    %v4703 = vsel %vm4702, 0, %v4701
    %v4704 = vsub.s32 32, %v4703
    %v4705 = vshll.u32 %v4696, %v4703
    %v4706 = vshrl.u32 %v4688, %v4704
    %v4707 = vor.u32 %v4705, %v4706
    %v4708 = vsub.s32 4294967266, %v4703
    %v4709 = vadd.s32 %v4708, 127
    %v4710 = vshll.u32 %v4709, 23
    %v4711 = vor.u32 4788187, %v4710
    %v4712 = vand.u32 2147483647, %v4711
    %v4714 = vcvt.s32.f32 %v4707
    %v4715 = vmul.f32 %v4714, %v4712
    %v4716 = vxor.u32 %v4715, 2147483648
    %v4717 = vsel %vm4634, %v4716, %v4715
    %v4718 = vsub.s32 4, %v4694
    %v4719 = vsel %vm4634, %v4718, %v4694
    %v4720 = vsel %vm4633, %v2483, %v4717
    %v4721 = vsel %vm4633, 0, %v4719
    %v4722 = vcosq.f32.pop %v4720
    %v4723 = vsinq.f32.pop %v4720
    %vm4724 = vweird.f32 %v2483
    %v4725 = vadd.s32 %v4721, 3
    %v4726 = vand.u32 %v4725, 3
    %vm4727 = vcmp.lt.s32.totalorder %v4726, 2
    %vm4728 = vcmp.eq.s32.totalorder %v4726, 0
    %v4729 = vxor.u32 %v4723, 2147483648
    %v4730 = vsel %vm4728, %v4722, %v4729
    %vm4731 = vcmp.eq.s32.totalorder %v4726, 2
    %v4732 = vxor.u32 %v4722, 2147483648
    %v4733 = vsel %vm4731, %v4732, %v4723
    %v4734 = vsel %vm4727, %v4730, %v4733
    %v4735 = vsel %vm4724, nan, %v4734
    %v4736 = vand.u32 2147483647, %v2489
    %vm4737 = vcmp.le.f32.partialorder %v4736, 0.7853982
    %vm4738 = vcmp.lt.s32.totalorder %v2489, 0
    %v4739 = vand.u32 %v2489, 2139095040
    %v4740 = vshrl.u32 %v4739, 23
    %v4741 = vsub.s32 %v4740, 127
    %v4742 = vand.u32 2147483647, %v2489
    %v4743 = vand.u32 %v4742, 8388607
    %v4744 = vor.u32 %v4743, 8388608
    %v4745 = vsub.s32 0, %v4744
    %v4746 = vadd.s32 %v4741, 1
    %vm4747 = vcmp.gt.s32.totalorder %v4746, 0
    %v4748 = vsel %vm4747, %v4746, 0
    %v4749 = vshrl.u32 %v4748, 5
    %v4750 = vand.u32 %v4748, 31
    %v4751 = vsub.s32 32, %v4750
    %v4752 = vshrl.u32 683565275, %v4751
    %v4753 = vshll.u32 683565275, %v4750
    %v4754 = vshrl.u32 2475754826, %v4751
    %v4755 = vor.u32 %v4753, %v4754
    %v4756 = vshll.u32 2475754826, %v4750
    %v4757 = vshrl.u32 2131351028, %v4751
    %v4758 = vor.u32 %v4756, %v4757
    %v4759 = vshll.u32 2131351028, %v4750
    %v4760 = vshrl.u32 2102212464, %v4751
    %v4761 = vor.u32 %v4759, %v4760
    %v4762 = vshll.u32 2102212464, %v4750
    %v4763 = vshrl.u32 920167782, %v4751
    %v4764 = vor.u32 %v4762, %v4763
    %v4765 = vshll.u32 920167782, %v4750
    %v4766 = vshrl.u32 1326507024, %v4751
    %v4767 = vor.u32 %v4765, %v4766
    %vm4768 = vcmp.lt.s32.totalorder %v4749, 1
    %vm4769 = vcmp.lt.s32.totalorder %v4749, 2
    %vm4770 = vcmp.lt.s32.totalorder %v4749, 3
    %vm4771 = vcmp.lt.s32.totalorder %v4749, 4
    %v4772 = vsel %vm4768, %v4752, %v4755
    %v4773 = vsel %vm4771, %v4761, 2102212464
    %v4774 = vsel %vm4770, %v4758, %v4773
    %v4775 = vsel %vm4769, %v4772, %v4774
    %v4776 = vsel %vm4768, %v4755, %v4758
    %v4777 = vsel %vm4771, %v4764, 920167782
    %v4778 = vsel %vm4770, %v4761, %v4777
    %v4779 = vsel %vm4769, %v4776, %v4778
    %v4780 = vsel %vm4768, %v4758, %v4761
    %v4781 = vsel %vm4771, %v4767, 1326507024
    %v4782 = vsel %vm4770, %v4764, %v4781
    %v4783 = vsel %vm4769, %v4780, %v4782
    %v4784 = vshll.u32 %v4744, 8
    %v4785 = vmul.u32.u64.compose %v4784, %v4783
    %v4786 = vextract.low.u32 %v4785
    %v4787 = vextract.high.u32 %v4785
    %v4788 = vmul.u32.u64.compose %v4784, %v4779
    %v4789 = vextract.low.u32 %v4788
    %v4790 = vextract.high.u32 %v4788
    %v4791 = vmul.u32 %v4784, %v4775
    %v4792 = vadd.s32 %v4787, %v4789
    %vm4793 = vc.u32 %v4787, %v4789
    %v4794 = vadd.s32 %v4790, 1
    %v4795 = vsel %vm4793, %v4794, %v4790
    %v4796 = vadd.s32 %v4791, %v4795
    %v4797 = vadd.s32 %v4796, 536870912
    %v4798 = vshrl.u32 %v4797, 30
    %v4799 = vshll.u32 %v4798, 30
    %v4800 = vsub.s32 %v4796, %v4799
    %vm4801 = vcmp.lt.s32.totalorder %v4800, 0
    %v4802 = vsub.s32 0, %v4800
    %v4803 = vsel %vm4801, %v4802, %v4800
    %v4804 = vclz %v4803
    %v4805 = vsub.s32 %v4804, 2
    %vm4806 = vcmp.gt.s32.totalorder 0, %v4805
    %v4807 = vsel %vm4806, 0, %v4805
    %v4808 = vsub.s32 32, %v4807
    %v4809 = vshll.u32 %v4800, %v4807
    %v4810 = vshrl.u32 %v4792, %v4808
    %v4811 = vor.u32 %v4809, %v4810
    %v4812 = vsub.s32 4294967266, %v4807
    %v4813 = vadd.s32 %v4812, 127
    %v4814 = vshll.u32 %v4813, 23
    %v4815 = vor.u32 4788187, %v4814
    %v4816 = vand.u32 2147483647, %v4815
    %v4818 = vcvt.s32.f32 %v4811
    %v4819 = vmul.f32 %v4818, %v4816
    %v4820 = vxor.u32 %v4819, 2147483648
    %v4821 = vsel %vm4738, %v4820, %v4819
    %v4822 = vsub.s32 4, %v4798
    %v4823 = vsel %vm4738, %v4822, %v4798
    %v4824 = vsel %vm4737, %v2489, %v4821
    %v4825 = vsel %vm4737, 0, %v4823
    %v4826 = vcosq.f32.pop %v4824
    %v4827 = vsinq.f32.pop %v4824
    %vm4828 = vweird.f32 %v2489
    %v4829 = vadd.s32 %v4825, 3
    %v4830 = vand.u32 %v4829, 3
    %vm4831 = vcmp.lt.s32.totalorder %v4830, 2
    %vm4832 = vcmp.eq.s32.totalorder %v4830, 0
    %v4833 = vxor.u32 %v4827, 2147483648
    %v4834 = vsel %vm4832, %v4826, %v4833
    %vm4835 = vcmp.eq.s32.totalorder %v4830, 2
    %v4836 = vxor.u32 %v4826, 2147483648
    %v4837 = vsel %vm4835, %v4836, %v4827
    %v4838 = vsel %vm4831, %v4834, %v4837
    %v4839 = vsel %vm4828, nan, %v4838
    %v4840 = vand.u32 2147483647, %v2495
    %vm4841 = vcmp.le.f32.partialorder %v4840, 0.7853982
    %vm4842 = vcmp.lt.s32.totalorder %v2495, 0
    %v4843 = vand.u32 %v2495, 2139095040
    %v4844 = vshrl.u32 %v4843, 23
    %v4845 = vsub.s32 %v4844, 127
    %v4846 = vand.u32 2147483647, %v2495
    %v4847 = vand.u32 %v4846, 8388607
    %v4848 = vor.u32 %v4847, 8388608
    %v4849 = vsub.s32 0, %v4848
    %v4850 = vadd.s32 %v4845, 1
    %vm4851 = vcmp.gt.s32.totalorder %v4850, 0
    %v4852 = vsel %vm4851, %v4850, 0
    %v4853 = vshrl.u32 %v4852, 5
    %v4854 = vand.u32 %v4852, 31
    %v4855 = vsub.s32 32, %v4854
    %v4856 = vshrl.u32 683565275, %v4855
    %v4857 = vshll.u32 683565275, %v4854
    %v4858 = vshrl.u32 2475754826, %v4855
    %v4859 = vor.u32 %v4857, %v4858
    %v4860 = vshll.u32 2475754826, %v4854
    %v4861 = vshrl.u32 2131351028, %v4855
    %v4862 = vor.u32 %v4860, %v4861
    %v4863 = vshll.u32 2131351028, %v4854
    %v4864 = vshrl.u32 2102212464, %v4855
    %v4865 = vor.u32 %v4863, %v4864
    %v4866 = vshll.u32 2102212464, %v4854
    %v4867 = vshrl.u32 920167782, %v4855
    %v4868 = vor.u32 %v4866, %v4867
    %v4869 = vshll.u32 920167782, %v4854
    %v4870 = vshrl.u32 1326507024, %v4855
    %v4871 = vor.u32 %v4869, %v4870
    %vm4872 = vcmp.lt.s32.totalorder %v4853, 1
    %vm4873 = vcmp.lt.s32.totalorder %v4853, 2
    %vm4874 = vcmp.lt.s32.totalorder %v4853, 3
    %vm4875 = vcmp.lt.s32.totalorder %v4853, 4
    %v4876 = vsel %vm4872, %v4856, %v4859
    %v4877 = vsel %vm4875, %v4865, 2102212464
    %v4878 = vsel %vm4874, %v4862, %v4877
    %v4879 = vsel %vm4873, %v4876, %v4878
    %v4880 = vsel %vm4872, %v4859, %v4862
    %v4881 = vsel %vm4875, %v4868, 920167782
    %v4882 = vsel %vm4874, %v4865, %v4881
    %v4883 = vsel %vm4873, %v4880, %v4882
    %v4884 = vsel %vm4872, %v4862, %v4865
    %v4885 = vsel %vm4875, %v4871, 1326507024
    %v4886 = vsel %vm4874, %v4868, %v4885
    %v4887 = vsel %vm4873, %v4884, %v4886
    %v4888 = vshll.u32 %v4848, 8
    %v4889 = vmul.u32.u64.compose %v4888, %v4887
    %v4890 = vextract.low.u32 %v4889
    %v4891 = vextract.high.u32 %v4889
    %v4892 = vmul.u32.u64.compose %v4888, %v4883
    %v4893 = vextract.low.u32 %v4892
    %v4894 = vextract.high.u32 %v4892
    %v4895 = vmul.u32 %v4888, %v4879
    %v4896 = vadd.s32 %v4891, %v4893
    %vm4897 = vc.u32 %v4891, %v4893
    %v4898 = vadd.s32 %v4894, 1
    %v4899 = vsel %vm4897, %v4898, %v4894
    %v4900 = vadd.s32 %v4895, %v4899
    %v4901 = vadd.s32 %v4900, 536870912
    %v4902 = vshrl.u32 %v4901, 30
    %v4903 = vshll.u32 %v4902, 30
    %v4904 = vsub.s32 %v4900, %v4903
    %vm4905 = vcmp.lt.s32.totalorder %v4904, 0
    %v4906 = vsub.s32 0, %v4904
    %v4907 = vsel %vm4905, %v4906, %v4904
    %v4908 = vclz %v4907
    %v4909 = vsub.s32 %v4908, 2
    %vm4910 = vcmp.gt.s32.totalorder 0, %v4909
    %v4911 = vsel %vm4910, 0, %v4909
    %v4912 = vsub.s32 32, %v4911
    %v4913 = vshll.u32 %v4904, %v4911
    %v4914 = vshrl.u32 %v4896, %v4912
    %v4915 = vor.u32 %v4913, %v4914
    %v4916 = vsub.s32 4294967266, %v4911
    %v4917 = vadd.s32 %v4916, 127
    %v4918 = vshll.u32 %v4917, 23
    %v4919 = vor.u32 4788187, %v4918
    %v4920 = vand.u32 2147483647, %v4919
    %v4922 = vcvt.s32.f32 %v4915
    %v4923 = vmul.f32 %v4922, %v4920
    %v4924 = vxor.u32 %v4923, 2147483648
    %v4925 = vsel %vm4842, %v4924, %v4923
    %v4926 = vsub.s32 4, %v4902
    %v4927 = vsel %vm4842, %v4926, %v4902
    %v4928 = vsel %vm4841, %v2495, %v4925
    %v4929 = vsel %vm4841, 0, %v4927
    %v4930 = vcosq.f32.pop %v4928
    %v4931 = vsinq.f32.pop %v4928
    %vm4932 = vweird.f32 %v2495
    %v4933 = vadd.s32 %v4929, 3
    %v4934 = vand.u32 %v4933, 3
    %vm4935 = vcmp.lt.s32.totalorder %v4934, 2
    %vm4936 = vcmp.eq.s32.totalorder %v4934, 0
    %v4937 = vxor.u32 %v4931, 2147483648
    %v4938 = vsel %vm4936, %v4930, %v4937
    %vm4939 = vcmp.eq.s32.totalorder %v4934, 2
    %v4940 = vxor.u32 %v4930, 2147483648
    %v4941 = vsel %vm4939, %v4940, %v4931
    %v4942 = vsel %vm4935, %v4938, %v4941
    %v4943 = vsel %vm4932, nan, %v4942
    %v4944 = vand.u32 2147483647, %v2501
    %vm4945 = vcmp.le.f32.partialorder %v4944, 0.7853982
    %vm4946 = vcmp.lt.s32.totalorder %v2501, 0
    %v4947 = vand.u32 %v2501, 2139095040
    %v4948 = vshrl.u32 %v4947, 23
    %v4949 = vsub.s32 %v4948, 127
    %v4950 = vand.u32 2147483647, %v2501
    %v4951 = vand.u32 %v4950, 8388607
    %v4952 = vor.u32 %v4951, 8388608
    %v4953 = vsub.s32 0, %v4952
    %v4954 = vadd.s32 %v4949, 1
    %vm4955 = vcmp.gt.s32.totalorder %v4954, 0
    %v4956 = vsel %vm4955, %v4954, 0
    %v4957 = vshrl.u32 %v4956, 5
    %v4958 = vand.u32 %v4956, 31
    %v4959 = vsub.s32 32, %v4958
    %v4960 = vshrl.u32 683565275, %v4959
    %v4961 = vshll.u32 683565275, %v4958
    %v4962 = vshrl.u32 2475754826, %v4959
    %v4963 = vor.u32 %v4961, %v4962
    %v4964 = vshll.u32 2475754826, %v4958
    %v4965 = vshrl.u32 2131351028, %v4959
    %v4966 = vor.u32 %v4964, %v4965
    %v4967 = vshll.u32 2131351028, %v4958
    %v4968 = vshrl.u32 2102212464, %v4959
    %v4969 = vor.u32 %v4967, %v4968
    %v4970 = vshll.u32 2102212464, %v4958
    %v4971 = vshrl.u32 920167782, %v4959
    %v4972 = vor.u32 %v4970, %v4971
    %v4973 = vshll.u32 920167782, %v4958
    %v4974 = vshrl.u32 1326507024, %v4959
    %v4975 = vor.u32 %v4973, %v4974
    %vm4976 = vcmp.lt.s32.totalorder %v4957, 1
    %vm4977 = vcmp.lt.s32.totalorder %v4957, 2
    %vm4978 = vcmp.lt.s32.totalorder %v4957, 3
    %vm4979 = vcmp.lt.s32.totalorder %v4957, 4
    %v4980 = vsel %vm4976, %v4960, %v4963
    %v4981 = vsel %vm4979, %v4969, 2102212464
    %v4982 = vsel %vm4978, %v4966, %v4981
    %v4983 = vsel %vm4977, %v4980, %v4982
    %v4984 = vsel %vm4976, %v4963, %v4966
    %v4985 = vsel %vm4979, %v4972, 920167782
    %v4986 = vsel %vm4978, %v4969, %v4985
    %v4987 = vsel %vm4977, %v4984, %v4986
    %v4988 = vsel %vm4976, %v4966, %v4969
    %v4989 = vsel %vm4979, %v4975, 1326507024
    %v4990 = vsel %vm4978, %v4972, %v4989
    %v4991 = vsel %vm4977, %v4988, %v4990
    %v4992 = vshll.u32 %v4952, 8
    %v4993 = vmul.u32.u64.compose %v4992, %v4991
    %v4994 = vextract.low.u32 %v4993
    %v4995 = vextract.high.u32 %v4993
    %v4996 = vmul.u32.u64.compose %v4992, %v4987
    %v4997 = vextract.low.u32 %v4996
    %v4998 = vextract.high.u32 %v4996
    %v4999 = vmul.u32 %v4992, %v4983
    %v5000 = vadd.s32 %v4995, %v4997
    %vm5001 = vc.u32 %v4995, %v4997
    %v5002 = vadd.s32 %v4998, 1
    %v5003 = vsel %vm5001, %v5002, %v4998
    %v5004 = vadd.s32 %v4999, %v5003
    %v5005 = vadd.s32 %v5004, 536870912
    %v5006 = vshrl.u32 %v5005, 30
    %v5007 = vshll.u32 %v5006, 30
    %v5008 = vsub.s32 %v5004, %v5007
    %vm5009 = vcmp.lt.s32.totalorder %v5008, 0
    %v5010 = vsub.s32 0, %v5008
    %v5011 = vsel %vm5009, %v5010, %v5008
    %v5012 = vclz %v5011
    %v5013 = vsub.s32 %v5012, 2
    %vm5014 = vcmp.gt.s32.totalorder 0, %v5013
    %v5015 = vsel %vm5014, 0, %v5013
    %v5016 = vsub.s32 32, %v5015
    %v5017 = vshll.u32 %v5008, %v5015
    %v5018 = vshrl.u32 %v5000, %v5016
    %v5019 = vor.u32 %v5017, %v5018
    %v5020 = vsub.s32 4294967266, %v5015
    %v5021 = vadd.s32 %v5020, 127
    %v5022 = vshll.u32 %v5021, 23
    %v5023 = vor.u32 4788187, %v5022
    %v5024 = vand.u32 2147483647, %v5023
    %v5026 = vcvt.s32.f32 %v5019
    %v5027 = vmul.f32 %v5026, %v5024
    %v5028 = vxor.u32 %v5027, 2147483648
    %v5029 = vsel %vm4946, %v5028, %v5027
    %v5030 = vsub.s32 4, %v5006
    %v5031 = vsel %vm4946, %v5030, %v5006
    %v5032 = vsel %vm4945, %v2501, %v5029
    %v5033 = vsel %vm4945, 0, %v5031
    %v5034 = vcosq.f32.pop %v5032
    %v5035 = vsinq.f32.pop %v5032
    %vm5036 = vweird.f32 %v2501
    %v5037 = vadd.s32 %v5033, 3
    %v5038 = vand.u32 %v5037, 3
    %vm5039 = vcmp.lt.s32.totalorder %v5038, 2
    %vm5040 = vcmp.eq.s32.totalorder %v5038, 0
    %v5041 = vxor.u32 %v5035, 2147483648
    %v5042 = vsel %vm5040, %v5034, %v5041
    %vm5043 = vcmp.eq.s32.totalorder %v5038, 2
    %v5044 = vxor.u32 %v5034, 2147483648
    %v5045 = vsel %vm5043, %v5044, %v5035
    %v5046 = vsel %vm5039, %v5042, %v5045
    %v5047 = vsel %vm5036, nan, %v5046
    %v5048 = vand.u32 2147483647, %v2507
    %vm5049 = vcmp.le.f32.partialorder %v5048, 0.7853982
    %vm5050 = vcmp.lt.s32.totalorder %v2507, 0
    %v5051 = vand.u32 %v2507, 2139095040
    %v5052 = vshrl.u32 %v5051, 23
    %v5053 = vsub.s32 %v5052, 127
    %v5054 = vand.u32 2147483647, %v2507
    %v5055 = vand.u32 %v5054, 8388607
    %v5056 = vor.u32 %v5055, 8388608
    %v5057 = vsub.s32 0, %v5056
    %v5058 = vadd.s32 %v5053, 1
    %vm5059 = vcmp.gt.s32.totalorder %v5058, 0
    %v5060 = vsel %vm5059, %v5058, 0
    %v5061 = vshrl.u32 %v5060, 5
    %v5062 = vand.u32 %v5060, 31
    %v5063 = vsub.s32 32, %v5062
    %v5064 = vshrl.u32 683565275, %v5063
    %v5065 = vshll.u32 683565275, %v5062
    %v5066 = vshrl.u32 2475754826, %v5063
    %v5067 = vor.u32 %v5065, %v5066
    %v5068 = vshll.u32 2475754826, %v5062
    %v5069 = vshrl.u32 2131351028, %v5063
    %v5070 = vor.u32 %v5068, %v5069
    %v5071 = vshll.u32 2131351028, %v5062
    %v5072 = vshrl.u32 2102212464, %v5063
    %v5073 = vor.u32 %v5071, %v5072
    %v5074 = vshll.u32 2102212464, %v5062
    %v5075 = vshrl.u32 920167782, %v5063
    %v5076 = vor.u32 %v5074, %v5075
    %v5077 = vshll.u32 920167782, %v5062
    %v5078 = vshrl.u32 1326507024, %v5063
    %v5079 = vor.u32 %v5077, %v5078
    %vm5080 = vcmp.lt.s32.totalorder %v5061, 1
    %vm5081 = vcmp.lt.s32.totalorder %v5061, 2
    %vm5082 = vcmp.lt.s32.totalorder %v5061, 3
    %vm5083 = vcmp.lt.s32.totalorder %v5061, 4
    %v5084 = vsel %vm5080, %v5064, %v5067
    %v5085 = vsel %vm5083, %v5073, 2102212464
    %v5086 = vsel %vm5082, %v5070, %v5085
    %v5087 = vsel %vm5081, %v5084, %v5086
    %v5088 = vsel %vm5080, %v5067, %v5070
    %v5089 = vsel %vm5083, %v5076, 920167782
    %v5090 = vsel %vm5082, %v5073, %v5089
    %v5091 = vsel %vm5081, %v5088, %v5090
    %v5092 = vsel %vm5080, %v5070, %v5073
    %v5093 = vsel %vm5083, %v5079, 1326507024
    %v5094 = vsel %vm5082, %v5076, %v5093
    %v5095 = vsel %vm5081, %v5092, %v5094
    %v5096 = vshll.u32 %v5056, 8
    %v5097 = vmul.u32.u64.compose %v5096, %v5095
    %v5098 = vextract.low.u32 %v5097
    %v5099 = vextract.high.u32 %v5097
    %v5100 = vmul.u32.u64.compose %v5096, %v5091
    %v5101 = vextract.low.u32 %v5100
    %v5102 = vextract.high.u32 %v5100
    %v5103 = vmul.u32 %v5096, %v5087
    %v5104 = vadd.s32 %v5099, %v5101
    %vm5105 = vc.u32 %v5099, %v5101
    %v5106 = vadd.s32 %v5102, 1
    %v5107 = vsel %vm5105, %v5106, %v5102
    %v5108 = vadd.s32 %v5103, %v5107
    %v5109 = vadd.s32 %v5108, 536870912
    %v5110 = vshrl.u32 %v5109, 30
    %v5111 = vshll.u32 %v5110, 30
    %v5112 = vsub.s32 %v5108, %v5111
    %vm5113 = vcmp.lt.s32.totalorder %v5112, 0
    %v5114 = vsub.s32 0, %v5112
    %v5115 = vsel %vm5113, %v5114, %v5112
    %v5116 = vclz %v5115
    %v5117 = vsub.s32 %v5116, 2
    %vm5118 = vcmp.gt.s32.totalorder 0, %v5117
    %v5119 = vsel %vm5118, 0, %v5117
    %v5120 = vsub.s32 32, %v5119
    %v5121 = vshll.u32 %v5112, %v5119
    %v5122 = vshrl.u32 %v5104, %v5120
    %v5123 = vor.u32 %v5121, %v5122
    %v5124 = vsub.s32 4294967266, %v5119
    %v5125 = vadd.s32 %v5124, 127
    %v5126 = vshll.u32 %v5125, 23
    %v5127 = vor.u32 4788187, %v5126
    %v5128 = vand.u32 2147483647, %v5127
    %v5130 = vcvt.s32.f32 %v5123
    %v5131 = vmul.f32 %v5130, %v5128
    %v5132 = vxor.u32 %v5131, 2147483648
    %v5133 = vsel %vm5050, %v5132, %v5131
    %v5134 = vsub.s32 4, %v5110
    %v5135 = vsel %vm5050, %v5134, %v5110
    %v5136 = vsel %vm5049, %v2507, %v5133
    %v5137 = vsel %vm5049, 0, %v5135
    %v5138 = vcosq.f32.pop %v5136
    %v5139 = vsinq.f32.pop %v5136
    %vm5140 = vweird.f32 %v2507
    %v5141 = vadd.s32 %v5137, 3
    %v5142 = vand.u32 %v5141, 3
    %vm5143 = vcmp.lt.s32.totalorder %v5142, 2
    %vm5144 = vcmp.eq.s32.totalorder %v5142, 0
    %v5145 = vxor.u32 %v5139, 2147483648
    %v5146 = vsel %vm5144, %v5138, %v5145
    %vm5147 = vcmp.eq.s32.totalorder %v5142, 2
    %v5148 = vxor.u32 %v5138, 2147483648
    %v5149 = vsel %vm5147, %v5148, %v5139
    %v5150 = vsel %vm5143, %v5146, %v5149
    %v5151 = vsel %vm5140, nan, %v5150
    %v5152 = vand.u32 2147483647, %v2513
    %vm5153 = vcmp.le.f32.partialorder %v5152, 0.7853982
    %vm5154 = vcmp.lt.s32.totalorder %v2513, 0
    %v5155 = vand.u32 %v2513, 2139095040
    %v5156 = vshrl.u32 %v5155, 23
    %v5157 = vsub.s32 %v5156, 127
    %v5158 = vand.u32 2147483647, %v2513
    %v5159 = vand.u32 %v5158, 8388607
    %v5160 = vor.u32 %v5159, 8388608
    %v5161 = vsub.s32 0, %v5160
    %v5162 = vadd.s32 %v5157, 1
    %vm5163 = vcmp.gt.s32.totalorder %v5162, 0
    %v5164 = vsel %vm5163, %v5162, 0
    %v5165 = vshrl.u32 %v5164, 5
    %v5166 = vand.u32 %v5164, 31
    %v5167 = vsub.s32 32, %v5166
    %v5168 = vshrl.u32 683565275, %v5167
    %v5169 = vshll.u32 683565275, %v5166
    %v5170 = vshrl.u32 2475754826, %v5167
    %v5171 = vor.u32 %v5169, %v5170
    %v5172 = vshll.u32 2475754826, %v5166
    %v5173 = vshrl.u32 2131351028, %v5167
    %v5174 = vor.u32 %v5172, %v5173
    %v5175 = vshll.u32 2131351028, %v5166
    %v5176 = vshrl.u32 2102212464, %v5167
    %v5177 = vor.u32 %v5175, %v5176
    %v5178 = vshll.u32 2102212464, %v5166
    %v5179 = vshrl.u32 920167782, %v5167
    %v5180 = vor.u32 %v5178, %v5179
    %v5181 = vshll.u32 920167782, %v5166
    %v5182 = vshrl.u32 1326507024, %v5167
    %v5183 = vor.u32 %v5181, %v5182
    %vm5184 = vcmp.lt.s32.totalorder %v5165, 1
    %vm5185 = vcmp.lt.s32.totalorder %v5165, 2
    %vm5186 = vcmp.lt.s32.totalorder %v5165, 3
    %vm5187 = vcmp.lt.s32.totalorder %v5165, 4
    %v5188 = vsel %vm5184, %v5168, %v5171
    %v5189 = vsel %vm5187, %v5177, 2102212464
    %v5190 = vsel %vm5186, %v5174, %v5189
    %v5191 = vsel %vm5185, %v5188, %v5190
    %v5192 = vsel %vm5184, %v5171, %v5174
    %v5193 = vsel %vm5187, %v5180, 920167782
    %v5194 = vsel %vm5186, %v5177, %v5193
    %v5195 = vsel %vm5185, %v5192, %v5194
    %v5196 = vsel %vm5184, %v5174, %v5177
    %v5197 = vsel %vm5187, %v5183, 1326507024
    %v5198 = vsel %vm5186, %v5180, %v5197
    %v5199 = vsel %vm5185, %v5196, %v5198
    %v5200 = vshll.u32 %v5160, 8
    %v5201 = vmul.u32.u64.compose %v5200, %v5199
    %v5202 = vextract.low.u32 %v5201
    %v5203 = vextract.high.u32 %v5201
    %v5204 = vmul.u32.u64.compose %v5200, %v5195
    %v5205 = vextract.low.u32 %v5204
    %v5206 = vextract.high.u32 %v5204
    %v5207 = vmul.u32 %v5200, %v5191
    %v5208 = vadd.s32 %v5203, %v5205
    %vm5209 = vc.u32 %v5203, %v5205
    %v5210 = vadd.s32 %v5206, 1
    %v5211 = vsel %vm5209, %v5210, %v5206
    %v5212 = vadd.s32 %v5207, %v5211
    %v5213 = vadd.s32 %v5212, 536870912
    %v5214 = vshrl.u32 %v5213, 30
    %v5215 = vshll.u32 %v5214, 30
    %v5216 = vsub.s32 %v5212, %v5215
    %vm5217 = vcmp.lt.s32.totalorder %v5216, 0
    %v5218 = vsub.s32 0, %v5216
    %v5219 = vsel %vm5217, %v5218, %v5216
    %v5220 = vclz %v5219
    %v5221 = vsub.s32 %v5220, 2
    %vm5222 = vcmp.gt.s32.totalorder 0, %v5221
    %v5223 = vsel %vm5222, 0, %v5221
    %v5224 = vsub.s32 32, %v5223
    %v5225 = vshll.u32 %v5216, %v5223
    %v5226 = vshrl.u32 %v5208, %v5224
    %v5227 = vor.u32 %v5225, %v5226
    %v5228 = vsub.s32 4294967266, %v5223
    %v5229 = vadd.s32 %v5228, 127
    %v5230 = vshll.u32 %v5229, 23
    %v5231 = vor.u32 4788187, %v5230
    %v5232 = vand.u32 2147483647, %v5231
    %v5234 = vcvt.s32.f32 %v5227
    %v5235 = vmul.f32 %v5234, %v5232
    %v5236 = vxor.u32 %v5235, 2147483648
    %v5237 = vsel %vm5154, %v5236, %v5235
    %v5238 = vsub.s32 4, %v5214
    %v5239 = vsel %vm5154, %v5238, %v5214
    %v5240 = vsel %vm5153, %v2513, %v5237
    %v5241 = vsel %vm5153, 0, %v5239
    %v5242 = vcosq.f32.pop %v5240
    %v5243 = vsinq.f32.pop %v5240
    %vm5244 = vweird.f32 %v2513
    %v5245 = vadd.s32 %v5241, 3
    %v5246 = vand.u32 %v5245, 3
    %vm5247 = vcmp.lt.s32.totalorder %v5246, 2
    %vm5248 = vcmp.eq.s32.totalorder %v5246, 0
    %v5249 = vxor.u32 %v5243, 2147483648
    %v5250 = vsel %vm5248, %v5242, %v5249
    %vm5251 = vcmp.eq.s32.totalorder %v5246, 2
    %v5252 = vxor.u32 %v5242, 2147483648
    %v5253 = vsel %vm5251, %v5252, %v5243
    %v5254 = vsel %vm5247, %v5250, %v5253
    %v5255 = vsel %vm5244, nan, %v5254
    %v5256 = vand.u32 2147483647, %v2519
    %vm5257 = vcmp.le.f32.partialorder %v5256, 0.7853982
    %vm5258 = vcmp.lt.s32.totalorder %v2519, 0
    %v5259 = vand.u32 %v2519, 2139095040
    %v5260 = vshrl.u32 %v5259, 23
    %v5261 = vsub.s32 %v5260, 127
    %v5262 = vand.u32 2147483647, %v2519
    %v5263 = vand.u32 %v5262, 8388607
    %v5264 = vor.u32 %v5263, 8388608
    %v5265 = vsub.s32 0, %v5264
    %v5266 = vadd.s32 %v5261, 1
    %vm5267 = vcmp.gt.s32.totalorder %v5266, 0
    %v5268 = vsel %vm5267, %v5266, 0
    %v5269 = vshrl.u32 %v5268, 5
    %v5270 = vand.u32 %v5268, 31
    %v5271 = vsub.s32 32, %v5270
    %v5272 = vshrl.u32 683565275, %v5271
    %v5273 = vshll.u32 683565275, %v5270
    %v5274 = vshrl.u32 2475754826, %v5271
    %v5275 = vor.u32 %v5273, %v5274
    %v5276 = vshll.u32 2475754826, %v5270
    %v5277 = vshrl.u32 2131351028, %v5271
    %v5278 = vor.u32 %v5276, %v5277
    %v5279 = vshll.u32 2131351028, %v5270
    %v5280 = vshrl.u32 2102212464, %v5271
    %v5281 = vor.u32 %v5279, %v5280
    %v5282 = vshll.u32 2102212464, %v5270
    %v5283 = vshrl.u32 920167782, %v5271
    %v5284 = vor.u32 %v5282, %v5283
    %v5285 = vshll.u32 920167782, %v5270
    %v5286 = vshrl.u32 1326507024, %v5271
    %v5287 = vor.u32 %v5285, %v5286
    %vm5288 = vcmp.lt.s32.totalorder %v5269, 1
    %vm5289 = vcmp.lt.s32.totalorder %v5269, 2
    %vm5290 = vcmp.lt.s32.totalorder %v5269, 3
    %vm5291 = vcmp.lt.s32.totalorder %v5269, 4
    %v5292 = vsel %vm5288, %v5272, %v5275
    %v5293 = vsel %vm5291, %v5281, 2102212464
    %v5294 = vsel %vm5290, %v5278, %v5293
    %v5295 = vsel %vm5289, %v5292, %v5294
    %v5296 = vsel %vm5288, %v5275, %v5278
    %v5297 = vsel %vm5291, %v5284, 920167782
    %v5298 = vsel %vm5290, %v5281, %v5297
    %v5299 = vsel %vm5289, %v5296, %v5298
    %v5300 = vsel %vm5288, %v5278, %v5281
    %v5301 = vsel %vm5291, %v5287, 1326507024
    %v5302 = vsel %vm5290, %v5284, %v5301
    %v5303 = vsel %vm5289, %v5300, %v5302
    %v5304 = vshll.u32 %v5264, 8
    %v5305 = vmul.u32.u64.compose %v5304, %v5303
    %v5306 = vextract.low.u32 %v5305
    %v5307 = vextract.high.u32 %v5305
    %v5308 = vmul.u32.u64.compose %v5304, %v5299
    %v5309 = vextract.low.u32 %v5308
    %v5310 = vextract.high.u32 %v5308
    %v5311 = vmul.u32 %v5304, %v5295
    %v5312 = vadd.s32 %v5307, %v5309
    %vm5313 = vc.u32 %v5307, %v5309
    %v5314 = vadd.s32 %v5310, 1
    %v5315 = vsel %vm5313, %v5314, %v5310
    %v5316 = vadd.s32 %v5311, %v5315
    %v5317 = vadd.s32 %v5316, 536870912
    %v5318 = vshrl.u32 %v5317, 30
    %v5319 = vshll.u32 %v5318, 30
    %v5320 = vsub.s32 %v5316, %v5319
    %vm5321 = vcmp.lt.s32.totalorder %v5320, 0
    %v5322 = vsub.s32 0, %v5320
    %v5323 = vsel %vm5321, %v5322, %v5320
    %v5324 = vclz %v5323
    %v5325 = vsub.s32 %v5324, 2
    %vm5326 = vcmp.gt.s32.totalorder 0, %v5325
    %v5327 = vsel %vm5326, 0, %v5325
    %v5328 = vsub.s32 32, %v5327
    %v5329 = vshll.u32 %v5320, %v5327
    %v5330 = vshrl.u32 %v5312, %v5328
    %v5331 = vor.u32 %v5329, %v5330
    %v5332 = vsub.s32 4294967266, %v5327
    %v5333 = vadd.s32 %v5332, 127
    %v5334 = vshll.u32 %v5333, 23
    %v5335 = vor.u32 4788187, %v5334
    %v5336 = vand.u32 2147483647, %v5335
    %v5338 = vcvt.s32.f32 %v5331
    %v5339 = vmul.f32 %v5338, %v5336
    %v5340 = vxor.u32 %v5339, 2147483648
    %v5341 = vsel %vm5258, %v5340, %v5339
    %v5342 = vsub.s32 4, %v5318
    %v5343 = vsel %vm5258, %v5342, %v5318
    %v5344 = vsel %vm5257, %v2519, %v5341
    %v5345 = vsel %vm5257, 0, %v5343
    %v5346 = vcosq.f32.pop %v5344
    %v5347 = vsinq.f32.pop %v5344
    %vm5348 = vweird.f32 %v2519
    %v5349 = vadd.s32 %v5345, 3
    %v5350 = vand.u32 %v5349, 3
    %vm5351 = vcmp.lt.s32.totalorder %v5350, 2
    %vm5352 = vcmp.eq.s32.totalorder %v5350, 0
    %v5353 = vxor.u32 %v5347, 2147483648
    %v5354 = vsel %vm5352, %v5346, %v5353
    %vm5355 = vcmp.eq.s32.totalorder %v5350, 2
    %v5356 = vxor.u32 %v5346, 2147483648
    %v5357 = vsel %vm5355, %v5356, %v5347
    %v5358 = vsel %vm5351, %v5354, %v5357
    %v5359 = vsel %vm5348, nan, %v5358
    %v5360 = vand.u32 2147483647, %v2525
    %vm5361 = vcmp.le.f32.partialorder %v5360, 0.7853982
    %vm5362 = vcmp.lt.s32.totalorder %v2525, 0
    %v5363 = vand.u32 %v2525, 2139095040
    %v5364 = vshrl.u32 %v5363, 23
    %v5365 = vsub.s32 %v5364, 127
    %v5366 = vand.u32 2147483647, %v2525
    %v5367 = vand.u32 %v5366, 8388607
    %v5368 = vor.u32 %v5367, 8388608
    %v5369 = vsub.s32 0, %v5368
    %v5370 = vadd.s32 %v5365, 1
    %vm5371 = vcmp.gt.s32.totalorder %v5370, 0
    %v5372 = vsel %vm5371, %v5370, 0
    %v5373 = vshrl.u32 %v5372, 5
    %v5374 = vand.u32 %v5372, 31
    %v5375 = vsub.s32 32, %v5374
    %v5376 = vshrl.u32 683565275, %v5375
    %v5377 = vshll.u32 683565275, %v5374
    %v5378 = vshrl.u32 2475754826, %v5375
    %v5379 = vor.u32 %v5377, %v5378
    %v5380 = vshll.u32 2475754826, %v5374
    %v5381 = vshrl.u32 2131351028, %v5375
    %v5382 = vor.u32 %v5380, %v5381
    %v5383 = vshll.u32 2131351028, %v5374
    %v5384 = vshrl.u32 2102212464, %v5375
    %v5385 = vor.u32 %v5383, %v5384
    %v5386 = vshll.u32 2102212464, %v5374
    %v5387 = vshrl.u32 920167782, %v5375
    %v5388 = vor.u32 %v5386, %v5387
    %v5389 = vshll.u32 920167782, %v5374
    %v5390 = vshrl.u32 1326507024, %v5375
    %v5391 = vor.u32 %v5389, %v5390
    %vm5392 = vcmp.lt.s32.totalorder %v5373, 1
    %vm5393 = vcmp.lt.s32.totalorder %v5373, 2
    %vm5394 = vcmp.lt.s32.totalorder %v5373, 3
    %vm5395 = vcmp.lt.s32.totalorder %v5373, 4
    %v5396 = vsel %vm5392, %v5376, %v5379
    %v5397 = vsel %vm5395, %v5385, 2102212464
    %v5398 = vsel %vm5394, %v5382, %v5397
    %v5399 = vsel %vm5393, %v5396, %v5398
    %v5400 = vsel %vm5392, %v5379, %v5382
    %v5401 = vsel %vm5395, %v5388, 920167782
    %v5402 = vsel %vm5394, %v5385, %v5401
    %v5403 = vsel %vm5393, %v5400, %v5402
    %v5404 = vsel %vm5392, %v5382, %v5385
    %v5405 = vsel %vm5395, %v5391, 1326507024
    %v5406 = vsel %vm5394, %v5388, %v5405
    %v5407 = vsel %vm5393, %v5404, %v5406
    %v5408 = vshll.u32 %v5368, 8
    %v5409 = vmul.u32.u64.compose %v5408, %v5407
    %v5410 = vextract.low.u32 %v5409
    %v5411 = vextract.high.u32 %v5409
    %v5412 = vmul.u32.u64.compose %v5408, %v5403
    %v5413 = vextract.low.u32 %v5412
    %v5414 = vextract.high.u32 %v5412
    %v5415 = vmul.u32 %v5408, %v5399
    %v5416 = vadd.s32 %v5411, %v5413
    %vm5417 = vc.u32 %v5411, %v5413
    %v5418 = vadd.s32 %v5414, 1
    %v5419 = vsel %vm5417, %v5418, %v5414
    %v5420 = vadd.s32 %v5415, %v5419
    %v5421 = vadd.s32 %v5420, 536870912
    %v5422 = vshrl.u32 %v5421, 30
    %v5423 = vshll.u32 %v5422, 30
    %v5424 = vsub.s32 %v5420, %v5423
    %vm5425 = vcmp.lt.s32.totalorder %v5424, 0
    %v5426 = vsub.s32 0, %v5424
    %v5427 = vsel %vm5425, %v5426, %v5424
    %v5428 = vclz %v5427
    %v5429 = vsub.s32 %v5428, 2
    %vm5430 = vcmp.gt.s32.totalorder 0, %v5429
    %v5431 = vsel %vm5430, 0, %v5429
    %v5432 = vsub.s32 32, %v5431
    %v5433 = vshll.u32 %v5424, %v5431
    %v5434 = vshrl.u32 %v5416, %v5432
    %v5435 = vor.u32 %v5433, %v5434
    %v5436 = vsub.s32 4294967266, %v5431
    %v5437 = vadd.s32 %v5436, 127
    %v5438 = vshll.u32 %v5437, 23
    %v5439 = vor.u32 4788187, %v5438
    %v5440 = vand.u32 2147483647, %v5439
    %v5442 = vcvt.s32.f32 %v5435
    %v5443 = vmul.f32 %v5442, %v5440
    %v5444 = vxor.u32 %v5443, 2147483648
    %v5445 = vsel %vm5362, %v5444, %v5443
    %v5446 = vsub.s32 4, %v5422
    %v5447 = vsel %vm5362, %v5446, %v5422
    %v5448 = vsel %vm5361, %v2525, %v5445
    %v5449 = vsel %vm5361, 0, %v5447
    %v5450 = vcosq.f32.pop %v5448
    %v5451 = vsinq.f32.pop %v5448
    %vm5452 = vweird.f32 %v2525
    %v5453 = vadd.s32 %v5449, 3
    %v5454 = vand.u32 %v5453, 3
    %vm5455 = vcmp.lt.s32.totalorder %v5454, 2
    %vm5456 = vcmp.eq.s32.totalorder %v5454, 0
    %v5457 = vxor.u32 %v5451, 2147483648
    %v5458 = vsel %vm5456, %v5450, %v5457
    %vm5459 = vcmp.eq.s32.totalorder %v5454, 2
    %v5460 = vxor.u32 %v5450, 2147483648
    %v5461 = vsel %vm5459, %v5460, %v5451
    %v5462 = vsel %vm5455, %v5458, %v5461
    %v5463 = vsel %vm5452, nan, %v5462
    %v5464 = vand.u32 2147483647, %v2531
    %vm5465 = vcmp.le.f32.partialorder %v5464, 0.7853982
    %vm5466 = vcmp.lt.s32.totalorder %v2531, 0
    %v5467 = vand.u32 %v2531, 2139095040
    %v5468 = vshrl.u32 %v5467, 23
    %v5469 = vsub.s32 %v5468, 127
    %v5470 = vand.u32 2147483647, %v2531
    %v5471 = vand.u32 %v5470, 8388607
    %v5472 = vor.u32 %v5471, 8388608
    %v5473 = vsub.s32 0, %v5472
    %v5474 = vadd.s32 %v5469, 1
    %vm5475 = vcmp.gt.s32.totalorder %v5474, 0
    %v5476 = vsel %vm5475, %v5474, 0
    %v5477 = vshrl.u32 %v5476, 5
    %v5478 = vand.u32 %v5476, 31
    %v5479 = vsub.s32 32, %v5478
    %v5480 = vshrl.u32 683565275, %v5479
    %v5481 = vshll.u32 683565275, %v5478
    %v5482 = vshrl.u32 2475754826, %v5479
    %v5483 = vor.u32 %v5481, %v5482
    %v5484 = vshll.u32 2475754826, %v5478
    %v5485 = vshrl.u32 2131351028, %v5479
    %v5486 = vor.u32 %v5484, %v5485
    %v5487 = vshll.u32 2131351028, %v5478
    %v5488 = vshrl.u32 2102212464, %v5479
    %v5489 = vor.u32 %v5487, %v5488
    %v5490 = vshll.u32 2102212464, %v5478
    %v5491 = vshrl.u32 920167782, %v5479
    %v5492 = vor.u32 %v5490, %v5491
    %v5493 = vshll.u32 920167782, %v5478
    %v5494 = vshrl.u32 1326507024, %v5479
    %v5495 = vor.u32 %v5493, %v5494
    %vm5496 = vcmp.lt.s32.totalorder %v5477, 1
    %vm5497 = vcmp.lt.s32.totalorder %v5477, 2
    %vm5498 = vcmp.lt.s32.totalorder %v5477, 3
    %vm5499 = vcmp.lt.s32.totalorder %v5477, 4
    %v5500 = vsel %vm5496, %v5480, %v5483
    %v5501 = vsel %vm5499, %v5489, 2102212464
    %v5502 = vsel %vm5498, %v5486, %v5501
    %v5503 = vsel %vm5497, %v5500, %v5502
    %v5504 = vsel %vm5496, %v5483, %v5486
    %v5505 = vsel %vm5499, %v5492, 920167782
    %v5506 = vsel %vm5498, %v5489, %v5505
    %v5507 = vsel %vm5497, %v5504, %v5506
    %v5508 = vsel %vm5496, %v5486, %v5489
    %v5509 = vsel %vm5499, %v5495, 1326507024
    %v5510 = vsel %vm5498, %v5492, %v5509
    %v5511 = vsel %vm5497, %v5508, %v5510
    %v5512 = vshll.u32 %v5472, 8
    %v5513 = vmul.u32.u64.compose %v5512, %v5511
    %v5514 = vextract.low.u32 %v5513
    %v5515 = vextract.high.u32 %v5513
    %v5516 = vmul.u32.u64.compose %v5512, %v5507
    %v5517 = vextract.low.u32 %v5516
    %v5518 = vextract.high.u32 %v5516
    %v5519 = vmul.u32 %v5512, %v5503
    %v5520 = vadd.s32 %v5515, %v5517
    %vm5521 = vc.u32 %v5515, %v5517
    %v5522 = vadd.s32 %v5518, 1
    %v5523 = vsel %vm5521, %v5522, %v5518
    %v5524 = vadd.s32 %v5519, %v5523
    %v5525 = vadd.s32 %v5524, 536870912
    %v5526 = vshrl.u32 %v5525, 30
    %v5527 = vshll.u32 %v5526, 30
    %v5528 = vsub.s32 %v5524, %v5527
    %vm5529 = vcmp.lt.s32.totalorder %v5528, 0
    %v5530 = vsub.s32 0, %v5528
    %v5531 = vsel %vm5529, %v5530, %v5528
    %v5532 = vclz %v5531
    %v5533 = vsub.s32 %v5532, 2
    %vm5534 = vcmp.gt.s32.totalorder 0, %v5533
    %v5535 = vsel %vm5534, 0, %v5533
    %v5536 = vsub.s32 32, %v5535
    %v5537 = vshll.u32 %v5528, %v5535
    %v5538 = vshrl.u32 %v5520, %v5536
    %v5539 = vor.u32 %v5537, %v5538
    %v5540 = vsub.s32 4294967266, %v5535
    %v5541 = vadd.s32 %v5540, 127
    %v5542 = vshll.u32 %v5541, 23
    %v5543 = vor.u32 4788187, %v5542
    %v5544 = vand.u32 2147483647, %v5543
    %v5546 = vcvt.s32.f32 %v5539
    %v5547 = vmul.f32 %v5546, %v5544
    %v5548 = vxor.u32 %v5547, 2147483648
    %v5549 = vsel %vm5466, %v5548, %v5547
    %v5550 = vsub.s32 4, %v5526
    %v5551 = vsel %vm5466, %v5550, %v5526
    %v5552 = vsel %vm5465, %v2531, %v5549
    %v5553 = vsel %vm5465, 0, %v5551
    %v5554 = vcosq.f32.pop %v5552
    %v5555 = vsinq.f32.pop %v5552
    %vm5556 = vweird.f32 %v2531
    %v5557 = vadd.s32 %v5553, 3
    %v5558 = vand.u32 %v5557, 3
    %vm5559 = vcmp.lt.s32.totalorder %v5558, 2
    %vm5560 = vcmp.eq.s32.totalorder %v5558, 0
    %v5561 = vxor.u32 %v5555, 2147483648
    %v5562 = vsel %vm5560, %v5554, %v5561
    %vm5563 = vcmp.eq.s32.totalorder %v5558, 2
    %v5564 = vxor.u32 %v5554, 2147483648
    %v5565 = vsel %vm5563, %v5564, %v5555
    %v5566 = vsel %vm5559, %v5562, %v5565
    %v5567 = vsel %vm5556, nan, %v5566
    %v5568 = vand.u32 2147483647, %v2537
    %vm5569 = vcmp.le.f32.partialorder %v5568, 0.7853982
    %vm5570 = vcmp.lt.s32.totalorder %v2537, 0
    %v5571 = vand.u32 %v2537, 2139095040
    %v5572 = vshrl.u32 %v5571, 23
    %v5573 = vsub.s32 %v5572, 127
    %v5574 = vand.u32 2147483647, %v2537
    %v5575 = vand.u32 %v5574, 8388607
    %v5576 = vor.u32 %v5575, 8388608
    %v5577 = vsub.s32 0, %v5576
    %v5578 = vadd.s32 %v5573, 1
    %vm5579 = vcmp.gt.s32.totalorder %v5578, 0
    %v5580 = vsel %vm5579, %v5578, 0
    %v5581 = vshrl.u32 %v5580, 5
    %v5582 = vand.u32 %v5580, 31
    %v5583 = vsub.s32 32, %v5582
    %v5584 = vshrl.u32 683565275, %v5583
    %v5585 = vshll.u32 683565275, %v5582
    %v5586 = vshrl.u32 2475754826, %v5583
    %v5587 = vor.u32 %v5585, %v5586
    %v5588 = vshll.u32 2475754826, %v5582
    %v5589 = vshrl.u32 2131351028, %v5583
    %v5590 = vor.u32 %v5588, %v5589
    %v5591 = vshll.u32 2131351028, %v5582
    %v5592 = vshrl.u32 2102212464, %v5583
    %v5593 = vor.u32 %v5591, %v5592
    %v5594 = vshll.u32 2102212464, %v5582
    %v5595 = vshrl.u32 920167782, %v5583
    %v5596 = vor.u32 %v5594, %v5595
    %v5597 = vshll.u32 920167782, %v5582
    %v5598 = vshrl.u32 1326507024, %v5583
    %v5599 = vor.u32 %v5597, %v5598
    %vm5600 = vcmp.lt.s32.totalorder %v5581, 1
    %vm5601 = vcmp.lt.s32.totalorder %v5581, 2
    %vm5602 = vcmp.lt.s32.totalorder %v5581, 3
    %vm5603 = vcmp.lt.s32.totalorder %v5581, 4
    %v5604 = vsel %vm5600, %v5584, %v5587
    %v5605 = vsel %vm5603, %v5593, 2102212464
    %v5606 = vsel %vm5602, %v5590, %v5605
    %v5607 = vsel %vm5601, %v5604, %v5606
    %v5608 = vsel %vm5600, %v5587, %v5590
    %v5609 = vsel %vm5603, %v5596, 920167782
    %v5610 = vsel %vm5602, %v5593, %v5609
    %v5611 = vsel %vm5601, %v5608, %v5610
    %v5612 = vsel %vm5600, %v5590, %v5593
    %v5613 = vsel %vm5603, %v5599, 1326507024
    %v5614 = vsel %vm5602, %v5596, %v5613
    %v5615 = vsel %vm5601, %v5612, %v5614
    %v5616 = vshll.u32 %v5576, 8
    %v5617 = vmul.u32.u64.compose %v5616, %v5615
    %v5618 = vextract.low.u32 %v5617
    %v5619 = vextract.high.u32 %v5617
    %v5620 = vmul.u32.u64.compose %v5616, %v5611
    %v5621 = vextract.low.u32 %v5620
    %v5622 = vextract.high.u32 %v5620
    %v5623 = vmul.u32 %v5616, %v5607
    %v5624 = vadd.s32 %v5619, %v5621
    %vm5625 = vc.u32 %v5619, %v5621
    %v5626 = vadd.s32 %v5622, 1
    %v5627 = vsel %vm5625, %v5626, %v5622
    %v5628 = vadd.s32 %v5623, %v5627
    %v5629 = vadd.s32 %v5628, 536870912
    %v5630 = vshrl.u32 %v5629, 30
    %v5631 = vshll.u32 %v5630, 30
    %v5632 = vsub.s32 %v5628, %v5631
    %vm5633 = vcmp.lt.s32.totalorder %v5632, 0
    %v5634 = vsub.s32 0, %v5632
    %v5635 = vsel %vm5633, %v5634, %v5632
    %v5636 = vclz %v5635
    %v5637 = vsub.s32 %v5636, 2
    %vm5638 = vcmp.gt.s32.totalorder 0, %v5637
    %v5639 = vsel %vm5638, 0, %v5637
    %v5640 = vsub.s32 32, %v5639
    %v5641 = vshll.u32 %v5632, %v5639
    %v5642 = vshrl.u32 %v5624, %v5640
    %v5643 = vor.u32 %v5641, %v5642
    %v5644 = vsub.s32 4294967266, %v5639
    %v5645 = vadd.s32 %v5644, 127
    %v5646 = vshll.u32 %v5645, 23
    %v5647 = vor.u32 4788187, %v5646
    %v5648 = vand.u32 2147483647, %v5647
    %v5650 = vcvt.s32.f32 %v5643
    %v5651 = vmul.f32 %v5650, %v5648
    %v5652 = vxor.u32 %v5651, 2147483648
    %v5653 = vsel %vm5570, %v5652, %v5651
    %v5654 = vsub.s32 4, %v5630
    %v5655 = vsel %vm5570, %v5654, %v5630
    %v5656 = vsel %vm5569, %v2537, %v5653
    %v5657 = vsel %vm5569, 0, %v5655
    %v5658 = vcosq.f32.pop %v5656
    %v5659 = vsinq.f32.pop %v5656
    %vm5660 = vweird.f32 %v2537
    %v5661 = vadd.s32 %v5657, 3
    %v5662 = vand.u32 %v5661, 3
    %vm5663 = vcmp.lt.s32.totalorder %v5662, 2
    %vm5664 = vcmp.eq.s32.totalorder %v5662, 0
    %v5665 = vxor.u32 %v5659, 2147483648
    %v5666 = vsel %vm5664, %v5658, %v5665
    %vm5667 = vcmp.eq.s32.totalorder %v5662, 2
    %v5668 = vxor.u32 %v5658, 2147483648
    %v5669 = vsel %vm5667, %v5668, %v5659
    %v5670 = vsel %vm5663, %v5666, %v5669
    %v5671 = vsel %vm5660, nan, %v5670
    %v5672 = vand.u32 2147483647, %v2543
    %vm5673 = vcmp.le.f32.partialorder %v5672, 0.7853982
    %vm5674 = vcmp.lt.s32.totalorder %v2543, 0
    %v5675 = vand.u32 %v2543, 2139095040
    %v5676 = vshrl.u32 %v5675, 23
    %v5677 = vsub.s32 %v5676, 127
    %v5678 = vand.u32 2147483647, %v2543
    %v5679 = vand.u32 %v5678, 8388607
    %v5680 = vor.u32 %v5679, 8388608
    %v5681 = vsub.s32 0, %v5680
    %v5682 = vadd.s32 %v5677, 1
    %vm5683 = vcmp.gt.s32.totalorder %v5682, 0
    %v5684 = vsel %vm5683, %v5682, 0
    %v5685 = vshrl.u32 %v5684, 5
    %v5686 = vand.u32 %v5684, 31
    %v5687 = vsub.s32 32, %v5686
    %v5688 = vshrl.u32 683565275, %v5687
    %v5689 = vshll.u32 683565275, %v5686
    %v5690 = vshrl.u32 2475754826, %v5687
    %v5691 = vor.u32 %v5689, %v5690
    %v5692 = vshll.u32 2475754826, %v5686
    %v5693 = vshrl.u32 2131351028, %v5687
    %v5694 = vor.u32 %v5692, %v5693
    %v5695 = vshll.u32 2131351028, %v5686
    %v5696 = vshrl.u32 2102212464, %v5687
    %v5697 = vor.u32 %v5695, %v5696
    %v5698 = vshll.u32 2102212464, %v5686
    %v5699 = vshrl.u32 920167782, %v5687
    %v5700 = vor.u32 %v5698, %v5699
    %v5701 = vshll.u32 920167782, %v5686
    %v5702 = vshrl.u32 1326507024, %v5687
    %v5703 = vor.u32 %v5701, %v5702
    %vm5704 = vcmp.lt.s32.totalorder %v5685, 1
    %vm5705 = vcmp.lt.s32.totalorder %v5685, 2
    %vm5706 = vcmp.lt.s32.totalorder %v5685, 3
    %vm5707 = vcmp.lt.s32.totalorder %v5685, 4
    %v5708 = vsel %vm5704, %v5688, %v5691
    %v5709 = vsel %vm5707, %v5697, 2102212464
    %v5710 = vsel %vm5706, %v5694, %v5709
    %v5711 = vsel %vm5705, %v5708, %v5710
    %v5712 = vsel %vm5704, %v5691, %v5694
    %v5713 = vsel %vm5707, %v5700, 920167782
    %v5714 = vsel %vm5706, %v5697, %v5713
    %v5715 = vsel %vm5705, %v5712, %v5714
    %v5716 = vsel %vm5704, %v5694, %v5697
    %v5717 = vsel %vm5707, %v5703, 1326507024
    %v5718 = vsel %vm5706, %v5700, %v5717
    %v5719 = vsel %vm5705, %v5716, %v5718
    %v5720 = vshll.u32 %v5680, 8
    %v5721 = vmul.u32.u64.compose %v5720, %v5719
    %v5722 = vextract.low.u32 %v5721
    %v5723 = vextract.high.u32 %v5721
    %v5724 = vmul.u32.u64.compose %v5720, %v5715
    %v5725 = vextract.low.u32 %v5724
    %v5726 = vextract.high.u32 %v5724
    %v5727 = vmul.u32 %v5720, %v5711
    %v5728 = vadd.s32 %v5723, %v5725
    %vm5729 = vc.u32 %v5723, %v5725
    %v5730 = vadd.s32 %v5726, 1
    %v5731 = vsel %vm5729, %v5730, %v5726
    %v5732 = vadd.s32 %v5727, %v5731
    %v5733 = vadd.s32 %v5732, 536870912
    %v5734 = vshrl.u32 %v5733, 30
    %v5735 = vshll.u32 %v5734, 30
    %v5736 = vsub.s32 %v5732, %v5735
    %vm5737 = vcmp.lt.s32.totalorder %v5736, 0
    %v5738 = vsub.s32 0, %v5736
    %v5739 = vsel %vm5737, %v5738, %v5736
    %v5740 = vclz %v5739
    %v5741 = vsub.s32 %v5740, 2
    %vm5742 = vcmp.gt.s32.totalorder 0, %v5741
    %v5743 = vsel %vm5742, 0, %v5741
    %v5744 = vsub.s32 32, %v5743
    %v5745 = vshll.u32 %v5736, %v5743
    %v5746 = vshrl.u32 %v5728, %v5744
    %v5747 = vor.u32 %v5745, %v5746
    %v5748 = vsub.s32 4294967266, %v5743
    %v5749 = vadd.s32 %v5748, 127
    %v5750 = vshll.u32 %v5749, 23
    %v5751 = vor.u32 4788187, %v5750
    %v5752 = vand.u32 2147483647, %v5751
    %v5754 = vcvt.s32.f32 %v5747
    %v5755 = vmul.f32 %v5754, %v5752
    %v5756 = vxor.u32 %v5755, 2147483648
    %v5757 = vsel %vm5674, %v5756, %v5755
    %v5758 = vsub.s32 4, %v5734
    %v5759 = vsel %vm5674, %v5758, %v5734
    %v5760 = vsel %vm5673, %v2543, %v5757
    %v5761 = vsel %vm5673, 0, %v5759
    %v5762 = vcosq.f32.pop %v5760
    %v5763 = vsinq.f32.pop %v5760
    %vm5764 = vweird.f32 %v2543
    %v5765 = vadd.s32 %v5761, 3
    %v5766 = vand.u32 %v5765, 3
    %vm5767 = vcmp.lt.s32.totalorder %v5766, 2
    %vm5768 = vcmp.eq.s32.totalorder %v5766, 0
    %v5769 = vxor.u32 %v5763, 2147483648
    %v5770 = vsel %vm5768, %v5762, %v5769
    %vm5771 = vcmp.eq.s32.totalorder %v5766, 2
    %v5772 = vxor.u32 %v5762, 2147483648
    %v5773 = vsel %vm5771, %v5772, %v5763
    %v5774 = vsel %vm5767, %v5770, %v5773
    %v5775 = vsel %vm5764, nan, %v5774
    %v5776 = vand.u32 2147483647, %v2549
    %vm5777 = vcmp.le.f32.partialorder %v5776, 0.7853982
    %vm5778 = vcmp.lt.s32.totalorder %v2549, 0
    %v5779 = vand.u32 %v2549, 2139095040
    %v5780 = vshrl.u32 %v5779, 23
    %v5781 = vsub.s32 %v5780, 127
    %v5782 = vand.u32 2147483647, %v2549
    %v5783 = vand.u32 %v5782, 8388607
    %v5784 = vor.u32 %v5783, 8388608
    %v5785 = vsub.s32 0, %v5784
    %v5786 = vadd.s32 %v5781, 1
    %vm5787 = vcmp.gt.s32.totalorder %v5786, 0
    %v5788 = vsel %vm5787, %v5786, 0
    %v5789 = vshrl.u32 %v5788, 5
    %v5790 = vand.u32 %v5788, 31
    %v5791 = vsub.s32 32, %v5790
    %v5792 = vshrl.u32 683565275, %v5791
    %v5793 = vshll.u32 683565275, %v5790
    %v5794 = vshrl.u32 2475754826, %v5791
    %v5795 = vor.u32 %v5793, %v5794
    %v5796 = vshll.u32 2475754826, %v5790
    %v5797 = vshrl.u32 2131351028, %v5791
    %v5798 = vor.u32 %v5796, %v5797
    %v5799 = vshll.u32 2131351028, %v5790
    %v5800 = vshrl.u32 2102212464, %v5791
    %v5801 = vor.u32 %v5799, %v5800
    %v5802 = vshll.u32 2102212464, %v5790
    %v5803 = vshrl.u32 920167782, %v5791
    %v5804 = vor.u32 %v5802, %v5803
    %v5805 = vshll.u32 920167782, %v5790
    %v5806 = vshrl.u32 1326507024, %v5791
    %v5807 = vor.u32 %v5805, %v5806
    %vm5808 = vcmp.lt.s32.totalorder %v5789, 1
    %vm5809 = vcmp.lt.s32.totalorder %v5789, 2
    %vm5810 = vcmp.lt.s32.totalorder %v5789, 3
    %vm5811 = vcmp.lt.s32.totalorder %v5789, 4
    %v5812 = vsel %vm5808, %v5792, %v5795
    %v5813 = vsel %vm5811, %v5801, 2102212464
    %v5814 = vsel %vm5810, %v5798, %v5813
    %v5815 = vsel %vm5809, %v5812, %v5814
    %v5816 = vsel %vm5808, %v5795, %v5798
    %v5817 = vsel %vm5811, %v5804, 920167782
    %v5818 = vsel %vm5810, %v5801, %v5817
    %v5819 = vsel %vm5809, %v5816, %v5818
    %v5820 = vsel %vm5808, %v5798, %v5801
    %v5821 = vsel %vm5811, %v5807, 1326507024
    %v5822 = vsel %vm5810, %v5804, %v5821
    %v5823 = vsel %vm5809, %v5820, %v5822
    %v5824 = vshll.u32 %v5784, 8
    %v5825 = vmul.u32.u64.compose %v5824, %v5823
    %v5826 = vextract.low.u32 %v5825
    %v5827 = vextract.high.u32 %v5825
    %v5828 = vmul.u32.u64.compose %v5824, %v5819
    %v5829 = vextract.low.u32 %v5828
    %v5830 = vextract.high.u32 %v5828
    %v5831 = vmul.u32 %v5824, %v5815
    %v5832 = vadd.s32 %v5827, %v5829
    %vm5833 = vc.u32 %v5827, %v5829
    %v5834 = vadd.s32 %v5830, 1
    %v5835 = vsel %vm5833, %v5834, %v5830
    %v5836 = vadd.s32 %v5831, %v5835
    %v5837 = vadd.s32 %v5836, 536870912
    %v5838 = vshrl.u32 %v5837, 30
    %v5839 = vshll.u32 %v5838, 30
    %v5840 = vsub.s32 %v5836, %v5839
    %vm5841 = vcmp.lt.s32.totalorder %v5840, 0
    %v5842 = vsub.s32 0, %v5840
    %v5843 = vsel %vm5841, %v5842, %v5840
    %v5844 = vclz %v5843
    %v5845 = vsub.s32 %v5844, 2
    %vm5846 = vcmp.gt.s32.totalorder 0, %v5845
    %v5847 = vsel %vm5846, 0, %v5845
    %v5848 = vsub.s32 32, %v5847
    %v5849 = vshll.u32 %v5840, %v5847
    %v5850 = vshrl.u32 %v5832, %v5848
    %v5851 = vor.u32 %v5849, %v5850
    %v5852 = vsub.s32 4294967266, %v5847
    %v5853 = vadd.s32 %v5852, 127
    %v5854 = vshll.u32 %v5853, 23
    %v5855 = vor.u32 4788187, %v5854
    %v5856 = vand.u32 2147483647, %v5855
    %v5858 = vcvt.s32.f32 %v5851
    %v5859 = vmul.f32 %v5858, %v5856
    %v5860 = vxor.u32 %v5859, 2147483648
    %v5861 = vsel %vm5778, %v5860, %v5859
    %v5862 = vsub.s32 4, %v5838
    %v5863 = vsel %vm5778, %v5862, %v5838
    %v5864 = vsel %vm5777, %v2549, %v5861
    %v5865 = vsel %vm5777, 0, %v5863
    %v5866 = vcosq.f32.pop %v5864
    %v5867 = vsinq.f32.pop %v5864
    %vm5868 = vweird.f32 %v2549
    %v5869 = vadd.s32 %v5865, 3
    %v5870 = vand.u32 %v5869, 3
    %vm5871 = vcmp.lt.s32.totalorder %v5870, 2
    %vm5872 = vcmp.eq.s32.totalorder %v5870, 0
    %v5873 = vxor.u32 %v5867, 2147483648
    %v5874 = vsel %vm5872, %v5866, %v5873
    %vm5875 = vcmp.eq.s32.totalorder %v5870, 2
    %v5876 = vxor.u32 %v5866, 2147483648
    %v5877 = vsel %vm5875, %v5876, %v5867
    %v5878 = vsel %vm5871, %v5874, %v5877
    %v5879 = vsel %vm5868, nan, %v5878
    %5880 = vst [vmem:[#allocation5] sm:$0xff] %v2655
    %5881 = vst [vmem:[#allocation5 + $0x8] sm:$0xff] %v2759
    %5882 = vst [vmem:[#allocation5 + $0x10] sm:$0xff] %v2863
    %5883 = vst [vmem:[#allocation5 + $0x18] sm:$0xff] %v2967
    %5884 = vst [vmem:[#allocation5 + $0x20] sm:$0xff] %v3071
    %5885 = vst [vmem:[#allocation5 + $0x28] sm:$0xff] %v3175
    %5886 = vst [vmem:[#allocation5 + $0x30] sm:$0xff] %v3279
    %5887 = vst [vmem:[#allocation5 + $0x38] sm:$0xff] %v3383
    %5888 = vst [vmem:[#allocation5 + $0x40] sm:$0xff] %v3487
    %5889 = vst [vmem:[#allocation5 + $0x48] sm:$0xff] %v3591
    %5890 = vst [vmem:[#allocation5 + $0x50] sm:$0xff] %v3695
    %5891 = vst [vmem:[#allocation5 + $0x58] sm:$0xff] %v3799
    %5892 = vst [vmem:[#allocation5 + $0x60] sm:$0xff] %v3903
    %5893 = vst [vmem:[#allocation5 + $0x68] sm:$0xff] %v4007
    %5894 = vst [vmem:[#allocation5 + $0x70] sm:$0xff] %v4111
    %5895 = vst [vmem:[#allocation5 + $0x78] sm:$0xff] %v4215
    %5896 = vst [vmem:[#allocation5 + $0x80] sm:$0xff] %v4319
    %5897 = vst [vmem:[#allocation5 + $0x88] sm:$0xff] %v4423
    %5898 = vst [vmem:[#allocation5 + $0x90] sm:$0xff] %v4527
    %5899 = vst [vmem:[#allocation5 + $0x98] sm:$0xff] %v4631
    %5900 = vst [vmem:[#allocation5 + $0xa0] sm:$0xff] %v4735
    %5901 = vst [vmem:[#allocation5 + $0xa8] sm:$0xff] %v4839
    %5902 = vst [vmem:[#allocation5 + $0xb0] sm:$0xff] %v4943
    %5903 = vst [vmem:[#allocation5 + $0xb8] sm:$0xff] %v5047
    %5904 = vst [vmem:[#allocation5 + $0xc0] sm:$0xff] %v5151
    %5905 = vst [vmem:[#allocation5 + $0xc8] sm:$0xff] %v5255
    %5906 = vst [vmem:[#allocation5 + $0xd0] sm:$0xff] %v5359
    %5907 = vst [vmem:[#allocation5 + $0xd8] sm:$0xff] %v5463
    %5908 = vst [vmem:[#allocation5 + $0xe0] sm:$0xff] %v5567
    %5909 = vst [vmem:[#allocation5 + $0xe8] sm:$0xff] %v5671
    %5910 = vst [vmem:[#allocation5 + $0xf0] sm:$0xff] %v5775
    %5911 = vst [vmem:[#allocation5 + $0xf8] sm:$0xff] %v5879
    // Predicated region
    $region34: #{tpu_custom_call.1} parent=1 // pred_check
      _
    $region35: #{tpu_custom_call.1} parent=1 // pred_check_branch
      %5913 = sbr.rel (0) target = $region37
    $region36: #{tpu_custom_call.1} parent=1 // pred_region
      %s5915 = ssub.s32 4096, 4096
      %5916 = vsyncadd [#allocation4], %s5915
      %s5917 = sshll.u32 [#allocation5], 4
      %s5918 = int_to_ptr.vmem [resolvable:$true] %s5917
      %5923 = dma.vmem_to_hbm [thread:$0]  %s5918, 4096, %s7, [#allocation4], 128, 128, 8
    $region37: #{tpu_custom_call.1} parent=1 // pred_fallthru
      _
    // Predicated region
    $region38: #{tpu_custom_call.1} parent=1 // pred_check
      _
    $region39: #{tpu_custom_call.1} parent=1 // pred_check_branch
      %5925 = sbr.rel (0) target = $region41
    $region40: #{tpu_custom_call.1} parent=1 // pred_region
      %5926 = dma.done [#allocation4], 4096
    $region41: #{tpu_custom_call.1} parent=1 // pred_fallthru
      _
    %5927 = vsyncpa [#allocation3], 1
    %5928 = vsyncpa [#allocation4], 1

// kernel: tpu_custom_call.1
$region0: #{tpu_custom_call.1}
  #allocation0 [shape = 'u32[]', space=smem, size = 0x4, offset = 0x4, fixed_abs, tag = 'smem constant byte address 0x4 - core index']
  #allocation1 [shape = 'u32[144,128]{1,0:T(1,128)}', space=vmem, size = 0x12000, scoped, tag = 'internal scratch']
  %s0 = inlined_call_operand.vmem [shape: bf16[2,16,16], index: 0, kind: input, shape index: {}]
  %s1 = inlined_call_operand.vmem [shape: bf16[2,16,16], index: 1, kind: input, shape index: {}]
  %s2 = inlined_call_operand.vmem [shape: bf16[16,16], index: 2, kind: input, shape index: {}]
  %s3 = inlined_call_operand.hbm [shape: bf16[16,16], index: 3, kind: input, shape index: {}]
  %s4 = inlined_call_operand.vmem [shape: f32[8,128], index: 4, kind: input, shape index: {}]
  %s5 = inlined_call_operand.vmem [shape: f32[2,1,16], index: 5, kind: input, shape index: {}]
  %s6 = inlined_call_operand.vmem [shape: f32[2,16,1], index: 6, kind: input, shape index: {}]
  %s7 = inlined_call_operand.hbm [shape: f32[2,16,16,128], index: 7, kind: output, shape index: {}]
  %s8 = sld [smem:[#allocation0]]
  $region65: #{tpu_custom_call.1} parent=0
    _
  %s10 = ssub.s32 1, %s8
  %s11 = scalar_select 0, %s10, %s8
  $region1: #{tpu_custom_call.1} parent=0
    #allocation2 [shape = 'u8[4096]{0}', space=vmem, size = 0x1000, scoped, tag = 'input window, operand 3, single buffered']
    #allocation3 [shape = 's32[2]{0}', space=sflag, size = 0x8, scoped, tag = 'scoped memory for tpu_custom_call.1']
    #allocation4 [shape = 's32[2]{0}', space=sflag, size = 0x8, scoped, tag = 'scoped memory for tpu_custom_call.1']
    #allocation5 [shape = 'u8[262144]{0}', space=vmem, size = 0x40000, scoped, tag = 'output window, operand 0']
    %12 = vsyncpa [#allocation3], 0
    %13 = vsyncpa [#allocation4], 0
    %s14 = scalar_lea.sflag [#allocation4], 1
    %15 = vsyncpa %s14, 0
    loop: start=0, step=1, limit=4
    $region2: #{tpu_custom_call.1} parent=1 // loop_pre_header
      _
    $region3: #{tpu_custom_call.1} parent=1 // loop_header
      %s17 = sphi 0, %s21
      %p18 = scmp.ge.s32.totalorder %s17, 4
      %s24 = sphi 0, %s36
      %s25 = sphi 0, %s32
      %s26 = sphi 0, %s24
      %s27 = sphi 0, %s25
      %s28 = sphi 0, %s26
      %s29 = sphi 0, %s27
      %s39 = sphi 0, %s41
      %s42 = sphi 0, %s39
      %s43 = sphi 0, %s42
      %s59 = sphi 0, %s43
      %s67 = sphi 0, %s69
      %s70 = sphi 0, %s67
      %s71 = sphi 0, %s70
      %s87 = sphi 0, %s71
      %s93 = sphi 0, %s95
      %s96 = sphi 0, %s93
      %s97 = sphi 0, %s96
      %s113 = sphi 0, %s97
      %s117 = sphi 0, %s117
      %s119 = sphi 0, %s117
      %s120 = sphi 0, %s119
      %s134 = sphi 0, %s120
      %s138 = sphi 0, %s138
      %s140 = sphi 0, %s138
      %s141 = sphi 0, %s140
      %s155 = sphi 0, %s141
      %s161 = sphi 0, %s163
      %s164 = sphi 0, %s161
      %s165 = sphi 0, %s164
      %s181 = sphi 0, %s165
      %s189 = sphi 0, %s191
      %s192 = sphi 0, %s189
      %s193 = sphi 0, %s192
      %s209 = sphi 0, %s193
      %s217 = sphi 0, %s219
      %s220 = sphi 0, %s217
      %s221 = sphi 0, %s220
      %s237 = sphi 0, %s221
    $region4: #{tpu_custom_call.1} parent=1 // loop_header_branch
      %20 = sbr.rel (%p18) target = $region8
    $region5: #{tpu_custom_call.1} parent=1 // loop_body
      %s22 = ssub.s32 %s17, 1
      %s23 = ssub.s32 %s17, 2
      %s30 = sadd.s32 1, %s25
      %p31 = scmp.ge.s32.totalorder %s30, 1
      %s32 = scalar_select %p31, 0, %s30
      %s33 = sadd.s32 1, %s24
      %s34 = scalar_select %p31, %s33, %s24
      %p35 = scmp.ge.s32.totalorder %s34, 2
      %s36 = scalar_select %p35, 0, %s34
      %s37 = ssub.s32 %s24, %s36
      %p38 = scmp.eq.s32.totalorder %s37, 0
      %s40 = sadd.s32 %s39, 1
      %s41 = scalar_select %p38, %s39, %s40
      %p44 = pneg %p38
      %p45 = scmp.eq.s32.totalorder %s17, 1
      %p46 = por %p44, %p45
      %p47 = scmp.ne.s32.totalorder %s39, %s42
      %p48 = scmp.eq.s32.totalorder %s17, 0
      %p49 = por %p47, %p48
      %p50 = scmp.ne.s32.totalorder %s39, %s42
      %p51 = scmp.eq.s32.totalorder %s22, 1
      %p52 = por %p50, %p51
      %p53 = scmp.ne.s32.totalorder %s42, %s43
      %p54 = scmp.eq.s32.totalorder %s22, 0
      %p55 = por %p53, %p54
      %p56 = scmp.ne.s32.totalorder %s42, %s43
      %p57 = scmp.eq.s32.totalorder %s23, 1
      %p58 = por %p56, %p57
      %p60 = scmp.ne.s32.totalorder %s43, %s59
      %p61 = scmp.eq.s32.totalorder %s23, 0
      %p62 = por %p60, %p61
      %s63 = ssub.s32 %s24, %s36
      %s64 = ssub.s32 %s25, %s32
      %s65 = sor.u32 %s63, %s64
      %p66 = scmp.eq.s32.totalorder %s65, 0
      %s68 = sadd.s32 %s67, 1
      %s69 = scalar_select %p66, %s67, %s68
      %p72 = pneg %p66
      %p73 = scmp.eq.s32.totalorder %s17, 1
      %p74 = por %p72, %p73
      %p75 = scmp.ne.s32.totalorder %s67, %s70
      %p76 = scmp.eq.s32.totalorder %s17, 0
      %p77 = por %p75, %p76
      %p78 = scmp.ne.s32.totalorder %s67, %s70
      %p79 = scmp.eq.s32.totalorder %s22, 1
      %p80 = por %p78, %p79
      %p81 = scmp.ne.s32.totalorder %s70, %s71
      %p82 = scmp.eq.s32.totalorder %s22, 0
      %p83 = por %p81, %p82
      %p84 = scmp.ne.s32.totalorder %s70, %s71
      %p85 = scmp.eq.s32.totalorder %s23, 1
      %p86 = por %p84, %p85
      %p88 = scmp.ne.s32.totalorder %s71, %s87
      %p89 = scmp.eq.s32.totalorder %s23, 0
      %p90 = por %p88, %p89
      %s91 = ssub.s32 %s25, %s32
      %p92 = scmp.eq.s32.totalorder %s91, 0
      %s94 = sadd.s32 %s93, 1
      %s95 = scalar_select %p92, %s93, %s94
      %p98 = pneg %p92
      %p99 = scmp.eq.s32.totalorder %s17, 1
      %p100 = por %p98, %p99
      %p101 = scmp.ne.s32.totalorder %s93, %s96
      %p102 = scmp.eq.s32.totalorder %s17, 0
      %p103 = por %p101, %p102
      %p104 = scmp.ne.s32.totalorder %s93, %s96
      %p105 = scmp.eq.s32.totalorder %s22, 1
      %p106 = por %p104, %p105
      %p107 = scmp.ne.s32.totalorder %s96, %s97
      %p108 = scmp.eq.s32.totalorder %s22, 0
      %p109 = por %p107, %p108
      %p110 = scmp.ne.s32.totalorder %s96, %s97
      %p111 = scmp.eq.s32.totalorder %s23, 1
      %p112 = por %p110, %p111
      %p114 = scmp.ne.s32.totalorder %s97, %s113
      %p115 = scmp.eq.s32.totalorder %s23, 0
      %p116 = por %p114, %p115
      %s118 = sadd.s32 %s117, 1
      %p121 = scmp.eq.s32.totalorder %s17, 1
      %p122 = scmp.ne.s32.totalorder %s117, %s119
      %p123 = scmp.eq.s32.totalorder %s17, 0
      %p124 = por %p122, %p123
      %p125 = scmp.ne.s32.totalorder %s117, %s119
      %p126 = scmp.eq.s32.totalorder %s22, 1
      %p127 = por %p125, %p126
      %p128 = scmp.ne.s32.totalorder %s119, %s120
      %p129 = scmp.eq.s32.totalorder %s22, 0
      %p130 = por %p128, %p129
      %p131 = scmp.ne.s32.totalorder %s119, %s120
      %p132 = scmp.eq.s32.totalorder %s23, 1
      %p133 = por %p131, %p132
      %p135 = scmp.ne.s32.totalorder %s120, %s134
      %p136 = scmp.eq.s32.totalorder %s23, 0
      %p137 = por %p135, %p136
      %s139 = sadd.s32 %s138, 1
      %p142 = scmp.eq.s32.totalorder %s17, 1
      %p143 = scmp.ne.s32.totalorder %s138, %s140
      %p144 = scmp.eq.s32.totalorder %s17, 0
      %p145 = por %p143, %p144
      %p146 = scmp.ne.s32.totalorder %s138, %s140
      %p147 = scmp.eq.s32.totalorder %s22, 1
      %p148 = por %p146, %p147
      %p149 = scmp.ne.s32.totalorder %s140, %s141
      %p150 = scmp.eq.s32.totalorder %s22, 0
      %p151 = por %p149, %p150
      %p152 = scmp.ne.s32.totalorder %s140, %s141
      %p153 = scmp.eq.s32.totalorder %s23, 1
      %p154 = por %p152, %p153
      %p156 = scmp.ne.s32.totalorder %s141, %s155
      %p157 = scmp.eq.s32.totalorder %s23, 0
      %p158 = por %p156, %p157
      %s159 = ssub.s32 %s24, %s36
      %p160 = scmp.eq.s32.totalorder %s159, 0
      %s162 = sadd.s32 %s161, 1
      %s163 = scalar_select %p160, %s161, %s162
      %p166 = pneg %p160
      %p167 = scmp.eq.s32.totalorder %s17, 1
      %p168 = por %p166, %p167
      %p169 = scmp.ne.s32.totalorder %s161, %s164
      %p170 = scmp.eq.s32.totalorder %s17, 0
      %p171 = por %p169, %p170
      %p172 = scmp.ne.s32.totalorder %s161, %s164
      %p173 = scmp.eq.s32.totalorder %s22, 1
      %p174 = por %p172, %p173
      %p175 = scmp.ne.s32.totalorder %s164, %s165
      %p176 = scmp.eq.s32.totalorder %s22, 0
      %p177 = por %p175, %p176
      %p178 = scmp.ne.s32.totalorder %s164, %s165
      %p179 = scmp.eq.s32.totalorder %s23, 1
      %p180 = por %p178, %p179
      %p182 = scmp.ne.s32.totalorder %s165, %s181
      %p183 = scmp.eq.s32.totalorder %s23, 0
      %p184 = por %p182, %p183
      %s185 = ssub.s32 %s24, %s36
      %s186 = ssub.s32 %s25, %s32
      %s187 = sor.u32 %s185, %s186
      %p188 = scmp.eq.s32.totalorder %s187, 0
      %s190 = sadd.s32 %s189, 1
      %s191 = scalar_select %p188, %s189, %s190
      %p194 = pneg %p188
      %p195 = scmp.eq.s32.totalorder %s17, 1
      %p196 = por %p194, %p195
      %p197 = scmp.ne.s32.totalorder %s189, %s192
      %p198 = scmp.eq.s32.totalorder %s17, 0
      %p199 = por %p197, %p198
      %p200 = scmp.ne.s32.totalorder %s189, %s192
      %p201 = scmp.eq.s32.totalorder %s22, 1
      %p202 = por %p200, %p201
      %p203 = scmp.ne.s32.totalorder %s192, %s193
      %p204 = scmp.eq.s32.totalorder %s22, 0
      %p205 = por %p203, %p204
      %p206 = scmp.ne.s32.totalorder %s192, %s193
      %p207 = scmp.eq.s32.totalorder %s23, 1
      %p208 = por %p206, %p207
      %p210 = scmp.ne.s32.totalorder %s193, %s209
      %p211 = scmp.eq.s32.totalorder %s23, 0
      %p212 = por %p210, %p211
      %s213 = ssub.s32 %s24, %s36
      %s214 = ssub.s32 %s25, %s32
      %s215 = sor.u32 %s213, %s214
      %p216 = scmp.eq.s32.totalorder %s215, 0
      %s218 = sadd.s32 %s217, 1
      %s219 = scalar_select %p216, %s217, %s218
      %p222 = pneg %p216
      %p223 = scmp.eq.s32.totalorder %s17, 1
      %p224 = por %p222, %p223
      %p225 = scmp.ne.s32.totalorder %s217, %s220
      %p226 = scmp.eq.s32.totalorder %s17, 0
      %p227 = por %p225, %p226
      %p228 = scmp.ne.s32.totalorder %s217, %s220
      %p229 = scmp.eq.s32.totalorder %s22, 1
      %p230 = por %p228, %p229
      %p231 = scmp.ne.s32.totalorder %s220, %s221
      %p232 = scmp.eq.s32.totalorder %s22, 0
      %p233 = por %p231, %p232
      %p234 = scmp.ne.s32.totalorder %s220, %s221
      %p235 = scmp.eq.s32.totalorder %s23, 1
      %p236 = por %p234, %p235
      %p238 = scmp.ne.s32.totalorder %s221, %s237
      %p239 = scmp.eq.s32.totalorder %s23, 0
      %p240 = por %p238, %p239
      %p241 = scmp.le.s32.totalorder 1, %s17
      %p242 = scmp.lt.s32.totalorder %s17, 3
      %p243 = pnand %p241, %p242
      %p244 = pneg %p243
      // Predicated region
      $region9: #{tpu_custom_call.1} parent=5 // pred_check
        _
      $region10: #{tpu_custom_call.1} parent=5 // pred_check_branch
        %246 = sbr.rel (%p243) target = $region12
      $region11: #{tpu_custom_call.1} parent=5 // pred_region
        %s247 = ssub.s32 %s17, 1
        // Predicated region
        $region13: #{tpu_custom_call.1} parent=11 // pred_check
          %p248 = pneg %p109
        $region14: #{tpu_custom_call.1} parent=11 // pred_check_branch
          %250 = sbr.rel (%p248) target = $region16
        $region15: #{tpu_custom_call.1} parent=11 // pred_region
          %s251 = smul.u32 2, %s27
          %p252 = scmp.lt.s32.totalorder %s251, 1
          %s253 = scalar_select %p252, %s251, 1
          %s254 = smul.addr %s253, 4
          %s255 = scalar_lea.vmem %s2, %s254
          %s256 = smul.u32 2, %s27
        $region16: #{tpu_custom_call.1} parent=11 // pred_fallthru
          _
        // Predicated region
        $region17: #{tpu_custom_call.1} parent=11 // pred_check
          %p257 = pneg %p130
        $region18: #{tpu_custom_call.1} parent=11 // pred_check_branch
          %259 = sbr.rel (%p257) target = $region20
        $region19: #{tpu_custom_call.1} parent=11 // pred_region
          %s261 = ssub.s32 128, 128
          %262 = vsyncadd [#allocation3], %s261
          %s263 = sshll.u32 [#allocation2], 4
          %s264 = int_to_ptr.vmem [resolvable:$true] %s263
          %269 = dma.hbm_to_vmem [thread:$0]  %s3, 128, %s264, [#allocation3], 64, 64, 4
        $region20: #{tpu_custom_call.1} parent=11 // pred_fallthru
          _
        // Predicated region
        $region21: #{tpu_custom_call.1} parent=11 // pred_check
          %p270 = pneg %p151
        $region22: #{tpu_custom_call.1} parent=11 // pred_check_branch
          %272 = sbr.rel (%p270) target = $region24
        $region23: #{tpu_custom_call.1} parent=11 // pred_region
          _
        $region24: #{tpu_custom_call.1} parent=11 // pred_fallthru
          _
      $region12: #{tpu_custom_call.1} parent=5 // pred_fallthru
        _
      %p273 = scmp.lt.s32.totalorder %s17, 2
      // Predicated region
      $region25: #{tpu_custom_call.1} parent=5 // pred_check
        %p274 = pneg %p273
      $region26: #{tpu_custom_call.1} parent=5 // pred_check_branch
        %276 = sbr.rel (%p274) target = $region28
      $region27: #{tpu_custom_call.1} parent=5 // pred_region
        // Predicated region
        $region29: #{tpu_custom_call.1} parent=27 // pred_check
          %p277 = pneg %p49
        $region30: #{tpu_custom_call.1} parent=27 // pred_check_branch
          %279 = sbr.rel (%p277) target = $region32
        $region31: #{tpu_custom_call.1} parent=27 // pred_region
          %p280 = scmp.lt.s32.totalorder %s24, 1
          %s281 = scalar_select %p280, %s24, 1
          %s282 = smul.addr %s281, 2
          %s283 = smul.addr %s282, 4
          %s284 = scalar_lea.vmem %s0, %s283
        $region32: #{tpu_custom_call.1} parent=27 // pred_fallthru
          _
        // Predicated region
        $region33: #{tpu_custom_call.1} parent=27 // pred_check
          %p285 = pneg %p77
        $region34: #{tpu_custom_call.1} parent=27 // pred_check_branch
          %287 = sbr.rel (%p285) target = $region36
        $region35: #{tpu_custom_call.1} parent=27 // pred_region
          %s288 = smul.u32 2, %s25
          %p289 = scmp.lt.s32.totalorder %s24, 1
          %s290 = scalar_select %p289, %s24, 1
          %p291 = scmp.lt.s32.totalorder %s288, 1
          %s292 = scalar_select %p291, %s288, 1
          %s293 = smul.addr %s290, 2
          %s294 = sadd.s32 %s292, %s293
          %s295 = smul.addr %s294, 4
          %s296 = scalar_lea.vmem %s1, %s295
          %s297 = smul.u32 2, %s25
        $region36: #{tpu_custom_call.1} parent=27 // pred_fallthru
          _
        // Predicated region
        $region37: #{tpu_custom_call.1} parent=27 // pred_check
          %p298 = pneg %p171
        $region38: #{tpu_custom_call.1} parent=27 // pred_check_branch
          %300 = sbr.rel (%p298) target = $region40
        $region39: #{tpu_custom_call.1} parent=27 // pred_region
          %p301 = scmp.lt.s32.totalorder %s24, 1
          %s302 = scalar_select %p301, %s24, 1
          %s303 = scalar_lea.vmem %s5, %s302
        $region40: #{tpu_custom_call.1} parent=27 // pred_fallthru
          _
        // Predicated region
        $region41: #{tpu_custom_call.1} parent=27 // pred_check
          %p304 = pneg %p199
        $region42: #{tpu_custom_call.1} parent=27 // pred_check_branch
          %306 = sbr.rel (%p304) target = $region44
        $region43: #{tpu_custom_call.1} parent=27 // pred_region
          %s307 = smul.u32 2, %s25
          %p308 = scmp.lt.s32.totalorder %s24, 1
          %s309 = scalar_select %p308, %s24, 1
          %p310 = scmp.lt.s32.totalorder %s307, 1
          %s311 = scalar_select %p310, %s307, 1
          %s312 = smul.addr %s309, 2
          %s313 = sadd.s32 %s311, %s312
          %s314 = smul.addr %s313, 8
          %s315 = scalar_lea.vmem %s6, %s314
          %s316 = smul.u32 2, %s25
        $region44: #{tpu_custom_call.1} parent=27 // pred_fallthru
          _
      $region28: #{tpu_custom_call.1} parent=5 // pred_fallthru
        _
      %p317 = scmp.le.s32.totalorder 1, %s17
      %p318 = scmp.lt.s32.totalorder %s17, 3
      %p319 = pnand %p317, %p318
      %p320 = pneg %p319
      // Predicated region
      $region45: #{tpu_custom_call.1} parent=5 // pred_check
        _
      $region46: #{tpu_custom_call.1} parent=5 // pred_check_branch
        %322 = sbr.rel (%p319) target = $region48
      $region47: #{tpu_custom_call.1} parent=5 // pred_region
        %s323 = ssub.s32 %s17, 1
        // Predicated region
        $region49: #{tpu_custom_call.1} parent=47 // pred_check
          %p324 = pneg %p130
        $region50: #{tpu_custom_call.1} parent=47 // pred_check_branch
          %326 = sbr.rel (%p324) target = $region52
        $region51: #{tpu_custom_call.1} parent=47 // pred_region
          %327 = dma.done [#allocation3], 128
        $region52: #{tpu_custom_call.1} parent=47 // pred_fallthru
          _
        %p328 = scmp.lt.s32.totalorder %s26, 1
        %s329 = scalar_select %p328, %s26, 1
        %s330 = smul.addr %s329, 2
        %s331 = smul.addr %s330, 4
        %s332 = scalar_lea.vmem %s0, %s331
        %p333 = pneg %p55
        %p334 = pneg %p52
        %s335 = smul.u32 2, %s27
        %p336 = scmp.lt.s32.totalorder %s26, 1
        %s337 = scalar_select %p336, %s26, 1
        %p338 = scmp.lt.s32.totalorder %s335, 1
        %s339 = scalar_select %p338, %s335, 1
        %s340 = smul.addr %s337, 2
        %s341 = sadd.s32 %s339, %s340
        %s342 = smul.addr %s341, 4
        %s343 = scalar_lea.vmem %s1, %s342
        %p344 = pneg %p83
        %p345 = pneg %p80
        %s346 = smul.u32 2, %s27
        %p347 = scmp.lt.s32.totalorder %s346, 1
        %s348 = scalar_select %p347, %s346, 1
        %s349 = smul.addr %s348, 4
        %s350 = scalar_lea.vmem %s2, %s349
        %p351 = pneg %p109
        %p352 = pneg %p106
        %p353 = pneg %p130
        %p354 = pneg %p127
        %p355 = pneg %p151
        %p356 = pneg %p148
        %p357 = scmp.lt.s32.totalorder %s26, 1
        %s358 = scalar_select %p357, %s26, 1
        %s359 = scalar_lea.vmem %s5, %s358
        %p360 = pneg %p177
        %p361 = pneg %p174
        %s362 = smul.u32 2, %s27
        %p363 = scmp.lt.s32.totalorder %s26, 1
        %s364 = scalar_select %p363, %s26, 1
        %p365 = scmp.lt.s32.totalorder %s362, 1
        %s366 = scalar_select %p365, %s362, 1
        %s367 = smul.addr %s364, 2
        %s368 = sadd.s32 %s366, %s367
        %s369 = smul.addr %s368, 8
        %s370 = scalar_lea.vmem %s6, %s369
        %p371 = pneg %p205
        %p372 = pneg %p202
        %p373 = pneg %p233
        %p374 = pneg %p230
        %s375 = sand.u32 %s220, 1
        %s376 = scalar_lea.sflag [#allocation4], %s375
        %s377 = sand.u32 %s220, 1
        %s378 = smul.addr %s377, 256
        %s379 = scalar_lea.vmem [#allocation5], %s378
        %p380 = scmp.lt.s32.totalorder %s26, 1
        %s381 = scalar_select %p380, %s26, 1
        %s382 = smul.addr %s381, 2
        %s383 = smul.addr %s382, 4
        %s384 = scalar_lea.vmem %s0, %s383
        %s385 = smul.u32 2, %s27
        %p386 = scmp.lt.s32.totalorder %s26, 1
        %s387 = scalar_select %p386, %s26, 1
        %p388 = scmp.lt.s32.totalorder %s385, 1
        %s389 = scalar_select %p388, %s385, 1
        %s390 = smul.addr %s387, 2
        %s391 = sadd.s32 %s389, %s390
        %s392 = smul.addr %s391, 4
        %s393 = scalar_lea.vmem %s1, %s392
        %s394 = smul.u32 2, %s27
        %s395 = smul.u32 2, %s27
        %p396 = scmp.lt.s32.totalorder %s395, 1
        %s397 = scalar_select %p396, %s395, 1
        %s398 = smul.addr %s397, 4
        %s399 = scalar_lea.vmem %s2, %s398
        %s400 = smul.u32 2, %s27
        %p401 = scmp.lt.s32.totalorder %s26, 1
        %s402 = scalar_select %p401, %s26, 1
        %s403 = scalar_lea.vmem %s5, %s402
        %s404 = smul.u32 2, %s27
        %p405 = scmp.lt.s32.totalorder %s26, 1
        %s406 = scalar_select %p405, %s26, 1
        %p407 = scmp.lt.s32.totalorder %s404, 1
        %s408 = scalar_select %p407, %s404, 1
        %s409 = smul.addr %s406, 2
        %s410 = sadd.s32 %s408, %s409
        %s411 = smul.addr %s410, 8
        %s412 = scalar_lea.vmem %s6, %s411
        %s413 = smul.u32 2, %s27
        %s414 = smul.u32 16, %s27
        %v416 = vld [vmem:[%s399] sm:$0xf]
        %v417 = vld [vmem:[%s399 + $0x4] sm:$0xf]
        %v418 = vld [vmem:[#allocation2] sm:$0xf]
        %v419 = vld [vmem:[#allocation2 + $0x4] sm:$0xf]
        %v420 = vld [vmem:[%s4] sm:$0xff]
        %v422 = vrot.slane %v420, 1
        %v424 = vadd.f32 %v420, %v422
        %v425 = vlaneseq
        %v426 = vand.u32 %v425, 127
        %vm427 = vcmp.lt.s32.totalorder %v426, 64
        %v428 = vld [vmem:[%s384] sm:$0xf]
        %v429 = vld [vmem:[%s384 + $0x4] sm:$0xf]
        %v430 = vld [vmem:[%s393] sm:$0xf]
        %v431 = vld [vmem:[%s393 + $0x4] sm:$0xf]
        %v434 = vunpack.c.l.b16 %v416
        %v435 = vunpack.c.l.b16 %v417
        %v436 = vpack.c.b16 %v435, %v434
        %v439 = vunpack.c.l.b16 %v428
        %v440 = vunpack.c.l.b16 %v429
        %v441 = vpack.c.b16 %v440, %v439
        %vm443 = vcmask 130048
        %v445 = vsel %vm443, %v436, 0
        %447 = vmatprep.subr.bf16.mxu0 0
        %448 = vmatpush1.bf16.msra.mxu0 %v441
        %449 = vmatprep.subr.bf16.mxu0 0
        %450 = vmatpush1.bf16.msra.mxu0 0
        %451 = vmatprep.subr.bf16.mxu0 0
        %452 = vmatpush1.bf16.msra.mxu0 0
        %453 = vmatprep.subr.bf16.mxu0 0
        %454 = vmatpush1.bf16.msra.mxu0 0
        %455 = vmatprep.subr.bf16.mxu0 0
        %456 = vmatpush1.bf16.msra.mxu0 0
        %457 = vmatprep.subr.bf16.mxu0 0
        %458 = vmatpush1.bf16.msra.mxu0 0
        %459 = vmatprep.subr.bf16.mxu0 0
        %460 = vmatpush1.bf16.msra.mxu0 0
        %461 = vmatprep.subr.bf16.mxu0 0
        %462 = vmatpush1.bf16.msra.mxu0 0
        %463 = vmatprep.subr.bf16.mxu0 0
        %464 = vmatpush1.bf16.msra.mxu0 0
        %465 = vmatprep.subr.bf16.mxu0 0
        %466 = vmatpush1.bf16.msra.mxu0 0
        %467 = vmatprep.subr.bf16.mxu0 0
        %468 = vmatpush1.bf16.msra.mxu0 0
        %469 = vmatprep.subr.bf16.mxu0 0
        %470 = vmatpush1.bf16.msra.mxu0 0
        %471 = vmatprep.subr.bf16.mxu0 0
        %472 = vmatpush1.bf16.msra.mxu0 0
        %473 = vmatprep.subr.bf16.mxu0 0
        %474 = vmatpush1.bf16.msra.mxu0 0
        %475 = vmatprep.subr.bf16.mxu0 0
        %476 = vmatpush1.bf16.msra.mxu0 0
        %477 = vmatprep.subr.bf16.mxu0 0
        %478 = vmatpush1.bf16.msra.mxu0 0
        %479 = vmatprep.mubr.bf16.mxu0 0
        %480 = vmatmul.mubr.bf16.gmra.mrb[0].mxu0 %v445
        %v481 = vpop.f32.mrb[0].mxu0
        %v482 = vadd.f32 0.0, %v481
        %v483 = vpop.f32.mrb[0].mxu0
        %v484 = vpop.f32.mrb[0].mxu0
        %v485 = vadd.f32 0.0, %v484
        %v486 = vpop.f32.mrb[0].mxu0
        %487 = vdwg.mxu0
        %v490 = vunpack.c.l.b16 %v430
        %v491 = vunpack.c.l.b16 %v431
        %v492 = vpack.c.b16 %v491, %v490
        %v495 = vunpack.c.l.b16 %v418
        %v496 = vunpack.c.l.b16 %v419
        %v497 = vpack.c.b16 %v496, %v495
        %v500 = vsel %vm443, %v492, 0
        %502 = vmatprep.subr.bf16.mxu0 0
        %503 = vmatpush1.bf16.msra.mxu0 %v497
        %504 = vmatprep.subr.bf16.mxu0 0
        %505 = vmatpush1.bf16.msra.mxu0 0
        %506 = vmatprep.subr.bf16.mxu0 0
        %507 = vmatpush1.bf16.msra.mxu0 0
        %508 = vmatprep.subr.bf16.mxu0 0
        %509 = vmatpush1.bf16.msra.mxu0 0
        %510 = vmatprep.subr.bf16.mxu0 0
        %511 = vmatpush1.bf16.msra.mxu0 0
        %512 = vmatprep.subr.bf16.mxu0 0
        %513 = vmatpush1.bf16.msra.mxu0 0
        %514 = vmatprep.subr.bf16.mxu0 0
        %515 = vmatpush1.bf16.msra.mxu0 0
        %516 = vmatprep.subr.bf16.mxu0 0
        %517 = vmatpush1.bf16.msra.mxu0 0
        %518 = vmatprep.subr.bf16.mxu0 0
        %519 = vmatpush1.bf16.msra.mxu0 0
        %520 = vmatprep.subr.bf16.mxu0 0
        %521 = vmatpush1.bf16.msra.mxu0 0
        %522 = vmatprep.subr.bf16.mxu0 0
        %523 = vmatpush1.bf16.msra.mxu0 0
        %524 = vmatprep.subr.bf16.mxu0 0
        %525 = vmatpush1.bf16.msra.mxu0 0
        %526 = vmatprep.subr.bf16.mxu0 0
        %527 = vmatpush1.bf16.msra.mxu0 0
        %528 = vmatprep.subr.bf16.mxu0 0
        %529 = vmatpush1.bf16.msra.mxu0 0
        %530 = vmatprep.subr.bf16.mxu0 0
        %531 = vmatpush1.bf16.msra.mxu0 0
        %532 = vmatprep.subr.bf16.mxu0 0
        %533 = vmatpush1.bf16.msra.mxu0 0
        %534 = vmatprep.mubr.bf16.mxu0 0
        %535 = vmatmul.mubr.bf16.gmra.mrb[0].mxu0 %v500
        %v536 = vpop.f32.mrb[0].mxu0
        %v537 = vadd.f32 0.0, %v536
        %v538 = vpop.f32.mrb[0].mxu0
        %v539 = vpop.f32.mrb[0].mxu0
        %v540 = vadd.f32 0.0, %v539
        %v541 = vpop.f32.mrb[0].mxu0
        %542 = vdwg.mxu0
        %v543 = vlaneseq
        %v544 = vshrl.u32 %v543, 7
        %v545 = vsub.s32 0, %v544
        %v546 = vrot.slane %v482, %v545
        %548 = vbcast.lane.b32.xlu0 %v546, 256
        %v549 = vpop.permute.xlu0 %548
        %s551 = sor.u32 256, 8
        %552 = vbcast.lane.b32.xlu0 %v546, %s551
        %v553 = vpop.permute.xlu0 %552
        %v554 = vlaneseq
        %v555 = vshrl.u32 %v554, 7
        %v556 = vsub.s32 1, %v555
        %v557 = vrot.slane %v482, %v556
        %559 = vbcast.lane.b32.xlu0 %v557, 256
        %v560 = vpop.permute.xlu0 %559
        %s562 = sor.u32 256, 8
        %563 = vbcast.lane.b32.xlu0 %v557, %s562
        %v564 = vpop.permute.xlu0 %563
        %v565 = vlaneseq
        %v566 = vshrl.u32 %v565, 7
        %v567 = vsub.s32 2, %v566
        %v568 = vrot.slane %v482, %v567
        %570 = vbcast.lane.b32.xlu0 %v568, 256
        %v571 = vpop.permute.xlu0 %570
        %s573 = sor.u32 256, 8
        %574 = vbcast.lane.b32.xlu0 %v568, %s573
        %v575 = vpop.permute.xlu0 %574
        %v576 = vlaneseq
        %v577 = vshrl.u32 %v576, 7
        %v578 = vsub.s32 3, %v577
        %v579 = vrot.slane %v482, %v578
        %581 = vbcast.lane.b32.xlu0 %v579, 256
        %v582 = vpop.permute.xlu0 %581
        %s584 = sor.u32 256, 8
        %585 = vbcast.lane.b32.xlu0 %v579, %s584
        %v586 = vpop.permute.xlu0 %585
        %v587 = vlaneseq
        %v588 = vshrl.u32 %v587, 7
        %v589 = vsub.s32 4, %v588
        %v590 = vrot.slane %v482, %v589
        %592 = vbcast.lane.b32.xlu0 %v590, 256
        %v593 = vpop.permute.xlu0 %592
        %s595 = sor.u32 256, 8
        %596 = vbcast.lane.b32.xlu0 %v590, %s595
        %v597 = vpop.permute.xlu0 %596
        %v598 = vlaneseq
        %v599 = vshrl.u32 %v598, 7
        %v600 = vsub.s32 5, %v599
        %v601 = vrot.slane %v482, %v600
        %603 = vbcast.lane.b32.xlu0 %v601, 256
        %v604 = vpop.permute.xlu0 %603
        %s606 = sor.u32 256, 8
        %607 = vbcast.lane.b32.xlu0 %v601, %s606
        %v608 = vpop.permute.xlu0 %607
        %v609 = vlaneseq
        %v610 = vshrl.u32 %v609, 7
        %v611 = vsub.s32 6, %v610
        %v612 = vrot.slane %v482, %v611
        %614 = vbcast.lane.b32.xlu0 %v612, 256
        %v615 = vpop.permute.xlu0 %614
        %s617 = sor.u32 256, 8
        %618 = vbcast.lane.b32.xlu0 %v612, %s617
        %v619 = vpop.permute.xlu0 %618
        %v620 = vlaneseq
        %v621 = vshrl.u32 %v620, 7
        %v622 = vsub.s32 7, %v621
        %v623 = vrot.slane %v482, %v622
        %625 = vbcast.lane.b32.xlu0 %v623, 256
        %v626 = vpop.permute.xlu0 %625
        %s628 = sor.u32 256, 8
        %629 = vbcast.lane.b32.xlu0 %v623, %s628
        %v630 = vpop.permute.xlu0 %629
        %v631 = vlaneseq
        %v632 = vshrl.u32 %v631, 7
        %v633 = vsub.s32 0, %v632
        %v634 = vrot.slane %v485, %v633
        %636 = vbcast.lane.b32.xlu0 %v634, 256
        %v637 = vpop.permute.xlu0 %636
        %s639 = sor.u32 256, 8
        %640 = vbcast.lane.b32.xlu0 %v634, %s639
        %v641 = vpop.permute.xlu0 %640
        %v642 = vlaneseq
        %v643 = vshrl.u32 %v642, 7
        %v644 = vsub.s32 1, %v643
        %v645 = vrot.slane %v485, %v644
        %647 = vbcast.lane.b32.xlu0 %v645, 256
        %v648 = vpop.permute.xlu0 %647
        %s650 = sor.u32 256, 8
        %651 = vbcast.lane.b32.xlu0 %v645, %s650
        %v652 = vpop.permute.xlu0 %651
        %v653 = vlaneseq
        %v654 = vshrl.u32 %v653, 7
        %v655 = vsub.s32 2, %v654
        %v656 = vrot.slane %v485, %v655
        %658 = vbcast.lane.b32.xlu0 %v656, 256
        %v659 = vpop.permute.xlu0 %658
        %s661 = sor.u32 256, 8
        %662 = vbcast.lane.b32.xlu0 %v656, %s661
        %v663 = vpop.permute.xlu0 %662
        %v664 = vlaneseq
        %v665 = vshrl.u32 %v664, 7
        %v666 = vsub.s32 3, %v665
        %v667 = vrot.slane %v485, %v666
        %669 = vbcast.lane.b32.xlu0 %v667, 256
        %v670 = vpop.permute.xlu0 %669
        %s672 = sor.u32 256, 8
        %673 = vbcast.lane.b32.xlu0 %v667, %s672
        %v674 = vpop.permute.xlu0 %673
        %v675 = vlaneseq
        %v676 = vshrl.u32 %v675, 7
        %v677 = vsub.s32 4, %v676
        %v678 = vrot.slane %v485, %v677
        %680 = vbcast.lane.b32.xlu0 %v678, 256
        %v681 = vpop.permute.xlu0 %680
        %s683 = sor.u32 256, 8
        %684 = vbcast.lane.b32.xlu0 %v678, %s683
        %v685 = vpop.permute.xlu0 %684
        %v686 = vlaneseq
        %v687 = vshrl.u32 %v686, 7
        %v688 = vsub.s32 5, %v687
        %v689 = vrot.slane %v485, %v688
        %691 = vbcast.lane.b32.xlu0 %v689, 256
        %v692 = vpop.permute.xlu0 %691
        %s694 = sor.u32 256, 8
        %695 = vbcast.lane.b32.xlu0 %v689, %s694
        %v696 = vpop.permute.xlu0 %695
        %v697 = vlaneseq
        %v698 = vshrl.u32 %v697, 7
        %v699 = vsub.s32 6, %v698
        %v700 = vrot.slane %v485, %v699
        %702 = vbcast.lane.b32.xlu0 %v700, 256
        %v703 = vpop.permute.xlu0 %702
        %s705 = sor.u32 256, 8
        %706 = vbcast.lane.b32.xlu0 %v700, %s705
        %v707 = vpop.permute.xlu0 %706
        %v708 = vlaneseq
        %v709 = vshrl.u32 %v708, 7
        %v710 = vsub.s32 7, %v709
        %v711 = vrot.slane %v485, %v710
        %713 = vbcast.lane.b32.xlu0 %v711, 256
        %v714 = vpop.permute.xlu0 %713
        %s716 = sor.u32 256, 8
        %717 = vbcast.lane.b32.xlu0 %v711, %s716
        %v718 = vpop.permute.xlu0 %717
        %v719 = vlaneseq
        %v720 = vshrl.u32 %v719, 7
        %v721 = vsub.s32 0, %v720
        %v722 = vrot.slane %v537, %v721
        %724 = vbcast.lane.b32.xlu0 %v722, 256
        %v725 = vpop.permute.xlu0 %724
        %s727 = sor.u32 256, 8
        %728 = vbcast.lane.b32.xlu0 %v722, %s727
        %v729 = vpop.permute.xlu0 %728
        %v730 = vlaneseq
        %v731 = vshrl.u32 %v730, 7
        %v732 = vsub.s32 1, %v731
        %v733 = vrot.slane %v537, %v732
        %735 = vbcast.lane.b32.xlu0 %v733, 256
        %v736 = vpop.permute.xlu0 %735
        %s738 = sor.u32 256, 8
        %739 = vbcast.lane.b32.xlu0 %v733, %s738
        %v740 = vpop.permute.xlu0 %739
        %v741 = vlaneseq
        %v742 = vshrl.u32 %v741, 7
        %v743 = vsub.s32 2, %v742
        %v744 = vrot.slane %v537, %v743
        %746 = vbcast.lane.b32.xlu0 %v744, 256
        %v747 = vpop.permute.xlu0 %746
        %s749 = sor.u32 256, 8
        %750 = vbcast.lane.b32.xlu0 %v744, %s749
        %v751 = vpop.permute.xlu0 %750
        %v752 = vlaneseq
        %v753 = vshrl.u32 %v752, 7
        %v754 = vsub.s32 3, %v753
        %v755 = vrot.slane %v537, %v754
        %757 = vbcast.lane.b32.xlu0 %v755, 256
        %v758 = vpop.permute.xlu0 %757
        %s760 = sor.u32 256, 8
        %761 = vbcast.lane.b32.xlu0 %v755, %s760
        %v762 = vpop.permute.xlu0 %761
        %v763 = vlaneseq
        %v764 = vshrl.u32 %v763, 7
        %v765 = vsub.s32 4, %v764
        %v766 = vrot.slane %v537, %v765
        %768 = vbcast.lane.b32.xlu0 %v766, 256
        %v769 = vpop.permute.xlu0 %768
        %s771 = sor.u32 256, 8
        %772 = vbcast.lane.b32.xlu0 %v766, %s771
        %v773 = vpop.permute.xlu0 %772
        %v774 = vlaneseq
        %v775 = vshrl.u32 %v774, 7
        %v776 = vsub.s32 5, %v775
        %v777 = vrot.slane %v537, %v776
        %779 = vbcast.lane.b32.xlu0 %v777, 256
        %v780 = vpop.permute.xlu0 %779
        %s782 = sor.u32 256, 8
        %783 = vbcast.lane.b32.xlu0 %v777, %s782
        %v784 = vpop.permute.xlu0 %783
        %v785 = vlaneseq
        %v786 = vshrl.u32 %v785, 7
        %v787 = vsub.s32 6, %v786
        %v788 = vrot.slane %v537, %v787
        %790 = vbcast.lane.b32.xlu0 %v788, 256
        %v791 = vpop.permute.xlu0 %790
        %s793 = sor.u32 256, 8
        %794 = vbcast.lane.b32.xlu0 %v788, %s793
        %v795 = vpop.permute.xlu0 %794
        %v796 = vlaneseq
        %v797 = vshrl.u32 %v796, 7
        %v798 = vsub.s32 7, %v797
        %v799 = vrot.slane %v537, %v798
        %801 = vbcast.lane.b32.xlu0 %v799, 256
        %v802 = vpop.permute.xlu0 %801
        %s804 = sor.u32 256, 8
        %805 = vbcast.lane.b32.xlu0 %v799, %s804
        %v806 = vpop.permute.xlu0 %805
        %v807 = vlaneseq
        %v808 = vshrl.u32 %v807, 7
        %v809 = vsub.s32 0, %v808
        %v810 = vrot.slane %v540, %v809
        %812 = vbcast.lane.b32.xlu0 %v810, 256
        %v813 = vpop.permute.xlu0 %812
        %s815 = sor.u32 256, 8
        %816 = vbcast.lane.b32.xlu0 %v810, %s815
        %v817 = vpop.permute.xlu0 %816
        %v818 = vlaneseq
        %v819 = vshrl.u32 %v818, 7
        %v820 = vsub.s32 1, %v819
        %v821 = vrot.slane %v540, %v820
        %823 = vbcast.lane.b32.xlu0 %v821, 256
        %v824 = vpop.permute.xlu0 %823
        %s826 = sor.u32 256, 8
        %827 = vbcast.lane.b32.xlu0 %v821, %s826
        %v828 = vpop.permute.xlu0 %827
        %v829 = vlaneseq
        %v830 = vshrl.u32 %v829, 7
        %v831 = vsub.s32 2, %v830
        %v832 = vrot.slane %v540, %v831
        %834 = vbcast.lane.b32.xlu0 %v832, 256
        %v835 = vpop.permute.xlu0 %834
        %s837 = sor.u32 256, 8
        %838 = vbcast.lane.b32.xlu0 %v832, %s837
        %v839 = vpop.permute.xlu0 %838
        %v840 = vlaneseq
        %v841 = vshrl.u32 %v840, 7
        %v842 = vsub.s32 3, %v841
        %v843 = vrot.slane %v540, %v842
        %845 = vbcast.lane.b32.xlu0 %v843, 256
        %v846 = vpop.permute.xlu0 %845
        %s848 = sor.u32 256, 8
        %849 = vbcast.lane.b32.xlu0 %v843, %s848
        %v850 = vpop.permute.xlu0 %849
        %v851 = vlaneseq
        %v852 = vshrl.u32 %v851, 7
        %v853 = vsub.s32 4, %v852
        %v854 = vrot.slane %v540, %v853
        %856 = vbcast.lane.b32.xlu0 %v854, 256
        %v857 = vpop.permute.xlu0 %856
        %s859 = sor.u32 256, 8
        %860 = vbcast.lane.b32.xlu0 %v854, %s859
        %v861 = vpop.permute.xlu0 %860
        %v862 = vlaneseq
        %v863 = vshrl.u32 %v862, 7
        %v864 = vsub.s32 5, %v863
        %v865 = vrot.slane %v540, %v864
        %867 = vbcast.lane.b32.xlu0 %v865, 256
        %v868 = vpop.permute.xlu0 %867
        %s870 = sor.u32 256, 8
        %871 = vbcast.lane.b32.xlu0 %v865, %s870
        %v872 = vpop.permute.xlu0 %871
        %v873 = vlaneseq
        %v874 = vshrl.u32 %v873, 7
        %v875 = vsub.s32 6, %v874
        %v876 = vrot.slane %v540, %v875
        %878 = vbcast.lane.b32.xlu0 %v876, 256
        %v879 = vpop.permute.xlu0 %878
        %s881 = sor.u32 256, 8
        %882 = vbcast.lane.b32.xlu0 %v876, %s881
        %v883 = vpop.permute.xlu0 %882
        %v884 = vlaneseq
        %v885 = vshrl.u32 %v884, 7
        %v886 = vsub.s32 7, %v885
        %v887 = vrot.slane %v540, %v886
        %889 = vbcast.lane.b32.xlu0 %v887, 256
        %v890 = vpop.permute.xlu0 %889
        %s892 = sor.u32 256, 8
        %893 = vbcast.lane.b32.xlu0 %v887, %s892
        %v894 = vpop.permute.xlu0 %893
        %v895 = vsel %vm427, 1, 0
        %vm896 = vcmp.eq.s32.totalorder %v895, 1
        %v897 = vsel %vm896, %v549, %v725
        %v898 = vsel %vm896, %v553, %v729
        %v899 = vsel %vm896, %v560, %v736
        %v900 = vsel %vm896, %v564, %v740
        %v901 = vsel %vm896, %v571, %v747
        %v902 = vsel %vm896, %v575, %v751
        %v903 = vsel %vm896, %v582, %v758
        %v904 = vsel %vm896, %v586, %v762
        %v905 = vsel %vm896, %v593, %v769
        %v906 = vsel %vm896, %v597, %v773
        %v907 = vsel %vm896, %v604, %v780
        %v908 = vsel %vm896, %v608, %v784
        %v909 = vsel %vm896, %v615, %v791
        %v910 = vsel %vm896, %v619, %v795
        %v911 = vsel %vm896, %v626, %v802
        %v912 = vsel %vm896, %v630, %v806
        %v913 = vsel %vm896, %v637, %v813
        %v914 = vsel %vm896, %v641, %v817
        %v915 = vsel %vm896, %v648, %v824
        %v916 = vsel %vm896, %v652, %v828
        %v917 = vsel %vm896, %v659, %v835
        %v918 = vsel %vm896, %v663, %v839
        %v919 = vsel %vm896, %v670, %v846
        %v920 = vsel %vm896, %v674, %v850
        %v921 = vsel %vm896, %v681, %v857
        %v922 = vsel %vm896, %v685, %v861
        %v923 = vsel %vm896, %v692, %v868
        %v924 = vsel %vm896, %v696, %v872
        %v925 = vsel %vm896, %v703, %v879
        %v926 = vsel %vm896, %v707, %v883
        %v927 = vsel %vm896, %v714, %v890
        %v928 = vsel %vm896, %v718, %v894
        %v929 = vlaneseq
        %v930 = vshrl.u32 %v929, 7
        %v931 = vsub.s32 0, %v930
        %v932 = vrot.slane %v424, %v931
        %v933 = vmul.f32 %v897, %v932
        %v934 = vmul.f32 %v898, %v932
        %v935 = vmul.f32 %v899, %v932
        %v936 = vmul.f32 %v900, %v932
        %v937 = vmul.f32 %v901, %v932
        %v938 = vmul.f32 %v902, %v932
        %v939 = vmul.f32 %v903, %v932
        %v940 = vmul.f32 %v904, %v932
        %v941 = vmul.f32 %v905, %v932
        %v942 = vmul.f32 %v906, %v932
        %v943 = vmul.f32 %v907, %v932
        %v944 = vmul.f32 %v908, %v932
        %v945 = vmul.f32 %v909, %v932
        %v946 = vmul.f32 %v910, %v932
        %v947 = vmul.f32 %v911, %v932
        %v948 = vmul.f32 %v912, %v932
        %v949 = vmul.f32 %v913, %v932
        %v950 = vmul.f32 %v914, %v932
        %v951 = vmul.f32 %v915, %v932
        %v952 = vmul.f32 %v916, %v932
        %v953 = vmul.f32 %v917, %v932
        %v954 = vmul.f32 %v918, %v932
        %v955 = vmul.f32 %v919, %v932
        %v956 = vmul.f32 %v920, %v932
        %v957 = vmul.f32 %v921, %v932
        %v958 = vmul.f32 %v922, %v932
        %v959 = vmul.f32 %v923, %v932
        %v960 = vmul.f32 %v924, %v932
        %v961 = vmul.f32 %v925, %v932
        %v962 = vmul.f32 %v926, %v932
        %v963 = vmul.f32 %v927, %v932
        %v964 = vmul.f32 %v928, %v932
        %v965 = vlaneseq
        %v966 = vshrl.u32 %v965, 7
        %v967 = vsub.s32 2, %v966
        %v968 = vrot.slane %v420, %v967
        %v969 = vadd.f32 %v933, %v968
        %v970 = vadd.f32 %v934, %v968
        %v971 = vadd.f32 %v935, %v968
        %v972 = vadd.f32 %v936, %v968
        %v973 = vadd.f32 %v937, %v968
        %v974 = vadd.f32 %v938, %v968
        %v975 = vadd.f32 %v939, %v968
        %v976 = vadd.f32 %v940, %v968
        %v977 = vadd.f32 %v941, %v968
        %v978 = vadd.f32 %v942, %v968
        %v979 = vadd.f32 %v943, %v968
        %v980 = vadd.f32 %v944, %v968
        %v981 = vadd.f32 %v945, %v968
        %v982 = vadd.f32 %v946, %v968
        %v983 = vadd.f32 %v947, %v968
        %v984 = vadd.f32 %v948, %v968
        %v985 = vadd.f32 %v949, %v968
        %v986 = vadd.f32 %v950, %v968
        %v987 = vadd.f32 %v951, %v968
        %v988 = vadd.f32 %v952, %v968
        %v989 = vadd.f32 %v953, %v968
        %v990 = vadd.f32 %v954, %v968
        %v991 = vadd.f32 %v955, %v968
        %v992 = vadd.f32 %v956, %v968
        %v993 = vadd.f32 %v957, %v968
        %v994 = vadd.f32 %v958, %v968
        %v995 = vadd.f32 %v959, %v968
        %v996 = vadd.f32 %v960, %v968
        %v997 = vadd.f32 %v961, %v968
        %v998 = vadd.f32 %v962, %v968
        %v999 = vadd.f32 %v963, %v968
        %v1000 = vadd.f32 %v964, %v968
        %v1001 = vand.u32 2147483647, %v969
        %vm1002 = vcmp.le.f32.partialorder %v1001, 0.7853982
        %vm1003 = vcmp.lt.s32.totalorder %v969, 0
        %v1004 = vand.u32 %v969, 2139095040
        %v1005 = vshrl.u32 %v1004, 23
        %v1006 = vsub.s32 %v1005, 127
        %v1007 = vand.u32 2147483647, %v969
        %v1008 = vand.u32 %v1007, 8388607
        %v1009 = vor.u32 %v1008, 8388608
        %v1010 = vsub.s32 0, %v1009
        %v1011 = vadd.s32 %v1006, 1
        %vm1012 = vcmp.gt.s32.totalorder %v1011, 0
        %v1013 = vsel %vm1012, %v1011, 0
        %v1014 = vshrl.u32 %v1013, 5
        %v1015 = vand.u32 %v1013, 31
        %v1016 = vsub.s32 32, %v1015
        %v1017 = vshrl.u32 683565275, %v1016
        %v1018 = vshll.u32 683565275, %v1015
        %v1019 = vshrl.u32 2475754826, %v1016
        %v1020 = vor.u32 %v1018, %v1019
        %v1021 = vshll.u32 2475754826, %v1015
        %v1022 = vshrl.u32 2131351028, %v1016
        %v1023 = vor.u32 %v1021, %v1022
        %v1024 = vshll.u32 2131351028, %v1015
        %v1025 = vshrl.u32 2102212464, %v1016
        %v1026 = vor.u32 %v1024, %v1025
        %v1027 = vshll.u32 2102212464, %v1015
        %v1028 = vshrl.u32 920167782, %v1016
        %v1029 = vor.u32 %v1027, %v1028
        %v1030 = vshll.u32 920167782, %v1015
        %v1031 = vshrl.u32 1326507024, %v1016
        %v1032 = vor.u32 %v1030, %v1031
        %vm1033 = vcmp.lt.s32.totalorder %v1014, 1
        %vm1034 = vcmp.lt.s32.totalorder %v1014, 2
        %vm1035 = vcmp.lt.s32.totalorder %v1014, 3
        %vm1036 = vcmp.lt.s32.totalorder %v1014, 4
        %v1037 = vsel %vm1033, %v1017, %v1020
        %v1038 = vsel %vm1036, %v1026, 2102212464
        %v1039 = vsel %vm1035, %v1023, %v1038
        %v1040 = vsel %vm1034, %v1037, %v1039
        %v1041 = vsel %vm1033, %v1020, %v1023
        %v1042 = vsel %vm1036, %v1029, 920167782
        %v1043 = vsel %vm1035, %v1026, %v1042
        %v1044 = vsel %vm1034, %v1041, %v1043
        %v1045 = vsel %vm1033, %v1023, %v1026
        %v1046 = vsel %vm1036, %v1032, 1326507024
        %v1047 = vsel %vm1035, %v1029, %v1046
        %v1048 = vsel %vm1034, %v1045, %v1047
        %v1049 = vshll.u32 %v1009, 8
        %v1050 = vmul.u32.u64.compose %v1049, %v1048
        %v1051 = vextract.low.u32 %v1050
        %v1052 = vextract.high.u32 %v1050
        %v1053 = vmul.u32.u64.compose %v1049, %v1044
        %v1054 = vextract.low.u32 %v1053
        %v1055 = vextract.high.u32 %v1053
        %v1056 = vmul.u32 %v1049, %v1040
        %v1057 = vadd.s32 %v1052, %v1054
        %vm1058 = vc.u32 %v1052, %v1054
        %v1059 = vadd.s32 %v1055, 1
        %v1060 = vsel %vm1058, %v1059, %v1055
        %v1061 = vadd.s32 %v1056, %v1060
        %v1062 = vadd.s32 %v1061, 536870912
        %v1063 = vshrl.u32 %v1062, 30
        %v1064 = vshll.u32 %v1063, 30
        %v1065 = vsub.s32 %v1061, %v1064
        %vm1066 = vcmp.lt.s32.totalorder %v1065, 0
        %v1067 = vsub.s32 0, %v1065
        %v1068 = vsel %vm1066, %v1067, %v1065
        %v1069 = vclz %v1068
        %v1070 = vsub.s32 %v1069, 2
        %vm1071 = vcmp.gt.s32.totalorder 0, %v1070
        %v1072 = vsel %vm1071, 0, %v1070
        %v1073 = vsub.s32 32, %v1072
        %v1074 = vshll.u32 %v1065, %v1072
        %v1075 = vshrl.u32 %v1057, %v1073
        %v1076 = vor.u32 %v1074, %v1075
        %v1077 = vsub.s32 4294967266, %v1072
        %v1078 = vadd.s32 %v1077, 127
        %v1079 = vshll.u32 %v1078, 23
        %v1080 = vor.u32 4788187, %v1079
        %v1081 = vand.u32 2147483647, %v1080
        %v1083 = vcvt.s32.f32 %v1076
        %v1084 = vmul.f32 %v1083, %v1081
        %v1085 = vxor.u32 %v1084, 2147483648
        %v1086 = vsel %vm1003, %v1085, %v1084
        %v1087 = vsub.s32 4, %v1063
        %v1088 = vsel %vm1003, %v1087, %v1063
        %v1089 = vsel %vm1002, %v969, %v1086
        %v1090 = vsel %vm1002, 0, %v1088
        %v1091 = vcosq.f32.pop %v1089
        %v1092 = vsinq.f32.pop %v1089
        %vm1093 = vweird.f32 %v969
        %v1094 = vadd.s32 %v1090, 3
        %v1095 = vand.u32 %v1094, 3
        %vm1096 = vcmp.lt.s32.totalorder %v1095, 2
        %vm1097 = vcmp.eq.s32.totalorder %v1095, 0
        %v1098 = vxor.u32 %v1092, 2147483648
        %v1099 = vsel %vm1097, %v1091, %v1098
        %vm1100 = vcmp.eq.s32.totalorder %v1095, 2
        %v1101 = vxor.u32 %v1091, 2147483648
        %v1102 = vsel %vm1100, %v1101, %v1092
        %v1103 = vsel %vm1096, %v1099, %v1102
        %v1104 = vsel %vm1093, nan, %v1103
        %v1105 = vand.u32 2147483647, %v970
        %vm1106 = vcmp.le.f32.partialorder %v1105, 0.7853982
        %vm1107 = vcmp.lt.s32.totalorder %v970, 0
        %v1108 = vand.u32 %v970, 2139095040
        %v1109 = vshrl.u32 %v1108, 23
        %v1110 = vsub.s32 %v1109, 127
        %v1111 = vand.u32 2147483647, %v970
        %v1112 = vand.u32 %v1111, 8388607
        %v1113 = vor.u32 %v1112, 8388608
        %v1114 = vsub.s32 0, %v1113
        %v1115 = vadd.s32 %v1110, 1
        %vm1116 = vcmp.gt.s32.totalorder %v1115, 0
        %v1117 = vsel %vm1116, %v1115, 0
        %v1118 = vshrl.u32 %v1117, 5
        %v1119 = vand.u32 %v1117, 31
        %v1120 = vsub.s32 32, %v1119
        %v1121 = vshrl.u32 683565275, %v1120
        %v1122 = vshll.u32 683565275, %v1119
        %v1123 = vshrl.u32 2475754826, %v1120
        %v1124 = vor.u32 %v1122, %v1123
        %v1125 = vshll.u32 2475754826, %v1119
        %v1126 = vshrl.u32 2131351028, %v1120
        %v1127 = vor.u32 %v1125, %v1126
        %v1128 = vshll.u32 2131351028, %v1119
        %v1129 = vshrl.u32 2102212464, %v1120
        %v1130 = vor.u32 %v1128, %v1129
        %v1131 = vshll.u32 2102212464, %v1119
        %v1132 = vshrl.u32 920167782, %v1120
        %v1133 = vor.u32 %v1131, %v1132
        %v1134 = vshll.u32 920167782, %v1119
        %v1135 = vshrl.u32 1326507024, %v1120
        %v1136 = vor.u32 %v1134, %v1135
        %vm1137 = vcmp.lt.s32.totalorder %v1118, 1
        %vm1138 = vcmp.lt.s32.totalorder %v1118, 2
        %vm1139 = vcmp.lt.s32.totalorder %v1118, 3
        %vm1140 = vcmp.lt.s32.totalorder %v1118, 4
        %v1141 = vsel %vm1137, %v1121, %v1124
        %v1142 = vsel %vm1140, %v1130, 2102212464
        %v1143 = vsel %vm1139, %v1127, %v1142
        %v1144 = vsel %vm1138, %v1141, %v1143
        %v1145 = vsel %vm1137, %v1124, %v1127
        %v1146 = vsel %vm1140, %v1133, 920167782
        %v1147 = vsel %vm1139, %v1130, %v1146
        %v1148 = vsel %vm1138, %v1145, %v1147
        %v1149 = vsel %vm1137, %v1127, %v1130
        %v1150 = vsel %vm1140, %v1136, 1326507024
        %v1151 = vsel %vm1139, %v1133, %v1150
        %v1152 = vsel %vm1138, %v1149, %v1151
        %v1153 = vshll.u32 %v1113, 8
        %v1154 = vmul.u32.u64.compose %v1153, %v1152
        %v1155 = vextract.low.u32 %v1154
        %v1156 = vextract.high.u32 %v1154
        %v1157 = vmul.u32.u64.compose %v1153, %v1148
        %v1158 = vextract.low.u32 %v1157
        %v1159 = vextract.high.u32 %v1157
        %v1160 = vmul.u32 %v1153, %v1144
        %v1161 = vadd.s32 %v1156, %v1158
        %vm1162 = vc.u32 %v1156, %v1158
        %v1163 = vadd.s32 %v1159, 1
        %v1164 = vsel %vm1162, %v1163, %v1159
        %v1165 = vadd.s32 %v1160, %v1164
        %v1166 = vadd.s32 %v1165, 536870912
        %v1167 = vshrl.u32 %v1166, 30
        %v1168 = vshll.u32 %v1167, 30
        %v1169 = vsub.s32 %v1165, %v1168
        %vm1170 = vcmp.lt.s32.totalorder %v1169, 0
        %v1171 = vsub.s32 0, %v1169
        %v1172 = vsel %vm1170, %v1171, %v1169
        %v1173 = vclz %v1172
        %v1174 = vsub.s32 %v1173, 2
        %vm1175 = vcmp.gt.s32.totalorder 0, %v1174
        %v1176 = vsel %vm1175, 0, %v1174
        %v1177 = vsub.s32 32, %v1176
        %v1178 = vshll.u32 %v1169, %v1176
        %v1179 = vshrl.u32 %v1161, %v1177
        %v1180 = vor.u32 %v1178, %v1179
        %v1181 = vsub.s32 4294967266, %v1176
        %v1182 = vadd.s32 %v1181, 127
        %v1183 = vshll.u32 %v1182, 23
        %v1184 = vor.u32 4788187, %v1183
        %v1185 = vand.u32 2147483647, %v1184
        %v1187 = vcvt.s32.f32 %v1180
        %v1188 = vmul.f32 %v1187, %v1185
        %v1189 = vxor.u32 %v1188, 2147483648
        %v1190 = vsel %vm1107, %v1189, %v1188
        %v1191 = vsub.s32 4, %v1167
        %v1192 = vsel %vm1107, %v1191, %v1167
        %v1193 = vsel %vm1106, %v970, %v1190
        %v1194 = vsel %vm1106, 0, %v1192
        %v1195 = vcosq.f32.pop %v1193
        %v1196 = vsinq.f32.pop %v1193
        %vm1197 = vweird.f32 %v970
        %v1198 = vadd.s32 %v1194, 3
        %v1199 = vand.u32 %v1198, 3
        %vm1200 = vcmp.lt.s32.totalorder %v1199, 2
        %vm1201 = vcmp.eq.s32.totalorder %v1199, 0
        %v1202 = vxor.u32 %v1196, 2147483648
        %v1203 = vsel %vm1201, %v1195, %v1202
        %vm1204 = vcmp.eq.s32.totalorder %v1199, 2
        %v1205 = vxor.u32 %v1195, 2147483648
        %v1206 = vsel %vm1204, %v1205, %v1196
        %v1207 = vsel %vm1200, %v1203, %v1206
        %v1208 = vsel %vm1197, nan, %v1207
        %v1209 = vand.u32 2147483647, %v971
        %vm1210 = vcmp.le.f32.partialorder %v1209, 0.7853982
        %vm1211 = vcmp.lt.s32.totalorder %v971, 0
        %v1212 = vand.u32 %v971, 2139095040
        %v1213 = vshrl.u32 %v1212, 23
        %v1214 = vsub.s32 %v1213, 127
        %v1215 = vand.u32 2147483647, %v971
        %v1216 = vand.u32 %v1215, 8388607
        %v1217 = vor.u32 %v1216, 8388608
        %v1218 = vsub.s32 0, %v1217
        %v1219 = vadd.s32 %v1214, 1
        %vm1220 = vcmp.gt.s32.totalorder %v1219, 0
        %v1221 = vsel %vm1220, %v1219, 0
        %v1222 = vshrl.u32 %v1221, 5
        %v1223 = vand.u32 %v1221, 31
        %v1224 = vsub.s32 32, %v1223
        %v1225 = vshrl.u32 683565275, %v1224
        %v1226 = vshll.u32 683565275, %v1223
        %v1227 = vshrl.u32 2475754826, %v1224
        %v1228 = vor.u32 %v1226, %v1227
        %v1229 = vshll.u32 2475754826, %v1223
        %v1230 = vshrl.u32 2131351028, %v1224
        %v1231 = vor.u32 %v1229, %v1230
        %v1232 = vshll.u32 2131351028, %v1223
        %v1233 = vshrl.u32 2102212464, %v1224
        %v1234 = vor.u32 %v1232, %v1233
        %v1235 = vshll.u32 2102212464, %v1223
        %v1236 = vshrl.u32 920167782, %v1224
        %v1237 = vor.u32 %v1235, %v1236
        %v1238 = vshll.u32 920167782, %v1223
        %v1239 = vshrl.u32 1326507024, %v1224
        %v1240 = vor.u32 %v1238, %v1239
        %vm1241 = vcmp.lt.s32.totalorder %v1222, 1
        %vm1242 = vcmp.lt.s32.totalorder %v1222, 2
        %vm1243 = vcmp.lt.s32.totalorder %v1222, 3
        %vm1244 = vcmp.lt.s32.totalorder %v1222, 4
        %v1245 = vsel %vm1241, %v1225, %v1228
        %v1246 = vsel %vm1244, %v1234, 2102212464
        %v1247 = vsel %vm1243, %v1231, %v1246
        %v1248 = vsel %vm1242, %v1245, %v1247
        %v1249 = vsel %vm1241, %v1228, %v1231
        %v1250 = vsel %vm1244, %v1237, 920167782
        %v1251 = vsel %vm1243, %v1234, %v1250
        %v1252 = vsel %vm1242, %v1249, %v1251
        %v1253 = vsel %vm1241, %v1231, %v1234
        %v1254 = vsel %vm1244, %v1240, 1326507024
        %v1255 = vsel %vm1243, %v1237, %v1254
        %v1256 = vsel %vm1242, %v1253, %v1255
        %v1257 = vshll.u32 %v1217, 8
        %v1258 = vmul.u32.u64.compose %v1257, %v1256
        %v1259 = vextract.low.u32 %v1258
        %v1260 = vextract.high.u32 %v1258
        %v1261 = vmul.u32.u64.compose %v1257, %v1252
        %v1262 = vextract.low.u32 %v1261
        %v1263 = vextract.high.u32 %v1261
        %v1264 = vmul.u32 %v1257, %v1248
        %v1265 = vadd.s32 %v1260, %v1262
        %vm1266 = vc.u32 %v1260, %v1262
        %v1267 = vadd.s32 %v1263, 1
        %v1268 = vsel %vm1266, %v1267, %v1263
        %v1269 = vadd.s32 %v1264, %v1268
        %v1270 = vadd.s32 %v1269, 536870912
        %v1271 = vshrl.u32 %v1270, 30
        %v1272 = vshll.u32 %v1271, 30
        %v1273 = vsub.s32 %v1269, %v1272
        %vm1274 = vcmp.lt.s32.totalorder %v1273, 0
        %v1275 = vsub.s32 0, %v1273
        %v1276 = vsel %vm1274, %v1275, %v1273
        %v1277 = vclz %v1276
        %v1278 = vsub.s32 %v1277, 2
        %vm1279 = vcmp.gt.s32.totalorder 0, %v1278
        %v1280 = vsel %vm1279, 0, %v1278
        %v1281 = vsub.s32 32, %v1280
        %v1282 = vshll.u32 %v1273, %v1280
        %v1283 = vshrl.u32 %v1265, %v1281
        %v1284 = vor.u32 %v1282, %v1283
        %v1285 = vsub.s32 4294967266, %v1280
        %v1286 = vadd.s32 %v1285, 127
        %v1287 = vshll.u32 %v1286, 23
        %v1288 = vor.u32 4788187, %v1287
        %v1289 = vand.u32 2147483647, %v1288
        %v1291 = vcvt.s32.f32 %v1284
        %v1292 = vmul.f32 %v1291, %v1289
        %v1293 = vxor.u32 %v1292, 2147483648
        %v1294 = vsel %vm1211, %v1293, %v1292
        %v1295 = vsub.s32 4, %v1271
        %v1296 = vsel %vm1211, %v1295, %v1271
        %v1297 = vsel %vm1210, %v971, %v1294
        %v1298 = vsel %vm1210, 0, %v1296
        %v1299 = vcosq.f32.pop %v1297
        %v1300 = vsinq.f32.pop %v1297
        %vm1301 = vweird.f32 %v971
        %v1302 = vadd.s32 %v1298, 3
        %v1303 = vand.u32 %v1302, 3
        %vm1304 = vcmp.lt.s32.totalorder %v1303, 2
        %vm1305 = vcmp.eq.s32.totalorder %v1303, 0
        %v1306 = vxor.u32 %v1300, 2147483648
        %v1307 = vsel %vm1305, %v1299, %v1306
        %vm1308 = vcmp.eq.s32.totalorder %v1303, 2
        %v1309 = vxor.u32 %v1299, 2147483648
        %v1310 = vsel %vm1308, %v1309, %v1300
        %v1311 = vsel %vm1304, %v1307, %v1310
        %v1312 = vsel %vm1301, nan, %v1311
        %v1313 = vand.u32 2147483647, %v972
        %vm1314 = vcmp.le.f32.partialorder %v1313, 0.7853982
        %vm1315 = vcmp.lt.s32.totalorder %v972, 0
        %v1316 = vand.u32 %v972, 2139095040
        %v1317 = vshrl.u32 %v1316, 23
        %v1318 = vsub.s32 %v1317, 127
        %v1319 = vand.u32 2147483647, %v972
        %v1320 = vand.u32 %v1319, 8388607
        %v1321 = vor.u32 %v1320, 8388608
        %v1322 = vsub.s32 0, %v1321
        %v1323 = vadd.s32 %v1318, 1
        %vm1324 = vcmp.gt.s32.totalorder %v1323, 0
        %v1325 = vsel %vm1324, %v1323, 0
        %v1326 = vshrl.u32 %v1325, 5
        %v1327 = vand.u32 %v1325, 31
        %v1328 = vsub.s32 32, %v1327
        %v1329 = vshrl.u32 683565275, %v1328
        %v1330 = vshll.u32 683565275, %v1327
        %v1331 = vshrl.u32 2475754826, %v1328
        %v1332 = vor.u32 %v1330, %v1331
        %v1333 = vshll.u32 2475754826, %v1327
        %v1334 = vshrl.u32 2131351028, %v1328
        %v1335 = vor.u32 %v1333, %v1334
        %v1336 = vshll.u32 2131351028, %v1327
        %v1337 = vshrl.u32 2102212464, %v1328
        %v1338 = vor.u32 %v1336, %v1337
        %v1339 = vshll.u32 2102212464, %v1327
        %v1340 = vshrl.u32 920167782, %v1328
        %v1341 = vor.u32 %v1339, %v1340
        %v1342 = vshll.u32 920167782, %v1327
        %v1343 = vshrl.u32 1326507024, %v1328
        %v1344 = vor.u32 %v1342, %v1343
        %vm1345 = vcmp.lt.s32.totalorder %v1326, 1
        %vm1346 = vcmp.lt.s32.totalorder %v1326, 2
        %vm1347 = vcmp.lt.s32.totalorder %v1326, 3
        %vm1348 = vcmp.lt.s32.totalorder %v1326, 4
        %v1349 = vsel %vm1345, %v1329, %v1332
        %v1350 = vsel %vm1348, %v1338, 2102212464
        %v1351 = vsel %vm1347, %v1335, %v1350
        %v1352 = vsel %vm1346, %v1349, %v1351
        %v1353 = vsel %vm1345, %v1332, %v1335
        %v1354 = vsel %vm1348, %v1341, 920167782
        %v1355 = vsel %vm1347, %v1338, %v1354
        %v1356 = vsel %vm1346, %v1353, %v1355
        %v1357 = vsel %vm1345, %v1335, %v1338
        %v1358 = vsel %vm1348, %v1344, 1326507024
        %v1359 = vsel %vm1347, %v1341, %v1358
        %v1360 = vsel %vm1346, %v1357, %v1359
        %v1361 = vshll.u32 %v1321, 8
        %v1362 = vmul.u32.u64.compose %v1361, %v1360
        %v1363 = vextract.low.u32 %v1362
        %v1364 = vextract.high.u32 %v1362
        %v1365 = vmul.u32.u64.compose %v1361, %v1356
        %v1366 = vextract.low.u32 %v1365
        %v1367 = vextract.high.u32 %v1365
        %v1368 = vmul.u32 %v1361, %v1352
        %v1369 = vadd.s32 %v1364, %v1366
        %vm1370 = vc.u32 %v1364, %v1366
        %v1371 = vadd.s32 %v1367, 1
        %v1372 = vsel %vm1370, %v1371, %v1367
        %v1373 = vadd.s32 %v1368, %v1372
        %v1374 = vadd.s32 %v1373, 536870912
        %v1375 = vshrl.u32 %v1374, 30
        %v1376 = vshll.u32 %v1375, 30
        %v1377 = vsub.s32 %v1373, %v1376
        %vm1378 = vcmp.lt.s32.totalorder %v1377, 0
        %v1379 = vsub.s32 0, %v1377
        %v1380 = vsel %vm1378, %v1379, %v1377
        %v1381 = vclz %v1380
        %v1382 = vsub.s32 %v1381, 2
        %vm1383 = vcmp.gt.s32.totalorder 0, %v1382
        %v1384 = vsel %vm1383, 0, %v1382
        %v1385 = vsub.s32 32, %v1384
        %v1386 = vshll.u32 %v1377, %v1384
        %v1387 = vshrl.u32 %v1369, %v1385
        %v1388 = vor.u32 %v1386, %v1387
        %v1389 = vsub.s32 4294967266, %v1384
        %v1390 = vadd.s32 %v1389, 127
        %v1391 = vshll.u32 %v1390, 23
        %v1392 = vor.u32 4788187, %v1391
        %v1393 = vand.u32 2147483647, %v1392
        %v1395 = vcvt.s32.f32 %v1388
        %v1396 = vmul.f32 %v1395, %v1393
        %v1397 = vxor.u32 %v1396, 2147483648
        %v1398 = vsel %vm1315, %v1397, %v1396
        %v1399 = vsub.s32 4, %v1375
        %v1400 = vsel %vm1315, %v1399, %v1375
        %v1401 = vsel %vm1314, %v972, %v1398
        %v1402 = vsel %vm1314, 0, %v1400
        %v1403 = vcosq.f32.pop %v1401
        %v1404 = vsinq.f32.pop %v1401
        %vm1405 = vweird.f32 %v972
        %v1406 = vadd.s32 %v1402, 3
        %v1407 = vand.u32 %v1406, 3
        %vm1408 = vcmp.lt.s32.totalorder %v1407, 2
        %vm1409 = vcmp.eq.s32.totalorder %v1407, 0
        %v1410 = vxor.u32 %v1404, 2147483648
        %v1411 = vsel %vm1409, %v1403, %v1410
        %vm1412 = vcmp.eq.s32.totalorder %v1407, 2
        %v1413 = vxor.u32 %v1403, 2147483648
        %v1414 = vsel %vm1412, %v1413, %v1404
        %v1415 = vsel %vm1408, %v1411, %v1414
        %v1416 = vsel %vm1405, nan, %v1415
        %v1417 = vand.u32 2147483647, %v973
        %vm1418 = vcmp.le.f32.partialorder %v1417, 0.7853982
        %vm1419 = vcmp.lt.s32.totalorder %v973, 0
        %v1420 = vand.u32 %v973, 2139095040
        %v1421 = vshrl.u32 %v1420, 23
        %v1422 = vsub.s32 %v1421, 127
        %v1423 = vand.u32 2147483647, %v973
        %v1424 = vand.u32 %v1423, 8388607
        %v1425 = vor.u32 %v1424, 8388608
        %v1426 = vsub.s32 0, %v1425
        %v1427 = vadd.s32 %v1422, 1
        %vm1428 = vcmp.gt.s32.totalorder %v1427, 0
        %v1429 = vsel %vm1428, %v1427, 0
        %v1430 = vshrl.u32 %v1429, 5
        %v1431 = vand.u32 %v1429, 31
        %v1432 = vsub.s32 32, %v1431
        %v1433 = vshrl.u32 683565275, %v1432
        %v1434 = vshll.u32 683565275, %v1431
        %v1435 = vshrl.u32 2475754826, %v1432
        %v1436 = vor.u32 %v1434, %v1435
        %v1437 = vshll.u32 2475754826, %v1431
        %v1438 = vshrl.u32 2131351028, %v1432
        %v1439 = vor.u32 %v1437, %v1438
        %v1440 = vshll.u32 2131351028, %v1431
        %v1441 = vshrl.u32 2102212464, %v1432
        %v1442 = vor.u32 %v1440, %v1441
        %v1443 = vshll.u32 2102212464, %v1431
        %v1444 = vshrl.u32 920167782, %v1432
        %v1445 = vor.u32 %v1443, %v1444
        %v1446 = vshll.u32 920167782, %v1431
        %v1447 = vshrl.u32 1326507024, %v1432
        %v1448 = vor.u32 %v1446, %v1447
        %vm1449 = vcmp.lt.s32.totalorder %v1430, 1
        %vm1450 = vcmp.lt.s32.totalorder %v1430, 2
        %vm1451 = vcmp.lt.s32.totalorder %v1430, 3
        %vm1452 = vcmp.lt.s32.totalorder %v1430, 4
        %v1453 = vsel %vm1449, %v1433, %v1436
        %v1454 = vsel %vm1452, %v1442, 2102212464
        %v1455 = vsel %vm1451, %v1439, %v1454
        %v1456 = vsel %vm1450, %v1453, %v1455
        %v1457 = vsel %vm1449, %v1436, %v1439
        %v1458 = vsel %vm1452, %v1445, 920167782
        %v1459 = vsel %vm1451, %v1442, %v1458
        %v1460 = vsel %vm1450, %v1457, %v1459
        %v1461 = vsel %vm1449, %v1439, %v1442
        %v1462 = vsel %vm1452, %v1448, 1326507024
        %v1463 = vsel %vm1451, %v1445, %v1462
        %v1464 = vsel %vm1450, %v1461, %v1463
        %v1465 = vshll.u32 %v1425, 8
        %v1466 = vmul.u32.u64.compose %v1465, %v1464
        %v1467 = vextract.low.u32 %v1466
        %v1468 = vextract.high.u32 %v1466
        %v1469 = vmul.u32.u64.compose %v1465, %v1460
        %v1470 = vextract.low.u32 %v1469
        %v1471 = vextract.high.u32 %v1469
        %v1472 = vmul.u32 %v1465, %v1456
        %v1473 = vadd.s32 %v1468, %v1470
        %vm1474 = vc.u32 %v1468, %v1470
        %v1475 = vadd.s32 %v1471, 1
        %v1476 = vsel %vm1474, %v1475, %v1471
        %v1477 = vadd.s32 %v1472, %v1476
        %v1478 = vadd.s32 %v1477, 536870912
        %v1479 = vshrl.u32 %v1478, 30
        %v1480 = vshll.u32 %v1479, 30
        %v1481 = vsub.s32 %v1477, %v1480
        %vm1482 = vcmp.lt.s32.totalorder %v1481, 0
        %v1483 = vsub.s32 0, %v1481
        %v1484 = vsel %vm1482, %v1483, %v1481
        %v1485 = vclz %v1484
        %v1486 = vsub.s32 %v1485, 2
        %vm1487 = vcmp.gt.s32.totalorder 0, %v1486
        %v1488 = vsel %vm1487, 0, %v1486
        %v1489 = vsub.s32 32, %v1488
        %v1490 = vshll.u32 %v1481, %v1488
        %v1491 = vshrl.u32 %v1473, %v1489
        %v1492 = vor.u32 %v1490, %v1491
        %v1493 = vsub.s32 4294967266, %v1488
        %v1494 = vadd.s32 %v1493, 127
        %v1495 = vshll.u32 %v1494, 23
        %v1496 = vor.u32 4788187, %v1495
        %v1497 = vand.u32 2147483647, %v1496
        %v1499 = vcvt.s32.f32 %v1492
        %v1500 = vmul.f32 %v1499, %v1497
        %v1501 = vxor.u32 %v1500, 2147483648
        %v1502 = vsel %vm1419, %v1501, %v1500
        %v1503 = vsub.s32 4, %v1479
        %v1504 = vsel %vm1419, %v1503, %v1479
        %v1505 = vsel %vm1418, %v973, %v1502
        %v1506 = vsel %vm1418, 0, %v1504
        %v1507 = vcosq.f32.pop %v1505
        %v1508 = vsinq.f32.pop %v1505
        %vm1509 = vweird.f32 %v973
        %v1510 = vadd.s32 %v1506, 3
        %v1511 = vand.u32 %v1510, 3
        %vm1512 = vcmp.lt.s32.totalorder %v1511, 2
        %vm1513 = vcmp.eq.s32.totalorder %v1511, 0
        %v1514 = vxor.u32 %v1508, 2147483648
        %v1515 = vsel %vm1513, %v1507, %v1514
        %vm1516 = vcmp.eq.s32.totalorder %v1511, 2
        %v1517 = vxor.u32 %v1507, 2147483648
        %v1518 = vsel %vm1516, %v1517, %v1508
        %v1519 = vsel %vm1512, %v1515, %v1518
        %v1520 = vsel %vm1509, nan, %v1519
        %v1521 = vand.u32 2147483647, %v974
        %vm1522 = vcmp.le.f32.partialorder %v1521, 0.7853982
        %vm1523 = vcmp.lt.s32.totalorder %v974, 0
        %v1524 = vand.u32 %v974, 2139095040
        %v1525 = vshrl.u32 %v1524, 23
        %v1526 = vsub.s32 %v1525, 127
        %v1527 = vand.u32 2147483647, %v974
        %v1528 = vand.u32 %v1527, 8388607
        %v1529 = vor.u32 %v1528, 8388608
        %v1530 = vsub.s32 0, %v1529
        %v1531 = vadd.s32 %v1526, 1
        %vm1532 = vcmp.gt.s32.totalorder %v1531, 0
        %v1533 = vsel %vm1532, %v1531, 0
        %v1534 = vshrl.u32 %v1533, 5
        %v1535 = vand.u32 %v1533, 31
        %v1536 = vsub.s32 32, %v1535
        %v1537 = vshrl.u32 683565275, %v1536
        %v1538 = vshll.u32 683565275, %v1535
        %v1539 = vshrl.u32 2475754826, %v1536
        %v1540 = vor.u32 %v1538, %v1539
        %v1541 = vshll.u32 2475754826, %v1535
        %v1542 = vshrl.u32 2131351028, %v1536
        %v1543 = vor.u32 %v1541, %v1542
        %v1544 = vshll.u32 2131351028, %v1535
        %v1545 = vshrl.u32 2102212464, %v1536
        %v1546 = vor.u32 %v1544, %v1545
        %v1547 = vshll.u32 2102212464, %v1535
        %v1548 = vshrl.u32 920167782, %v1536
        %v1549 = vor.u32 %v1547, %v1548
        %v1550 = vshll.u32 920167782, %v1535
        %v1551 = vshrl.u32 1326507024, %v1536
        %v1552 = vor.u32 %v1550, %v1551
        %vm1553 = vcmp.lt.s32.totalorder %v1534, 1
        %vm1554 = vcmp.lt.s32.totalorder %v1534, 2
        %vm1555 = vcmp.lt.s32.totalorder %v1534, 3
        %vm1556 = vcmp.lt.s32.totalorder %v1534, 4
        %v1557 = vsel %vm1553, %v1537, %v1540
        %v1558 = vsel %vm1556, %v1546, 2102212464
        %v1559 = vsel %vm1555, %v1543, %v1558
        %v1560 = vsel %vm1554, %v1557, %v1559
        %v1561 = vsel %vm1553, %v1540, %v1543
        %v1562 = vsel %vm1556, %v1549, 920167782
        %v1563 = vsel %vm1555, %v1546, %v1562
        %v1564 = vsel %vm1554, %v1561, %v1563
        %v1565 = vsel %vm1553, %v1543, %v1546
        %v1566 = vsel %vm1556, %v1552, 1326507024
        %v1567 = vsel %vm1555, %v1549, %v1566
        %v1568 = vsel %vm1554, %v1565, %v1567
        %v1569 = vshll.u32 %v1529, 8
        %v1570 = vmul.u32.u64.compose %v1569, %v1568
        %v1571 = vextract.low.u32 %v1570
        %v1572 = vextract.high.u32 %v1570
        %v1573 = vmul.u32.u64.compose %v1569, %v1564
        %v1574 = vextract.low.u32 %v1573
        %v1575 = vextract.high.u32 %v1573
        %v1576 = vmul.u32 %v1569, %v1560
        %v1577 = vadd.s32 %v1572, %v1574
        %vm1578 = vc.u32 %v1572, %v1574
        %v1579 = vadd.s32 %v1575, 1
        %v1580 = vsel %vm1578, %v1579, %v1575
        %v1581 = vadd.s32 %v1576, %v1580
        %v1582 = vadd.s32 %v1581, 536870912
        %v1583 = vshrl.u32 %v1582, 30
        %v1584 = vshll.u32 %v1583, 30
        %v1585 = vsub.s32 %v1581, %v1584
        %vm1586 = vcmp.lt.s32.totalorder %v1585, 0
        %v1587 = vsub.s32 0, %v1585
        %v1588 = vsel %vm1586, %v1587, %v1585
        %v1589 = vclz %v1588
        %v1590 = vsub.s32 %v1589, 2
        %vm1591 = vcmp.gt.s32.totalorder 0, %v1590
        %v1592 = vsel %vm1591, 0, %v1590
        %v1593 = vsub.s32 32, %v1592
        %v1594 = vshll.u32 %v1585, %v1592
        %v1595 = vshrl.u32 %v1577, %v1593
        %v1596 = vor.u32 %v1594, %v1595
        %v1597 = vsub.s32 4294967266, %v1592
        %v1598 = vadd.s32 %v1597, 127
        %v1599 = vshll.u32 %v1598, 23
        %v1600 = vor.u32 4788187, %v1599
        %v1601 = vand.u32 2147483647, %v1600
        %v1603 = vcvt.s32.f32 %v1596
        %v1604 = vmul.f32 %v1603, %v1601
        %v1605 = vxor.u32 %v1604, 2147483648
        %v1606 = vsel %vm1523, %v1605, %v1604
        %v1607 = vsub.s32 4, %v1583
        %v1608 = vsel %vm1523, %v1607, %v1583
        %v1609 = vsel %vm1522, %v974, %v1606
        %v1610 = vsel %vm1522, 0, %v1608
        %v1611 = vcosq.f32.pop %v1609
        %v1612 = vsinq.f32.pop %v1609
        %vm1613 = vweird.f32 %v974
        %v1614 = vadd.s32 %v1610, 3
        %v1615 = vand.u32 %v1614, 3
        %vm1616 = vcmp.lt.s32.totalorder %v1615, 2
        %vm1617 = vcmp.eq.s32.totalorder %v1615, 0
        %v1618 = vxor.u32 %v1612, 2147483648
        %v1619 = vsel %vm1617, %v1611, %v1618
        %vm1620 = vcmp.eq.s32.totalorder %v1615, 2
        %v1621 = vxor.u32 %v1611, 2147483648
        %v1622 = vsel %vm1620, %v1621, %v1612
        %v1623 = vsel %vm1616, %v1619, %v1622
        %v1624 = vsel %vm1613, nan, %v1623
        %v1625 = vand.u32 2147483647, %v975
        %vm1626 = vcmp.le.f32.partialorder %v1625, 0.7853982
        %vm1627 = vcmp.lt.s32.totalorder %v975, 0
        %v1628 = vand.u32 %v975, 2139095040
        %v1629 = vshrl.u32 %v1628, 23
        %v1630 = vsub.s32 %v1629, 127
        %v1631 = vand.u32 2147483647, %v975
        %v1632 = vand.u32 %v1631, 8388607
        %v1633 = vor.u32 %v1632, 8388608
        %v1634 = vsub.s32 0, %v1633
        %v1635 = vadd.s32 %v1630, 1
        %vm1636 = vcmp.gt.s32.totalorder %v1635, 0
        %v1637 = vsel %vm1636, %v1635, 0
        %v1638 = vshrl.u32 %v1637, 5
        %v1639 = vand.u32 %v1637, 31
        %v1640 = vsub.s32 32, %v1639
        %v1641 = vshrl.u32 683565275, %v1640
        %v1642 = vshll.u32 683565275, %v1639
        %v1643 = vshrl.u32 2475754826, %v1640
        %v1644 = vor.u32 %v1642, %v1643
        %v1645 = vshll.u32 2475754826, %v1639
        %v1646 = vshrl.u32 2131351028, %v1640
        %v1647 = vor.u32 %v1645, %v1646
        %v1648 = vshll.u32 2131351028, %v1639
        %v1649 = vshrl.u32 2102212464, %v1640
        %v1650 = vor.u32 %v1648, %v1649
        %v1651 = vshll.u32 2102212464, %v1639
        %v1652 = vshrl.u32 920167782, %v1640
        %v1653 = vor.u32 %v1651, %v1652
        %v1654 = vshll.u32 920167782, %v1639
        %v1655 = vshrl.u32 1326507024, %v1640
        %v1656 = vor.u32 %v1654, %v1655
        %vm1657 = vcmp.lt.s32.totalorder %v1638, 1
        %vm1658 = vcmp.lt.s32.totalorder %v1638, 2
        %vm1659 = vcmp.lt.s32.totalorder %v1638, 3
        %vm1660 = vcmp.lt.s32.totalorder %v1638, 4
        %v1661 = vsel %vm1657, %v1641, %v1644
        %v1662 = vsel %vm1660, %v1650, 2102212464
        %v1663 = vsel %vm1659, %v1647, %v1662
        %v1664 = vsel %vm1658, %v1661, %v1663
        %v1665 = vsel %vm1657, %v1644, %v1647
        %v1666 = vsel %vm1660, %v1653, 920167782
        %v1667 = vsel %vm1659, %v1650, %v1666
        %v1668 = vsel %vm1658, %v1665, %v1667
        %v1669 = vsel %vm1657, %v1647, %v1650
        %v1670 = vsel %vm1660, %v1656, 1326507024
        %v1671 = vsel %vm1659, %v1653, %v1670
        %v1672 = vsel %vm1658, %v1669, %v1671
        %v1673 = vshll.u32 %v1633, 8
        %v1674 = vmul.u32.u64.compose %v1673, %v1672
        %v1675 = vextract.low.u32 %v1674
        %v1676 = vextract.high.u32 %v1674
        %v1677 = vmul.u32.u64.compose %v1673, %v1668
        %v1678 = vextract.low.u32 %v1677
        %v1679 = vextract.high.u32 %v1677
        %v1680 = vmul.u32 %v1673, %v1664
        %v1681 = vadd.s32 %v1676, %v1678
        %vm1682 = vc.u32 %v1676, %v1678
        %v1683 = vadd.s32 %v1679, 1
        %v1684 = vsel %vm1682, %v1683, %v1679
        %v1685 = vadd.s32 %v1680, %v1684
        %v1686 = vadd.s32 %v1685, 536870912
        %v1687 = vshrl.u32 %v1686, 30
        %v1688 = vshll.u32 %v1687, 30
        %v1689 = vsub.s32 %v1685, %v1688
        %vm1690 = vcmp.lt.s32.totalorder %v1689, 0
        %v1691 = vsub.s32 0, %v1689
        %v1692 = vsel %vm1690, %v1691, %v1689
        %v1693 = vclz %v1692
        %v1694 = vsub.s32 %v1693, 2
        %vm1695 = vcmp.gt.s32.totalorder 0, %v1694
        %v1696 = vsel %vm1695, 0, %v1694
        %v1697 = vsub.s32 32, %v1696
        %v1698 = vshll.u32 %v1689, %v1696
        %v1699 = vshrl.u32 %v1681, %v1697
        %v1700 = vor.u32 %v1698, %v1699
        %v1701 = vsub.s32 4294967266, %v1696
        %v1702 = vadd.s32 %v1701, 127
        %v1703 = vshll.u32 %v1702, 23
        %v1704 = vor.u32 4788187, %v1703
        %v1705 = vand.u32 2147483647, %v1704
        %v1707 = vcvt.s32.f32 %v1700
        %v1708 = vmul.f32 %v1707, %v1705
        %v1709 = vxor.u32 %v1708, 2147483648
        %v1710 = vsel %vm1627, %v1709, %v1708
        %v1711 = vsub.s32 4, %v1687
        %v1712 = vsel %vm1627, %v1711, %v1687
        %v1713 = vsel %vm1626, %v975, %v1710
        %v1714 = vsel %vm1626, 0, %v1712
        %v1715 = vcosq.f32.pop %v1713
        %v1716 = vsinq.f32.pop %v1713
        %vm1717 = vweird.f32 %v975
        %v1718 = vadd.s32 %v1714, 3
        %v1719 = vand.u32 %v1718, 3
        %vm1720 = vcmp.lt.s32.totalorder %v1719, 2
        %vm1721 = vcmp.eq.s32.totalorder %v1719, 0
        %v1722 = vxor.u32 %v1716, 2147483648
        %v1723 = vsel %vm1721, %v1715, %v1722
        %vm1724 = vcmp.eq.s32.totalorder %v1719, 2
        %v1725 = vxor.u32 %v1715, 2147483648
        %v1726 = vsel %vm1724, %v1725, %v1716
        %v1727 = vsel %vm1720, %v1723, %v1726
        %v1728 = vsel %vm1717, nan, %v1727
        %v1729 = vand.u32 2147483647, %v976
        %vm1730 = vcmp.le.f32.partialorder %v1729, 0.7853982
        %vm1731 = vcmp.lt.s32.totalorder %v976, 0
        %v1732 = vand.u32 %v976, 2139095040
        %v1733 = vshrl.u32 %v1732, 23
        %v1734 = vsub.s32 %v1733, 127
        %v1735 = vand.u32 2147483647, %v976
        %v1736 = vand.u32 %v1735, 8388607
        %v1737 = vor.u32 %v1736, 8388608
        %v1738 = vsub.s32 0, %v1737
        %v1739 = vadd.s32 %v1734, 1
        %vm1740 = vcmp.gt.s32.totalorder %v1739, 0
        %v1741 = vsel %vm1740, %v1739, 0
        %v1742 = vshrl.u32 %v1741, 5
        %v1743 = vand.u32 %v1741, 31
        %v1744 = vsub.s32 32, %v1743
        %v1745 = vshrl.u32 683565275, %v1744
        %v1746 = vshll.u32 683565275, %v1743
        %v1747 = vshrl.u32 2475754826, %v1744
        %v1748 = vor.u32 %v1746, %v1747
        %v1749 = vshll.u32 2475754826, %v1743
        %v1750 = vshrl.u32 2131351028, %v1744
        %v1751 = vor.u32 %v1749, %v1750
        %v1752 = vshll.u32 2131351028, %v1743
        %v1753 = vshrl.u32 2102212464, %v1744
        %v1754 = vor.u32 %v1752, %v1753
        %v1755 = vshll.u32 2102212464, %v1743
        %v1756 = vshrl.u32 920167782, %v1744
        %v1757 = vor.u32 %v1755, %v1756
        %v1758 = vshll.u32 920167782, %v1743
        %v1759 = vshrl.u32 1326507024, %v1744
        %v1760 = vor.u32 %v1758, %v1759
        %vm1761 = vcmp.lt.s32.totalorder %v1742, 1
        %vm1762 = vcmp.lt.s32.totalorder %v1742, 2
        %vm1763 = vcmp.lt.s32.totalorder %v1742, 3
        %vm1764 = vcmp.lt.s32.totalorder %v1742, 4
        %v1765 = vsel %vm1761, %v1745, %v1748
        %v1766 = vsel %vm1764, %v1754, 2102212464
        %v1767 = vsel %vm1763, %v1751, %v1766
        %v1768 = vsel %vm1762, %v1765, %v1767
        %v1769 = vsel %vm1761, %v1748, %v1751
        %v1770 = vsel %vm1764, %v1757, 920167782
        %v1771 = vsel %vm1763, %v1754, %v1770
        %v1772 = vsel %vm1762, %v1769, %v1771
        %v1773 = vsel %vm1761, %v1751, %v1754
        %v1774 = vsel %vm1764, %v1760, 1326507024
        %v1775 = vsel %vm1763, %v1757, %v1774
        %v1776 = vsel %vm1762, %v1773, %v1775
        %v1777 = vshll.u32 %v1737, 8
        %v1778 = vmul.u32.u64.compose %v1777, %v1776
        %v1779 = vextract.low.u32 %v1778
        %v1780 = vextract.high.u32 %v1778
        %v1781 = vmul.u32.u64.compose %v1777, %v1772
        %v1782 = vextract.low.u32 %v1781
        %v1783 = vextract.high.u32 %v1781
        %v1784 = vmul.u32 %v1777, %v1768
        %v1785 = vadd.s32 %v1780, %v1782
        %vm1786 = vc.u32 %v1780, %v1782
        %v1787 = vadd.s32 %v1783, 1
        %v1788 = vsel %vm1786, %v1787, %v1783
        %v1789 = vadd.s32 %v1784, %v1788
        %v1790 = vadd.s32 %v1789, 536870912
        %v1791 = vshrl.u32 %v1790, 30
        %v1792 = vshll.u32 %v1791, 30
        %v1793 = vsub.s32 %v1789, %v1792
        %vm1794 = vcmp.lt.s32.totalorder %v1793, 0
        %v1795 = vsub.s32 0, %v1793
        %v1796 = vsel %vm1794, %v1795, %v1793
        %v1797 = vclz %v1796
        %v1798 = vsub.s32 %v1797, 2
        %vm1799 = vcmp.gt.s32.totalorder 0, %v1798
        %v1800 = vsel %vm1799, 0, %v1798
        %v1801 = vsub.s32 32, %v1800
        %v1802 = vshll.u32 %v1793, %v1800
        %v1803 = vshrl.u32 %v1785, %v1801
        %v1804 = vor.u32 %v1802, %v1803
        %v1805 = vsub.s32 4294967266, %v1800
        %v1806 = vadd.s32 %v1805, 127
        %v1807 = vshll.u32 %v1806, 23
        %v1808 = vor.u32 4788187, %v1807
        %v1809 = vand.u32 2147483647, %v1808
        %v1811 = vcvt.s32.f32 %v1804
        %v1812 = vmul.f32 %v1811, %v1809
        %v1813 = vxor.u32 %v1812, 2147483648
        %v1814 = vsel %vm1731, %v1813, %v1812
        %v1815 = vsub.s32 4, %v1791
        %v1816 = vsel %vm1731, %v1815, %v1791
        %v1817 = vsel %vm1730, %v976, %v1814
        %v1818 = vsel %vm1730, 0, %v1816
        %v1819 = vcosq.f32.pop %v1817
        %v1820 = vsinq.f32.pop %v1817
        %vm1821 = vweird.f32 %v976
        %v1822 = vadd.s32 %v1818, 3
        %v1823 = vand.u32 %v1822, 3
        %vm1824 = vcmp.lt.s32.totalorder %v1823, 2
        %vm1825 = vcmp.eq.s32.totalorder %v1823, 0
        %v1826 = vxor.u32 %v1820, 2147483648
        %v1827 = vsel %vm1825, %v1819, %v1826
        %vm1828 = vcmp.eq.s32.totalorder %v1823, 2
        %v1829 = vxor.u32 %v1819, 2147483648
        %v1830 = vsel %vm1828, %v1829, %v1820
        %v1831 = vsel %vm1824, %v1827, %v1830
        %v1832 = vsel %vm1821, nan, %v1831
        %v1833 = vand.u32 2147483647, %v977
        %vm1834 = vcmp.le.f32.partialorder %v1833, 0.7853982
        %vm1835 = vcmp.lt.s32.totalorder %v977, 0
        %v1836 = vand.u32 %v977, 2139095040
        %v1837 = vshrl.u32 %v1836, 23
        %v1838 = vsub.s32 %v1837, 127
        %v1839 = vand.u32 2147483647, %v977
        %v1840 = vand.u32 %v1839, 8388607
        %v1841 = vor.u32 %v1840, 8388608
        %v1842 = vsub.s32 0, %v1841
        %v1843 = vadd.s32 %v1838, 1
        %vm1844 = vcmp.gt.s32.totalorder %v1843, 0
        %v1845 = vsel %vm1844, %v1843, 0
        %v1846 = vshrl.u32 %v1845, 5
        %v1847 = vand.u32 %v1845, 31
        %v1848 = vsub.s32 32, %v1847
        %v1849 = vshrl.u32 683565275, %v1848
        %v1850 = vshll.u32 683565275, %v1847
        %v1851 = vshrl.u32 2475754826, %v1848
        %v1852 = vor.u32 %v1850, %v1851
        %v1853 = vshll.u32 2475754826, %v1847
        %v1854 = vshrl.u32 2131351028, %v1848
        %v1855 = vor.u32 %v1853, %v1854
        %v1856 = vshll.u32 2131351028, %v1847
        %v1857 = vshrl.u32 2102212464, %v1848
        %v1858 = vor.u32 %v1856, %v1857
        %v1859 = vshll.u32 2102212464, %v1847
        %v1860 = vshrl.u32 920167782, %v1848
        %v1861 = vor.u32 %v1859, %v1860
        %v1862 = vshll.u32 920167782, %v1847
        %v1863 = vshrl.u32 1326507024, %v1848
        %v1864 = vor.u32 %v1862, %v1863
        %vm1865 = vcmp.lt.s32.totalorder %v1846, 1
        %vm1866 = vcmp.lt.s32.totalorder %v1846, 2
        %vm1867 = vcmp.lt.s32.totalorder %v1846, 3
        %vm1868 = vcmp.lt.s32.totalorder %v1846, 4
        %v1869 = vsel %vm1865, %v1849, %v1852
        %v1870 = vsel %vm1868, %v1858, 2102212464
        %v1871 = vsel %vm1867, %v1855, %v1870
        %v1872 = vsel %vm1866, %v1869, %v1871
        %v1873 = vsel %vm1865, %v1852, %v1855
        %v1874 = vsel %vm1868, %v1861, 920167782
        %v1875 = vsel %vm1867, %v1858, %v1874
        %v1876 = vsel %vm1866, %v1873, %v1875
        %v1877 = vsel %vm1865, %v1855, %v1858
        %v1878 = vsel %vm1868, %v1864, 1326507024
        %v1879 = vsel %vm1867, %v1861, %v1878
        %v1880 = vsel %vm1866, %v1877, %v1879
        %v1881 = vshll.u32 %v1841, 8
        %v1882 = vmul.u32.u64.compose %v1881, %v1880
        %v1883 = vextract.low.u32 %v1882
        %v1884 = vextract.high.u32 %v1882
        %v1885 = vmul.u32.u64.compose %v1881, %v1876
        %v1886 = vextract.low.u32 %v1885
        %v1887 = vextract.high.u32 %v1885
        %v1888 = vmul.u32 %v1881, %v1872
        %v1889 = vadd.s32 %v1884, %v1886
        %vm1890 = vc.u32 %v1884, %v1886
        %v1891 = vadd.s32 %v1887, 1
        %v1892 = vsel %vm1890, %v1891, %v1887
        %v1893 = vadd.s32 %v1888, %v1892
        %v1894 = vadd.s32 %v1893, 536870912
        %v1895 = vshrl.u32 %v1894, 30
        %v1896 = vshll.u32 %v1895, 30
        %v1897 = vsub.s32 %v1893, %v1896
        %vm1898 = vcmp.lt.s32.totalorder %v1897, 0
        %v1899 = vsub.s32 0, %v1897
        %v1900 = vsel %vm1898, %v1899, %v1897
        %v1901 = vclz %v1900
        %v1902 = vsub.s32 %v1901, 2
        %vm1903 = vcmp.gt.s32.totalorder 0, %v1902
        %v1904 = vsel %vm1903, 0, %v1902
        %v1905 = vsub.s32 32, %v1904
        %v1906 = vshll.u32 %v1897, %v1904
        %v1907 = vshrl.u32 %v1889, %v1905
        %v1908 = vor.u32 %v1906, %v1907
        %v1909 = vsub.s32 4294967266, %v1904
        %v1910 = vadd.s32 %v1909, 127
        %v1911 = vshll.u32 %v1910, 23
        %v1912 = vor.u32 4788187, %v1911
        %v1913 = vand.u32 2147483647, %v1912
        %v1915 = vcvt.s32.f32 %v1908
        %v1916 = vmul.f32 %v1915, %v1913
        %v1917 = vxor.u32 %v1916, 2147483648
        %v1918 = vsel %vm1835, %v1917, %v1916
        %v1919 = vsub.s32 4, %v1895
        %v1920 = vsel %vm1835, %v1919, %v1895
        %v1921 = vsel %vm1834, %v977, %v1918
        %v1922 = vsel %vm1834, 0, %v1920
        %v1923 = vcosq.f32.pop %v1921
        %v1924 = vsinq.f32.pop %v1921
        %vm1925 = vweird.f32 %v977
        %v1926 = vadd.s32 %v1922, 3
        %v1927 = vand.u32 %v1926, 3
        %vm1928 = vcmp.lt.s32.totalorder %v1927, 2
        %vm1929 = vcmp.eq.s32.totalorder %v1927, 0
        %v1930 = vxor.u32 %v1924, 2147483648
        %v1931 = vsel %vm1929, %v1923, %v1930
        %vm1932 = vcmp.eq.s32.totalorder %v1927, 2
        %v1933 = vxor.u32 %v1923, 2147483648
        %v1934 = vsel %vm1932, %v1933, %v1924
        %v1935 = vsel %vm1928, %v1931, %v1934
        %v1936 = vsel %vm1925, nan, %v1935
        %v1937 = vand.u32 2147483647, %v978
        %vm1938 = vcmp.le.f32.partialorder %v1937, 0.7853982
        %vm1939 = vcmp.lt.s32.totalorder %v978, 0
        %v1940 = vand.u32 %v978, 2139095040
        %v1941 = vshrl.u32 %v1940, 23
        %v1942 = vsub.s32 %v1941, 127
        %v1943 = vand.u32 2147483647, %v978
        %v1944 = vand.u32 %v1943, 8388607
        %v1945 = vor.u32 %v1944, 8388608
        %v1946 = vsub.s32 0, %v1945
        %v1947 = vadd.s32 %v1942, 1
        %vm1948 = vcmp.gt.s32.totalorder %v1947, 0
        %v1949 = vsel %vm1948, %v1947, 0
        %v1950 = vshrl.u32 %v1949, 5
        %v1951 = vand.u32 %v1949, 31
        %v1952 = vsub.s32 32, %v1951
        %v1953 = vshrl.u32 683565275, %v1952
        %v1954 = vshll.u32 683565275, %v1951
        %v1955 = vshrl.u32 2475754826, %v1952
        %v1956 = vor.u32 %v1954, %v1955
        %v1957 = vshll.u32 2475754826, %v1951
        %v1958 = vshrl.u32 2131351028, %v1952
        %v1959 = vor.u32 %v1957, %v1958
        %v1960 = vshll.u32 2131351028, %v1951
        %v1961 = vshrl.u32 2102212464, %v1952
        %v1962 = vor.u32 %v1960, %v1961
        %v1963 = vshll.u32 2102212464, %v1951
        %v1964 = vshrl.u32 920167782, %v1952
        %v1965 = vor.u32 %v1963, %v1964
        %v1966 = vshll.u32 920167782, %v1951
        %v1967 = vshrl.u32 1326507024, %v1952
        %v1968 = vor.u32 %v1966, %v1967
        %vm1969 = vcmp.lt.s32.totalorder %v1950, 1
        %vm1970 = vcmp.lt.s32.totalorder %v1950, 2
        %vm1971 = vcmp.lt.s32.totalorder %v1950, 3
        %vm1972 = vcmp.lt.s32.totalorder %v1950, 4
        %v1973 = vsel %vm1969, %v1953, %v1956
        %v1974 = vsel %vm1972, %v1962, 2102212464
        %v1975 = vsel %vm1971, %v1959, %v1974
        %v1976 = vsel %vm1970, %v1973, %v1975
        %v1977 = vsel %vm1969, %v1956, %v1959
        %v1978 = vsel %vm1972, %v1965, 920167782
        %v1979 = vsel %vm1971, %v1962, %v1978
        %v1980 = vsel %vm1970, %v1977, %v1979
        %v1981 = vsel %vm1969, %v1959, %v1962
        %v1982 = vsel %vm1972, %v1968, 1326507024
        %v1983 = vsel %vm1971, %v1965, %v1982
        %v1984 = vsel %vm1970, %v1981, %v1983
        %v1985 = vshll.u32 %v1945, 8
        %v1986 = vmul.u32.u64.compose %v1985, %v1984
        %v1987 = vextract.low.u32 %v1986
        %v1988 = vextract.high.u32 %v1986
        %v1989 = vmul.u32.u64.compose %v1985, %v1980
        %v1990 = vextract.low.u32 %v1989
        %v1991 = vextract.high.u32 %v1989
        %v1992 = vmul.u32 %v1985, %v1976
        %v1993 = vadd.s32 %v1988, %v1990
        %vm1994 = vc.u32 %v1988, %v1990
        %v1995 = vadd.s32 %v1991, 1
        %v1996 = vsel %vm1994, %v1995, %v1991
        %v1997 = vadd.s32 %v1992, %v1996
        %v1998 = vadd.s32 %v1997, 536870912
        %v1999 = vshrl.u32 %v1998, 30
        %v2000 = vshll.u32 %v1999, 30
        %v2001 = vsub.s32 %v1997, %v2000
        %vm2002 = vcmp.lt.s32.totalorder %v2001, 0
        %v2003 = vsub.s32 0, %v2001
        %v2004 = vsel %vm2002, %v2003, %v2001
        %v2005 = vclz %v2004
        %v2006 = vsub.s32 %v2005, 2
        %vm2007 = vcmp.gt.s32.totalorder 0, %v2006
        %v2008 = vsel %vm2007, 0, %v2006
        %v2009 = vsub.s32 32, %v2008
        %v2010 = vshll.u32 %v2001, %v2008
        %v2011 = vshrl.u32 %v1993, %v2009
        %v2012 = vor.u32 %v2010, %v2011
        %v2013 = vsub.s32 4294967266, %v2008
        %v2014 = vadd.s32 %v2013, 127
        %v2015 = vshll.u32 %v2014, 23
        %v2016 = vor.u32 4788187, %v2015
        %v2017 = vand.u32 2147483647, %v2016
        %v2019 = vcvt.s32.f32 %v2012
        %v2020 = vmul.f32 %v2019, %v2017
        %v2021 = vxor.u32 %v2020, 2147483648
        %v2022 = vsel %vm1939, %v2021, %v2020
        %v2023 = vsub.s32 4, %v1999
        %v2024 = vsel %vm1939, %v2023, %v1999
        %v2025 = vsel %vm1938, %v978, %v2022
        %v2026 = vsel %vm1938, 0, %v2024
        %v2027 = vcosq.f32.pop %v2025
        %v2028 = vsinq.f32.pop %v2025
        %vm2029 = vweird.f32 %v978
        %v2030 = vadd.s32 %v2026, 3
        %v2031 = vand.u32 %v2030, 3
        %vm2032 = vcmp.lt.s32.totalorder %v2031, 2
        %vm2033 = vcmp.eq.s32.totalorder %v2031, 0
        %v2034 = vxor.u32 %v2028, 2147483648
        %v2035 = vsel %vm2033, %v2027, %v2034
        %vm2036 = vcmp.eq.s32.totalorder %v2031, 2
        %v2037 = vxor.u32 %v2027, 2147483648
        %v2038 = vsel %vm2036, %v2037, %v2028
        %v2039 = vsel %vm2032, %v2035, %v2038
        %v2040 = vsel %vm2029, nan, %v2039
        %v2041 = vand.u32 2147483647, %v979
        %vm2042 = vcmp.le.f32.partialorder %v2041, 0.7853982
        %vm2043 = vcmp.lt.s32.totalorder %v979, 0
        %v2044 = vand.u32 %v979, 2139095040
        %v2045 = vshrl.u32 %v2044, 23
        %v2046 = vsub.s32 %v2045, 127
        %v2047 = vand.u32 2147483647, %v979
        %v2048 = vand.u32 %v2047, 8388607
        %v2049 = vor.u32 %v2048, 8388608
        %v2050 = vsub.s32 0, %v2049
        %v2051 = vadd.s32 %v2046, 1
        %vm2052 = vcmp.gt.s32.totalorder %v2051, 0
        %v2053 = vsel %vm2052, %v2051, 0
        %v2054 = vshrl.u32 %v2053, 5
        %v2055 = vand.u32 %v2053, 31
        %v2056 = vsub.s32 32, %v2055
        %v2057 = vshrl.u32 683565275, %v2056
        %v2058 = vshll.u32 683565275, %v2055
        %v2059 = vshrl.u32 2475754826, %v2056
        %v2060 = vor.u32 %v2058, %v2059
        %v2061 = vshll.u32 2475754826, %v2055
        %v2062 = vshrl.u32 2131351028, %v2056
        %v2063 = vor.u32 %v2061, %v2062
        %v2064 = vshll.u32 2131351028, %v2055
        %v2065 = vshrl.u32 2102212464, %v2056
        %v2066 = vor.u32 %v2064, %v2065
        %v2067 = vshll.u32 2102212464, %v2055
        %v2068 = vshrl.u32 920167782, %v2056
        %v2069 = vor.u32 %v2067, %v2068
        %v2070 = vshll.u32 920167782, %v2055
        %v2071 = vshrl.u32 1326507024, %v2056
        %v2072 = vor.u32 %v2070, %v2071
        %vm2073 = vcmp.lt.s32.totalorder %v2054, 1
        %vm2074 = vcmp.lt.s32.totalorder %v2054, 2
        %vm2075 = vcmp.lt.s32.totalorder %v2054, 3
        %vm2076 = vcmp.lt.s32.totalorder %v2054, 4
        %v2077 = vsel %vm2073, %v2057, %v2060
        %v2078 = vsel %vm2076, %v2066, 2102212464
        %v2079 = vsel %vm2075, %v2063, %v2078
        %v2080 = vsel %vm2074, %v2077, %v2079
        %v2081 = vsel %vm2073, %v2060, %v2063
        %v2082 = vsel %vm2076, %v2069, 920167782
        %v2083 = vsel %vm2075, %v2066, %v2082
        %v2084 = vsel %vm2074, %v2081, %v2083
        %v2085 = vsel %vm2073, %v2063, %v2066
        %v2086 = vsel %vm2076, %v2072, 1326507024
        %v2087 = vsel %vm2075, %v2069, %v2086
        %v2088 = vsel %vm2074, %v2085, %v2087
        %v2089 = vshll.u32 %v2049, 8
        %v2090 = vmul.u32.u64.compose %v2089, %v2088
        %v2091 = vextract.low.u32 %v2090
        %v2092 = vextract.high.u32 %v2090
        %v2093 = vmul.u32.u64.compose %v2089, %v2084
        %v2094 = vextract.low.u32 %v2093
        %v2095 = vextract.high.u32 %v2093
        %v2096 = vmul.u32 %v2089, %v2080
        %v2097 = vadd.s32 %v2092, %v2094
        %vm2098 = vc.u32 %v2092, %v2094
        %v2099 = vadd.s32 %v2095, 1
        %v2100 = vsel %vm2098, %v2099, %v2095
        %v2101 = vadd.s32 %v2096, %v2100
        %v2102 = vadd.s32 %v2101, 536870912
        %v2103 = vshrl.u32 %v2102, 30
        %v2104 = vshll.u32 %v2103, 30
        %v2105 = vsub.s32 %v2101, %v2104
        %vm2106 = vcmp.lt.s32.totalorder %v2105, 0
        %v2107 = vsub.s32 0, %v2105
        %v2108 = vsel %vm2106, %v2107, %v2105
        %v2109 = vclz %v2108
        %v2110 = vsub.s32 %v2109, 2
        %vm2111 = vcmp.gt.s32.totalorder 0, %v2110
        %v2112 = vsel %vm2111, 0, %v2110
        %v2113 = vsub.s32 32, %v2112
        %v2114 = vshll.u32 %v2105, %v2112
        %v2115 = vshrl.u32 %v2097, %v2113
        %v2116 = vor.u32 %v2114, %v2115
        %v2117 = vsub.s32 4294967266, %v2112
        %v2118 = vadd.s32 %v2117, 127
        %v2119 = vshll.u32 %v2118, 23
        %v2120 = vor.u32 4788187, %v2119
        %v2121 = vand.u32 2147483647, %v2120
        %v2123 = vcvt.s32.f32 %v2116
        %v2124 = vmul.f32 %v2123, %v2121
        %v2125 = vxor.u32 %v2124, 2147483648
        %v2126 = vsel %vm2043, %v2125, %v2124
        %v2127 = vsub.s32 4, %v2103
        %v2128 = vsel %vm2043, %v2127, %v2103
        %v2129 = vsel %vm2042, %v979, %v2126
        %v2130 = vsel %vm2042, 0, %v2128
        %v2131 = vcosq.f32.pop %v2129
        %v2132 = vsinq.f32.pop %v2129
        %vm2133 = vweird.f32 %v979
        %v2134 = vadd.s32 %v2130, 3
        %v2135 = vand.u32 %v2134, 3
        %vm2136 = vcmp.lt.s32.totalorder %v2135, 2
        %vm2137 = vcmp.eq.s32.totalorder %v2135, 0
        %v2138 = vxor.u32 %v2132, 2147483648
        %v2139 = vsel %vm2137, %v2131, %v2138
        %vm2140 = vcmp.eq.s32.totalorder %v2135, 2
        %v2141 = vxor.u32 %v2131, 2147483648
        %v2142 = vsel %vm2140, %v2141, %v2132
        %v2143 = vsel %vm2136, %v2139, %v2142
        %v2144 = vsel %vm2133, nan, %v2143
        %v2145 = vand.u32 2147483647, %v980
        %vm2146 = vcmp.le.f32.partialorder %v2145, 0.7853982
        %vm2147 = vcmp.lt.s32.totalorder %v980, 0
        %v2148 = vand.u32 %v980, 2139095040
        %v2149 = vshrl.u32 %v2148, 23
        %v2150 = vsub.s32 %v2149, 127
        %v2151 = vand.u32 2147483647, %v980
        %v2152 = vand.u32 %v2151, 8388607
        %v2153 = vor.u32 %v2152, 8388608
        %v2154 = vsub.s32 0, %v2153
        %v2155 = vadd.s32 %v2150, 1
        %vm2156 = vcmp.gt.s32.totalorder %v2155, 0
        %v2157 = vsel %vm2156, %v2155, 0
        %v2158 = vshrl.u32 %v2157, 5
        %v2159 = vand.u32 %v2157, 31
        %v2160 = vsub.s32 32, %v2159
        %v2161 = vshrl.u32 683565275, %v2160
        %v2162 = vshll.u32 683565275, %v2159
        %v2163 = vshrl.u32 2475754826, %v2160
        %v2164 = vor.u32 %v2162, %v2163
        %v2165 = vshll.u32 2475754826, %v2159
        %v2166 = vshrl.u32 2131351028, %v2160
        %v2167 = vor.u32 %v2165, %v2166
        %v2168 = vshll.u32 2131351028, %v2159
        %v2169 = vshrl.u32 2102212464, %v2160
        %v2170 = vor.u32 %v2168, %v2169
        %v2171 = vshll.u32 2102212464, %v2159
        %v2172 = vshrl.u32 920167782, %v2160
        %v2173 = vor.u32 %v2171, %v2172
        %v2174 = vshll.u32 920167782, %v2159
        %v2175 = vshrl.u32 1326507024, %v2160
        %v2176 = vor.u32 %v2174, %v2175
        %vm2177 = vcmp.lt.s32.totalorder %v2158, 1
        %vm2178 = vcmp.lt.s32.totalorder %v2158, 2
        %vm2179 = vcmp.lt.s32.totalorder %v2158, 3
        %vm2180 = vcmp.lt.s32.totalorder %v2158, 4
        %v2181 = vsel %vm2177, %v2161, %v2164
        %v2182 = vsel %vm2180, %v2170, 2102212464
        %v2183 = vsel %vm2179, %v2167, %v2182
        %v2184 = vsel %vm2178, %v2181, %v2183
        %v2185 = vsel %vm2177, %v2164, %v2167
        %v2186 = vsel %vm2180, %v2173, 920167782
        %v2187 = vsel %vm2179, %v2170, %v2186
        %v2188 = vsel %vm2178, %v2185, %v2187
        %v2189 = vsel %vm2177, %v2167, %v2170
        %v2190 = vsel %vm2180, %v2176, 1326507024
        %v2191 = vsel %vm2179, %v2173, %v2190
        %v2192 = vsel %vm2178, %v2189, %v2191
        %v2193 = vshll.u32 %v2153, 8
        %v2194 = vmul.u32.u64.compose %v2193, %v2192
        %v2195 = vextract.low.u32 %v2194
        %v2196 = vextract.high.u32 %v2194
        %v2197 = vmul.u32.u64.compose %v2193, %v2188
        %v2198 = vextract.low.u32 %v2197
        %v2199 = vextract.high.u32 %v2197
        %v2200 = vmul.u32 %v2193, %v2184
        %v2201 = vadd.s32 %v2196, %v2198
        %vm2202 = vc.u32 %v2196, %v2198
        %v2203 = vadd.s32 %v2199, 1
        %v2204 = vsel %vm2202, %v2203, %v2199
        %v2205 = vadd.s32 %v2200, %v2204
        %v2206 = vadd.s32 %v2205, 536870912
        %v2207 = vshrl.u32 %v2206, 30
        %v2208 = vshll.u32 %v2207, 30
        %v2209 = vsub.s32 %v2205, %v2208
        %vm2210 = vcmp.lt.s32.totalorder %v2209, 0
        %v2211 = vsub.s32 0, %v2209
        %v2212 = vsel %vm2210, %v2211, %v2209
        %v2213 = vclz %v2212
        %v2214 = vsub.s32 %v2213, 2
        %vm2215 = vcmp.gt.s32.totalorder 0, %v2214
        %v2216 = vsel %vm2215, 0, %v2214
        %v2217 = vsub.s32 32, %v2216
        %v2218 = vshll.u32 %v2209, %v2216
        %v2219 = vshrl.u32 %v2201, %v2217
        %v2220 = vor.u32 %v2218, %v2219
        %v2221 = vsub.s32 4294967266, %v2216
        %v2222 = vadd.s32 %v2221, 127
        %v2223 = vshll.u32 %v2222, 23
        %v2224 = vor.u32 4788187, %v2223
        %v2225 = vand.u32 2147483647, %v2224
        %v2227 = vcvt.s32.f32 %v2220
        %v2228 = vmul.f32 %v2227, %v2225
        %v2229 = vxor.u32 %v2228, 2147483648
        %v2230 = vsel %vm2147, %v2229, %v2228
        %v2231 = vsub.s32 4, %v2207
        %v2232 = vsel %vm2147, %v2231, %v2207
        %v2233 = vsel %vm2146, %v980, %v2230
        %v2234 = vsel %vm2146, 0, %v2232
        %v2235 = vcosq.f32.pop %v2233
        %v2236 = vsinq.f32.pop %v2233
        %vm2237 = vweird.f32 %v980
        %v2238 = vadd.s32 %v2234, 3
        %v2239 = vand.u32 %v2238, 3
        %vm2240 = vcmp.lt.s32.totalorder %v2239, 2
        %vm2241 = vcmp.eq.s32.totalorder %v2239, 0
        %v2242 = vxor.u32 %v2236, 2147483648
        %v2243 = vsel %vm2241, %v2235, %v2242
        %vm2244 = vcmp.eq.s32.totalorder %v2239, 2
        %v2245 = vxor.u32 %v2235, 2147483648
        %v2246 = vsel %vm2244, %v2245, %v2236
        %v2247 = vsel %vm2240, %v2243, %v2246
        %v2248 = vsel %vm2237, nan, %v2247
        %v2249 = vand.u32 2147483647, %v981
        %vm2250 = vcmp.le.f32.partialorder %v2249, 0.7853982
        %vm2251 = vcmp.lt.s32.totalorder %v981, 0
        %v2252 = vand.u32 %v981, 2139095040
        %v2253 = vshrl.u32 %v2252, 23
        %v2254 = vsub.s32 %v2253, 127
        %v2255 = vand.u32 2147483647, %v981
        %v2256 = vand.u32 %v2255, 8388607
        %v2257 = vor.u32 %v2256, 8388608
        %v2258 = vsub.s32 0, %v2257
        %v2259 = vadd.s32 %v2254, 1
        %vm2260 = vcmp.gt.s32.totalorder %v2259, 0
        %v2261 = vsel %vm2260, %v2259, 0
        %v2262 = vshrl.u32 %v2261, 5
        %v2263 = vand.u32 %v2261, 31
        %v2264 = vsub.s32 32, %v2263
        %v2265 = vshrl.u32 683565275, %v2264
        %v2266 = vshll.u32 683565275, %v2263
        %v2267 = vshrl.u32 2475754826, %v2264
        %v2268 = vor.u32 %v2266, %v2267
        %v2269 = vshll.u32 2475754826, %v2263
        %v2270 = vshrl.u32 2131351028, %v2264
        %v2271 = vor.u32 %v2269, %v2270
        %v2272 = vshll.u32 2131351028, %v2263
        %v2273 = vshrl.u32 2102212464, %v2264
        %v2274 = vor.u32 %v2272, %v2273
        %v2275 = vshll.u32 2102212464, %v2263
        %v2276 = vshrl.u32 920167782, %v2264
        %v2277 = vor.u32 %v2275, %v2276
        %v2278 = vshll.u32 920167782, %v2263
        %v2279 = vshrl.u32 1326507024, %v2264
        %v2280 = vor.u32 %v2278, %v2279
        %vm2281 = vcmp.lt.s32.totalorder %v2262, 1
        %vm2282 = vcmp.lt.s32.totalorder %v2262, 2
        %vm2283 = vcmp.lt.s32.totalorder %v2262, 3
        %vm2284 = vcmp.lt.s32.totalorder %v2262, 4
        %v2285 = vsel %vm2281, %v2265, %v2268
        %v2286 = vsel %vm2284, %v2274, 2102212464
        %v2287 = vsel %vm2283, %v2271, %v2286
        %v2288 = vsel %vm2282, %v2285, %v2287
        %v2289 = vsel %vm2281, %v2268, %v2271
        %v2290 = vsel %vm2284, %v2277, 920167782
        %v2291 = vsel %vm2283, %v2274, %v2290
        %v2292 = vsel %vm2282, %v2289, %v2291
        %v2293 = vsel %vm2281, %v2271, %v2274
        %v2294 = vsel %vm2284, %v2280, 1326507024
        %v2295 = vsel %vm2283, %v2277, %v2294
        %v2296 = vsel %vm2282, %v2293, %v2295
        %v2297 = vshll.u32 %v2257, 8
        %v2298 = vmul.u32.u64.compose %v2297, %v2296
        %v2299 = vextract.low.u32 %v2298
        %v2300 = vextract.high.u32 %v2298
        %v2301 = vmul.u32.u64.compose %v2297, %v2292
        %v2302 = vextract.low.u32 %v2301
        %v2303 = vextract.high.u32 %v2301
        %v2304 = vmul.u32 %v2297, %v2288
        %v2305 = vadd.s32 %v2300, %v2302
        %vm2306 = vc.u32 %v2300, %v2302
        %v2307 = vadd.s32 %v2303, 1
        %v2308 = vsel %vm2306, %v2307, %v2303
        %v2309 = vadd.s32 %v2304, %v2308
        %v2310 = vadd.s32 %v2309, 536870912
        %v2311 = vshrl.u32 %v2310, 30
        %v2312 = vshll.u32 %v2311, 30
        %v2313 = vsub.s32 %v2309, %v2312
        %vm2314 = vcmp.lt.s32.totalorder %v2313, 0
        %v2315 = vsub.s32 0, %v2313
        %v2316 = vsel %vm2314, %v2315, %v2313
        %v2317 = vclz %v2316
        %v2318 = vsub.s32 %v2317, 2
        %vm2319 = vcmp.gt.s32.totalorder 0, %v2318
        %v2320 = vsel %vm2319, 0, %v2318
        %v2321 = vsub.s32 32, %v2320
        %v2322 = vshll.u32 %v2313, %v2320
        %v2323 = vshrl.u32 %v2305, %v2321
        %v2324 = vor.u32 %v2322, %v2323
        %v2325 = vsub.s32 4294967266, %v2320
        %v2326 = vadd.s32 %v2325, 127
        %v2327 = vshll.u32 %v2326, 23
        %v2328 = vor.u32 4788187, %v2327
        %v2329 = vand.u32 2147483647, %v2328
        %v2331 = vcvt.s32.f32 %v2324
        %v2332 = vmul.f32 %v2331, %v2329
        %v2333 = vxor.u32 %v2332, 2147483648
        %v2334 = vsel %vm2251, %v2333, %v2332
        %v2335 = vsub.s32 4, %v2311
        %v2336 = vsel %vm2251, %v2335, %v2311
        %v2337 = vsel %vm2250, %v981, %v2334
        %v2338 = vsel %vm2250, 0, %v2336
        %v2339 = vcosq.f32.pop %v2337
        %v2340 = vsinq.f32.pop %v2337
        %vm2341 = vweird.f32 %v981
        %v2342 = vadd.s32 %v2338, 3
        %v2343 = vand.u32 %v2342, 3
        %vm2344 = vcmp.lt.s32.totalorder %v2343, 2
        %vm2345 = vcmp.eq.s32.totalorder %v2343, 0
        %v2346 = vxor.u32 %v2340, 2147483648
        %v2347 = vsel %vm2345, %v2339, %v2346
        %vm2348 = vcmp.eq.s32.totalorder %v2343, 2
        %v2349 = vxor.u32 %v2339, 2147483648
        %v2350 = vsel %vm2348, %v2349, %v2340
        %v2351 = vsel %vm2344, %v2347, %v2350
        %v2352 = vsel %vm2341, nan, %v2351
        %v2353 = vand.u32 2147483647, %v982
        %vm2354 = vcmp.le.f32.partialorder %v2353, 0.7853982
        %vm2355 = vcmp.lt.s32.totalorder %v982, 0
        %v2356 = vand.u32 %v982, 2139095040
        %v2357 = vshrl.u32 %v2356, 23
        %v2358 = vsub.s32 %v2357, 127
        %v2359 = vand.u32 2147483647, %v982
        %v2360 = vand.u32 %v2359, 8388607
        %v2361 = vor.u32 %v2360, 8388608
        %v2362 = vsub.s32 0, %v2361
        %v2363 = vadd.s32 %v2358, 1
        %vm2364 = vcmp.gt.s32.totalorder %v2363, 0
        %v2365 = vsel %vm2364, %v2363, 0
        %v2366 = vshrl.u32 %v2365, 5
        %v2367 = vand.u32 %v2365, 31
        %v2368 = vsub.s32 32, %v2367
        %v2369 = vshrl.u32 683565275, %v2368
        %v2370 = vshll.u32 683565275, %v2367
        %v2371 = vshrl.u32 2475754826, %v2368
        %v2372 = vor.u32 %v2370, %v2371
        %v2373 = vshll.u32 2475754826, %v2367
        %v2374 = vshrl.u32 2131351028, %v2368
        %v2375 = vor.u32 %v2373, %v2374
        %v2376 = vshll.u32 2131351028, %v2367
        %v2377 = vshrl.u32 2102212464, %v2368
        %v2378 = vor.u32 %v2376, %v2377
        %v2379 = vshll.u32 2102212464, %v2367
        %v2380 = vshrl.u32 920167782, %v2368
        %v2381 = vor.u32 %v2379, %v2380
        %v2382 = vshll.u32 920167782, %v2367
        %v2383 = vshrl.u32 1326507024, %v2368
        %v2384 = vor.u32 %v2382, %v2383
        %vm2385 = vcmp.lt.s32.totalorder %v2366, 1
        %vm2386 = vcmp.lt.s32.totalorder %v2366, 2
        %vm2387 = vcmp.lt.s32.totalorder %v2366, 3
        %vm2388 = vcmp.lt.s32.totalorder %v2366, 4
        %v2389 = vsel %vm2385, %v2369, %v2372
        %v2390 = vsel %vm2388, %v2378, 2102212464
        %v2391 = vsel %vm2387, %v2375, %v2390
        %v2392 = vsel %vm2386, %v2389, %v2391
        %v2393 = vsel %vm2385, %v2372, %v2375
        %v2394 = vsel %vm2388, %v2381, 920167782
        %v2395 = vsel %vm2387, %v2378, %v2394
        %v2396 = vsel %vm2386, %v2393, %v2395
        %v2397 = vsel %vm2385, %v2375, %v2378
        %v2398 = vsel %vm2388, %v2384, 1326507024
        %v2399 = vsel %vm2387, %v2381, %v2398
        %v2400 = vsel %vm2386, %v2397, %v2399
        %v2401 = vshll.u32 %v2361, 8
        %v2402 = vmul.u32.u64.compose %v2401, %v2400
        %v2403 = vextract.low.u32 %v2402
        %v2404 = vextract.high.u32 %v2402
        %v2405 = vmul.u32.u64.compose %v2401, %v2396
        %v2406 = vextract.low.u32 %v2405
        %v2407 = vextract.high.u32 %v2405
        %v2408 = vmul.u32 %v2401, %v2392
        %v2409 = vadd.s32 %v2404, %v2406
        %vm2410 = vc.u32 %v2404, %v2406
        %v2411 = vadd.s32 %v2407, 1
        %v2412 = vsel %vm2410, %v2411, %v2407
        %v2413 = vadd.s32 %v2408, %v2412
        %v2414 = vadd.s32 %v2413, 536870912
        %v2415 = vshrl.u32 %v2414, 30
        %v2416 = vshll.u32 %v2415, 30
        %v2417 = vsub.s32 %v2413, %v2416
        %vm2418 = vcmp.lt.s32.totalorder %v2417, 0
        %v2419 = vsub.s32 0, %v2417
        %v2420 = vsel %vm2418, %v2419, %v2417
        %v2421 = vclz %v2420
        %v2422 = vsub.s32 %v2421, 2
        %vm2423 = vcmp.gt.s32.totalorder 0, %v2422
        %v2424 = vsel %vm2423, 0, %v2422
        %v2425 = vsub.s32 32, %v2424
        %v2426 = vshll.u32 %v2417, %v2424
        %v2427 = vshrl.u32 %v2409, %v2425
        %v2428 = vor.u32 %v2426, %v2427
        %v2429 = vsub.s32 4294967266, %v2424
        %v2430 = vadd.s32 %v2429, 127
        %v2431 = vshll.u32 %v2430, 23
        %v2432 = vor.u32 4788187, %v2431
        %v2433 = vand.u32 2147483647, %v2432
        %v2435 = vcvt.s32.f32 %v2428
        %v2436 = vmul.f32 %v2435, %v2433
        %v2437 = vxor.u32 %v2436, 2147483648
        %v2438 = vsel %vm2355, %v2437, %v2436
        %v2439 = vsub.s32 4, %v2415
        %v2440 = vsel %vm2355, %v2439, %v2415
        %v2441 = vsel %vm2354, %v982, %v2438
        %v2442 = vsel %vm2354, 0, %v2440
        %v2443 = vcosq.f32.pop %v2441
        %v2444 = vsinq.f32.pop %v2441
        %vm2445 = vweird.f32 %v982
        %v2446 = vadd.s32 %v2442, 3
        %v2447 = vand.u32 %v2446, 3
        %vm2448 = vcmp.lt.s32.totalorder %v2447, 2
        %vm2449 = vcmp.eq.s32.totalorder %v2447, 0
        %v2450 = vxor.u32 %v2444, 2147483648
        %v2451 = vsel %vm2449, %v2443, %v2450
        %vm2452 = vcmp.eq.s32.totalorder %v2447, 2
        %v2453 = vxor.u32 %v2443, 2147483648
        %v2454 = vsel %vm2452, %v2453, %v2444
        %v2455 = vsel %vm2448, %v2451, %v2454
        %v2456 = vsel %vm2445, nan, %v2455
        %v2457 = vand.u32 2147483647, %v983
        %vm2458 = vcmp.le.f32.partialorder %v2457, 0.7853982
        %vm2459 = vcmp.lt.s32.totalorder %v983, 0
        %v2460 = vand.u32 %v983, 2139095040
        %v2461 = vshrl.u32 %v2460, 23
        %v2462 = vsub.s32 %v2461, 127
        %v2463 = vand.u32 2147483647, %v983
        %v2464 = vand.u32 %v2463, 8388607
        %v2465 = vor.u32 %v2464, 8388608
        %v2466 = vsub.s32 0, %v2465
        %v2467 = vadd.s32 %v2462, 1
        %vm2468 = vcmp.gt.s32.totalorder %v2467, 0
        %v2469 = vsel %vm2468, %v2467, 0
        %v2470 = vshrl.u32 %v2469, 5
        %v2471 = vand.u32 %v2469, 31
        %v2472 = vsub.s32 32, %v2471
        %v2473 = vshrl.u32 683565275, %v2472
        %v2474 = vshll.u32 683565275, %v2471
        %v2475 = vshrl.u32 2475754826, %v2472
        %v2476 = vor.u32 %v2474, %v2475
        %v2477 = vshll.u32 2475754826, %v2471
        %v2478 = vshrl.u32 2131351028, %v2472
        %v2479 = vor.u32 %v2477, %v2478
        %v2480 = vshll.u32 2131351028, %v2471
        %v2481 = vshrl.u32 2102212464, %v2472
        %v2482 = vor.u32 %v2480, %v2481
        %v2483 = vshll.u32 2102212464, %v2471
        %v2484 = vshrl.u32 920167782, %v2472
        %v2485 = vor.u32 %v2483, %v2484
        %v2486 = vshll.u32 920167782, %v2471
        %v2487 = vshrl.u32 1326507024, %v2472
        %v2488 = vor.u32 %v2486, %v2487
        %vm2489 = vcmp.lt.s32.totalorder %v2470, 1
        %vm2490 = vcmp.lt.s32.totalorder %v2470, 2
        %vm2491 = vcmp.lt.s32.totalorder %v2470, 3
        %vm2492 = vcmp.lt.s32.totalorder %v2470, 4
        %v2493 = vsel %vm2489, %v2473, %v2476
        %v2494 = vsel %vm2492, %v2482, 2102212464
        %v2495 = vsel %vm2491, %v2479, %v2494
        %v2496 = vsel %vm2490, %v2493, %v2495
        %v2497 = vsel %vm2489, %v2476, %v2479
        %v2498 = vsel %vm2492, %v2485, 920167782
        %v2499 = vsel %vm2491, %v2482, %v2498
        %v2500 = vsel %vm2490, %v2497, %v2499
        %v2501 = vsel %vm2489, %v2479, %v2482
        %v2502 = vsel %vm2492, %v2488, 1326507024
        %v2503 = vsel %vm2491, %v2485, %v2502
        %v2504 = vsel %vm2490, %v2501, %v2503
        %v2505 = vshll.u32 %v2465, 8
        %v2506 = vmul.u32.u64.compose %v2505, %v2504
        %v2507 = vextract.low.u32 %v2506
        %v2508 = vextract.high.u32 %v2506
        %v2509 = vmul.u32.u64.compose %v2505, %v2500
        %v2510 = vextract.low.u32 %v2509
        %v2511 = vextract.high.u32 %v2509
        %v2512 = vmul.u32 %v2505, %v2496
        %v2513 = vadd.s32 %v2508, %v2510
        %vm2514 = vc.u32 %v2508, %v2510
        %v2515 = vadd.s32 %v2511, 1
        %v2516 = vsel %vm2514, %v2515, %v2511
        %v2517 = vadd.s32 %v2512, %v2516
        %v2518 = vadd.s32 %v2517, 536870912
        %v2519 = vshrl.u32 %v2518, 30
        %v2520 = vshll.u32 %v2519, 30
        %v2521 = vsub.s32 %v2517, %v2520
        %vm2522 = vcmp.lt.s32.totalorder %v2521, 0
        %v2523 = vsub.s32 0, %v2521
        %v2524 = vsel %vm2522, %v2523, %v2521
        %v2525 = vclz %v2524
        %v2526 = vsub.s32 %v2525, 2
        %vm2527 = vcmp.gt.s32.totalorder 0, %v2526
        %v2528 = vsel %vm2527, 0, %v2526
        %v2529 = vsub.s32 32, %v2528
        %v2530 = vshll.u32 %v2521, %v2528
        %v2531 = vshrl.u32 %v2513, %v2529
        %v2532 = vor.u32 %v2530, %v2531
        %v2533 = vsub.s32 4294967266, %v2528
        %v2534 = vadd.s32 %v2533, 127
        %v2535 = vshll.u32 %v2534, 23
        %v2536 = vor.u32 4788187, %v2535
        %v2537 = vand.u32 2147483647, %v2536
        %v2539 = vcvt.s32.f32 %v2532
        %v2540 = vmul.f32 %v2539, %v2537
        %v2541 = vxor.u32 %v2540, 2147483648
        %v2542 = vsel %vm2459, %v2541, %v2540
        %v2543 = vsub.s32 4, %v2519
        %v2544 = vsel %vm2459, %v2543, %v2519
        %v2545 = vsel %vm2458, %v983, %v2542
        %v2546 = vsel %vm2458, 0, %v2544
        %v2547 = vcosq.f32.pop %v2545
        %v2548 = vsinq.f32.pop %v2545
        %vm2549 = vweird.f32 %v983
        %v2550 = vadd.s32 %v2546, 3
        %v2551 = vand.u32 %v2550, 3
        %vm2552 = vcmp.lt.s32.totalorder %v2551, 2
        %vm2553 = vcmp.eq.s32.totalorder %v2551, 0
        %v2554 = vxor.u32 %v2548, 2147483648
        %v2555 = vsel %vm2553, %v2547, %v2554
        %vm2556 = vcmp.eq.s32.totalorder %v2551, 2
        %v2557 = vxor.u32 %v2547, 2147483648
        %v2558 = vsel %vm2556, %v2557, %v2548
        %v2559 = vsel %vm2552, %v2555, %v2558
        %v2560 = vsel %vm2549, nan, %v2559
        %v2561 = vand.u32 2147483647, %v984
        %vm2562 = vcmp.le.f32.partialorder %v2561, 0.7853982
        %vm2563 = vcmp.lt.s32.totalorder %v984, 0
        %v2564 = vand.u32 %v984, 2139095040
        %v2565 = vshrl.u32 %v2564, 23
        %v2566 = vsub.s32 %v2565, 127
        %v2567 = vand.u32 2147483647, %v984
        %v2568 = vand.u32 %v2567, 8388607
        %v2569 = vor.u32 %v2568, 8388608
        %v2570 = vsub.s32 0, %v2569
        %v2571 = vadd.s32 %v2566, 1
        %vm2572 = vcmp.gt.s32.totalorder %v2571, 0
        %v2573 = vsel %vm2572, %v2571, 0
        %v2574 = vshrl.u32 %v2573, 5
        %v2575 = vand.u32 %v2573, 31
        %v2576 = vsub.s32 32, %v2575
        %v2577 = vshrl.u32 683565275, %v2576
        %v2578 = vshll.u32 683565275, %v2575
        %v2579 = vshrl.u32 2475754826, %v2576
        %v2580 = vor.u32 %v2578, %v2579
        %v2581 = vshll.u32 2475754826, %v2575
        %v2582 = vshrl.u32 2131351028, %v2576
        %v2583 = vor.u32 %v2581, %v2582
        %v2584 = vshll.u32 2131351028, %v2575
        %v2585 = vshrl.u32 2102212464, %v2576
        %v2586 = vor.u32 %v2584, %v2585
        %v2587 = vshll.u32 2102212464, %v2575
        %v2588 = vshrl.u32 920167782, %v2576
        %v2589 = vor.u32 %v2587, %v2588
        %v2590 = vshll.u32 920167782, %v2575
        %v2591 = vshrl.u32 1326507024, %v2576
        %v2592 = vor.u32 %v2590, %v2591
        %vm2593 = vcmp.lt.s32.totalorder %v2574, 1
        %vm2594 = vcmp.lt.s32.totalorder %v2574, 2
        %vm2595 = vcmp.lt.s32.totalorder %v2574, 3
        %vm2596 = vcmp.lt.s32.totalorder %v2574, 4
        %v2597 = vsel %vm2593, %v2577, %v2580
        %v2598 = vsel %vm2596, %v2586, 2102212464
        %v2599 = vsel %vm2595, %v2583, %v2598
        %v2600 = vsel %vm2594, %v2597, %v2599
        %v2601 = vsel %vm2593, %v2580, %v2583
        %v2602 = vsel %vm2596, %v2589, 920167782
        %v2603 = vsel %vm2595, %v2586, %v2602
        %v2604 = vsel %vm2594, %v2601, %v2603
        %v2605 = vsel %vm2593, %v2583, %v2586
        %v2606 = vsel %vm2596, %v2592, 1326507024
        %v2607 = vsel %vm2595, %v2589, %v2606
        %v2608 = vsel %vm2594, %v2605, %v2607
        %v2609 = vshll.u32 %v2569, 8
        %v2610 = vmul.u32.u64.compose %v2609, %v2608
        %v2611 = vextract.low.u32 %v2610
        %v2612 = vextract.high.u32 %v2610
        %v2613 = vmul.u32.u64.compose %v2609, %v2604
        %v2614 = vextract.low.u32 %v2613
        %v2615 = vextract.high.u32 %v2613
        %v2616 = vmul.u32 %v2609, %v2600
        %v2617 = vadd.s32 %v2612, %v2614
        %vm2618 = vc.u32 %v2612, %v2614
        %v2619 = vadd.s32 %v2615, 1
        %v2620 = vsel %vm2618, %v2619, %v2615
        %v2621 = vadd.s32 %v2616, %v2620
        %v2622 = vadd.s32 %v2621, 536870912
        %v2623 = vshrl.u32 %v2622, 30
        %v2624 = vshll.u32 %v2623, 30
        %v2625 = vsub.s32 %v2621, %v2624
        %vm2626 = vcmp.lt.s32.totalorder %v2625, 0
        %v2627 = vsub.s32 0, %v2625
        %v2628 = vsel %vm2626, %v2627, %v2625
        %v2629 = vclz %v2628
        %v2630 = vsub.s32 %v2629, 2
        %vm2631 = vcmp.gt.s32.totalorder 0, %v2630
        %v2632 = vsel %vm2631, 0, %v2630
        %v2633 = vsub.s32 32, %v2632
        %v2634 = vshll.u32 %v2625, %v2632
        %v2635 = vshrl.u32 %v2617, %v2633
        %v2636 = vor.u32 %v2634, %v2635
        %v2637 = vsub.s32 4294967266, %v2632
        %v2638 = vadd.s32 %v2637, 127
        %v2639 = vshll.u32 %v2638, 23
        %v2640 = vor.u32 4788187, %v2639
        %v2641 = vand.u32 2147483647, %v2640
        %v2643 = vcvt.s32.f32 %v2636
        %v2644 = vmul.f32 %v2643, %v2641
        %v2645 = vxor.u32 %v2644, 2147483648
        %v2646 = vsel %vm2563, %v2645, %v2644
        %v2647 = vsub.s32 4, %v2623
        %v2648 = vsel %vm2563, %v2647, %v2623
        %v2649 = vsel %vm2562, %v984, %v2646
        %v2650 = vsel %vm2562, 0, %v2648
        %v2651 = vcosq.f32.pop %v2649
        %v2652 = vsinq.f32.pop %v2649
        %vm2653 = vweird.f32 %v984
        %v2654 = vadd.s32 %v2650, 3
        %v2655 = vand.u32 %v2654, 3
        %vm2656 = vcmp.lt.s32.totalorder %v2655, 2
        %vm2657 = vcmp.eq.s32.totalorder %v2655, 0
        %v2658 = vxor.u32 %v2652, 2147483648
        %v2659 = vsel %vm2657, %v2651, %v2658
        %vm2660 = vcmp.eq.s32.totalorder %v2655, 2
        %v2661 = vxor.u32 %v2651, 2147483648
        %v2662 = vsel %vm2660, %v2661, %v2652
        %v2663 = vsel %vm2656, %v2659, %v2662
        %v2664 = vsel %vm2653, nan, %v2663
        %v2665 = vand.u32 2147483647, %v985
        %vm2666 = vcmp.le.f32.partialorder %v2665, 0.7853982
        %vm2667 = vcmp.lt.s32.totalorder %v985, 0
        %v2668 = vand.u32 %v985, 2139095040
        %v2669 = vshrl.u32 %v2668, 23
        %v2670 = vsub.s32 %v2669, 127
        %v2671 = vand.u32 2147483647, %v985
        %v2672 = vand.u32 %v2671, 8388607
        %v2673 = vor.u32 %v2672, 8388608
        %v2674 = vsub.s32 0, %v2673
        %v2675 = vadd.s32 %v2670, 1
        %vm2676 = vcmp.gt.s32.totalorder %v2675, 0
        %v2677 = vsel %vm2676, %v2675, 0
        %v2678 = vshrl.u32 %v2677, 5
        %v2679 = vand.u32 %v2677, 31
        %v2680 = vsub.s32 32, %v2679
        %v2681 = vshrl.u32 683565275, %v2680
        %v2682 = vshll.u32 683565275, %v2679
        %v2683 = vshrl.u32 2475754826, %v2680
        %v2684 = vor.u32 %v2682, %v2683
        %v2685 = vshll.u32 2475754826, %v2679
        %v2686 = vshrl.u32 2131351028, %v2680
        %v2687 = vor.u32 %v2685, %v2686
        %v2688 = vshll.u32 2131351028, %v2679
        %v2689 = vshrl.u32 2102212464, %v2680
        %v2690 = vor.u32 %v2688, %v2689
        %v2691 = vshll.u32 2102212464, %v2679
        %v2692 = vshrl.u32 920167782, %v2680
        %v2693 = vor.u32 %v2691, %v2692
        %v2694 = vshll.u32 920167782, %v2679
        %v2695 = vshrl.u32 1326507024, %v2680
        %v2696 = vor.u32 %v2694, %v2695
        %vm2697 = vcmp.lt.s32.totalorder %v2678, 1
        %vm2698 = vcmp.lt.s32.totalorder %v2678, 2
        %vm2699 = vcmp.lt.s32.totalorder %v2678, 3
        %vm2700 = vcmp.lt.s32.totalorder %v2678, 4
        %v2701 = vsel %vm2697, %v2681, %v2684
        %v2702 = vsel %vm2700, %v2690, 2102212464
        %v2703 = vsel %vm2699, %v2687, %v2702
        %v2704 = vsel %vm2698, %v2701, %v2703
        %v2705 = vsel %vm2697, %v2684, %v2687
        %v2706 = vsel %vm2700, %v2693, 920167782
        %v2707 = vsel %vm2699, %v2690, %v2706
        %v2708 = vsel %vm2698, %v2705, %v2707
        %v2709 = vsel %vm2697, %v2687, %v2690
        %v2710 = vsel %vm2700, %v2696, 1326507024
        %v2711 = vsel %vm2699, %v2693, %v2710
        %v2712 = vsel %vm2698, %v2709, %v2711
        %v2713 = vshll.u32 %v2673, 8
        %v2714 = vmul.u32.u64.compose %v2713, %v2712
        %v2715 = vextract.low.u32 %v2714
        %v2716 = vextract.high.u32 %v2714
        %v2717 = vmul.u32.u64.compose %v2713, %v2708
        %v2718 = vextract.low.u32 %v2717
        %v2719 = vextract.high.u32 %v2717
        %v2720 = vmul.u32 %v2713, %v2704
        %v2721 = vadd.s32 %v2716, %v2718
        %vm2722 = vc.u32 %v2716, %v2718
        %v2723 = vadd.s32 %v2719, 1
        %v2724 = vsel %vm2722, %v2723, %v2719
        %v2725 = vadd.s32 %v2720, %v2724
        %v2726 = vadd.s32 %v2725, 536870912
        %v2727 = vshrl.u32 %v2726, 30
        %v2728 = vshll.u32 %v2727, 30
        %v2729 = vsub.s32 %v2725, %v2728
        %vm2730 = vcmp.lt.s32.totalorder %v2729, 0
        %v2731 = vsub.s32 0, %v2729
        %v2732 = vsel %vm2730, %v2731, %v2729
        %v2733 = vclz %v2732
        %v2734 = vsub.s32 %v2733, 2
        %vm2735 = vcmp.gt.s32.totalorder 0, %v2734
        %v2736 = vsel %vm2735, 0, %v2734
        %v2737 = vsub.s32 32, %v2736
        %v2738 = vshll.u32 %v2729, %v2736
        %v2739 = vshrl.u32 %v2721, %v2737
        %v2740 = vor.u32 %v2738, %v2739
        %v2741 = vsub.s32 4294967266, %v2736
        %v2742 = vadd.s32 %v2741, 127
        %v2743 = vshll.u32 %v2742, 23
        %v2744 = vor.u32 4788187, %v2743
        %v2745 = vand.u32 2147483647, %v2744
        %v2747 = vcvt.s32.f32 %v2740
        %v2748 = vmul.f32 %v2747, %v2745
        %v2749 = vxor.u32 %v2748, 2147483648
        %v2750 = vsel %vm2667, %v2749, %v2748
        %v2751 = vsub.s32 4, %v2727
        %v2752 = vsel %vm2667, %v2751, %v2727
        %v2753 = vsel %vm2666, %v985, %v2750
        %v2754 = vsel %vm2666, 0, %v2752
        %v2755 = vcosq.f32.pop %v2753
        %v2756 = vsinq.f32.pop %v2753
        %vm2757 = vweird.f32 %v985
        %v2758 = vadd.s32 %v2754, 3
        %v2759 = vand.u32 %v2758, 3
        %vm2760 = vcmp.lt.s32.totalorder %v2759, 2
        %vm2761 = vcmp.eq.s32.totalorder %v2759, 0
        %v2762 = vxor.u32 %v2756, 2147483648
        %v2763 = vsel %vm2761, %v2755, %v2762
        %vm2764 = vcmp.eq.s32.totalorder %v2759, 2
        %v2765 = vxor.u32 %v2755, 2147483648
        %v2766 = vsel %vm2764, %v2765, %v2756
        %v2767 = vsel %vm2760, %v2763, %v2766
        %v2768 = vsel %vm2757, nan, %v2767
        %v2769 = vand.u32 2147483647, %v986
        %vm2770 = vcmp.le.f32.partialorder %v2769, 0.7853982
        %vm2771 = vcmp.lt.s32.totalorder %v986, 0
        %v2772 = vand.u32 %v986, 2139095040
        %v2773 = vshrl.u32 %v2772, 23
        %v2774 = vsub.s32 %v2773, 127
        %v2775 = vand.u32 2147483647, %v986
        %v2776 = vand.u32 %v2775, 8388607
        %v2777 = vor.u32 %v2776, 8388608
        %v2778 = vsub.s32 0, %v2777
        %v2779 = vadd.s32 %v2774, 1
        %vm2780 = vcmp.gt.s32.totalorder %v2779, 0
        %v2781 = vsel %vm2780, %v2779, 0
        %v2782 = vshrl.u32 %v2781, 5
        %v2783 = vand.u32 %v2781, 31
        %v2784 = vsub.s32 32, %v2783
        %v2785 = vshrl.u32 683565275, %v2784
        %v2786 = vshll.u32 683565275, %v2783
        %v2787 = vshrl.u32 2475754826, %v2784
        %v2788 = vor.u32 %v2786, %v2787
        %v2789 = vshll.u32 2475754826, %v2783
        %v2790 = vshrl.u32 2131351028, %v2784
        %v2791 = vor.u32 %v2789, %v2790
        %v2792 = vshll.u32 2131351028, %v2783
        %v2793 = vshrl.u32 2102212464, %v2784
        %v2794 = vor.u32 %v2792, %v2793
        %v2795 = vshll.u32 2102212464, %v2783
        %v2796 = vshrl.u32 920167782, %v2784
        %v2797 = vor.u32 %v2795, %v2796
        %v2798 = vshll.u32 920167782, %v2783
        %v2799 = vshrl.u32 1326507024, %v2784
        %v2800 = vor.u32 %v2798, %v2799
        %vm2801 = vcmp.lt.s32.totalorder %v2782, 1
        %vm2802 = vcmp.lt.s32.totalorder %v2782, 2
        %vm2803 = vcmp.lt.s32.totalorder %v2782, 3
        %vm2804 = vcmp.lt.s32.totalorder %v2782, 4
        %v2805 = vsel %vm2801, %v2785, %v2788
        %v2806 = vsel %vm2804, %v2794, 2102212464
        %v2807 = vsel %vm2803, %v2791, %v2806
        %v2808 = vsel %vm2802, %v2805, %v2807
        %v2809 = vsel %vm2801, %v2788, %v2791
        %v2810 = vsel %vm2804, %v2797, 920167782
        %v2811 = vsel %vm2803, %v2794, %v2810
        %v2812 = vsel %vm2802, %v2809, %v2811
        %v2813 = vsel %vm2801, %v2791, %v2794
        %v2814 = vsel %vm2804, %v2800, 1326507024
        %v2815 = vsel %vm2803, %v2797, %v2814
        %v2816 = vsel %vm2802, %v2813, %v2815
        %v2817 = vshll.u32 %v2777, 8
        %v2818 = vmul.u32.u64.compose %v2817, %v2816
        %v2819 = vextract.low.u32 %v2818
        %v2820 = vextract.high.u32 %v2818
        %v2821 = vmul.u32.u64.compose %v2817, %v2812
        %v2822 = vextract.low.u32 %v2821
        %v2823 = vextract.high.u32 %v2821
        %v2824 = vmul.u32 %v2817, %v2808
        %v2825 = vadd.s32 %v2820, %v2822
        %vm2826 = vc.u32 %v2820, %v2822
        %v2827 = vadd.s32 %v2823, 1
        %v2828 = vsel %vm2826, %v2827, %v2823
        %v2829 = vadd.s32 %v2824, %v2828
        %v2830 = vadd.s32 %v2829, 536870912
        %v2831 = vshrl.u32 %v2830, 30
        %v2832 = vshll.u32 %v2831, 30
        %v2833 = vsub.s32 %v2829, %v2832
        %vm2834 = vcmp.lt.s32.totalorder %v2833, 0
        %v2835 = vsub.s32 0, %v2833
        %v2836 = vsel %vm2834, %v2835, %v2833
        %v2837 = vclz %v2836
        %v2838 = vsub.s32 %v2837, 2
        %vm2839 = vcmp.gt.s32.totalorder 0, %v2838
        %v2840 = vsel %vm2839, 0, %v2838
        %v2841 = vsub.s32 32, %v2840
        %v2842 = vshll.u32 %v2833, %v2840
        %v2843 = vshrl.u32 %v2825, %v2841
        %v2844 = vor.u32 %v2842, %v2843
        %v2845 = vsub.s32 4294967266, %v2840
        %v2846 = vadd.s32 %v2845, 127
        %v2847 = vshll.u32 %v2846, 23
        %v2848 = vor.u32 4788187, %v2847
        %v2849 = vand.u32 2147483647, %v2848
        %v2851 = vcvt.s32.f32 %v2844
        %v2852 = vmul.f32 %v2851, %v2849
        %v2853 = vxor.u32 %v2852, 2147483648
        %v2854 = vsel %vm2771, %v2853, %v2852
        %v2855 = vsub.s32 4, %v2831
        %v2856 = vsel %vm2771, %v2855, %v2831
        %v2857 = vsel %vm2770, %v986, %v2854
        %v2858 = vsel %vm2770, 0, %v2856
        %v2859 = vcosq.f32.pop %v2857
        %v2860 = vsinq.f32.pop %v2857
        %vm2861 = vweird.f32 %v986
        %v2862 = vadd.s32 %v2858, 3
        %v2863 = vand.u32 %v2862, 3
        %vm2864 = vcmp.lt.s32.totalorder %v2863, 2
        %vm2865 = vcmp.eq.s32.totalorder %v2863, 0
        %v2866 = vxor.u32 %v2860, 2147483648
        %v2867 = vsel %vm2865, %v2859, %v2866
        %vm2868 = vcmp.eq.s32.totalorder %v2863, 2
        %v2869 = vxor.u32 %v2859, 2147483648
        %v2870 = vsel %vm2868, %v2869, %v2860
        %v2871 = vsel %vm2864, %v2867, %v2870
        %v2872 = vsel %vm2861, nan, %v2871
        %v2873 = vand.u32 2147483647, %v987
        %vm2874 = vcmp.le.f32.partialorder %v2873, 0.7853982
        %vm2875 = vcmp.lt.s32.totalorder %v987, 0
        %v2876 = vand.u32 %v987, 2139095040
        %v2877 = vshrl.u32 %v2876, 23
        %v2878 = vsub.s32 %v2877, 127
        %v2879 = vand.u32 2147483647, %v987
        %v2880 = vand.u32 %v2879, 8388607
        %v2881 = vor.u32 %v2880, 8388608
        %v2882 = vsub.s32 0, %v2881
        %v2883 = vadd.s32 %v2878, 1
        %vm2884 = vcmp.gt.s32.totalorder %v2883, 0
        %v2885 = vsel %vm2884, %v2883, 0
        %v2886 = vshrl.u32 %v2885, 5
        %v2887 = vand.u32 %v2885, 31
        %v2888 = vsub.s32 32, %v2887
        %v2889 = vshrl.u32 683565275, %v2888
        %v2890 = vshll.u32 683565275, %v2887
        %v2891 = vshrl.u32 2475754826, %v2888
        %v2892 = vor.u32 %v2890, %v2891
        %v2893 = vshll.u32 2475754826, %v2887
        %v2894 = vshrl.u32 2131351028, %v2888
        %v2895 = vor.u32 %v2893, %v2894
        %v2896 = vshll.u32 2131351028, %v2887
        %v2897 = vshrl.u32 2102212464, %v2888
        %v2898 = vor.u32 %v2896, %v2897
        %v2899 = vshll.u32 2102212464, %v2887
        %v2900 = vshrl.u32 920167782, %v2888
        %v2901 = vor.u32 %v2899, %v2900
        %v2902 = vshll.u32 920167782, %v2887
        %v2903 = vshrl.u32 1326507024, %v2888
        %v2904 = vor.u32 %v2902, %v2903
        %vm2905 = vcmp.lt.s32.totalorder %v2886, 1
        %vm2906 = vcmp.lt.s32.totalorder %v2886, 2
        %vm2907 = vcmp.lt.s32.totalorder %v2886, 3
        %vm2908 = vcmp.lt.s32.totalorder %v2886, 4
        %v2909 = vsel %vm2905, %v2889, %v2892
        %v2910 = vsel %vm2908, %v2898, 2102212464
        %v2911 = vsel %vm2907, %v2895, %v2910
        %v2912 = vsel %vm2906, %v2909, %v2911
        %v2913 = vsel %vm2905, %v2892, %v2895
        %v2914 = vsel %vm2908, %v2901, 920167782
        %v2915 = vsel %vm2907, %v2898, %v2914
        %v2916 = vsel %vm2906, %v2913, %v2915
        %v2917 = vsel %vm2905, %v2895, %v2898
        %v2918 = vsel %vm2908, %v2904, 1326507024
        %v2919 = vsel %vm2907, %v2901, %v2918
        %v2920 = vsel %vm2906, %v2917, %v2919
        %v2921 = vshll.u32 %v2881, 8
        %v2922 = vmul.u32.u64.compose %v2921, %v2920
        %v2923 = vextract.low.u32 %v2922
        %v2924 = vextract.high.u32 %v2922
        %v2925 = vmul.u32.u64.compose %v2921, %v2916
        %v2926 = vextract.low.u32 %v2925
        %v2927 = vextract.high.u32 %v2925
        %v2928 = vmul.u32 %v2921, %v2912
        %v2929 = vadd.s32 %v2924, %v2926
        %vm2930 = vc.u32 %v2924, %v2926
        %v2931 = vadd.s32 %v2927, 1
        %v2932 = vsel %vm2930, %v2931, %v2927
        %v2933 = vadd.s32 %v2928, %v2932
        %v2934 = vadd.s32 %v2933, 536870912
        %v2935 = vshrl.u32 %v2934, 30
        %v2936 = vshll.u32 %v2935, 30
        %v2937 = vsub.s32 %v2933, %v2936
        %vm2938 = vcmp.lt.s32.totalorder %v2937, 0
        %v2939 = vsub.s32 0, %v2937
        %v2940 = vsel %vm2938, %v2939, %v2937
        %v2941 = vclz %v2940
        %v2942 = vsub.s32 %v2941, 2
        %vm2943 = vcmp.gt.s32.totalorder 0, %v2942
        %v2944 = vsel %vm2943, 0, %v2942
        %v2945 = vsub.s32 32, %v2944
        %v2946 = vshll.u32 %v2937, %v2944
        %v2947 = vshrl.u32 %v2929, %v2945
        %v2948 = vor.u32 %v2946, %v2947
        %v2949 = vsub.s32 4294967266, %v2944
        %v2950 = vadd.s32 %v2949, 127
        %v2951 = vshll.u32 %v2950, 23
        %v2952 = vor.u32 4788187, %v2951
        %v2953 = vand.u32 2147483647, %v2952
        %v2955 = vcvt.s32.f32 %v2948
        %v2956 = vmul.f32 %v2955, %v2953
        %v2957 = vxor.u32 %v2956, 2147483648
        %v2958 = vsel %vm2875, %v2957, %v2956
        %v2959 = vsub.s32 4, %v2935
        %v2960 = vsel %vm2875, %v2959, %v2935
        %v2961 = vsel %vm2874, %v987, %v2958
        %v2962 = vsel %vm2874, 0, %v2960
        %v2963 = vcosq.f32.pop %v2961
        %v2964 = vsinq.f32.pop %v2961
        %vm2965 = vweird.f32 %v987
        %v2966 = vadd.s32 %v2962, 3
        %v2967 = vand.u32 %v2966, 3
        %vm2968 = vcmp.lt.s32.totalorder %v2967, 2
        %vm2969 = vcmp.eq.s32.totalorder %v2967, 0
        %v2970 = vxor.u32 %v2964, 2147483648
        %v2971 = vsel %vm2969, %v2963, %v2970
        %vm2972 = vcmp.eq.s32.totalorder %v2967, 2
        %v2973 = vxor.u32 %v2963, 2147483648
        %v2974 = vsel %vm2972, %v2973, %v2964
        %v2975 = vsel %vm2968, %v2971, %v2974
        %v2976 = vsel %vm2965, nan, %v2975
        %v2977 = vand.u32 2147483647, %v988
        %vm2978 = vcmp.le.f32.partialorder %v2977, 0.7853982
        %vm2979 = vcmp.lt.s32.totalorder %v988, 0
        %v2980 = vand.u32 %v988, 2139095040
        %v2981 = vshrl.u32 %v2980, 23
        %v2982 = vsub.s32 %v2981, 127
        %v2983 = vand.u32 2147483647, %v988
        %v2984 = vand.u32 %v2983, 8388607
        %v2985 = vor.u32 %v2984, 8388608
        %v2986 = vsub.s32 0, %v2985
        %v2987 = vadd.s32 %v2982, 1
        %vm2988 = vcmp.gt.s32.totalorder %v2987, 0
        %v2989 = vsel %vm2988, %v2987, 0
        %v2990 = vshrl.u32 %v2989, 5
        %v2991 = vand.u32 %v2989, 31
        %v2992 = vsub.s32 32, %v2991
        %v2993 = vshrl.u32 683565275, %v2992
        %v2994 = vshll.u32 683565275, %v2991
        %v2995 = vshrl.u32 2475754826, %v2992
        %v2996 = vor.u32 %v2994, %v2995
        %v2997 = vshll.u32 2475754826, %v2991
        %v2998 = vshrl.u32 2131351028, %v2992
        %v2999 = vor.u32 %v2997, %v2998
        %v3000 = vshll.u32 2131351028, %v2991
        %v3001 = vshrl.u32 2102212464, %v2992
        %v3002 = vor.u32 %v3000, %v3001
        %v3003 = vshll.u32 2102212464, %v2991
        %v3004 = vshrl.u32 920167782, %v2992
        %v3005 = vor.u32 %v3003, %v3004
        %v3006 = vshll.u32 920167782, %v2991
        %v3007 = vshrl.u32 1326507024, %v2992
        %v3008 = vor.u32 %v3006, %v3007
        %vm3009 = vcmp.lt.s32.totalorder %v2990, 1
        %vm3010 = vcmp.lt.s32.totalorder %v2990, 2
        %vm3011 = vcmp.lt.s32.totalorder %v2990, 3
        %vm3012 = vcmp.lt.s32.totalorder %v2990, 4
        %v3013 = vsel %vm3009, %v2993, %v2996
        %v3014 = vsel %vm3012, %v3002, 2102212464
        %v3015 = vsel %vm3011, %v2999, %v3014
        %v3016 = vsel %vm3010, %v3013, %v3015
        %v3017 = vsel %vm3009, %v2996, %v2999
        %v3018 = vsel %vm3012, %v3005, 920167782
        %v3019 = vsel %vm3011, %v3002, %v3018
        %v3020 = vsel %vm3010, %v3017, %v3019
        %v3021 = vsel %vm3009, %v2999, %v3002
        %v3022 = vsel %vm3012, %v3008, 1326507024
        %v3023 = vsel %vm3011, %v3005, %v3022
        %v3024 = vsel %vm3010, %v3021, %v3023
        %v3025 = vshll.u32 %v2985, 8
        %v3026 = vmul.u32.u64.compose %v3025, %v3024
        %v3027 = vextract.low.u32 %v3026
        %v3028 = vextract.high.u32 %v3026
        %v3029 = vmul.u32.u64.compose %v3025, %v3020
        %v3030 = vextract.low.u32 %v3029
        %v3031 = vextract.high.u32 %v3029
        %v3032 = vmul.u32 %v3025, %v3016
        %v3033 = vadd.s32 %v3028, %v3030
        %vm3034 = vc.u32 %v3028, %v3030
        %v3035 = vadd.s32 %v3031, 1
        %v3036 = vsel %vm3034, %v3035, %v3031
        %v3037 = vadd.s32 %v3032, %v3036
        %v3038 = vadd.s32 %v3037, 536870912
        %v3039 = vshrl.u32 %v3038, 30
        %v3040 = vshll.u32 %v3039, 30
        %v3041 = vsub.s32 %v3037, %v3040
        %vm3042 = vcmp.lt.s32.totalorder %v3041, 0
        %v3043 = vsub.s32 0, %v3041
        %v3044 = vsel %vm3042, %v3043, %v3041
        %v3045 = vclz %v3044
        %v3046 = vsub.s32 %v3045, 2
        %vm3047 = vcmp.gt.s32.totalorder 0, %v3046
        %v3048 = vsel %vm3047, 0, %v3046
        %v3049 = vsub.s32 32, %v3048
        %v3050 = vshll.u32 %v3041, %v3048
        %v3051 = vshrl.u32 %v3033, %v3049
        %v3052 = vor.u32 %v3050, %v3051
        %v3053 = vsub.s32 4294967266, %v3048
        %v3054 = vadd.s32 %v3053, 127
        %v3055 = vshll.u32 %v3054, 23
        %v3056 = vor.u32 4788187, %v3055
        %v3057 = vand.u32 2147483647, %v3056
        %v3059 = vcvt.s32.f32 %v3052
        %v3060 = vmul.f32 %v3059, %v3057
        %v3061 = vxor.u32 %v3060, 2147483648
        %v3062 = vsel %vm2979, %v3061, %v3060
        %v3063 = vsub.s32 4, %v3039
        %v3064 = vsel %vm2979, %v3063, %v3039
        %v3065 = vsel %vm2978, %v988, %v3062
        %v3066 = vsel %vm2978, 0, %v3064
        %v3067 = vcosq.f32.pop %v3065
        %v3068 = vsinq.f32.pop %v3065
        %vm3069 = vweird.f32 %v988
        %v3070 = vadd.s32 %v3066, 3
        %v3071 = vand.u32 %v3070, 3
        %vm3072 = vcmp.lt.s32.totalorder %v3071, 2
        %vm3073 = vcmp.eq.s32.totalorder %v3071, 0
        %v3074 = vxor.u32 %v3068, 2147483648
        %v3075 = vsel %vm3073, %v3067, %v3074
        %vm3076 = vcmp.eq.s32.totalorder %v3071, 2
        %v3077 = vxor.u32 %v3067, 2147483648
        %v3078 = vsel %vm3076, %v3077, %v3068
        %v3079 = vsel %vm3072, %v3075, %v3078
        %v3080 = vsel %vm3069, nan, %v3079
        %v3081 = vand.u32 2147483647, %v989
        %vm3082 = vcmp.le.f32.partialorder %v3081, 0.7853982
        %vm3083 = vcmp.lt.s32.totalorder %v989, 0
        %v3084 = vand.u32 %v989, 2139095040
        %v3085 = vshrl.u32 %v3084, 23
        %v3086 = vsub.s32 %v3085, 127
        %v3087 = vand.u32 2147483647, %v989
        %v3088 = vand.u32 %v3087, 8388607
        %v3089 = vor.u32 %v3088, 8388608
        %v3090 = vsub.s32 0, %v3089
        %v3091 = vadd.s32 %v3086, 1
        %vm3092 = vcmp.gt.s32.totalorder %v3091, 0
        %v3093 = vsel %vm3092, %v3091, 0
        %v3094 = vshrl.u32 %v3093, 5
        %v3095 = vand.u32 %v3093, 31
        %v3096 = vsub.s32 32, %v3095
        %v3097 = vshrl.u32 683565275, %v3096
        %v3098 = vshll.u32 683565275, %v3095
        %v3099 = vshrl.u32 2475754826, %v3096
        %v3100 = vor.u32 %v3098, %v3099
        %v3101 = vshll.u32 2475754826, %v3095
        %v3102 = vshrl.u32 2131351028, %v3096
        %v3103 = vor.u32 %v3101, %v3102
        %v3104 = vshll.u32 2131351028, %v3095
        %v3105 = vshrl.u32 2102212464, %v3096
        %v3106 = vor.u32 %v3104, %v3105
        %v3107 = vshll.u32 2102212464, %v3095
        %v3108 = vshrl.u32 920167782, %v3096
        %v3109 = vor.u32 %v3107, %v3108
        %v3110 = vshll.u32 920167782, %v3095
        %v3111 = vshrl.u32 1326507024, %v3096
        %v3112 = vor.u32 %v3110, %v3111
        %vm3113 = vcmp.lt.s32.totalorder %v3094, 1
        %vm3114 = vcmp.lt.s32.totalorder %v3094, 2
        %vm3115 = vcmp.lt.s32.totalorder %v3094, 3
        %vm3116 = vcmp.lt.s32.totalorder %v3094, 4
        %v3117 = vsel %vm3113, %v3097, %v3100
        %v3118 = vsel %vm3116, %v3106, 2102212464
        %v3119 = vsel %vm3115, %v3103, %v3118
        %v3120 = vsel %vm3114, %v3117, %v3119
        %v3121 = vsel %vm3113, %v3100, %v3103
        %v3122 = vsel %vm3116, %v3109, 920167782
        %v3123 = vsel %vm3115, %v3106, %v3122
        %v3124 = vsel %vm3114, %v3121, %v3123
        %v3125 = vsel %vm3113, %v3103, %v3106
        %v3126 = vsel %vm3116, %v3112, 1326507024
        %v3127 = vsel %vm3115, %v3109, %v3126
        %v3128 = vsel %vm3114, %v3125, %v3127
        %v3129 = vshll.u32 %v3089, 8
        %v3130 = vmul.u32.u64.compose %v3129, %v3128
        %v3131 = vextract.low.u32 %v3130
        %v3132 = vextract.high.u32 %v3130
        %v3133 = vmul.u32.u64.compose %v3129, %v3124
        %v3134 = vextract.low.u32 %v3133
        %v3135 = vextract.high.u32 %v3133
        %v3136 = vmul.u32 %v3129, %v3120
        %v3137 = vadd.s32 %v3132, %v3134
        %vm3138 = vc.u32 %v3132, %v3134
        %v3139 = vadd.s32 %v3135, 1
        %v3140 = vsel %vm3138, %v3139, %v3135
        %v3141 = vadd.s32 %v3136, %v3140
        %v3142 = vadd.s32 %v3141, 536870912
        %v3143 = vshrl.u32 %v3142, 30
        %v3144 = vshll.u32 %v3143, 30
        %v3145 = vsub.s32 %v3141, %v3144
        %vm3146 = vcmp.lt.s32.totalorder %v3145, 0
        %v3147 = vsub.s32 0, %v3145
        %v3148 = vsel %vm3146, %v3147, %v3145
        %v3149 = vclz %v3148
        %v3150 = vsub.s32 %v3149, 2
        %vm3151 = vcmp.gt.s32.totalorder 0, %v3150
        %v3152 = vsel %vm3151, 0, %v3150
        %v3153 = vsub.s32 32, %v3152
        %v3154 = vshll.u32 %v3145, %v3152
        %v3155 = vshrl.u32 %v3137, %v3153
        %v3156 = vor.u32 %v3154, %v3155
        %v3157 = vsub.s32 4294967266, %v3152
        %v3158 = vadd.s32 %v3157, 127
        %v3159 = vshll.u32 %v3158, 23
        %v3160 = vor.u32 4788187, %v3159
        %v3161 = vand.u32 2147483647, %v3160
        %v3163 = vcvt.s32.f32 %v3156
        %v3164 = vmul.f32 %v3163, %v3161
        %v3165 = vxor.u32 %v3164, 2147483648
        %v3166 = vsel %vm3083, %v3165, %v3164
        %v3167 = vsub.s32 4, %v3143
        %v3168 = vsel %vm3083, %v3167, %v3143
        %v3169 = vsel %vm3082, %v989, %v3166
        %v3170 = vsel %vm3082, 0, %v3168
        %v3171 = vcosq.f32.pop %v3169
        %v3172 = vsinq.f32.pop %v3169
        %vm3173 = vweird.f32 %v989
        %v3174 = vadd.s32 %v3170, 3
        %v3175 = vand.u32 %v3174, 3
        %vm3176 = vcmp.lt.s32.totalorder %v3175, 2
        %vm3177 = vcmp.eq.s32.totalorder %v3175, 0
        %v3178 = vxor.u32 %v3172, 2147483648
        %v3179 = vsel %vm3177, %v3171, %v3178
        %vm3180 = vcmp.eq.s32.totalorder %v3175, 2
        %v3181 = vxor.u32 %v3171, 2147483648
        %v3182 = vsel %vm3180, %v3181, %v3172
        %v3183 = vsel %vm3176, %v3179, %v3182
        %v3184 = vsel %vm3173, nan, %v3183
        %v3185 = vand.u32 2147483647, %v990
        %vm3186 = vcmp.le.f32.partialorder %v3185, 0.7853982
        %vm3187 = vcmp.lt.s32.totalorder %v990, 0
        %v3188 = vand.u32 %v990, 2139095040
        %v3189 = vshrl.u32 %v3188, 23
        %v3190 = vsub.s32 %v3189, 127
        %v3191 = vand.u32 2147483647, %v990
        %v3192 = vand.u32 %v3191, 8388607
        %v3193 = vor.u32 %v3192, 8388608
        %v3194 = vsub.s32 0, %v3193
        %v3195 = vadd.s32 %v3190, 1
        %vm3196 = vcmp.gt.s32.totalorder %v3195, 0
        %v3197 = vsel %vm3196, %v3195, 0
        %v3198 = vshrl.u32 %v3197, 5
        %v3199 = vand.u32 %v3197, 31
        %v3200 = vsub.s32 32, %v3199
        %v3201 = vshrl.u32 683565275, %v3200
        %v3202 = vshll.u32 683565275, %v3199
        %v3203 = vshrl.u32 2475754826, %v3200
        %v3204 = vor.u32 %v3202, %v3203
        %v3205 = vshll.u32 2475754826, %v3199
        %v3206 = vshrl.u32 2131351028, %v3200
        %v3207 = vor.u32 %v3205, %v3206
        %v3208 = vshll.u32 2131351028, %v3199
        %v3209 = vshrl.u32 2102212464, %v3200
        %v3210 = vor.u32 %v3208, %v3209
        %v3211 = vshll.u32 2102212464, %v3199
        %v3212 = vshrl.u32 920167782, %v3200
        %v3213 = vor.u32 %v3211, %v3212
        %v3214 = vshll.u32 920167782, %v3199
        %v3215 = vshrl.u32 1326507024, %v3200
        %v3216 = vor.u32 %v3214, %v3215
        %vm3217 = vcmp.lt.s32.totalorder %v3198, 1
        %vm3218 = vcmp.lt.s32.totalorder %v3198, 2
        %vm3219 = vcmp.lt.s32.totalorder %v3198, 3
        %vm3220 = vcmp.lt.s32.totalorder %v3198, 4
        %v3221 = vsel %vm3217, %v3201, %v3204
        %v3222 = vsel %vm3220, %v3210, 2102212464
        %v3223 = vsel %vm3219, %v3207, %v3222
        %v3224 = vsel %vm3218, %v3221, %v3223
        %v3225 = vsel %vm3217, %v3204, %v3207
        %v3226 = vsel %vm3220, %v3213, 920167782
        %v3227 = vsel %vm3219, %v3210, %v3226
        %v3228 = vsel %vm3218, %v3225, %v3227
        %v3229 = vsel %vm3217, %v3207, %v3210
        %v3230 = vsel %vm3220, %v3216, 1326507024
        %v3231 = vsel %vm3219, %v3213, %v3230
        %v3232 = vsel %vm3218, %v3229, %v3231
        %v3233 = vshll.u32 %v3193, 8
        %v3234 = vmul.u32.u64.compose %v3233, %v3232
        %v3235 = vextract.low.u32 %v3234
        %v3236 = vextract.high.u32 %v3234
        %v3237 = vmul.u32.u64.compose %v3233, %v3228
        %v3238 = vextract.low.u32 %v3237
        %v3239 = vextract.high.u32 %v3237
        %v3240 = vmul.u32 %v3233, %v3224
        %v3241 = vadd.s32 %v3236, %v3238
        %vm3242 = vc.u32 %v3236, %v3238
        %v3243 = vadd.s32 %v3239, 1
        %v3244 = vsel %vm3242, %v3243, %v3239
        %v3245 = vadd.s32 %v3240, %v3244
        %v3246 = vadd.s32 %v3245, 536870912
        %v3247 = vshrl.u32 %v3246, 30
        %v3248 = vshll.u32 %v3247, 30
        %v3249 = vsub.s32 %v3245, %v3248
        %vm3250 = vcmp.lt.s32.totalorder %v3249, 0
        %v3251 = vsub.s32 0, %v3249
        %v3252 = vsel %vm3250, %v3251, %v3249
        %v3253 = vclz %v3252
        %v3254 = vsub.s32 %v3253, 2
        %vm3255 = vcmp.gt.s32.totalorder 0, %v3254
        %v3256 = vsel %vm3255, 0, %v3254
        %v3257 = vsub.s32 32, %v3256
        %v3258 = vshll.u32 %v3249, %v3256
        %v3259 = vshrl.u32 %v3241, %v3257
        %v3260 = vor.u32 %v3258, %v3259
        %v3261 = vsub.s32 4294967266, %v3256
        %v3262 = vadd.s32 %v3261, 127
        %v3263 = vshll.u32 %v3262, 23
        %v3264 = vor.u32 4788187, %v3263
        %v3265 = vand.u32 2147483647, %v3264
        %v3267 = vcvt.s32.f32 %v3260
        %v3268 = vmul.f32 %v3267, %v3265
        %v3269 = vxor.u32 %v3268, 2147483648
        %v3270 = vsel %vm3187, %v3269, %v3268
        %v3271 = vsub.s32 4, %v3247
        %v3272 = vsel %vm3187, %v3271, %v3247
        %v3273 = vsel %vm3186, %v990, %v3270
        %v3274 = vsel %vm3186, 0, %v3272
        %v3275 = vcosq.f32.pop %v3273
        %v3276 = vsinq.f32.pop %v3273
        %vm3277 = vweird.f32 %v990
        %v3278 = vadd.s32 %v3274, 3
        %v3279 = vand.u32 %v3278, 3
        %vm3280 = vcmp.lt.s32.totalorder %v3279, 2
        %vm3281 = vcmp.eq.s32.totalorder %v3279, 0
        %v3282 = vxor.u32 %v3276, 2147483648
        %v3283 = vsel %vm3281, %v3275, %v3282
        %vm3284 = vcmp.eq.s32.totalorder %v3279, 2
        %v3285 = vxor.u32 %v3275, 2147483648
        %v3286 = vsel %vm3284, %v3285, %v3276
        %v3287 = vsel %vm3280, %v3283, %v3286
        %v3288 = vsel %vm3277, nan, %v3287
        %v3289 = vand.u32 2147483647, %v991
        %vm3290 = vcmp.le.f32.partialorder %v3289, 0.7853982
        %vm3291 = vcmp.lt.s32.totalorder %v991, 0
        %v3292 = vand.u32 %v991, 2139095040
        %v3293 = vshrl.u32 %v3292, 23
        %v3294 = vsub.s32 %v3293, 127
        %v3295 = vand.u32 2147483647, %v991
        %v3296 = vand.u32 %v3295, 8388607
        %v3297 = vor.u32 %v3296, 8388608
        %v3298 = vsub.s32 0, %v3297
        %v3299 = vadd.s32 %v3294, 1
        %vm3300 = vcmp.gt.s32.totalorder %v3299, 0
        %v3301 = vsel %vm3300, %v3299, 0
        %v3302 = vshrl.u32 %v3301, 5
        %v3303 = vand.u32 %v3301, 31
        %v3304 = vsub.s32 32, %v3303
        %v3305 = vshrl.u32 683565275, %v3304
        %v3306 = vshll.u32 683565275, %v3303
        %v3307 = vshrl.u32 2475754826, %v3304
        %v3308 = vor.u32 %v3306, %v3307
        %v3309 = vshll.u32 2475754826, %v3303
        %v3310 = vshrl.u32 2131351028, %v3304
        %v3311 = vor.u32 %v3309, %v3310
        %v3312 = vshll.u32 2131351028, %v3303
        %v3313 = vshrl.u32 2102212464, %v3304
        %v3314 = vor.u32 %v3312, %v3313
        %v3315 = vshll.u32 2102212464, %v3303
        %v3316 = vshrl.u32 920167782, %v3304
        %v3317 = vor.u32 %v3315, %v3316
        %v3318 = vshll.u32 920167782, %v3303
        %v3319 = vshrl.u32 1326507024, %v3304
        %v3320 = vor.u32 %v3318, %v3319
        %vm3321 = vcmp.lt.s32.totalorder %v3302, 1
        %vm3322 = vcmp.lt.s32.totalorder %v3302, 2
        %vm3323 = vcmp.lt.s32.totalorder %v3302, 3
        %vm3324 = vcmp.lt.s32.totalorder %v3302, 4
        %v3325 = vsel %vm3321, %v3305, %v3308
        %v3326 = vsel %vm3324, %v3314, 2102212464
        %v3327 = vsel %vm3323, %v3311, %v3326
        %v3328 = vsel %vm3322, %v3325, %v3327
        %v3329 = vsel %vm3321, %v3308, %v3311
        %v3330 = vsel %vm3324, %v3317, 920167782
        %v3331 = vsel %vm3323, %v3314, %v3330
        %v3332 = vsel %vm3322, %v3329, %v3331
        %v3333 = vsel %vm3321, %v3311, %v3314
        %v3334 = vsel %vm3324, %v3320, 1326507024
        %v3335 = vsel %vm3323, %v3317, %v3334
        %v3336 = vsel %vm3322, %v3333, %v3335
        %v3337 = vshll.u32 %v3297, 8
        %v3338 = vmul.u32.u64.compose %v3337, %v3336
        %v3339 = vextract.low.u32 %v3338
        %v3340 = vextract.high.u32 %v3338
        %v3341 = vmul.u32.u64.compose %v3337, %v3332
        %v3342 = vextract.low.u32 %v3341
        %v3343 = vextract.high.u32 %v3341
        %v3344 = vmul.u32 %v3337, %v3328
        %v3345 = vadd.s32 %v3340, %v3342
        %vm3346 = vc.u32 %v3340, %v3342
        %v3347 = vadd.s32 %v3343, 1
        %v3348 = vsel %vm3346, %v3347, %v3343
        %v3349 = vadd.s32 %v3344, %v3348
        %v3350 = vadd.s32 %v3349, 536870912
        %v3351 = vshrl.u32 %v3350, 30
        %v3352 = vshll.u32 %v3351, 30
        %v3353 = vsub.s32 %v3349, %v3352
        %vm3354 = vcmp.lt.s32.totalorder %v3353, 0
        %v3355 = vsub.s32 0, %v3353
        %v3356 = vsel %vm3354, %v3355, %v3353
        %v3357 = vclz %v3356
        %v3358 = vsub.s32 %v3357, 2
        %vm3359 = vcmp.gt.s32.totalorder 0, %v3358
        %v3360 = vsel %vm3359, 0, %v3358
        %v3361 = vsub.s32 32, %v3360
        %v3362 = vshll.u32 %v3353, %v3360
        %v3363 = vshrl.u32 %v3345, %v3361
        %v3364 = vor.u32 %v3362, %v3363
        %v3365 = vsub.s32 4294967266, %v3360
        %v3366 = vadd.s32 %v3365, 127
        %v3367 = vshll.u32 %v3366, 23
        %v3368 = vor.u32 4788187, %v3367
        %v3369 = vand.u32 2147483647, %v3368
        %v3371 = vcvt.s32.f32 %v3364
        %v3372 = vmul.f32 %v3371, %v3369
        %v3373 = vxor.u32 %v3372, 2147483648
        %v3374 = vsel %vm3291, %v3373, %v3372
        %v3375 = vsub.s32 4, %v3351
        %v3376 = vsel %vm3291, %v3375, %v3351
        %v3377 = vsel %vm3290, %v991, %v3374
        %v3378 = vsel %vm3290, 0, %v3376
        %v3379 = vcosq.f32.pop %v3377
        %v3380 = vsinq.f32.pop %v3377
        %vm3381 = vweird.f32 %v991
        %v3382 = vadd.s32 %v3378, 3
        %v3383 = vand.u32 %v3382, 3
        %vm3384 = vcmp.lt.s32.totalorder %v3383, 2
        %vm3385 = vcmp.eq.s32.totalorder %v3383, 0
        %v3386 = vxor.u32 %v3380, 2147483648
        %v3387 = vsel %vm3385, %v3379, %v3386
        %vm3388 = vcmp.eq.s32.totalorder %v3383, 2
        %v3389 = vxor.u32 %v3379, 2147483648
        %v3390 = vsel %vm3388, %v3389, %v3380
        %v3391 = vsel %vm3384, %v3387, %v3390
        %v3392 = vsel %vm3381, nan, %v3391
        %v3393 = vand.u32 2147483647, %v992
        %vm3394 = vcmp.le.f32.partialorder %v3393, 0.7853982
        %vm3395 = vcmp.lt.s32.totalorder %v992, 0
        %v3396 = vand.u32 %v992, 2139095040
        %v3397 = vshrl.u32 %v3396, 23
        %v3398 = vsub.s32 %v3397, 127
        %v3399 = vand.u32 2147483647, %v992
        %v3400 = vand.u32 %v3399, 8388607
        %v3401 = vor.u32 %v3400, 8388608
        %v3402 = vsub.s32 0, %v3401
        %v3403 = vadd.s32 %v3398, 1
        %vm3404 = vcmp.gt.s32.totalorder %v3403, 0
        %v3405 = vsel %vm3404, %v3403, 0
        %v3406 = vshrl.u32 %v3405, 5
        %v3407 = vand.u32 %v3405, 31
        %v3408 = vsub.s32 32, %v3407
        %v3409 = vshrl.u32 683565275, %v3408
        %v3410 = vshll.u32 683565275, %v3407
        %v3411 = vshrl.u32 2475754826, %v3408
        %v3412 = vor.u32 %v3410, %v3411
        %v3413 = vshll.u32 2475754826, %v3407
        %v3414 = vshrl.u32 2131351028, %v3408
        %v3415 = vor.u32 %v3413, %v3414
        %v3416 = vshll.u32 2131351028, %v3407
        %v3417 = vshrl.u32 2102212464, %v3408
        %v3418 = vor.u32 %v3416, %v3417
        %v3419 = vshll.u32 2102212464, %v3407
        %v3420 = vshrl.u32 920167782, %v3408
        %v3421 = vor.u32 %v3419, %v3420
        %v3422 = vshll.u32 920167782, %v3407
        %v3423 = vshrl.u32 1326507024, %v3408
        %v3424 = vor.u32 %v3422, %v3423
        %vm3425 = vcmp.lt.s32.totalorder %v3406, 1
        %vm3426 = vcmp.lt.s32.totalorder %v3406, 2
        %vm3427 = vcmp.lt.s32.totalorder %v3406, 3
        %vm3428 = vcmp.lt.s32.totalorder %v3406, 4
        %v3429 = vsel %vm3425, %v3409, %v3412
        %v3430 = vsel %vm3428, %v3418, 2102212464
        %v3431 = vsel %vm3427, %v3415, %v3430
        %v3432 = vsel %vm3426, %v3429, %v3431
        %v3433 = vsel %vm3425, %v3412, %v3415
        %v3434 = vsel %vm3428, %v3421, 920167782
        %v3435 = vsel %vm3427, %v3418, %v3434
        %v3436 = vsel %vm3426, %v3433, %v3435
        %v3437 = vsel %vm3425, %v3415, %v3418
        %v3438 = vsel %vm3428, %v3424, 1326507024
        %v3439 = vsel %vm3427, %v3421, %v3438
        %v3440 = vsel %vm3426, %v3437, %v3439
        %v3441 = vshll.u32 %v3401, 8
        %v3442 = vmul.u32.u64.compose %v3441, %v3440
        %v3443 = vextract.low.u32 %v3442
        %v3444 = vextract.high.u32 %v3442
        %v3445 = vmul.u32.u64.compose %v3441, %v3436
        %v3446 = vextract.low.u32 %v3445
        %v3447 = vextract.high.u32 %v3445
        %v3448 = vmul.u32 %v3441, %v3432
        %v3449 = vadd.s32 %v3444, %v3446
        %vm3450 = vc.u32 %v3444, %v3446
        %v3451 = vadd.s32 %v3447, 1
        %v3452 = vsel %vm3450, %v3451, %v3447
        %v3453 = vadd.s32 %v3448, %v3452
        %v3454 = vadd.s32 %v3453, 536870912
        %v3455 = vshrl.u32 %v3454, 30
        %v3456 = vshll.u32 %v3455, 30
        %v3457 = vsub.s32 %v3453, %v3456
        %vm3458 = vcmp.lt.s32.totalorder %v3457, 0
        %v3459 = vsub.s32 0, %v3457
        %v3460 = vsel %vm3458, %v3459, %v3457
        %v3461 = vclz %v3460
        %v3462 = vsub.s32 %v3461, 2
        %vm3463 = vcmp.gt.s32.totalorder 0, %v3462
        %v3464 = vsel %vm3463, 0, %v3462
        %v3465 = vsub.s32 32, %v3464
        %v3466 = vshll.u32 %v3457, %v3464
        %v3467 = vshrl.u32 %v3449, %v3465
        %v3468 = vor.u32 %v3466, %v3467
        %v3469 = vsub.s32 4294967266, %v3464
        %v3470 = vadd.s32 %v3469, 127
        %v3471 = vshll.u32 %v3470, 23
        %v3472 = vor.u32 4788187, %v3471
        %v3473 = vand.u32 2147483647, %v3472
        %v3475 = vcvt.s32.f32 %v3468
        %v3476 = vmul.f32 %v3475, %v3473
        %v3477 = vxor.u32 %v3476, 2147483648
        %v3478 = vsel %vm3395, %v3477, %v3476
        %v3479 = vsub.s32 4, %v3455
        %v3480 = vsel %vm3395, %v3479, %v3455
        %v3481 = vsel %vm3394, %v992, %v3478
        %v3482 = vsel %vm3394, 0, %v3480
        %v3483 = vcosq.f32.pop %v3481
        %v3484 = vsinq.f32.pop %v3481
        %vm3485 = vweird.f32 %v992
        %v3486 = vadd.s32 %v3482, 3
        %v3487 = vand.u32 %v3486, 3
        %vm3488 = vcmp.lt.s32.totalorder %v3487, 2
        %vm3489 = vcmp.eq.s32.totalorder %v3487, 0
        %v3490 = vxor.u32 %v3484, 2147483648
        %v3491 = vsel %vm3489, %v3483, %v3490
        %vm3492 = vcmp.eq.s32.totalorder %v3487, 2
        %v3493 = vxor.u32 %v3483, 2147483648
        %v3494 = vsel %vm3492, %v3493, %v3484
        %v3495 = vsel %vm3488, %v3491, %v3494
        %v3496 = vsel %vm3485, nan, %v3495
        %v3497 = vand.u32 2147483647, %v993
        %vm3498 = vcmp.le.f32.partialorder %v3497, 0.7853982
        %vm3499 = vcmp.lt.s32.totalorder %v993, 0
        %v3500 = vand.u32 %v993, 2139095040
        %v3501 = vshrl.u32 %v3500, 23
        %v3502 = vsub.s32 %v3501, 127
        %v3503 = vand.u32 2147483647, %v993
        %v3504 = vand.u32 %v3503, 8388607
        %v3505 = vor.u32 %v3504, 8388608
        %v3506 = vsub.s32 0, %v3505
        %v3507 = vadd.s32 %v3502, 1
        %vm3508 = vcmp.gt.s32.totalorder %v3507, 0
        %v3509 = vsel %vm3508, %v3507, 0
        %v3510 = vshrl.u32 %v3509, 5
        %v3511 = vand.u32 %v3509, 31
        %v3512 = vsub.s32 32, %v3511
        %v3513 = vshrl.u32 683565275, %v3512
        %v3514 = vshll.u32 683565275, %v3511
        %v3515 = vshrl.u32 2475754826, %v3512
        %v3516 = vor.u32 %v3514, %v3515
        %v3517 = vshll.u32 2475754826, %v3511
        %v3518 = vshrl.u32 2131351028, %v3512
        %v3519 = vor.u32 %v3517, %v3518
        %v3520 = vshll.u32 2131351028, %v3511
        %v3521 = vshrl.u32 2102212464, %v3512
        %v3522 = vor.u32 %v3520, %v3521
        %v3523 = vshll.u32 2102212464, %v3511
        %v3524 = vshrl.u32 920167782, %v3512
        %v3525 = vor.u32 %v3523, %v3524
        %v3526 = vshll.u32 920167782, %v3511
        %v3527 = vshrl.u32 1326507024, %v3512
        %v3528 = vor.u32 %v3526, %v3527
        %vm3529 = vcmp.lt.s32.totalorder %v3510, 1
        %vm3530 = vcmp.lt.s32.totalorder %v3510, 2
        %vm3531 = vcmp.lt.s32.totalorder %v3510, 3
        %vm3532 = vcmp.lt.s32.totalorder %v3510, 4
        %v3533 = vsel %vm3529, %v3513, %v3516
        %v3534 = vsel %vm3532, %v3522, 2102212464
        %v3535 = vsel %vm3531, %v3519, %v3534
        %v3536 = vsel %vm3530, %v3533, %v3535
        %v3537 = vsel %vm3529, %v3516, %v3519
        %v3538 = vsel %vm3532, %v3525, 920167782
        %v3539 = vsel %vm3531, %v3522, %v3538
        %v3540 = vsel %vm3530, %v3537, %v3539
        %v3541 = vsel %vm3529, %v3519, %v3522
        %v3542 = vsel %vm3532, %v3528, 1326507024
        %v3543 = vsel %vm3531, %v3525, %v3542
        %v3544 = vsel %vm3530, %v3541, %v3543
        %v3545 = vshll.u32 %v3505, 8
        %v3546 = vmul.u32.u64.compose %v3545, %v3544
        %v3547 = vextract.low.u32 %v3546
        %v3548 = vextract.high.u32 %v3546
        %v3549 = vmul.u32.u64.compose %v3545, %v3540
        %v3550 = vextract.low.u32 %v3549
        %v3551 = vextract.high.u32 %v3549
        %v3552 = vmul.u32 %v3545, %v3536
        %v3553 = vadd.s32 %v3548, %v3550
        %vm3554 = vc.u32 %v3548, %v3550
        %v3555 = vadd.s32 %v3551, 1
        %v3556 = vsel %vm3554, %v3555, %v3551
        %v3557 = vadd.s32 %v3552, %v3556
        %v3558 = vadd.s32 %v3557, 536870912
        %v3559 = vshrl.u32 %v3558, 30
        %v3560 = vshll.u32 %v3559, 30
        %v3561 = vsub.s32 %v3557, %v3560
        %vm3562 = vcmp.lt.s32.totalorder %v3561, 0
        %v3563 = vsub.s32 0, %v3561
        %v3564 = vsel %vm3562, %v3563, %v3561
        %v3565 = vclz %v3564
        %v3566 = vsub.s32 %v3565, 2
        %vm3567 = vcmp.gt.s32.totalorder 0, %v3566
        %v3568 = vsel %vm3567, 0, %v3566
        %v3569 = vsub.s32 32, %v3568
        %v3570 = vshll.u32 %v3561, %v3568
        %v3571 = vshrl.u32 %v3553, %v3569
        %v3572 = vor.u32 %v3570, %v3571
        %v3573 = vsub.s32 4294967266, %v3568
        %v3574 = vadd.s32 %v3573, 127
        %v3575 = vshll.u32 %v3574, 23
        %v3576 = vor.u32 4788187, %v3575
        %v3577 = vand.u32 2147483647, %v3576
        %v3579 = vcvt.s32.f32 %v3572
        %v3580 = vmul.f32 %v3579, %v3577
        %v3581 = vxor.u32 %v3580, 2147483648
        %v3582 = vsel %vm3499, %v3581, %v3580
        %v3583 = vsub.s32 4, %v3559
        %v3584 = vsel %vm3499, %v3583, %v3559
        %v3585 = vsel %vm3498, %v993, %v3582
        %v3586 = vsel %vm3498, 0, %v3584
        %v3587 = vcosq.f32.pop %v3585
        %v3588 = vsinq.f32.pop %v3585
        %vm3589 = vweird.f32 %v993
        %v3590 = vadd.s32 %v3586, 3
        %v3591 = vand.u32 %v3590, 3
        %vm3592 = vcmp.lt.s32.totalorder %v3591, 2
        %vm3593 = vcmp.eq.s32.totalorder %v3591, 0
        %v3594 = vxor.u32 %v3588, 2147483648
        %v3595 = vsel %vm3593, %v3587, %v3594
        %vm3596 = vcmp.eq.s32.totalorder %v3591, 2
        %v3597 = vxor.u32 %v3587, 2147483648
        %v3598 = vsel %vm3596, %v3597, %v3588
        %v3599 = vsel %vm3592, %v3595, %v3598
        %v3600 = vsel %vm3589, nan, %v3599
        %v3601 = vand.u32 2147483647, %v994
        %vm3602 = vcmp.le.f32.partialorder %v3601, 0.7853982
        %vm3603 = vcmp.lt.s32.totalorder %v994, 0
        %v3604 = vand.u32 %v994, 2139095040
        %v3605 = vshrl.u32 %v3604, 23
        %v3606 = vsub.s32 %v3605, 127
        %v3607 = vand.u32 2147483647, %v994
        %v3608 = vand.u32 %v3607, 8388607
        %v3609 = vor.u32 %v3608, 8388608
        %v3610 = vsub.s32 0, %v3609
        %v3611 = vadd.s32 %v3606, 1
        %vm3612 = vcmp.gt.s32.totalorder %v3611, 0
        %v3613 = vsel %vm3612, %v3611, 0
        %v3614 = vshrl.u32 %v3613, 5
        %v3615 = vand.u32 %v3613, 31
        %v3616 = vsub.s32 32, %v3615
        %v3617 = vshrl.u32 683565275, %v3616
        %v3618 = vshll.u32 683565275, %v3615
        %v3619 = vshrl.u32 2475754826, %v3616
        %v3620 = vor.u32 %v3618, %v3619
        %v3621 = vshll.u32 2475754826, %v3615
        %v3622 = vshrl.u32 2131351028, %v3616
        %v3623 = vor.u32 %v3621, %v3622
        %v3624 = vshll.u32 2131351028, %v3615
        %v3625 = vshrl.u32 2102212464, %v3616
        %v3626 = vor.u32 %v3624, %v3625
        %v3627 = vshll.u32 2102212464, %v3615
        %v3628 = vshrl.u32 920167782, %v3616
        %v3629 = vor.u32 %v3627, %v3628
        %v3630 = vshll.u32 920167782, %v3615
        %v3631 = vshrl.u32 1326507024, %v3616
        %v3632 = vor.u32 %v3630, %v3631
        %vm3633 = vcmp.lt.s32.totalorder %v3614, 1
        %vm3634 = vcmp.lt.s32.totalorder %v3614, 2
        %vm3635 = vcmp.lt.s32.totalorder %v3614, 3
        %vm3636 = vcmp.lt.s32.totalorder %v3614, 4
        %v3637 = vsel %vm3633, %v3617, %v3620
        %v3638 = vsel %vm3636, %v3626, 2102212464
        %v3639 = vsel %vm3635, %v3623, %v3638
        %v3640 = vsel %vm3634, %v3637, %v3639
        %v3641 = vsel %vm3633, %v3620, %v3623
        %v3642 = vsel %vm3636, %v3629, 920167782
        %v3643 = vsel %vm3635, %v3626, %v3642
        %v3644 = vsel %vm3634, %v3641, %v3643
        %v3645 = vsel %vm3633, %v3623, %v3626
        %v3646 = vsel %vm3636, %v3632, 1326507024
        %v3647 = vsel %vm3635, %v3629, %v3646
        %v3648 = vsel %vm3634, %v3645, %v3647
        %v3649 = vshll.u32 %v3609, 8
        %v3650 = vmul.u32.u64.compose %v3649, %v3648
        %v3651 = vextract.low.u32 %v3650
        %v3652 = vextract.high.u32 %v3650
        %v3653 = vmul.u32.u64.compose %v3649, %v3644
        %v3654 = vextract.low.u32 %v3653
        %v3655 = vextract.high.u32 %v3653
        %v3656 = vmul.u32 %v3649, %v3640
        %v3657 = vadd.s32 %v3652, %v3654
        %vm3658 = vc.u32 %v3652, %v3654
        %v3659 = vadd.s32 %v3655, 1
        %v3660 = vsel %vm3658, %v3659, %v3655
        %v3661 = vadd.s32 %v3656, %v3660
        %v3662 = vadd.s32 %v3661, 536870912
        %v3663 = vshrl.u32 %v3662, 30
        %v3664 = vshll.u32 %v3663, 30
        %v3665 = vsub.s32 %v3661, %v3664
        %vm3666 = vcmp.lt.s32.totalorder %v3665, 0
        %v3667 = vsub.s32 0, %v3665
        %v3668 = vsel %vm3666, %v3667, %v3665
        %v3669 = vclz %v3668
        %v3670 = vsub.s32 %v3669, 2
        %vm3671 = vcmp.gt.s32.totalorder 0, %v3670
        %v3672 = vsel %vm3671, 0, %v3670
        %v3673 = vsub.s32 32, %v3672
        %v3674 = vshll.u32 %v3665, %v3672
        %v3675 = vshrl.u32 %v3657, %v3673
        %v3676 = vor.u32 %v3674, %v3675
        %v3677 = vsub.s32 4294967266, %v3672
        %v3678 = vadd.s32 %v3677, 127
        %v3679 = vshll.u32 %v3678, 23
        %v3680 = vor.u32 4788187, %v3679
        %v3681 = vand.u32 2147483647, %v3680
        %v3683 = vcvt.s32.f32 %v3676
        %v3684 = vmul.f32 %v3683, %v3681
        %v3685 = vxor.u32 %v3684, 2147483648
        %v3686 = vsel %vm3603, %v3685, %v3684
        %v3687 = vsub.s32 4, %v3663
        %v3688 = vsel %vm3603, %v3687, %v3663
        %v3689 = vsel %vm3602, %v994, %v3686
        %v3690 = vsel %vm3602, 0, %v3688
        %v3691 = vcosq.f32.pop %v3689
        %v3692 = vsinq.f32.pop %v3689
        %vm3693 = vweird.f32 %v994
        %v3694 = vadd.s32 %v3690, 3
        %v3695 = vand.u32 %v3694, 3
        %vm3696 = vcmp.lt.s32.totalorder %v3695, 2
        %vm3697 = vcmp.eq.s32.totalorder %v3695, 0
        %v3698 = vxor.u32 %v3692, 2147483648
        %v3699 = vsel %vm3697, %v3691, %v3698
        %vm3700 = vcmp.eq.s32.totalorder %v3695, 2
        %v3701 = vxor.u32 %v3691, 2147483648
        %v3702 = vsel %vm3700, %v3701, %v3692
        %v3703 = vsel %vm3696, %v3699, %v3702
        %v3704 = vsel %vm3693, nan, %v3703
        %v3705 = vand.u32 2147483647, %v995
        %vm3706 = vcmp.le.f32.partialorder %v3705, 0.7853982
        %vm3707 = vcmp.lt.s32.totalorder %v995, 0
        %v3708 = vand.u32 %v995, 2139095040
        %v3709 = vshrl.u32 %v3708, 23
        %v3710 = vsub.s32 %v3709, 127
        %v3711 = vand.u32 2147483647, %v995
        %v3712 = vand.u32 %v3711, 8388607
        %v3713 = vor.u32 %v3712, 8388608
        %v3714 = vsub.s32 0, %v3713
        %v3715 = vadd.s32 %v3710, 1
        %vm3716 = vcmp.gt.s32.totalorder %v3715, 0
        %v3717 = vsel %vm3716, %v3715, 0
        %v3718 = vshrl.u32 %v3717, 5
        %v3719 = vand.u32 %v3717, 31
        %v3720 = vsub.s32 32, %v3719
        %v3721 = vshrl.u32 683565275, %v3720
        %v3722 = vshll.u32 683565275, %v3719
        %v3723 = vshrl.u32 2475754826, %v3720
        %v3724 = vor.u32 %v3722, %v3723
        %v3725 = vshll.u32 2475754826, %v3719
        %v3726 = vshrl.u32 2131351028, %v3720
        %v3727 = vor.u32 %v3725, %v3726
        %v3728 = vshll.u32 2131351028, %v3719
        %v3729 = vshrl.u32 2102212464, %v3720
        %v3730 = vor.u32 %v3728, %v3729
        %v3731 = vshll.u32 2102212464, %v3719
        %v3732 = vshrl.u32 920167782, %v3720
        %v3733 = vor.u32 %v3731, %v3732
        %v3734 = vshll.u32 920167782, %v3719
        %v3735 = vshrl.u32 1326507024, %v3720
        %v3736 = vor.u32 %v3734, %v3735
        %vm3737 = vcmp.lt.s32.totalorder %v3718, 1
        %vm3738 = vcmp.lt.s32.totalorder %v3718, 2
        %vm3739 = vcmp.lt.s32.totalorder %v3718, 3
        %vm3740 = vcmp.lt.s32.totalorder %v3718, 4
        %v3741 = vsel %vm3737, %v3721, %v3724
        %v3742 = vsel %vm3740, %v3730, 2102212464
        %v3743 = vsel %vm3739, %v3727, %v3742
        %v3744 = vsel %vm3738, %v3741, %v3743
        %v3745 = vsel %vm3737, %v3724, %v3727
        %v3746 = vsel %vm3740, %v3733, 920167782
        %v3747 = vsel %vm3739, %v3730, %v3746
        %v3748 = vsel %vm3738, %v3745, %v3747
        %v3749 = vsel %vm3737, %v3727, %v3730
        %v3750 = vsel %vm3740, %v3736, 1326507024
        %v3751 = vsel %vm3739, %v3733, %v3750
        %v3752 = vsel %vm3738, %v3749, %v3751
        %v3753 = vshll.u32 %v3713, 8
        %v3754 = vmul.u32.u64.compose %v3753, %v3752
        %v3755 = vextract.low.u32 %v3754
        %v3756 = vextract.high.u32 %v3754
        %v3757 = vmul.u32.u64.compose %v3753, %v3748
        %v3758 = vextract.low.u32 %v3757
        %v3759 = vextract.high.u32 %v3757
        %v3760 = vmul.u32 %v3753, %v3744
        %v3761 = vadd.s32 %v3756, %v3758
        %vm3762 = vc.u32 %v3756, %v3758
        %v3763 = vadd.s32 %v3759, 1
        %v3764 = vsel %vm3762, %v3763, %v3759
        %v3765 = vadd.s32 %v3760, %v3764
        %v3766 = vadd.s32 %v3765, 536870912
        %v3767 = vshrl.u32 %v3766, 30
        %v3768 = vshll.u32 %v3767, 30
        %v3769 = vsub.s32 %v3765, %v3768
        %vm3770 = vcmp.lt.s32.totalorder %v3769, 0
        %v3771 = vsub.s32 0, %v3769
        %v3772 = vsel %vm3770, %v3771, %v3769
        %v3773 = vclz %v3772
        %v3774 = vsub.s32 %v3773, 2
        %vm3775 = vcmp.gt.s32.totalorder 0, %v3774
        %v3776 = vsel %vm3775, 0, %v3774
        %v3777 = vsub.s32 32, %v3776
        %v3778 = vshll.u32 %v3769, %v3776
        %v3779 = vshrl.u32 %v3761, %v3777
        %v3780 = vor.u32 %v3778, %v3779
        %v3781 = vsub.s32 4294967266, %v3776
        %v3782 = vadd.s32 %v3781, 127
        %v3783 = vshll.u32 %v3782, 23
        %v3784 = vor.u32 4788187, %v3783
        %v3785 = vand.u32 2147483647, %v3784
        %v3787 = vcvt.s32.f32 %v3780
        %v3788 = vmul.f32 %v3787, %v3785
        %v3789 = vxor.u32 %v3788, 2147483648
        %v3790 = vsel %vm3707, %v3789, %v3788
        %v3791 = vsub.s32 4, %v3767
        %v3792 = vsel %vm3707, %v3791, %v3767
        %v3793 = vsel %vm3706, %v995, %v3790
        %v3794 = vsel %vm3706, 0, %v3792
        %v3795 = vcosq.f32.pop %v3793
        %v3796 = vsinq.f32.pop %v3793
        %vm3797 = vweird.f32 %v995
        %v3798 = vadd.s32 %v3794, 3
        %v3799 = vand.u32 %v3798, 3
        %vm3800 = vcmp.lt.s32.totalorder %v3799, 2
        %vm3801 = vcmp.eq.s32.totalorder %v3799, 0
        %v3802 = vxor.u32 %v3796, 2147483648
        %v3803 = vsel %vm3801, %v3795, %v3802
        %vm3804 = vcmp.eq.s32.totalorder %v3799, 2
        %v3805 = vxor.u32 %v3795, 2147483648
        %v3806 = vsel %vm3804, %v3805, %v3796
        %v3807 = vsel %vm3800, %v3803, %v3806
        %v3808 = vsel %vm3797, nan, %v3807
        %v3809 = vand.u32 2147483647, %v996
        %vm3810 = vcmp.le.f32.partialorder %v3809, 0.7853982
        %vm3811 = vcmp.lt.s32.totalorder %v996, 0
        %v3812 = vand.u32 %v996, 2139095040
        %v3813 = vshrl.u32 %v3812, 23
        %v3814 = vsub.s32 %v3813, 127
        %v3815 = vand.u32 2147483647, %v996
        %v3816 = vand.u32 %v3815, 8388607
        %v3817 = vor.u32 %v3816, 8388608
        %v3818 = vsub.s32 0, %v3817
        %v3819 = vadd.s32 %v3814, 1
        %vm3820 = vcmp.gt.s32.totalorder %v3819, 0
        %v3821 = vsel %vm3820, %v3819, 0
        %v3822 = vshrl.u32 %v3821, 5
        %v3823 = vand.u32 %v3821, 31
        %v3824 = vsub.s32 32, %v3823
        %v3825 = vshrl.u32 683565275, %v3824
        %v3826 = vshll.u32 683565275, %v3823
        %v3827 = vshrl.u32 2475754826, %v3824
        %v3828 = vor.u32 %v3826, %v3827
        %v3829 = vshll.u32 2475754826, %v3823
        %v3830 = vshrl.u32 2131351028, %v3824
        %v3831 = vor.u32 %v3829, %v3830
        %v3832 = vshll.u32 2131351028, %v3823
        %v3833 = vshrl.u32 2102212464, %v3824
        %v3834 = vor.u32 %v3832, %v3833
        %v3835 = vshll.u32 2102212464, %v3823
        %v3836 = vshrl.u32 920167782, %v3824
        %v3837 = vor.u32 %v3835, %v3836
        %v3838 = vshll.u32 920167782, %v3823
        %v3839 = vshrl.u32 1326507024, %v3824
        %v3840 = vor.u32 %v3838, %v3839
        %vm3841 = vcmp.lt.s32.totalorder %v3822, 1
        %vm3842 = vcmp.lt.s32.totalorder %v3822, 2
        %vm3843 = vcmp.lt.s32.totalorder %v3822, 3
        %vm3844 = vcmp.lt.s32.totalorder %v3822, 4
        %v3845 = vsel %vm3841, %v3825, %v3828
        %v3846 = vsel %vm3844, %v3834, 2102212464
        %v3847 = vsel %vm3843, %v3831, %v3846
        %v3848 = vsel %vm3842, %v3845, %v3847
        %v3849 = vsel %vm3841, %v3828, %v3831
        %v3850 = vsel %vm3844, %v3837, 920167782
        %v3851 = vsel %vm3843, %v3834, %v3850
        %v3852 = vsel %vm3842, %v3849, %v3851
        %v3853 = vsel %vm3841, %v3831, %v3834
        %v3854 = vsel %vm3844, %v3840, 1326507024
        %v3855 = vsel %vm3843, %v3837, %v3854
        %v3856 = vsel %vm3842, %v3853, %v3855
        %v3857 = vshll.u32 %v3817, 8
        %v3858 = vmul.u32.u64.compose %v3857, %v3856
        %v3859 = vextract.low.u32 %v3858
        %v3860 = vextract.high.u32 %v3858
        %v3861 = vmul.u32.u64.compose %v3857, %v3852
        %v3862 = vextract.low.u32 %v3861
        %v3863 = vextract.high.u32 %v3861
        %v3864 = vmul.u32 %v3857, %v3848
        %v3865 = vadd.s32 %v3860, %v3862
        %vm3866 = vc.u32 %v3860, %v3862
        %v3867 = vadd.s32 %v3863, 1
        %v3868 = vsel %vm3866, %v3867, %v3863
        %v3869 = vadd.s32 %v3864, %v3868
        %v3870 = vadd.s32 %v3869, 536870912
        %v3871 = vshrl.u32 %v3870, 30
        %v3872 = vshll.u32 %v3871, 30
        %v3873 = vsub.s32 %v3869, %v3872
        %vm3874 = vcmp.lt.s32.totalorder %v3873, 0
        %v3875 = vsub.s32 0, %v3873
        %v3876 = vsel %vm3874, %v3875, %v3873
        %v3877 = vclz %v3876
        %v3878 = vsub.s32 %v3877, 2
        %vm3879 = vcmp.gt.s32.totalorder 0, %v3878
        %v3880 = vsel %vm3879, 0, %v3878
        %v3881 = vsub.s32 32, %v3880
        %v3882 = vshll.u32 %v3873, %v3880
        %v3883 = vshrl.u32 %v3865, %v3881
        %v3884 = vor.u32 %v3882, %v3883
        %v3885 = vsub.s32 4294967266, %v3880
        %v3886 = vadd.s32 %v3885, 127
        %v3887 = vshll.u32 %v3886, 23
        %v3888 = vor.u32 4788187, %v3887
        %v3889 = vand.u32 2147483647, %v3888
        %v3891 = vcvt.s32.f32 %v3884
        %v3892 = vmul.f32 %v3891, %v3889
        %v3893 = vxor.u32 %v3892, 2147483648
        %v3894 = vsel %vm3811, %v3893, %v3892
        %v3895 = vsub.s32 4, %v3871
        %v3896 = vsel %vm3811, %v3895, %v3871
        %v3897 = vsel %vm3810, %v996, %v3894
        %v3898 = vsel %vm3810, 0, %v3896
        %v3899 = vcosq.f32.pop %v3897
        %v3900 = vsinq.f32.pop %v3897
        %vm3901 = vweird.f32 %v996
        %v3902 = vadd.s32 %v3898, 3
        %v3903 = vand.u32 %v3902, 3
        %vm3904 = vcmp.lt.s32.totalorder %v3903, 2
        %vm3905 = vcmp.eq.s32.totalorder %v3903, 0
        %v3906 = vxor.u32 %v3900, 2147483648
        %v3907 = vsel %vm3905, %v3899, %v3906
        %vm3908 = vcmp.eq.s32.totalorder %v3903, 2
        %v3909 = vxor.u32 %v3899, 2147483648
        %v3910 = vsel %vm3908, %v3909, %v3900
        %v3911 = vsel %vm3904, %v3907, %v3910
        %v3912 = vsel %vm3901, nan, %v3911
        %v3913 = vand.u32 2147483647, %v997
        %vm3914 = vcmp.le.f32.partialorder %v3913, 0.7853982
        %vm3915 = vcmp.lt.s32.totalorder %v997, 0
        %v3916 = vand.u32 %v997, 2139095040
        %v3917 = vshrl.u32 %v3916, 23
        %v3918 = vsub.s32 %v3917, 127
        %v3919 = vand.u32 2147483647, %v997
        %v3920 = vand.u32 %v3919, 8388607
        %v3921 = vor.u32 %v3920, 8388608
        %v3922 = vsub.s32 0, %v3921
        %v3923 = vadd.s32 %v3918, 1
        %vm3924 = vcmp.gt.s32.totalorder %v3923, 0
        %v3925 = vsel %vm3924, %v3923, 0
        %v3926 = vshrl.u32 %v3925, 5
        %v3927 = vand.u32 %v3925, 31
        %v3928 = vsub.s32 32, %v3927
        %v3929 = vshrl.u32 683565275, %v3928
        %v3930 = vshll.u32 683565275, %v3927
        %v3931 = vshrl.u32 2475754826, %v3928
        %v3932 = vor.u32 %v3930, %v3931
        %v3933 = vshll.u32 2475754826, %v3927
        %v3934 = vshrl.u32 2131351028, %v3928
        %v3935 = vor.u32 %v3933, %v3934
        %v3936 = vshll.u32 2131351028, %v3927
        %v3937 = vshrl.u32 2102212464, %v3928
        %v3938 = vor.u32 %v3936, %v3937
        %v3939 = vshll.u32 2102212464, %v3927
        %v3940 = vshrl.u32 920167782, %v3928
        %v3941 = vor.u32 %v3939, %v3940
        %v3942 = vshll.u32 920167782, %v3927
        %v3943 = vshrl.u32 1326507024, %v3928
        %v3944 = vor.u32 %v3942, %v3943
        %vm3945 = vcmp.lt.s32.totalorder %v3926, 1
        %vm3946 = vcmp.lt.s32.totalorder %v3926, 2
        %vm3947 = vcmp.lt.s32.totalorder %v3926, 3
        %vm3948 = vcmp.lt.s32.totalorder %v3926, 4
        %v3949 = vsel %vm3945, %v3929, %v3932
        %v3950 = vsel %vm3948, %v3938, 2102212464
        %v3951 = vsel %vm3947, %v3935, %v3950
        %v3952 = vsel %vm3946, %v3949, %v3951
        %v3953 = vsel %vm3945, %v3932, %v3935
        %v3954 = vsel %vm3948, %v3941, 920167782
        %v3955 = vsel %vm3947, %v3938, %v3954
        %v3956 = vsel %vm3946, %v3953, %v3955
        %v3957 = vsel %vm3945, %v3935, %v3938
        %v3958 = vsel %vm3948, %v3944, 1326507024
        %v3959 = vsel %vm3947, %v3941, %v3958
        %v3960 = vsel %vm3946, %v3957, %v3959
        %v3961 = vshll.u32 %v3921, 8
        %v3962 = vmul.u32.u64.compose %v3961, %v3960
        %v3963 = vextract.low.u32 %v3962
        %v3964 = vextract.high.u32 %v3962
        %v3965 = vmul.u32.u64.compose %v3961, %v3956
        %v3966 = vextract.low.u32 %v3965
        %v3967 = vextract.high.u32 %v3965
        %v3968 = vmul.u32 %v3961, %v3952
        %v3969 = vadd.s32 %v3964, %v3966
        %vm3970 = vc.u32 %v3964, %v3966
        %v3971 = vadd.s32 %v3967, 1
        %v3972 = vsel %vm3970, %v3971, %v3967
        %v3973 = vadd.s32 %v3968, %v3972
        %v3974 = vadd.s32 %v3973, 536870912
        %v3975 = vshrl.u32 %v3974, 30
        %v3976 = vshll.u32 %v3975, 30
        %v3977 = vsub.s32 %v3973, %v3976
        %vm3978 = vcmp.lt.s32.totalorder %v3977, 0
        %v3979 = vsub.s32 0, %v3977
        %v3980 = vsel %vm3978, %v3979, %v3977
        %v3981 = vclz %v3980
        %v3982 = vsub.s32 %v3981, 2
        %vm3983 = vcmp.gt.s32.totalorder 0, %v3982
        %v3984 = vsel %vm3983, 0, %v3982
        %v3985 = vsub.s32 32, %v3984
        %v3986 = vshll.u32 %v3977, %v3984
        %v3987 = vshrl.u32 %v3969, %v3985
        %v3988 = vor.u32 %v3986, %v3987
        %v3989 = vsub.s32 4294967266, %v3984
        %v3990 = vadd.s32 %v3989, 127
        %v3991 = vshll.u32 %v3990, 23
        %v3992 = vor.u32 4788187, %v3991
        %v3993 = vand.u32 2147483647, %v3992
        %v3995 = vcvt.s32.f32 %v3988
        %v3996 = vmul.f32 %v3995, %v3993
        %v3997 = vxor.u32 %v3996, 2147483648
        %v3998 = vsel %vm3915, %v3997, %v3996
        %v3999 = vsub.s32 4, %v3975
        %v4000 = vsel %vm3915, %v3999, %v3975
        %v4001 = vsel %vm3914, %v997, %v3998
        %v4002 = vsel %vm3914, 0, %v4000
        %v4003 = vcosq.f32.pop %v4001
        %v4004 = vsinq.f32.pop %v4001
        %vm4005 = vweird.f32 %v997
        %v4006 = vadd.s32 %v4002, 3
        %v4007 = vand.u32 %v4006, 3
        %vm4008 = vcmp.lt.s32.totalorder %v4007, 2
        %vm4009 = vcmp.eq.s32.totalorder %v4007, 0
        %v4010 = vxor.u32 %v4004, 2147483648
        %v4011 = vsel %vm4009, %v4003, %v4010
        %vm4012 = vcmp.eq.s32.totalorder %v4007, 2
        %v4013 = vxor.u32 %v4003, 2147483648
        %v4014 = vsel %vm4012, %v4013, %v4004
        %v4015 = vsel %vm4008, %v4011, %v4014
        %v4016 = vsel %vm4005, nan, %v4015
        %v4017 = vand.u32 2147483647, %v998
        %vm4018 = vcmp.le.f32.partialorder %v4017, 0.7853982
        %vm4019 = vcmp.lt.s32.totalorder %v998, 0
        %v4020 = vand.u32 %v998, 2139095040
        %v4021 = vshrl.u32 %v4020, 23
        %v4022 = vsub.s32 %v4021, 127
        %v4023 = vand.u32 2147483647, %v998
        %v4024 = vand.u32 %v4023, 8388607
        %v4025 = vor.u32 %v4024, 8388608
        %v4026 = vsub.s32 0, %v4025
        %v4027 = vadd.s32 %v4022, 1
        %vm4028 = vcmp.gt.s32.totalorder %v4027, 0
        %v4029 = vsel %vm4028, %v4027, 0
        %v4030 = vshrl.u32 %v4029, 5
        %v4031 = vand.u32 %v4029, 31
        %v4032 = vsub.s32 32, %v4031
        %v4033 = vshrl.u32 683565275, %v4032
        %v4034 = vshll.u32 683565275, %v4031
        %v4035 = vshrl.u32 2475754826, %v4032
        %v4036 = vor.u32 %v4034, %v4035
        %v4037 = vshll.u32 2475754826, %v4031
        %v4038 = vshrl.u32 2131351028, %v4032
        %v4039 = vor.u32 %v4037, %v4038
        %v4040 = vshll.u32 2131351028, %v4031
        %v4041 = vshrl.u32 2102212464, %v4032
        %v4042 = vor.u32 %v4040, %v4041
        %v4043 = vshll.u32 2102212464, %v4031
        %v4044 = vshrl.u32 920167782, %v4032
        %v4045 = vor.u32 %v4043, %v4044
        %v4046 = vshll.u32 920167782, %v4031
        %v4047 = vshrl.u32 1326507024, %v4032
        %v4048 = vor.u32 %v4046, %v4047
        %vm4049 = vcmp.lt.s32.totalorder %v4030, 1
        %vm4050 = vcmp.lt.s32.totalorder %v4030, 2
        %vm4051 = vcmp.lt.s32.totalorder %v4030, 3
        %vm4052 = vcmp.lt.s32.totalorder %v4030, 4
        %v4053 = vsel %vm4049, %v4033, %v4036
        %v4054 = vsel %vm4052, %v4042, 2102212464
        %v4055 = vsel %vm4051, %v4039, %v4054
        %v4056 = vsel %vm4050, %v4053, %v4055
        %v4057 = vsel %vm4049, %v4036, %v4039
        %v4058 = vsel %vm4052, %v4045, 920167782
        %v4059 = vsel %vm4051, %v4042, %v4058
        %v4060 = vsel %vm4050, %v4057, %v4059
        %v4061 = vsel %vm4049, %v4039, %v4042
        %v4062 = vsel %vm4052, %v4048, 1326507024
        %v4063 = vsel %vm4051, %v4045, %v4062
        %v4064 = vsel %vm4050, %v4061, %v4063
        %v4065 = vshll.u32 %v4025, 8
        %v4066 = vmul.u32.u64.compose %v4065, %v4064
        %v4067 = vextract.low.u32 %v4066
        %v4068 = vextract.high.u32 %v4066
        %v4069 = vmul.u32.u64.compose %v4065, %v4060
        %v4070 = vextract.low.u32 %v4069
        %v4071 = vextract.high.u32 %v4069
        %v4072 = vmul.u32 %v4065, %v4056
        %v4073 = vadd.s32 %v4068, %v4070
        %vm4074 = vc.u32 %v4068, %v4070
        %v4075 = vadd.s32 %v4071, 1
        %v4076 = vsel %vm4074, %v4075, %v4071
        %v4077 = vadd.s32 %v4072, %v4076
        %v4078 = vadd.s32 %v4077, 536870912
        %v4079 = vshrl.u32 %v4078, 30
        %v4080 = vshll.u32 %v4079, 30
        %v4081 = vsub.s32 %v4077, %v4080
        %vm4082 = vcmp.lt.s32.totalorder %v4081, 0
        %v4083 = vsub.s32 0, %v4081
        %v4084 = vsel %vm4082, %v4083, %v4081
        %v4085 = vclz %v4084
        %v4086 = vsub.s32 %v4085, 2
        %vm4087 = vcmp.gt.s32.totalorder 0, %v4086
        %v4088 = vsel %vm4087, 0, %v4086
        %v4089 = vsub.s32 32, %v4088
        %v4090 = vshll.u32 %v4081, %v4088
        %v4091 = vshrl.u32 %v4073, %v4089
        %v4092 = vor.u32 %v4090, %v4091
        %v4093 = vsub.s32 4294967266, %v4088
        %v4094 = vadd.s32 %v4093, 127
        %v4095 = vshll.u32 %v4094, 23
        %v4096 = vor.u32 4788187, %v4095
        %v4097 = vand.u32 2147483647, %v4096
        %v4099 = vcvt.s32.f32 %v4092
        %v4100 = vmul.f32 %v4099, %v4097
        %v4101 = vxor.u32 %v4100, 2147483648
        %v4102 = vsel %vm4019, %v4101, %v4100
        %v4103 = vsub.s32 4, %v4079
        %v4104 = vsel %vm4019, %v4103, %v4079
        %v4105 = vsel %vm4018, %v998, %v4102
        %v4106 = vsel %vm4018, 0, %v4104
        %v4107 = vcosq.f32.pop %v4105
        %v4108 = vsinq.f32.pop %v4105
        %vm4109 = vweird.f32 %v998
        %v4110 = vadd.s32 %v4106, 3
        %v4111 = vand.u32 %v4110, 3
        %vm4112 = vcmp.lt.s32.totalorder %v4111, 2
        %vm4113 = vcmp.eq.s32.totalorder %v4111, 0
        %v4114 = vxor.u32 %v4108, 2147483648
        %v4115 = vsel %vm4113, %v4107, %v4114
        %vm4116 = vcmp.eq.s32.totalorder %v4111, 2
        %v4117 = vxor.u32 %v4107, 2147483648
        %v4118 = vsel %vm4116, %v4117, %v4108
        %v4119 = vsel %vm4112, %v4115, %v4118
        %v4120 = vsel %vm4109, nan, %v4119
        %v4121 = vand.u32 2147483647, %v999
        %vm4122 = vcmp.le.f32.partialorder %v4121, 0.7853982
        %vm4123 = vcmp.lt.s32.totalorder %v999, 0
        %v4124 = vand.u32 %v999, 2139095040
        %v4125 = vshrl.u32 %v4124, 23
        %v4126 = vsub.s32 %v4125, 127
        %v4127 = vand.u32 2147483647, %v999
        %v4128 = vand.u32 %v4127, 8388607
        %v4129 = vor.u32 %v4128, 8388608
        %v4130 = vsub.s32 0, %v4129
        %v4131 = vadd.s32 %v4126, 1
        %vm4132 = vcmp.gt.s32.totalorder %v4131, 0
        %v4133 = vsel %vm4132, %v4131, 0
        %v4134 = vshrl.u32 %v4133, 5
        %v4135 = vand.u32 %v4133, 31
        %v4136 = vsub.s32 32, %v4135
        %v4137 = vshrl.u32 683565275, %v4136
        %v4138 = vshll.u32 683565275, %v4135
        %v4139 = vshrl.u32 2475754826, %v4136
        %v4140 = vor.u32 %v4138, %v4139
        %v4141 = vshll.u32 2475754826, %v4135
        %v4142 = vshrl.u32 2131351028, %v4136
        %v4143 = vor.u32 %v4141, %v4142
        %v4144 = vshll.u32 2131351028, %v4135
        %v4145 = vshrl.u32 2102212464, %v4136
        %v4146 = vor.u32 %v4144, %v4145
        %v4147 = vshll.u32 2102212464, %v4135
        %v4148 = vshrl.u32 920167782, %v4136
        %v4149 = vor.u32 %v4147, %v4148
        %v4150 = vshll.u32 920167782, %v4135
        %v4151 = vshrl.u32 1326507024, %v4136
        %v4152 = vor.u32 %v4150, %v4151
        %vm4153 = vcmp.lt.s32.totalorder %v4134, 1
        %vm4154 = vcmp.lt.s32.totalorder %v4134, 2
        %vm4155 = vcmp.lt.s32.totalorder %v4134, 3
        %vm4156 = vcmp.lt.s32.totalorder %v4134, 4
        %v4157 = vsel %vm4153, %v4137, %v4140
        %v4158 = vsel %vm4156, %v4146, 2102212464
        %v4159 = vsel %vm4155, %v4143, %v4158
        %v4160 = vsel %vm4154, %v4157, %v4159
        %v4161 = vsel %vm4153, %v4140, %v4143
        %v4162 = vsel %vm4156, %v4149, 920167782
        %v4163 = vsel %vm4155, %v4146, %v4162
        %v4164 = vsel %vm4154, %v4161, %v4163
        %v4165 = vsel %vm4153, %v4143, %v4146
        %v4166 = vsel %vm4156, %v4152, 1326507024
        %v4167 = vsel %vm4155, %v4149, %v4166
        %v4168 = vsel %vm4154, %v4165, %v4167
        %v4169 = vshll.u32 %v4129, 8
        %v4170 = vmul.u32.u64.compose %v4169, %v4168
        %v4171 = vextract.low.u32 %v4170
        %v4172 = vextract.high.u32 %v4170
        %v4173 = vmul.u32.u64.compose %v4169, %v4164
        %v4174 = vextract.low.u32 %v4173
        %v4175 = vextract.high.u32 %v4173
        %v4176 = vmul.u32 %v4169, %v4160
        %v4177 = vadd.s32 %v4172, %v4174
        %vm4178 = vc.u32 %v4172, %v4174
        %v4179 = vadd.s32 %v4175, 1
        %v4180 = vsel %vm4178, %v4179, %v4175
        %v4181 = vadd.s32 %v4176, %v4180
        %v4182 = vadd.s32 %v4181, 536870912
        %v4183 = vshrl.u32 %v4182, 30
        %v4184 = vshll.u32 %v4183, 30
        %v4185 = vsub.s32 %v4181, %v4184
        %vm4186 = vcmp.lt.s32.totalorder %v4185, 0
        %v4187 = vsub.s32 0, %v4185
        %v4188 = vsel %vm4186, %v4187, %v4185
        %v4189 = vclz %v4188
        %v4190 = vsub.s32 %v4189, 2
        %vm4191 = vcmp.gt.s32.totalorder 0, %v4190
        %v4192 = vsel %vm4191, 0, %v4190
        %v4193 = vsub.s32 32, %v4192
        %v4194 = vshll.u32 %v4185, %v4192
        %v4195 = vshrl.u32 %v4177, %v4193
        %v4196 = vor.u32 %v4194, %v4195
        %v4197 = vsub.s32 4294967266, %v4192
        %v4198 = vadd.s32 %v4197, 127
        %v4199 = vshll.u32 %v4198, 23
        %v4200 = vor.u32 4788187, %v4199
        %v4201 = vand.u32 2147483647, %v4200
        %v4203 = vcvt.s32.f32 %v4196
        %v4204 = vmul.f32 %v4203, %v4201
        %v4205 = vxor.u32 %v4204, 2147483648
        %v4206 = vsel %vm4123, %v4205, %v4204
        %v4207 = vsub.s32 4, %v4183
        %v4208 = vsel %vm4123, %v4207, %v4183
        %v4209 = vsel %vm4122, %v999, %v4206
        %v4210 = vsel %vm4122, 0, %v4208
        %v4211 = vcosq.f32.pop %v4209
        %v4212 = vsinq.f32.pop %v4209
        %vm4213 = vweird.f32 %v999
        %v4214 = vadd.s32 %v4210, 3
        %v4215 = vand.u32 %v4214, 3
        %vm4216 = vcmp.lt.s32.totalorder %v4215, 2
        %vm4217 = vcmp.eq.s32.totalorder %v4215, 0
        %v4218 = vxor.u32 %v4212, 2147483648
        %v4219 = vsel %vm4217, %v4211, %v4218
        %vm4220 = vcmp.eq.s32.totalorder %v4215, 2
        %v4221 = vxor.u32 %v4211, 2147483648
        %v4222 = vsel %vm4220, %v4221, %v4212
        %v4223 = vsel %vm4216, %v4219, %v4222
        %v4224 = vsel %vm4213, nan, %v4223
        %v4225 = vand.u32 2147483647, %v1000
        %vm4226 = vcmp.le.f32.partialorder %v4225, 0.7853982
        %vm4227 = vcmp.lt.s32.totalorder %v1000, 0
        %v4228 = vand.u32 %v1000, 2139095040
        %v4229 = vshrl.u32 %v4228, 23
        %v4230 = vsub.s32 %v4229, 127
        %v4231 = vand.u32 2147483647, %v1000
        %v4232 = vand.u32 %v4231, 8388607
        %v4233 = vor.u32 %v4232, 8388608
        %v4234 = vsub.s32 0, %v4233
        %v4235 = vadd.s32 %v4230, 1
        %vm4236 = vcmp.gt.s32.totalorder %v4235, 0
        %v4237 = vsel %vm4236, %v4235, 0
        %v4238 = vshrl.u32 %v4237, 5
        %v4239 = vand.u32 %v4237, 31
        %v4240 = vsub.s32 32, %v4239
        %v4241 = vshrl.u32 683565275, %v4240
        %v4242 = vshll.u32 683565275, %v4239
        %v4243 = vshrl.u32 2475754826, %v4240
        %v4244 = vor.u32 %v4242, %v4243
        %v4245 = vshll.u32 2475754826, %v4239
        %v4246 = vshrl.u32 2131351028, %v4240
        %v4247 = vor.u32 %v4245, %v4246
        %v4248 = vshll.u32 2131351028, %v4239
        %v4249 = vshrl.u32 2102212464, %v4240
        %v4250 = vor.u32 %v4248, %v4249
        %v4251 = vshll.u32 2102212464, %v4239
        %v4252 = vshrl.u32 920167782, %v4240
        %v4253 = vor.u32 %v4251, %v4252
        %v4254 = vshll.u32 920167782, %v4239
        %v4255 = vshrl.u32 1326507024, %v4240
        %v4256 = vor.u32 %v4254, %v4255
        %vm4257 = vcmp.lt.s32.totalorder %v4238, 1
        %vm4258 = vcmp.lt.s32.totalorder %v4238, 2
        %vm4259 = vcmp.lt.s32.totalorder %v4238, 3
        %vm4260 = vcmp.lt.s32.totalorder %v4238, 4
        %v4261 = vsel %vm4257, %v4241, %v4244
        %v4262 = vsel %vm4260, %v4250, 2102212464
        %v4263 = vsel %vm4259, %v4247, %v4262
        %v4264 = vsel %vm4258, %v4261, %v4263
        %v4265 = vsel %vm4257, %v4244, %v4247
        %v4266 = vsel %vm4260, %v4253, 920167782
        %v4267 = vsel %vm4259, %v4250, %v4266
        %v4268 = vsel %vm4258, %v4265, %v4267
        %v4269 = vsel %vm4257, %v4247, %v4250
        %v4270 = vsel %vm4260, %v4256, 1326507024
        %v4271 = vsel %vm4259, %v4253, %v4270
        %v4272 = vsel %vm4258, %v4269, %v4271
        %v4273 = vshll.u32 %v4233, 8
        %v4274 = vmul.u32.u64.compose %v4273, %v4272
        %v4275 = vextract.low.u32 %v4274
        %v4276 = vextract.high.u32 %v4274
        %v4277 = vmul.u32.u64.compose %v4273, %v4268
        %v4278 = vextract.low.u32 %v4277
        %v4279 = vextract.high.u32 %v4277
        %v4280 = vmul.u32 %v4273, %v4264
        %v4281 = vadd.s32 %v4276, %v4278
        %vm4282 = vc.u32 %v4276, %v4278
        %v4283 = vadd.s32 %v4279, 1
        %v4284 = vsel %vm4282, %v4283, %v4279
        %v4285 = vadd.s32 %v4280, %v4284
        %v4286 = vadd.s32 %v4285, 536870912
        %v4287 = vshrl.u32 %v4286, 30
        %v4288 = vshll.u32 %v4287, 30
        %v4289 = vsub.s32 %v4285, %v4288
        %vm4290 = vcmp.lt.s32.totalorder %v4289, 0
        %v4291 = vsub.s32 0, %v4289
        %v4292 = vsel %vm4290, %v4291, %v4289
        %v4293 = vclz %v4292
        %v4294 = vsub.s32 %v4293, 2
        %vm4295 = vcmp.gt.s32.totalorder 0, %v4294
        %v4296 = vsel %vm4295, 0, %v4294
        %v4297 = vsub.s32 32, %v4296
        %v4298 = vshll.u32 %v4289, %v4296
        %v4299 = vshrl.u32 %v4281, %v4297
        %v4300 = vor.u32 %v4298, %v4299
        %v4301 = vsub.s32 4294967266, %v4296
        %v4302 = vadd.s32 %v4301, 127
        %v4303 = vshll.u32 %v4302, 23
        %v4304 = vor.u32 4788187, %v4303
        %v4305 = vand.u32 2147483647, %v4304
        %v4307 = vcvt.s32.f32 %v4300
        %v4308 = vmul.f32 %v4307, %v4305
        %v4309 = vxor.u32 %v4308, 2147483648
        %v4310 = vsel %vm4227, %v4309, %v4308
        %v4311 = vsub.s32 4, %v4287
        %v4312 = vsel %vm4227, %v4311, %v4287
        %v4313 = vsel %vm4226, %v1000, %v4310
        %v4314 = vsel %vm4226, 0, %v4312
        %v4315 = vcosq.f32.pop %v4313
        %v4316 = vsinq.f32.pop %v4313
        %vm4317 = vweird.f32 %v1000
        %v4318 = vadd.s32 %v4314, 3
        %v4319 = vand.u32 %v4318, 3
        %vm4320 = vcmp.lt.s32.totalorder %v4319, 2
        %vm4321 = vcmp.eq.s32.totalorder %v4319, 0
        %v4322 = vxor.u32 %v4316, 2147483648
        %v4323 = vsel %vm4321, %v4315, %v4322
        %vm4324 = vcmp.eq.s32.totalorder %v4319, 2
        %v4325 = vxor.u32 %v4315, 2147483648
        %v4326 = vsel %vm4324, %v4325, %v4316
        %v4327 = vsel %vm4320, %v4323, %v4326
        %v4328 = vsel %vm4317, nan, %v4327
        %4329 = vst [vmem:[%s379] sm:$0xff] %v1104
        %4330 = vst [vmem:[%s379 + $0x8] sm:$0xff] %v1208
        %4331 = vst [vmem:[%s379 + $0x10] sm:$0xff] %v1312
        %4332 = vst [vmem:[%s379 + $0x18] sm:$0xff] %v1416
        %4333 = vst [vmem:[%s379 + $0x20] sm:$0xff] %v1520
        %4334 = vst [vmem:[%s379 + $0x28] sm:$0xff] %v1624
        %4335 = vst [vmem:[%s379 + $0x30] sm:$0xff] %v1728
        %4336 = vst [vmem:[%s379 + $0x38] sm:$0xff] %v1832
        %4337 = vst [vmem:[%s379 + $0x40] sm:$0xff] %v1936
        %4338 = vst [vmem:[%s379 + $0x48] sm:$0xff] %v2040
        %4339 = vst [vmem:[%s379 + $0x50] sm:$0xff] %v2144
        %4340 = vst [vmem:[%s379 + $0x58] sm:$0xff] %v2248
        %4341 = vst [vmem:[%s379 + $0x60] sm:$0xff] %v2352
        %4342 = vst [vmem:[%s379 + $0x68] sm:$0xff] %v2456
        %4343 = vst [vmem:[%s379 + $0x70] sm:$0xff] %v2560
        %4344 = vst [vmem:[%s379 + $0x78] sm:$0xff] %v2664
        %4345 = vst [vmem:[%s379 + $0x80] sm:$0xff] %v2768
        %4346 = vst [vmem:[%s379 + $0x88] sm:$0xff] %v2872
        %4347 = vst [vmem:[%s379 + $0x90] sm:$0xff] %v2976
        %4348 = vst [vmem:[%s379 + $0x98] sm:$0xff] %v3080
        %4349 = vst [vmem:[%s379 + $0xa0] sm:$0xff] %v3184
        %4350 = vst [vmem:[%s379 + $0xa8] sm:$0xff] %v3288
        %4351 = vst [vmem:[%s379 + $0xb0] sm:$0xff] %v3392
        %4352 = vst [vmem:[%s379 + $0xb8] sm:$0xff] %v3496
        %4353 = vst [vmem:[%s379 + $0xc0] sm:$0xff] %v3600
        %4354 = vst [vmem:[%s379 + $0xc8] sm:$0xff] %v3704
        %4355 = vst [vmem:[%s379 + $0xd0] sm:$0xff] %v3808
        %4356 = vst [vmem:[%s379 + $0xd8] sm:$0xff] %v3912
        %4357 = vst [vmem:[%s379 + $0xe0] sm:$0xff] %v4016
        %4358 = vst [vmem:[%s379 + $0xe8] sm:$0xff] %v4120
        %4359 = vst [vmem:[%s379 + $0xf0] sm:$0xff] %v4224
        %4360 = vst [vmem:[%s379 + $0xf8] sm:$0xff] %v4328
        %s4361 = sand.u32 %s220, 1
        %s4362 = scalar_lea.sflag [#allocation4], %s4361
        %s4363 = sand.u32 %s220, 1
        %s4364 = smul.addr %s4363, 256
        %s4365 = scalar_lea.vmem [#allocation5], %s4364
        // Predicated region
        $region53: #{tpu_custom_call.1} parent=47 // pred_check
          %p4366 = pneg %p230
        $region54: #{tpu_custom_call.1} parent=47 // pred_check_branch
          %4368 = sbr.rel (%p4366) target = $region56
        $region55: #{tpu_custom_call.1} parent=47 // pred_region
          %s4369 = smul.u32 16, %s27
          %s4371 = ssub.s32 4096, 4096
          %4372 = vsyncadd %s4362, %s4371
          %s4373 = smul.addr %s4369, 2
          %s4374 = smul.addr %s26, 32
          %s4375 = sadd.s32 %s4373, %s4374
          %s4376 = smul.addr %s4375, 128
          %s4377 = scalar_lea.hbm %s7, %s4376
          %s4378 = sshll.u32 %s4365, 4
          %s4379 = int_to_ptr.vmem [resolvable:$true] %s4378
          %4384 = dma.vmem_to_hbm [thread:$0]  %s4379, 4096, %s4377, %s4362, 128, 128, 8
        $region56: #{tpu_custom_call.1} parent=47 // pred_fallthru
          _
      $region48: #{tpu_custom_call.1} parent=5 // pred_fallthru
        _
      %p4385 = scmp.le.s32.totalorder 2, %s17
      // Predicated region
      $region57: #{tpu_custom_call.1} parent=5 // pred_check
        %p4386 = pneg %p4385
      $region58: #{tpu_custom_call.1} parent=5 // pred_check_branch
        %4388 = sbr.rel (%p4386) target = $region60
      $region59: #{tpu_custom_call.1} parent=5 // pred_region
        %s4389 = ssub.s32 %s17, 2
        // Predicated region
        $region61: #{tpu_custom_call.1} parent=59 // pred_check
          %p4390 = pneg %p236
        $region62: #{tpu_custom_call.1} parent=59 // pred_check_branch
          %4392 = sbr.rel (%p4390) target = $region64
        $region63: #{tpu_custom_call.1} parent=59 // pred_region
          %s4393 = sand.u32 %s221, 1
          %s4394 = scalar_lea.sflag [#allocation4], %s4393
          %s4395 = sand.u32 %s221, 1
          %s4396 = smul.addr %s4395, 256
          %s4397 = scalar_lea.vmem [#allocation5], %s4396
          %4398 = dma.done %s4394, 4096
        $region64: #{tpu_custom_call.1} parent=59 // pred_fallthru
          _
      $region60: #{tpu_custom_call.1} parent=5 // pred_fallthru
        _
    $region6: #{tpu_custom_call.1} parent=1 // loop_footer
      %s21 = sadd.s32 1, %s17
    $region7: #{tpu_custom_call.1} parent=1 // loop_footer_branch
      %16 = sbr.rel target = $region3
    $region8: #{tpu_custom_call.1} parent=1 // loop_exit
      _
    %4399 = vsyncpa [#allocation3], 1
    %s4400 = scalar_lea.sflag [#allocation3], 1
    %4401 = vsyncpa %s4400, 1
    %4402 = vsyncpa [#allocation4], 1
    %s4403 = scalar_lea.sflag [#allocation4], 1
    %4404 = vsyncpa %s4403, 1

</llo_original>
